<compile_context>
chip_gen: v6e
topology: v6e:2x2x1
jax: 0.10.0
libtpu: 0.0.40
codegen_flags: <defaults>
</compile_context>

<pallas_src>
import jax
import jax.numpy as jnp
from jax.experimental import pallas as pl
from jax.experimental.pallas import tpu as pltpu

BN_EPS = 1e-5                           # PyTorch BatchNorm1d default
_VMEM_LIMIT = 48 * 1024 * 1024          # scoped-VMEM cap, safe on all gens
_POOL_TILE_BUDGET = 12 * 1024 * 1024    # per-buffer pooling input tile budget
                                        # (x2 for double buffering ~ 24 MiB)


def _largest_tile(total, max_tile, mult):
    """Largest multiple of `mult` that divides `total` and is <= max_tile.
    Falls back to the full extent if no such divisor exists (full-extent
    blocks are always legal)."""
    if total <= max_tile:
        return total
    t = (min(max_tile, total) // mult) * mult
    while t >= mult:
        if total % t == 0:
            return t
        t -= mult
    return total


# ----------------------------------------------------------------------------
# Kernel A: fused global average + max pooling over H*W
#   grid: (C // Ct,)  "parallel"; block (N, Ct, HW), HW lane-dense.
#   Two separate lane-dense (N, Ct) output slabs (no (2, Ct) stack).
# ----------------------------------------------------------------------------
def _pool_kernel(x_ref, avg_ref, max_ref):
    xb = x_ref[...].astype(jnp.float32)      # (N, Ct, HW)
    avg_ref[...] = jnp.mean(xb, axis=-1)     # (N, Ct)
    max_ref[...] = jnp.max(xb, axis=-1)      # (N, Ct)


# ----------------------------------------------------------------------------
# Kernel G: attention gate  g = s * sigmoid(relu(s @ W1^T) @ W2^T)
#   Single grid step; bf16 MXU operands, f32 accumulation; bf16 gate output.
# ----------------------------------------------------------------------------
def _gate_kernel(s_ref, w1t_ref, w2t_ref, g_ref):
    sv = s_ref[...]                                          # (N, D) f32
    h = jnp.maximum(
        jnp.dot(sv.astype(jnp.bfloat16), w1t_ref[...],
                preferred_element_type=jnp.float32), 0.0)    # (N, Dh) f32
    y = jax.nn.sigmoid(
        jnp.dot(h.astype(jnp.bfloat16), w2t_ref[...],
                preferred_element_type=jnp.float32))         # (N, D) f32
    g_ref[...] = (sv * y).astype(g_ref.dtype)                # (N, D) bf16


# ----------------------------------------------------------------------------
# Kernel B: FC + BatchNorm1d (training-mode batch statistics) + ReLU
#   grid: (F // Ft,)  "parallel"; whole batch resident per F-tile so the
#   per-feature batch statistics are computed in-kernel.
# ----------------------------------------------------------------------------
def _fc_bn_relu_kernel(g_ref, wf_ref, b_ref, gamma_ref, beta_ref, o_ref):
    z = jnp.dot(g_ref[...], wf_ref[...],
                preferred_element_type=jnp.float32) + b_ref[...]   # (N, Ft)
    mu = jnp.mean(z, axis=0, keepdims=True)
    var = jnp.mean(jnp.square(z - mu), axis=0, keepdims=True)
    zhat = (z - mu) * jax.lax.rsqrt(var + BN_EPS)
    out = jnp.maximum(zhat * gamma_ref[...] + beta_ref[...], 0.0)
    o_ref[...] = out.astype(o_ref.dtype)


# ----------------------------------------------------------------------------
# One-time weight preparation (call OUTSIDE the jitted forward):
#   transpose matmul weights to (in, out) layout and cast them to bf16.
# ----------------------------------------------------------------------------
def prepare_params(w1, w2, wf, bf, gamma, beta):
    """w1: (Dh, D), w2: (D, Dh), wf: (F, D), bf/gamma/beta: (F,)."""
    return (
        jnp.asarray(w1, jnp.float32).T.astype(jnp.bfloat16),   # (D, Dh)
        jnp.asarray(w2, jnp.float32).T.astype(jnp.bfloat16),   # (Dh, D)
        jnp.asarray(wf, jnp.float32).T.astype(jnp.bfloat16),   # (D, F)
        jnp.asarray(bf, jnp.float32).reshape(1, -1),           # (1, F)
        jnp.asarray(gamma, jnp.float32).reshape(1, -1),        # (1, F)
        jnp.asarray(beta, jnp.float32).reshape(1, -1),         # (1, F)
    )


# ----------------------------------------------------------------------------
# Forward wrapper
# ----------------------------------------------------------------------------
@jax.jit
def avgmax_attention(x, w1t, w2t, wft, bf2, gamma2, beta2):
    """x: (N, C, H, W); prepared params from prepare_params(). Returns (N, F)."""
    N, C, H, W = x.shape
    HW = H * W
    D = 2 * C
    Dh = w1t.shape[1]
    F = wft.shape[1]
    assert w1t.shape == (D, Dh) and w2t.shape == (Dh, D) and wft.shape[0] == D

    # ---------------- stage 1: fused avg + max pooling ----------------
    xr = x.reshape(N, C, HW)                      # trailing dim lane-dense
    ct_cap = max(8, _POOL_TILE_BUDGET // max(1, N * HW * x.dtype.itemsize))
    Ct = _largest_tile(C, ct_cap, 8)

    avg, mx = pl.pallas_call(
        _pool_kernel,
        out_shape=(jax.ShapeDtypeStruct((N, C), jnp.float32),
                   jax.ShapeDtypeStruct((N, C), jnp.float32)),
        grid=(C // Ct,),
        in_specs=[pl.BlockSpec((N, Ct, HW), lambda c: (0, c, 0))],
        out_specs=(pl.BlockSpec((N, Ct), lambda c: (0, c)),
                   pl.BlockSpec((N, Ct), lambda c: (0, c))),
        compiler_params=pltpu.CompilerParams(
            dimension_semantics=("parallel",),
            vmem_limit_bytes=_VMEM_LIMIT),
    )(xr)

    s = jnp.concatenate([avg, mx], axis=1)        # (N, D) f32 — tiny glue op

    # ---------------- stage 2: attention gate (single-step kernel) --------
    g = pl.pallas_call(
        _gate_kernel,
        out_shape=jax.ShapeDtypeStruct((N, D), jnp.bfloat16),
        grid=(1,),
        in_specs=[pl.BlockSpec((N, D), lambda i: (0, 0)),
                  pl.BlockSpec((D, Dh), lambda i: (0, 0)),
                  pl.BlockSpec((Dh, D), lambda i: (0, 0))],
        out_specs=pl.BlockSpec((N, D), lambda i: (0, 0)),
        compiler_params=pltpu.CompilerParams(
            dimension_semantics=("arbitrary",),
            vmem_limit_bytes=_VMEM_LIMIT),
    )(s, w1t, w2t)

    # ---------------- stage 3: FC + BatchNorm1d + ReLU, F-tiled -----------
    Ft = _largest_tile(F, 512, 128)
    out = pl.pallas_call(
        _fc_bn_relu_kernel,
        out_shape=jax.ShapeDtypeStruct((N, F), x.dtype),
        grid=(F // Ft,),
        in_specs=[
            pl.BlockSpec((N, D), lambda j: (0, 0)),      # gate (resident)
            pl.BlockSpec((D, Ft), lambda j: (0, j)),     # Wf^T tile (bf16)
            pl.BlockSpec((1, Ft), lambda j: (0, j)),     # bias tile
            pl.BlockSpec((1, Ft), lambda j: (0, j)),     # BN gamma tile
            pl.BlockSpec((1, Ft), lambda j: (0, j)),     # BN beta tile
        ],
        out_specs=pl.BlockSpec((N, Ft), lambda j: (0, j)),
        compiler_params=pltpu.CompilerParams(
            dimension_semantics=("parallel",),
            vmem_limit_bytes=_VMEM_LIMIT),
    )(g, wft, bf2, gamma2, beta2)
    return out


# ----------------------------------------------------------------------------
# Pure-JAX references
# ----------------------------------------------------------------------------
def avgmax_attention_f32_reference(x, w1, w2, wf, bf, gamma, beta):
    """Exact-module (all-f32) reference of the PyTorch forward (train-mode BN)."""
    avg = jnp.mean(x, axis=(2, 3))
    mx = jnp.max(x, axis=(2, 3))
    s = jnp.concatenate([avg, mx], axis=1)
    h = jax.nn.relu(s @ w1.T)
    y = jax.nn.sigmoid(h @ w2.T)
    g = s * y
    z = g @ wf.T + bf
    mu = jnp.mean(z, axis=0)
    var = jnp.mean(jnp.square(z - mu), axis=0)
    return jax.nn.relu((z - mu) / jnp.sqrt(var + BN_EPS) * gamma + beta)


def avgmax_attention_matched_reference(x, w1t, w2t, wft, bf2, gamma2, beta2):
    """Reference with the same bf16-operand / f32-accumulation mixed precision
    as the kernels (used for the tight numeric check)."""
    avg = jnp.mean(x.astype(jnp.float32), axis=(2, 3))
    mx = jnp.max(x.astype(jnp.float32), axis=(2, 3))
    s = jnp.concatenate([avg, mx], axis=1)
    h = jax.nn.relu(jnp.dot(s.astype(jnp.bfloat16), w1t,
                            preferred_element_type=jnp.float32))
    y = jax.nn.sigmoid(jnp.dot(h.astype(jnp.bfloat16), w2t,
                               preferred_element_type=jnp.float32))
    g = (s * y).astype(jnp.bfloat16)
    z = jnp.dot(g, wft, preferred_element_type=jnp.float32) + bf2
    mu = jnp.mean(z, axis=0, keepdims=True)
    var = jnp.mean(jnp.square(z - mu), axis=0, keepdims=True)
    return jax.nn.relu((z - mu) / jnp.sqrt(var + BN_EPS) * gamma2 + beta2)


if __name__ == "__main__":
    key = jax.random.PRNGKey(0)
    kx, k1, k2, k3, kg = jax.random.split(key, 5)

    # Small shapes consistent with the module structure
    # (real module: C=2048 -> D=4096, reduction=16, F=2048).
    N, C, H, W = 4, 256, 16, 16
    D = 2 * C            # 512
    reduction = 16
    Dh = D // reduction  # 32
    F = D // 2           # 256

    x = jax.random.normal(kx, (N, C, H, W), dtype=jnp.float32)

    # attention_block weights (nn.Linear default init, bias=False).
    b1 = 1.0 / (D ** 0.5)
    w1 = jax.random.uniform(k1, (Dh, D), jnp.float32, minval=-b1, maxval=b1)
    b2 = 1.0 / (Dh ** 0.5)
    w2 = jax.random.uniform(k2, (D, Dh), jnp.float32, minval=-b2, maxval=b2)

    # fc_linear: Linear (kaiming_normal fan_out, bias=0) + BatchNorm1d
    # (gamma ~ N(1, 0.02), beta = 0).
    wf = jax.random.normal(k3, (F, D), dtype=jnp.float32) * (2.0 / F) ** 0.5
    bf = jnp.zeros((F,), jnp.float32)
    gamma = 1.0 + 0.02 * jax.random.normal(kg, (F,), dtype=jnp.float32)
    beta = jnp.zeros((F,), jnp.float32)
    # TODO(synk): BatchNorm1d running_mean/running_var buffer updates (a
    # training-time side effect) are not emitted; the forward uses batch
    # statistics exactly like PyTorch train mode.

    # One-time weight prep (outside the jitted hot path): transpose + bf16.
    params = prepare_params(w1, w2, wf, bf, gamma, beta)

    out = avgmax_attention(x, *params)
    out = jax.block_until_ready(out)
    assert out.shape == (N, F)

    # Tight check against a precision-matched (bf16 operand) reference.
    ref_matched = avgmax_attention_matched_reference(x, *params)
    err = float(jnp.max(jnp.abs(out - ref_matched)))
    assert err < 2e-2, f"mismatch vs precision-matched reference: {err}"

    # Loose sanity check against the exact f32 module semantics.
    ref_f32 = avgmax_attention_f32_reference(x, w1, w2, wf, bf, gamma, beta)
    err32 = float(jnp.max(jnp.abs(out - ref_f32)))
    assert err32 < 0.5, f"mismatch vs f32 module reference: {err32}"

    print("KERNEL_OK")
</pallas_src>

<mosaic_0001>
module attributes {stable_mosaic.version = 11 : i64} {
  func.func @_pool_kernel(%arg0: i32, %arg1: memref<4x256x256xf32, #tpu.memory_space<vmem>>, %arg2: memref<4x256xf32, #tpu.memory_space<vmem>>, %arg3: memref<4x256xf32, #tpu.memory_space<vmem>>) attributes {dimension_semantics = [#tpu.dimension_semantics<parallel>], iteration_bounds = array<i64: 1>, scalar_prefetch = 0 : i64, scratch_operands = 0 : i64, tpu.core_type = #tpu.core_type<tc>, window_params = [{transform_indices = @transform_0, window_bounds = array<i64: 4, 256, 256>}, {transform_indices = @transform_1, window_bounds = array<i64: 4, 256>}, {transform_indices = @transform_2, window_bounds = array<i64: 4, 256>}]} {
    %c0 = arith.constant 0 : index
    %c0_0 = arith.constant 0 : index
    %c0_1 = arith.constant 0 : index
    %0 = vector.load %arg1[%c0, %c0_0, %c0_1] : memref<4x256x256xf32, #tpu.memory_space<vmem>>, vector<4x256x256xf32>
    %cst = arith.constant dense<0.000000e+00> : vector<4x256xf32>
    %1 = vector.multi_reduction <add>, %0, %cst [2] : vector<4x256x256xf32> to vector<4x256xf32>
    %cst_2 = arith.constant 2.560000e+02 : f32
    %2 = vector.broadcast %cst_2 : f32 to vector<4x256xf32>
    %3 = arith.divf %1, %2 : vector<4x256xf32>
    %c0_3 = arith.constant 0 : index
    %c0_4 = arith.constant 0 : index
    %4 = vector.load %arg2[%c0_3, %c0_4] : memref<4x256xf32, #tpu.memory_space<vmem>>, vector<4x256xf32>
    tpu.vector_store %arg2[%c0_3, %c0_4], %3 {strides = array<i32>} : memref<4x256xf32, #tpu.memory_space<vmem>>, vector<4x256xf32>,
    %cst_5 = arith.constant dense<0xFF800000> : vector<4x256xf32>
    %5 = vector.multi_reduction <maximumf>, %0, %cst_5 [2] : vector<4x256x256xf32> to vector<4x256xf32>
    %c0_6 = arith.constant 0 : index
    %c0_7 = arith.constant 0 : index
    %6 = vector.load %arg3[%c0_6, %c0_7] : memref<4x256xf32, #tpu.memory_space<vmem>>, vector<4x256xf32>
    tpu.vector_store %arg3[%c0_6, %c0_7], %5 {strides = array<i32>} : memref<4x256xf32, #tpu.memory_space<vmem>>, vector<4x256xf32>,
    return
  }
  func.func @transform_0(%arg0: i32) -> (i32, i32, i32) {
    %c0_i32 = arith.constant 0 : i32
    %c0_i32_0 = arith.constant 0 : i32
    %c0_i32_1 = arith.constant 0 : i32
    return %c0_i32, %arg0, %c0_i32_0 : i32, i32, i32
  }
  func.func @transform_1(%arg0: i32) -> (i32, i32) {
    %c0_i32 = arith.constant 0 : i32
    %c0_i32_0 = arith.constant 0 : i32
    return %c0_i32, %arg0 : i32, i32
  }
  func.func @transform_2(%arg0: i32) -> (i32, i32) {
    %c0_i32 = arith.constant 0 : i32
    %c0_i32_0 = arith.constant 0 : i32
    return %c0_i32, %arg0 : i32, i32
  }
}

module attributes {stable_mosaic.version = 11 : i64} {
  func.func @_fc_bn_relu_kernel(%arg0: i32, %arg1: memref<4x512xbf16, #tpu.memory_space<vmem>>, %arg2: memref<512x256xbf16, #tpu.memory_space<vmem>>, %arg3: memref<1x256xf32, #tpu.memory_space<vmem>>, %arg4: memref<1x256xf32, #tpu.memory_space<vmem>>, %arg5: memref<1x256xf32, #tpu.memory_space<vmem>>, %arg6: memref<4x256xf32, #tpu.memory_space<vmem>>) attributes {dimension_semantics = [#tpu.dimension_semantics<parallel>], iteration_bounds = array<i64: 1>, scalar_prefetch = 0 : i64, scratch_operands = 0 : i64, tpu.core_type = #tpu.core_type<tc>, window_params = [{pipeline_mode = #tpu.pipeline_mode<synchronous>, transform_indices = @transform_0, window_bounds = array<i64: 4, 512>}, {transform_indices = @transform_1, window_bounds = array<i64: 512, 256>}, {transform_indices = @transform_2, window_bounds = array<i64: 1, 256>}, {transform_indices = @transform_3, window_bounds = array<i64: 1, 256>}, {transform_indices = @transform_4, window_bounds = array<i64: 1, 256>}, {transform_indices = @transform_5, window_bounds = array<i64: 4, 256>}]} {
    %c0 = arith.constant 0 : index
    %c0_0 = arith.constant 0 : index
    %0 = vector.load %arg1[%c0, %c0_0] : memref<4x512xbf16, #tpu.memory_space<vmem>>, vector<4x512xbf16>
    %c0_1 = arith.constant 0 : index
    %c0_2 = arith.constant 0 : index
    %1 = vector.load %arg2[%c0_1, %c0_2] : memref<512x256xbf16, #tpu.memory_space<vmem>>, vector<512x256xbf16>
    %cst = arith.constant dense<0.000000e+00> : vector<4x256xf32>
    %2 = tpu.matmul %0, %1, %cst {dimension_numbers = #tpu.dot_dimension_numbers<[1], [0], [0], [1], [0, 0, 1, 1], [], []>} : vector<4x512xbf16>, vector<512x256xbf16>, vector<4x256xf32> -> vector<4x256xf32>
    %c0_3 = arith.constant 0 : index
    %c0_4 = arith.constant 0 : index
    %3 = vector.load %arg3[%c0_3, %c0_4] : memref<1x256xf32, #tpu.memory_space<vmem>>, vector<1x256xf32>
    %4 = vector.broadcast %3 : vector<1x256xf32> to vector<4x256xf32>
    %5 = arith.addf %2, %4 : vector<4x256xf32>
    %cst_5 = arith.constant dense<0.000000e+00> : vector<256xf32>
    %6 = vector.multi_reduction <add>, %5, %cst_5 [0] : vector<4x256xf32> to vector<256xf32>
    %7 = vector.shape_cast %6 : vector<256xf32> to vector<1x256xf32>
    %cst_6 = arith.constant 4.000000e+00 : f32
    %8 = vector.broadcast %cst_6 : f32 to vector<1x256xf32>
    %9 = arith.divf %7, %8 : vector<1x256xf32>
    %10 = vector.broadcast %9 : vector<1x256xf32> to vector<4x256xf32>
    %11 = arith.subf %5, %10 : vector<4x256xf32>
    %12 = arith.mulf %11, %11 : vector<4x256xf32>
    %cst_7 = arith.constant dense<0.000000e+00> : vector<256xf32>
    %13 = vector.multi_reduction <add>, %12, %cst_7 [0] : vector<4x256xf32> to vector<256xf32>
    %14 = vector.shape_cast %13 : vector<256xf32> to vector<1x256xf32>
    %cst_8 = arith.constant 4.000000e+00 : f32
    %15 = vector.broadcast %cst_8 : f32 to vector<1x256xf32>
    %16 = arith.divf %14, %15 : vector<1x256xf32>
    %17 = vector.broadcast %9 : vector<1x256xf32> to vector<4x256xf32>
    %18 = arith.subf %5, %17 : vector<4x256xf32>
    %cst_9 = arith.constant 9.99999974E-6 : f32
    %19 = vector.broadcast %cst_9 : f32 to vector<1x256xf32>
    %20 = arith.addf %16, %19 : vector<1x256xf32>
    %21 = math.rsqrt %20 : vector<1x256xf32>
    %22 = vector.broadcast %21 : vector<1x256xf32> to vector<4x256xf32>
    %23 = arith.mulf %18, %22 : vector<4x256xf32>
    %c0_10 = arith.constant 0 : index
    %c0_11 = arith.constant 0 : index
    %24 = vector.load %arg4[%c0_10, %c0_11] : memref<1x256xf32, #tpu.memory_space<vmem>>, vector<1x256xf32>
    %25 = vector.broadcast %24 : vector<1x256xf32> to vector<4x256xf32>
    %26 = arith.mulf %23, %25 : vector<4x256xf32>
    %c0_12 = arith.constant 0 : index
    %c0_13 = arith.constant 0 : index
    %27 = vector.load %arg5[%c0_12, %c0_13] : memref<1x256xf32, #tpu.memory_space<vmem>>, vector<1x256xf32>
    %28 = vector.broadcast %27 : vector<1x256xf32> to vector<4x256xf32>
    %29 = arith.addf %26, %28 : vector<4x256xf32>
    %cst_14 = arith.constant 0.000000e+00 : f32
    %30 = vector.broadcast %cst_14 : f32 to vector<4x256xf32>
    %31 = arith.maximumf %29, %30 : vector<4x256xf32>
    %c0_15 = arith.constant 0 : index
    %c0_16 = arith.constant 0 : index
    %32 = vector.load %arg6[%c0_15, %c0_16] : memref<4x256xf32, #tpu.memory_space<vmem>>, vector<4x256xf32>
    tpu.vector_store %arg6[%c0_15, %c0_16], %31 {strides = array<i32>} : memref<4x256xf32, #tpu.memory_space<vmem>>, vector<4x256xf32>,
    return
  }
  func.func @transform_0(%arg0: i32) -> (i32, i32) {
    %c0_i32 = arith.constant 0 : i32
    %c0_i32_0 = arith.constant 0 : i32
    %c0_i32_1 = arith.constant 0 : i32
    return %c0_i32, %c0_i32_0 : i32, i32
  }
  func.func @transform_1(%arg0: i32) -> (i32, i32) {
    %c0_i32 = arith.constant 0 : i32
    %c0_i32_0 = arith.constant 0 : i32
    return %c0_i32, %arg0 : i32, i32
  }
  func.func @transform_2(%arg0: i32) -> (i32, i32) {
    %c0_i32 = arith.constant 0 : i32
    %c0_i32_0 = arith.constant 0 : i32
    return %c0_i32, %arg0 : i32, i32
  }
  func.func @transform_3(%arg0: i32) -> (i32, i32) {
    %c0_i32 = arith.constant 0 : i32
    %c0_i32_0 = arith.constant 0 : i32
    return %c0_i32, %arg0 : i32, i32
  }
  func.func @transform_4(%arg0: i32) -> (i32, i32) {
    %c0_i32 = arith.constant 0 : i32
    %c0_i32_0 = arith.constant 0 : i32
    return %c0_i32, %arg0 : i32, i32
  }
  func.func @transform_5(%arg0: i32) -> (i32, i32) {
    %c0_i32 = arith.constant 0 : i32
    %c0_i32_0 = arith.constant 0 : i32
    return %c0_i32, %arg0 : i32, i32
  }
}

module attributes {stable_mosaic.version = 11 : i64} {
  func.func @_gate_kernel(%arg0: i32, %arg1: memref<4x512xf32, #tpu.memory_space<vmem>>, %arg2: memref<512x32xbf16, #tpu.memory_space<vmem>>, %arg3: memref<32x512xbf16, #tpu.memory_space<vmem>>, %arg4: memref<4x512xbf16, #tpu.memory_space<vmem>>) attributes {dimension_semantics = [#tpu.dimension_semantics<arbitrary>], iteration_bounds = array<i64: 1>, scalar_prefetch = 0 : i64, scratch_operands = 0 : i64, tpu.core_type = #tpu.core_type<tc>, window_params = [{pipeline_mode = #tpu.pipeline_mode<synchronous>, transform_indices = @transform_0, window_bounds = array<i64: 4, 512>}, {pipeline_mode = #tpu.pipeline_mode<synchronous>, transform_indices = @transform_1, window_bounds = array<i64: 512, 32>}, {pipeline_mode = #tpu.pipeline_mode<synchronous>, transform_indices = @transform_2, window_bounds = array<i64: 32, 512>}, {pipeline_mode = #tpu.pipeline_mode<synchronous>, transform_indices = @transform_3, window_bounds = array<i64: 4, 512>}]} {
    %c0 = arith.constant 0 : index
    %c0_0 = arith.constant 0 : index
    %0 = vector.load %arg1[%c0, %c0_0] : memref<4x512xf32, #tpu.memory_space<vmem>>, vector<4x512xf32>
    %1 = arith.truncf %0 : vector<4x512xf32> to vector<4x512xbf16>
    %c0_1 = arith.constant 0 : index
    %c0_2 = arith.constant 0 : index
    %2 = vector.load %arg2[%c0_1, %c0_2] : memref<512x32xbf16, #tpu.memory_space<vmem>>, vector<512x32xbf16>
    %cst = arith.constant dense<0.000000e+00> : vector<4x32xf32>
    %3 = tpu.matmul %1, %2, %cst {dimension_numbers = #tpu.dot_dimension_numbers<[1], [0], [0], [1], [0, 0, 1, 1], [], []>} : vector<4x512xbf16>, vector<512x32xbf16>, vector<4x32xf32> -> vector<4x32xf32>
    %cst_3 = arith.constant 0.000000e+00 : f32
    %4 = vector.broadcast %cst_3 : f32 to vector<4x32xf32>
    %5 = arith.maximumf %3, %4 : vector<4x32xf32>
    %6 = arith.truncf %5 : vector<4x32xf32> to vector<4x32xbf16>
    %c0_4 = arith.constant 0 : index
    %c0_5 = arith.constant 0 : index
    %7 = vector.load %arg3[%c0_4, %c0_5] : memref<32x512xbf16, #tpu.memory_space<vmem>>, vector<32x512xbf16>
    %cst_6 = arith.constant dense<0.000000e+00> : vector<4x512xf32>
    %8 = tpu.matmul %6, %7, %cst_6 {dimension_numbers = #tpu.dot_dimension_numbers<[1], [0], [0], [1], [0, 0, 1, 1], [], []>} : vector<4x32xbf16>, vector<32x512xbf16>, vector<4x512xf32> -> vector<4x512xf32>
    %9 = arith.negf %8 : vector<4x512xf32>
    %10 = math.exp %9 : vector<4x512xf32>
    %cst_7 = arith.constant 1.000000e+00 : f32
    %11 = vector.broadcast %cst_7 : f32 to vector<4x512xf32>
    %12 = arith.addf %11, %10 : vector<4x512xf32>
    %13 = arith.divf %11, %12 : vector<4x512xf32>
    %14 = arith.mulf %0, %13 : vector<4x512xf32>
    %15 = arith.truncf %14 : vector<4x512xf32> to vector<4x512xbf16>
    %c0_8 = arith.constant 0 : index
    %c0_9 = arith.constant 0 : index
    %16 = vector.load %arg4[%c0_8, %c0_9] : memref<4x512xbf16, #tpu.memory_space<vmem>>, vector<4x512xbf16>
    tpu.vector_store %arg4[%c0_8, %c0_9], %15 {strides = array<i32>} : memref<4x512xbf16, #tpu.memory_space<vmem>>, vector<4x512xbf16>,
    return
  }
  func.func @transform_0(%arg0: i32) -> (i32, i32) {
    %c0_i32 = arith.constant 0 : i32
    %c0_i32_0 = arith.constant 0 : i32
    %c0_i32_1 = arith.constant 0 : i32
    return %c0_i32, %c0_i32_0 : i32, i32
  }
  func.func @transform_1(%arg0: i32) -> (i32, i32) {
    %c0_i32 = arith.constant 0 : i32
    %c0_i32_0 = arith.constant 0 : i32
    %c0_i32_1 = arith.constant 0 : i32
    return %c0_i32, %c0_i32_0 : i32, i32
  }
  func.func @transform_2(%arg0: i32) -> (i32, i32) {
    %c0_i32 = arith.constant 0 : i32
    %c0_i32_0 = arith.constant 0 : i32
    %c0_i32_1 = arith.constant 0 : i32
    return %c0_i32, %c0_i32_0 : i32, i32
  }
  func.func @transform_3(%arg0: i32) -> (i32, i32) {
    %c0_i32 = arith.constant 0 : i32
    %c0_i32_0 = arith.constant 0 : i32
    %c0_i32_1 = arith.constant 0 : i32
    return %c0_i32, %c0_i32_0 : i32, i32
  }
}

</mosaic_0001>

<llo_original>
// kernel: avgmax_attention.4
$region0: #{avgmax_attention.4}
  #allocation0 [shape = 'u32[]', space=smem, size = 0x4, offset = 0x4, fixed_abs, tag = 'smem constant byte address 0x4 - core index']
  #allocation1 [shape = 'u32[144,128]{1,0:T(1,128)}', space=vmem, size = 0x12000, scoped, tag = 'internal scratch']
  %s0 = inlined_call_operand.vmem [shape: f32[4,512], index: 0, kind: input, shape index: {}]
  %s1 = inlined_call_operand.vmem [shape: bf16[512,32], index: 1, kind: input, shape index: {}]
  %s2 = inlined_call_operand.vmem [shape: bf16[32,512], index: 2, kind: input, shape index: {}]
  %s3 = inlined_call_operand.vmem [shape: bf16[4,512], index: 3, kind: output, shape index: {}]
  %s4 = sld [smem:[#allocation0]]
  $region22: #{avgmax_attention.4} parent=0
    _
  %s6 = ssub.s32 1, %s4
  %s7 = scalar_select 0, %s6, %s4
  // Predicated region
  $region2: #{avgmax_attention.4} parent=0 // pred_check
    _
  $region3: #{avgmax_attention.4} parent=0 // pred_check_branch
    %9 = sbr.rel (0) target = $region5
  $region4: #{avgmax_attention.4} parent=0 // pred_region
    _
  $region5: #{avgmax_attention.4} parent=0 // pred_fallthru
    _
  // Predicated region
  $region6: #{avgmax_attention.4} parent=0 // pred_check
    _
  $region7: #{avgmax_attention.4} parent=0 // pred_check_branch
    %11 = sbr.rel (0) target = $region9
  $region8: #{avgmax_attention.4} parent=0 // pred_region
    _
  $region9: #{avgmax_attention.4} parent=0 // pred_fallthru
    _
  // Predicated region
  $region10: #{avgmax_attention.4} parent=0 // pred_check
    _
  $region11: #{avgmax_attention.4} parent=0 // pred_check_branch
    %13 = sbr.rel (0) target = $region13
  $region12: #{avgmax_attention.4} parent=0 // pred_region
    _
  $region13: #{avgmax_attention.4} parent=0 // pred_fallthru
    _
  %v15 = vld [vmem:[%s0] sm:$0xff]
  %v16 = vld [vmem:[%s0 + $0x8] sm:$0xff]
  %v19 = vcombine.high %v15, %v15
  %v20 = vcombine.high %v16, %v16
  %v23 = vpack.c.bf16 %v15, %v15
  %v24 = vpack.c.bf16 %v19, %v19
  %v25 = vpack.c.bf16 %v16, %v16
  %v26 = vpack.c.bf16 %v20, %v20
  %v27 = vld [vmem:[%s1] sm:$0xf]
  %v28 = vld [vmem:[%s1 + $0x4] sm:$0xf]
  %v29 = vld [vmem:[%s1 + $0x8] sm:$0xf]
  %v30 = vld [vmem:[%s1 + $0xc] sm:$0xf]
  %v31 = vld [vmem:[%s1 + $0x10] sm:$0xf]
  %v32 = vld [vmem:[%s1 + $0x14] sm:$0xf]
  %v33 = vld [vmem:[%s1 + $0x18] sm:$0xf]
  %v34 = vld [vmem:[%s1 + $0x1c] sm:$0xf]
  %v35 = vld [vmem:[%s1 + $0x20] sm:$0xf]
  %v36 = vld [vmem:[%s1 + $0x24] sm:$0xf]
  %v37 = vld [vmem:[%s1 + $0x28] sm:$0xf]
  %v38 = vld [vmem:[%s1 + $0x2c] sm:$0xf]
  %v39 = vld [vmem:[%s1 + $0x30] sm:$0xf]
  %v40 = vld [vmem:[%s1 + $0x34] sm:$0xf]
  %v41 = vld [vmem:[%s1 + $0x38] sm:$0xf]
  %v42 = vld [vmem:[%s1 + $0x3c] sm:$0xf]
  %v43 = vld [vmem:[%s1 + $0x40] sm:$0xf]
  %v44 = vld [vmem:[%s1 + $0x44] sm:$0xf]
  %v45 = vld [vmem:[%s1 + $0x48] sm:$0xf]
  %v46 = vld [vmem:[%s1 + $0x4c] sm:$0xf]
  %v47 = vld [vmem:[%s1 + $0x50] sm:$0xf]
  %v48 = vld [vmem:[%s1 + $0x54] sm:$0xf]
  %v49 = vld [vmem:[%s1 + $0x58] sm:$0xf]
  %v50 = vld [vmem:[%s1 + $0x5c] sm:$0xf]
  %v51 = vld [vmem:[%s1 + $0x60] sm:$0xf]
  %v52 = vld [vmem:[%s1 + $0x64] sm:$0xf]
  %v53 = vld [vmem:[%s1 + $0x68] sm:$0xf]
  %v54 = vld [vmem:[%s1 + $0x6c] sm:$0xf]
  %v55 = vld [vmem:[%s1 + $0x70] sm:$0xf]
  %v56 = vld [vmem:[%s1 + $0x74] sm:$0xf]
  %v57 = vld [vmem:[%s1 + $0x78] sm:$0xf]
  %v58 = vld [vmem:[%s1 + $0x7c] sm:$0xf]
  %v59 = vld [vmem:[%s1 + $0x80] sm:$0xf]
  %v60 = vld [vmem:[%s1 + $0x84] sm:$0xf]
  %v61 = vld [vmem:[%s1 + $0x88] sm:$0xf]
  %v62 = vld [vmem:[%s1 + $0x8c] sm:$0xf]
  %v63 = vld [vmem:[%s1 + $0x90] sm:$0xf]
  %v64 = vld [vmem:[%s1 + $0x94] sm:$0xf]
  %v65 = vld [vmem:[%s1 + $0x98] sm:$0xf]
  %v66 = vld [vmem:[%s1 + $0x9c] sm:$0xf]
  %v67 = vld [vmem:[%s1 + $0xa0] sm:$0xf]
  %v68 = vld [vmem:[%s1 + $0xa4] sm:$0xf]
  %v69 = vld [vmem:[%s1 + $0xa8] sm:$0xf]
  %v70 = vld [vmem:[%s1 + $0xac] sm:$0xf]
  %v71 = vld [vmem:[%s1 + $0xb0] sm:$0xf]
  %v72 = vld [vmem:[%s1 + $0xb4] sm:$0xf]
  %v73 = vld [vmem:[%s1 + $0xb8] sm:$0xf]
  %v74 = vld [vmem:[%s1 + $0xbc] sm:$0xf]
  %v75 = vld [vmem:[%s1 + $0xc0] sm:$0xf]
  %v76 = vld [vmem:[%s1 + $0xc4] sm:$0xf]
  %v77 = vld [vmem:[%s1 + $0xc8] sm:$0xf]
  %v78 = vld [vmem:[%s1 + $0xcc] sm:$0xf]
  %v79 = vld [vmem:[%s1 + $0xd0] sm:$0xf]
  %v80 = vld [vmem:[%s1 + $0xd4] sm:$0xf]
  %v81 = vld [vmem:[%s1 + $0xd8] sm:$0xf]
  %v82 = vld [vmem:[%s1 + $0xdc] sm:$0xf]
  %v83 = vld [vmem:[%s1 + $0xe0] sm:$0xf]
  %v84 = vld [vmem:[%s1 + $0xe4] sm:$0xf]
  %v85 = vld [vmem:[%s1 + $0xe8] sm:$0xf]
  %v86 = vld [vmem:[%s1 + $0xec] sm:$0xf]
  %v87 = vld [vmem:[%s1 + $0xf0] sm:$0xf]
  %v88 = vld [vmem:[%s1 + $0xf4] sm:$0xf]
  %v89 = vld [vmem:[%s1 + $0xf8] sm:$0xf]
  %v90 = vld [vmem:[%s1 + $0xfc] sm:$0xf]
  %v155 = vunpack.c.l.b16 %v27
  %v156 = vunpack.c.l.b16 %v28
  %v157 = vunpack.c.l.b16 %v29
  %v158 = vunpack.c.l.b16 %v30
  %v159 = vunpack.c.l.b16 %v31
  %v160 = vunpack.c.l.b16 %v32
  %v161 = vunpack.c.l.b16 %v33
  %v162 = vunpack.c.l.b16 %v34
  %v163 = vunpack.c.l.b16 %v35
  %v164 = vunpack.c.l.b16 %v36
  %v165 = vunpack.c.l.b16 %v37
  %v166 = vunpack.c.l.b16 %v38
  %v167 = vunpack.c.l.b16 %v39
  %v168 = vunpack.c.l.b16 %v40
  %v169 = vunpack.c.l.b16 %v41
  %v170 = vunpack.c.l.b16 %v42
  %v171 = vunpack.c.l.b16 %v43
  %v172 = vunpack.c.l.b16 %v44
  %v173 = vunpack.c.l.b16 %v45
  %v174 = vunpack.c.l.b16 %v46
  %v175 = vunpack.c.l.b16 %v47
  %v176 = vunpack.c.l.b16 %v48
  %v177 = vunpack.c.l.b16 %v49
  %v178 = vunpack.c.l.b16 %v50
  %v179 = vunpack.c.l.b16 %v51
  %v180 = vunpack.c.l.b16 %v52
  %v181 = vunpack.c.l.b16 %v53
  %v182 = vunpack.c.l.b16 %v54
  %v183 = vunpack.c.l.b16 %v55
  %v184 = vunpack.c.l.b16 %v56
  %v185 = vunpack.c.l.b16 %v57
  %v186 = vunpack.c.l.b16 %v58
  %v187 = vunpack.c.l.b16 %v59
  %v188 = vunpack.c.l.b16 %v60
  %v189 = vunpack.c.l.b16 %v61
  %v190 = vunpack.c.l.b16 %v62
  %v191 = vunpack.c.l.b16 %v63
  %v192 = vunpack.c.l.b16 %v64
  %v193 = vunpack.c.l.b16 %v65
  %v194 = vunpack.c.l.b16 %v66
  %v195 = vunpack.c.l.b16 %v67
  %v196 = vunpack.c.l.b16 %v68
  %v197 = vunpack.c.l.b16 %v69
  %v198 = vunpack.c.l.b16 %v70
  %v199 = vunpack.c.l.b16 %v71
  %v200 = vunpack.c.l.b16 %v72
  %v201 = vunpack.c.l.b16 %v73
  %v202 = vunpack.c.l.b16 %v74
  %v203 = vunpack.c.l.b16 %v75
  %v204 = vunpack.c.l.b16 %v76
  %v205 = vunpack.c.l.b16 %v77
  %v206 = vunpack.c.l.b16 %v78
  %v207 = vunpack.c.l.b16 %v79
  %v208 = vunpack.c.l.b16 %v80
  %v209 = vunpack.c.l.b16 %v81
  %v210 = vunpack.c.l.b16 %v82
  %v211 = vunpack.c.l.b16 %v83
  %v212 = vunpack.c.l.b16 %v84
  %v213 = vunpack.c.l.b16 %v85
  %v214 = vunpack.c.l.b16 %v86
  %v215 = vunpack.c.l.b16 %v87
  %v216 = vunpack.c.l.b16 %v88
  %v217 = vunpack.c.l.b16 %v89
  %v218 = vunpack.c.l.b16 %v90
  %v219 = vpack.c.b16 %v156, %v155
  %v220 = vpack.c.b16 %v158, %v157
  %v221 = vpack.c.b16 %v160, %v159
  %v222 = vpack.c.b16 %v162, %v161
  %v223 = vpack.c.b16 %v164, %v163
  %v224 = vpack.c.b16 %v166, %v165
  %v225 = vpack.c.b16 %v168, %v167
  %v226 = vpack.c.b16 %v170, %v169
  %v227 = vpack.c.b16 %v172, %v171
  %v228 = vpack.c.b16 %v174, %v173
  %v229 = vpack.c.b16 %v176, %v175
  %v230 = vpack.c.b16 %v178, %v177
  %v231 = vpack.c.b16 %v180, %v179
  %v232 = vpack.c.b16 %v182, %v181
  %v233 = vpack.c.b16 %v184, %v183
  %v234 = vpack.c.b16 %v186, %v185
  %v235 = vpack.c.b16 %v188, %v187
  %v236 = vpack.c.b16 %v190, %v189
  %v237 = vpack.c.b16 %v192, %v191
  %v238 = vpack.c.b16 %v194, %v193
  %v239 = vpack.c.b16 %v196, %v195
  %v240 = vpack.c.b16 %v198, %v197
  %v241 = vpack.c.b16 %v200, %v199
  %v242 = vpack.c.b16 %v202, %v201
  %v243 = vpack.c.b16 %v204, %v203
  %v244 = vpack.c.b16 %v206, %v205
  %v245 = vpack.c.b16 %v208, %v207
  %v246 = vpack.c.b16 %v210, %v209
  %v247 = vpack.c.b16 %v212, %v211
  %v248 = vpack.c.b16 %v214, %v213
  %v249 = vpack.c.b16 %v216, %v215
  %v250 = vpack.c.b16 %v218, %v217
  %283 = vmatprep.subr.bf16.mxu0 0
  %284 = vmatpush1.bf16.msra.mxu0 %v226
  %285 = vmatprep.subr.bf16.mxu0 0
  %286 = vmatpush1.bf16.msra.mxu0 %v225
  %287 = vmatprep.subr.bf16.mxu0 0
  %288 = vmatpush1.bf16.msra.mxu0 %v224
  %289 = vmatprep.subr.bf16.mxu0 0
  %290 = vmatpush1.bf16.msra.mxu0 %v223
  %291 = vmatprep.subr.bf16.mxu0 0
  %292 = vmatpush1.bf16.msra.mxu0 %v222
  %293 = vmatprep.subr.bf16.mxu0 0
  %294 = vmatpush1.bf16.msra.mxu0 %v221
  %295 = vmatprep.subr.bf16.mxu0 0
  %296 = vmatpush1.bf16.msra.mxu0 %v220
  %297 = vmatprep.subr.bf16.mxu0 0
  %298 = vmatpush1.bf16.msra.mxu0 %v219
  %299 = vmatprep.subr.bf16.mxu0 0
  %300 = vmatpush2.bf16.msra.mxu0 %v234
  %301 = vmatprep.subr.bf16.mxu0 0
  %302 = vmatpush2.bf16.msra.mxu0 %v233
  %303 = vmatprep.subr.bf16.mxu0 0
  %304 = vmatpush2.bf16.msra.mxu0 %v232
  %305 = vmatprep.subr.bf16.mxu0 0
  %306 = vmatpush2.bf16.msra.mxu0 %v231
  %307 = vmatprep.subr.bf16.mxu0 0
  %308 = vmatpush2.bf16.msra.mxu0 %v230
  %309 = vmatprep.subr.bf16.mxu0 0
  %310 = vmatpush2.bf16.msra.mxu0 %v229
  %311 = vmatprep.subr.bf16.mxu0 0
  %312 = vmatpush2.bf16.msra.mxu0 %v228
  %313 = vmatprep.subr.bf16.mxu0 0
  %314 = vmatpush2.bf16.msra.mxu0 %v227
  %315 = vmatprep.mubr.bf16.mxu0 %v24
  %316 = vmatmul.mubr.bf16.gmra.mxu0 %v23
  %v317 = vpop.f32.mrf.mxu0
  %v318 = vadd.f32 0.0, %v317
  %v319 = vpop.f32.mrf.mxu0
  %v320 = vpop.f32.mrf.mxu0
  %v321 = vpop.f32.mrf.mxu0
  %322 = vdwg.mxu0
  %323 = vmatprep.subr.bf16.mxu0 0
  %324 = vmatpush1.bf16.msra.mxu0 %v242
  %325 = vmatprep.subr.bf16.mxu0 0
  %326 = vmatpush1.bf16.msra.mxu0 %v241
  %327 = vmatprep.subr.bf16.mxu0 0
  %328 = vmatpush1.bf16.msra.mxu0 %v240
  %329 = vmatprep.subr.bf16.mxu0 0
  %330 = vmatpush1.bf16.msra.mxu0 %v239
  %331 = vmatprep.subr.bf16.mxu0 0
  %332 = vmatpush1.bf16.msra.mxu0 %v238
  %333 = vmatprep.subr.bf16.mxu0 0
  %334 = vmatpush1.bf16.msra.mxu0 %v237
  %335 = vmatprep.subr.bf16.mxu0 0
  %336 = vmatpush1.bf16.msra.mxu0 %v236
  %337 = vmatprep.subr.bf16.mxu0 0
  %338 = vmatpush1.bf16.msra.mxu0 %v235
  %339 = vmatprep.subr.bf16.mxu0 0
  %340 = vmatpush2.bf16.msra.mxu0 %v250
  %341 = vmatprep.subr.bf16.mxu0 0
  %342 = vmatpush2.bf16.msra.mxu0 %v249
  %343 = vmatprep.subr.bf16.mxu0 0
  %344 = vmatpush2.bf16.msra.mxu0 %v248
  %345 = vmatprep.subr.bf16.mxu0 0
  %346 = vmatpush2.bf16.msra.mxu0 %v247
  %347 = vmatprep.subr.bf16.mxu0 0
  %348 = vmatpush2.bf16.msra.mxu0 %v246
  %349 = vmatprep.subr.bf16.mxu0 0
  %350 = vmatpush2.bf16.msra.mxu0 %v245
  %351 = vmatprep.subr.bf16.mxu0 0
  %352 = vmatpush2.bf16.msra.mxu0 %v244
  %353 = vmatprep.subr.bf16.mxu0 0
  %354 = vmatpush2.bf16.msra.mxu0 %v243
  %355 = vmatprep.mubr.bf16.mxu0 %v26
  %356 = vmatmul.mubr.bf16.gmra.mxu0 %v25
  %v357 = vpop.f32.mrf.mxu0
  %v358 = vadd.f32 %v318, %v357
  %v359 = vpop.f32.mrf.mxu0
  %v360 = vpop.f32.mrf.mxu0
  %v361 = vpop.f32.mrf.mxu0
  %362 = vdwg.mxu0
  %v363 = vmax.f32 %v358, 0.0
  %v364 = vpack.c.bf16 %v363, %v363
  %v365 = vld [vmem:[%s2] sm:$0xff]
  %v366 = vld [vmem:[%s2 + $0x8] sm:$0xff]
  %v367 = vld [vmem:[%s2 + $0x10] sm:$0xff]
  %v368 = vld [vmem:[%s2 + $0x18] sm:$0xff]
  %v369 = vld [vmem:[%s2 + $0x20] sm:$0xff]
  %v370 = vld [vmem:[%s2 + $0x28] sm:$0xff]
  %v371 = vld [vmem:[%s2 + $0x30] sm:$0xff]
  %v372 = vld [vmem:[%s2 + $0x38] sm:$0xff]
  %v381 = vunpack.c.l.b16 %v365
  %v382 = vunpack.c.h.b16 %v365
  %v383 = vunpack.c.l.b16 %v366
  %v384 = vunpack.c.h.b16 %v366
  %v385 = vunpack.c.l.b16 %v367
  %v386 = vunpack.c.h.b16 %v367
  %v387 = vunpack.c.l.b16 %v368
  %v388 = vunpack.c.h.b16 %v368
  %v389 = vunpack.c.l.b16 %v369
  %v390 = vunpack.c.h.b16 %v369
  %v391 = vunpack.c.l.b16 %v370
  %v392 = vunpack.c.h.b16 %v370
  %v393 = vunpack.c.l.b16 %v371
  %v394 = vunpack.c.h.b16 %v371
  %v395 = vunpack.c.l.b16 %v372
  %v396 = vunpack.c.h.b16 %v372
  %v397 = vpack.c.b16 %v385, %v381
  %v398 = vpack.c.b16 %v386, %v382
  %v399 = vpack.c.b16 %v387, %v383
  %v400 = vpack.c.b16 %v388, %v384
  %v401 = vpack.c.b16 %v393, %v389
  %v402 = vpack.c.b16 %v394, %v390
  %v403 = vpack.c.b16 %v395, %v391
  %v404 = vpack.c.b16 %v396, %v392
  %vm413 = vcmask 261120
  %v415 = vsel %vm413, %v364, 0
  %417 = vmatprep.subr.bf16.mxu0 0
  %418 = vmatpush1.bf16.msra.mxu0 0
  %419 = vmatprep.subr.bf16.mxu0 0
  %420 = vmatpush1.bf16.msra.mxu0 0
  %421 = vmatprep.subr.bf16.mxu0 0
  %422 = vmatpush1.bf16.msra.mxu0 0
  %423 = vmatprep.subr.bf16.mxu0 0
  %424 = vmatpush1.bf16.msra.mxu0 0
  %425 = vmatprep.subr.bf16.mxu0 0
  %426 = vmatpush1.bf16.msra.mxu0 0
  %427 = vmatprep.subr.bf16.mxu0 0
  %428 = vmatpush1.bf16.msra.mxu0 0
  %429 = vmatprep.subr.bf16.mxu0 %v402
  %430 = vmatpush1.bf16.msra.mxu0 %v401
  %431 = vmatprep.subr.bf16.mxu0 %v398
  %432 = vmatpush1.bf16.msra.mxu0 %v397
  %433 = vmatprep.subr.bf16.mxu0 0
  %434 = vmatpush2.bf16.msra.mxu0 0
  %435 = vmatprep.subr.bf16.mxu0 0
  %436 = vmatpush2.bf16.msra.mxu0 0
  %437 = vmatprep.subr.bf16.mxu0 0
  %438 = vmatpush2.bf16.msra.mxu0 0
  %439 = vmatprep.subr.bf16.mxu0 0
  %440 = vmatpush2.bf16.msra.mxu0 0
  %441 = vmatprep.subr.bf16.mxu0 0
  %442 = vmatpush2.bf16.msra.mxu0 0
  %443 = vmatprep.subr.bf16.mxu0 0
  %444 = vmatpush2.bf16.msra.mxu0 0
  %445 = vmatprep.subr.bf16.mxu0 0
  %446 = vmatpush2.bf16.msra.mxu0 0
  %447 = vmatprep.subr.bf16.mxu0 0
  %448 = vmatpush2.bf16.msra.mxu0 0
  %449 = vmatprep.mubr.bf16.mxu0 0
  %450 = vmatmul.mubr.bf16.gmra.mxu0 %v415
  %v451 = vpop.f32.mrf.mxu0
  %v452 = vadd.f32 0.0, %v451
  %v453 = vpop.f32.mrf.mxu0
  %v454 = vadd.f32 0.0, %v453
  %v455 = vpop.f32.mrf.mxu0
  %v456 = vpop.f32.mrf.mxu0
  %457 = vdwg.mxu0
  %458 = vmatprep.subr.bf16.mxu0 0
  %459 = vmatpush1.bf16.msra.mxu0 0
  %460 = vmatprep.subr.bf16.mxu0 0
  %461 = vmatpush1.bf16.msra.mxu0 0
  %462 = vmatprep.subr.bf16.mxu0 0
  %463 = vmatpush1.bf16.msra.mxu0 0
  %464 = vmatprep.subr.bf16.mxu0 0
  %465 = vmatpush1.bf16.msra.mxu0 0
  %466 = vmatprep.subr.bf16.mxu0 0
  %467 = vmatpush1.bf16.msra.mxu0 0
  %468 = vmatprep.subr.bf16.mxu0 0
  %469 = vmatpush1.bf16.msra.mxu0 0
  %470 = vmatprep.subr.bf16.mxu0 %v404
  %471 = vmatpush1.bf16.msra.mxu0 %v403
  %472 = vmatprep.subr.bf16.mxu0 %v400
  %473 = vmatpush1.bf16.msra.mxu0 %v399
  %474 = vmatprep.subr.bf16.mxu0 0
  %475 = vmatpush2.bf16.msra.mxu0 0
  %476 = vmatprep.subr.bf16.mxu0 0
  %477 = vmatpush2.bf16.msra.mxu0 0
  %478 = vmatprep.subr.bf16.mxu0 0
  %479 = vmatpush2.bf16.msra.mxu0 0
  %480 = vmatprep.subr.bf16.mxu0 0
  %481 = vmatpush2.bf16.msra.mxu0 0
  %482 = vmatprep.subr.bf16.mxu0 0
  %483 = vmatpush2.bf16.msra.mxu0 0
  %484 = vmatprep.subr.bf16.mxu0 0
  %485 = vmatpush2.bf16.msra.mxu0 0
  %486 = vmatprep.subr.bf16.mxu0 0
  %487 = vmatpush2.bf16.msra.mxu0 0
  %488 = vmatprep.subr.bf16.mxu0 0
  %489 = vmatpush2.bf16.msra.mxu0 0
  %490 = vmatprep.mubr.bf16.mxu0 0
  %491 = vmatmul.mubr.bf16.gmra.mxu0 %v415
  %v492 = vpop.f32.mrf.mxu0
  %v493 = vadd.f32 0.0, %v492
  %v494 = vpop.f32.mrf.mxu0
  %v495 = vadd.f32 0.0, %v494
  %v496 = vpop.f32.mrf.mxu0
  %v497 = vpop.f32.mrf.mxu0
  %498 = vdwg.mxu0
  %v499 = vxor.u32 %v452, 2147483648
  %v500 = vxor.u32 %v454, 2147483648
  %v501 = vxor.u32 %v493, 2147483648
  %v502 = vxor.u32 %v495, 2147483648
  %v503 = vmul.f32 %v499, 1.442695
  %v504 = vpow.pop %v503
  %v505 = vmul.f32 %v500, 1.442695
  %v506 = vpow.pop %v505
  %v507 = vmul.f32 %v501, 1.442695
  %v508 = vpow.pop %v507
  %v509 = vmul.f32 %v502, 1.442695
  %v510 = vpow.pop %v509
  %v511 = vadd.f32 %v504, 1.0
  %v512 = vadd.f32 %v506, 1.0
  %v513 = vadd.f32 %v508, 1.0
  %v514 = vadd.f32 %v510, 1.0
  %v515 = vrcp.pop %v511
  %v516 = vmul.f32 1.0, %v515
  %v517 = vrcp.pop %v512
  %v518 = vmul.f32 1.0, %v517
  %v519 = vrcp.pop %v513
  %v520 = vmul.f32 1.0, %v519
  %v521 = vrcp.pop %v514
  %v522 = vmul.f32 1.0, %v521
  %v527 = vcombine.low %v516, %v518
  %v528 = vcombine.low %v520, %v522
  %v531 = vmul.f32 %v15, %v527
  %v532 = vmul.f32 %v16, %v528
  %v535 = vcombine.high %v531, %v531
  %v536 = vcombine.high %v532, %v532
  %v539 = vpack.c.bf16 %v531, %v531
  %v540 = vpack.c.bf16 %v535, %v535
  %v541 = vpack.c.bf16 %v532, %v532
  %v542 = vpack.c.bf16 %v536, %v536
  %v547 = vcombine.low %v539, %v540
  %v548 = vcombine.low %v541, %v542
  %v550 = vunpack.c.l.s4 1983009808
  %v551 = vunpack.c.0.s8 %v550
  %v552 = vlaneseq
  %v553 = vshrl.u32 %v552, 7
  %v554 = vsub.s32 %v551, %v553
  %v555 = vrot.slane %v547, %v554
  %v557 = vunpack.c.l.s4 1983009808
  %v558 = vunpack.c.0.s8 %v557
  %v559 = vlaneseq
  %v560 = vshrl.u32 %v559, 7
  %v561 = vsub.s32 %v558, %v560
  %v562 = vrot.slane %v548, %v561
  %v563 = vcombine.low %v555, %v562
  %565 = vst [vmem:[%s3] sm:$0xff] %v563
  // Predicated region
  $region14: #{avgmax_attention.4} parent=0 // pred_check
    _
  $region15: #{avgmax_attention.4} parent=0 // pred_check_branch
    %567 = sbr.rel (0) target = $region17
  $region16: #{avgmax_attention.4} parent=0 // pred_region
    _
  $region17: #{avgmax_attention.4} parent=0 // pred_fallthru
    _
  // Predicated region
  $region18: #{avgmax_attention.4} parent=0 // pred_check
    _
  $region19: #{avgmax_attention.4} parent=0 // pred_check_branch
    %569 = sbr.rel (0) target = $region21
  $region20: #{avgmax_attention.4} parent=0 // pred_region
    _
  $region21: #{avgmax_attention.4} parent=0 // pred_fallthru
    _

// kernel: avgmax_attention.5
$region0: #{avgmax_attention.5}
  #allocation0 [shape = 'u32[]', space=smem, size = 0x4, offset = 0x4, fixed_abs, tag = 'smem constant byte address 0x4 - core index']
  #allocation1 [shape = 'u32[144,128]{1,0:T(1,128)}', space=vmem, size = 0x12000, scoped, tag = 'internal scratch']
  %s0 = inlined_call_operand.vmem [shape: bf16[4,512], index: 0, kind: input, shape index: {}]
  %s1 = inlined_call_operand.vmem [shape: bf16[512,256], index: 1, kind: input, shape index: {}]
  %s2 = inlined_call_operand.vmem [shape: f32[1,256], index: 2, kind: input, shape index: {}]
  %s3 = inlined_call_operand.vmem [shape: f32[1,256], index: 3, kind: input, shape index: {}]
  %s4 = inlined_call_operand.vmem [shape: f32[1,256], index: 4, kind: input, shape index: {}]
  %s5 = inlined_call_operand.hbm [shape: f32[4,256], index: 5, kind: output, shape index: {}]
  %s6 = sld [smem:[#allocation0]]
  $region30: #{avgmax_attention.5} parent=0
    _
  %s8 = ssub.s32 1, %s6
  %s9 = scalar_select 0, %s8, %s6
  $region1: #{avgmax_attention.5} parent=0
    #allocation2 [shape = 'u8[4096]{0}', space=vmem, size = 0x1000, scoped, tag = 'output window, operand 0, single buffered']
    #allocation3 [shape = 's32[1]{0}', space=sflag, size = 0x4, scoped, tag = 'scoped memory for avgmax_attention.5']
    %10 = vsyncpa [#allocation3], 0
    // Predicated region
    $region2: #{avgmax_attention.5} parent=1 // pred_check
      _
    $region3: #{avgmax_attention.5} parent=1 // pred_check_branch
      %12 = sbr.rel (0) target = $region5
    $region4: #{avgmax_attention.5} parent=1 // pred_region
      _
    $region5: #{avgmax_attention.5} parent=1 // pred_fallthru
      _
    // Predicated region
    $region6: #{avgmax_attention.5} parent=1 // pred_check
      _
    $region7: #{avgmax_attention.5} parent=1 // pred_check_branch
      %14 = sbr.rel (0) target = $region9
    $region8: #{avgmax_attention.5} parent=1 // pred_region
      _
    $region9: #{avgmax_attention.5} parent=1 // pred_fallthru
      _
    // Predicated region
    $region10: #{avgmax_attention.5} parent=1 // pred_check
      _
    $region11: #{avgmax_attention.5} parent=1 // pred_check_branch
      %16 = sbr.rel (0) target = $region13
    $region12: #{avgmax_attention.5} parent=1 // pred_region
      _
    $region13: #{avgmax_attention.5} parent=1 // pred_fallthru
      _
    // Predicated region
    $region14: #{avgmax_attention.5} parent=1 // pred_check
      _
    $region15: #{avgmax_attention.5} parent=1 // pred_check_branch
      %18 = sbr.rel (0) target = $region17
    $region16: #{avgmax_attention.5} parent=1 // pred_region
      _
    $region17: #{avgmax_attention.5} parent=1 // pred_fallthru
      _
    // Predicated region
    $region18: #{avgmax_attention.5} parent=1 // pred_check
      _
    $region19: #{avgmax_attention.5} parent=1 // pred_check_branch
      %20 = sbr.rel (0) target = $region21
    $region20: #{avgmax_attention.5} parent=1 // pred_region
      _
    $region21: #{avgmax_attention.5} parent=1 // pred_fallthru
      _
    %v21 = vld [vmem:[%s0] sm:$0xff]
    %v22 = vld [vmem:[%s1] sm:$0xff]
    %v23 = vld [vmem:[%s1 + $0x8] sm:$0xff]
    %v24 = vld [vmem:[%s1 + $0x10] sm:$0xff]
    %v25 = vld [vmem:[%s1 + $0x18] sm:$0xff]
    %v26 = vld [vmem:[%s1 + $0x20] sm:$0xff]
    %v27 = vld [vmem:[%s1 + $0x28] sm:$0xff]
    %v28 = vld [vmem:[%s1 + $0x30] sm:$0xff]
    %v29 = vld [vmem:[%s1 + $0x38] sm:$0xff]
    %v30 = vld [vmem:[%s1 + $0x40] sm:$0xff]
    %v31 = vld [vmem:[%s1 + $0x48] sm:$0xff]
    %v32 = vld [vmem:[%s1 + $0x50] sm:$0xff]
    %v33 = vld [vmem:[%s1 + $0x58] sm:$0xff]
    %v34 = vld [vmem:[%s1 + $0x60] sm:$0xff]
    %v35 = vld [vmem:[%s1 + $0x68] sm:$0xff]
    %v36 = vld [vmem:[%s1 + $0x70] sm:$0xff]
    %v37 = vld [vmem:[%s1 + $0x78] sm:$0xff]
    %v38 = vld [vmem:[%s1 + $0x80] sm:$0xff]
    %v39 = vld [vmem:[%s1 + $0x88] sm:$0xff]
    %v40 = vld [vmem:[%s1 + $0x90] sm:$0xff]
    %v41 = vld [vmem:[%s1 + $0x98] sm:$0xff]
    %v42 = vld [vmem:[%s1 + $0xa0] sm:$0xff]
    %v43 = vld [vmem:[%s1 + $0xa8] sm:$0xff]
    %v44 = vld [vmem:[%s1 + $0xb0] sm:$0xff]
    %v45 = vld [vmem:[%s1 + $0xb8] sm:$0xff]
    %v46 = vld [vmem:[%s1 + $0xc0] sm:$0xff]
    %v47 = vld [vmem:[%s1 + $0xc8] sm:$0xff]
    %v48 = vld [vmem:[%s1 + $0xd0] sm:$0xff]
    %v49 = vld [vmem:[%s1 + $0xd8] sm:$0xff]
    %v50 = vld [vmem:[%s1 + $0xe0] sm:$0xff]
    %v51 = vld [vmem:[%s1 + $0xe8] sm:$0xff]
    %v52 = vld [vmem:[%s1 + $0xf0] sm:$0xff]
    %v53 = vld [vmem:[%s1 + $0xf8] sm:$0xff]
    %v54 = vld [vmem:[%s1 + $0x100] sm:$0xff]
    %v55 = vld [vmem:[%s1 + $0x108] sm:$0xff]
    %v56 = vld [vmem:[%s1 + $0x110] sm:$0xff]
    %v57 = vld [vmem:[%s1 + $0x118] sm:$0xff]
    %v58 = vld [vmem:[%s1 + $0x120] sm:$0xff]
    %v59 = vld [vmem:[%s1 + $0x128] sm:$0xff]
    %v60 = vld [vmem:[%s1 + $0x130] sm:$0xff]
    %v61 = vld [vmem:[%s1 + $0x138] sm:$0xff]
    %v62 = vld [vmem:[%s1 + $0x140] sm:$0xff]
    %v63 = vld [vmem:[%s1 + $0x148] sm:$0xff]
    %v64 = vld [vmem:[%s1 + $0x150] sm:$0xff]
    %v65 = vld [vmem:[%s1 + $0x158] sm:$0xff]
    %v66 = vld [vmem:[%s1 + $0x160] sm:$0xff]
    %v67 = vld [vmem:[%s1 + $0x168] sm:$0xff]
    %v68 = vld [vmem:[%s1 + $0x170] sm:$0xff]
    %v69 = vld [vmem:[%s1 + $0x178] sm:$0xff]
    %v70 = vld [vmem:[%s1 + $0x180] sm:$0xff]
    %v71 = vld [vmem:[%s1 + $0x188] sm:$0xff]
    %v72 = vld [vmem:[%s1 + $0x190] sm:$0xff]
    %v73 = vld [vmem:[%s1 + $0x198] sm:$0xff]
    %v74 = vld [vmem:[%s1 + $0x1a0] sm:$0xff]
    %v75 = vld [vmem:[%s1 + $0x1a8] sm:$0xff]
    %v76 = vld [vmem:[%s1 + $0x1b0] sm:$0xff]
    %v77 = vld [vmem:[%s1 + $0x1b8] sm:$0xff]
    %v78 = vld [vmem:[%s1 + $0x1c0] sm:$0xff]
    %v79 = vld [vmem:[%s1 + $0x1c8] sm:$0xff]
    %v80 = vld [vmem:[%s1 + $0x1d0] sm:$0xff]
    %v81 = vld [vmem:[%s1 + $0x1d8] sm:$0xff]
    %v82 = vld [vmem:[%s1 + $0x1e0] sm:$0xff]
    %v83 = vld [vmem:[%s1 + $0x1e8] sm:$0xff]
    %v84 = vld [vmem:[%s1 + $0x1f0] sm:$0xff]
    %v85 = vld [vmem:[%s1 + $0x1f8] sm:$0xff]
    %v86 = vld [vmem:[%s2] sm:$0x3]
    %v88 = vlaneseq
    %v89 = vshrl.u32 %v88, 7
    %v90 = vsub.s32 0, %v89
    %v91 = vrot.slane %v86, %v90
    %v92 = vlaneseq
    %v93 = vshrl.u32 %v92, 7
    %v94 = vsub.s32 1, %v93
    %v95 = vrot.slane %v86, %v94
    %v99 = vcombine.high %v21, %v21
    %v101 = vunpack.c.l.s4 1983009808
    %v102 = vunpack.c.0.s8 %v101
    %v103 = vlaneseq
    %v104 = vshrl.u32 %v103, 7
    %v105 = vsub.s32 %v102, %v104
    %v106 = vrot.slane %v21, %v105
    %v108 = vunpack.c.l.s4 1983009808
    %v109 = vunpack.c.0.s8 %v108
    %v110 = vlaneseq
    %v111 = vshrl.u32 %v110, 7
    %v112 = vsub.s32 %v109, %v111
    %v113 = vrot.slane %v99, %v112
    %v114 = vcombine.high %v106, %v106
    %v115 = vcombine.high %v113, %v113
    %v184 = vunpack.c.l.b16 %v22
    %v185 = vunpack.c.h.b16 %v22
    %v186 = vunpack.c.l.b16 %v23
    %v187 = vunpack.c.h.b16 %v23
    %v188 = vunpack.c.l.b16 %v24
    %v189 = vunpack.c.h.b16 %v24
    %v190 = vunpack.c.l.b16 %v25
    %v191 = vunpack.c.h.b16 %v25
    %v192 = vunpack.c.l.b16 %v26
    %v193 = vunpack.c.h.b16 %v26
    %v194 = vunpack.c.l.b16 %v27
    %v195 = vunpack.c.h.b16 %v27
    %v196 = vunpack.c.l.b16 %v28
    %v197 = vunpack.c.h.b16 %v28
    %v198 = vunpack.c.l.b16 %v29
    %v199 = vunpack.c.h.b16 %v29
    %v200 = vunpack.c.l.b16 %v30
    %v201 = vunpack.c.h.b16 %v30
    %v202 = vunpack.c.l.b16 %v31
    %v203 = vunpack.c.h.b16 %v31
    %v204 = vunpack.c.l.b16 %v32
    %v205 = vunpack.c.h.b16 %v32
    %v206 = vunpack.c.l.b16 %v33
    %v207 = vunpack.c.h.b16 %v33
    %v208 = vunpack.c.l.b16 %v34
    %v209 = vunpack.c.h.b16 %v34
    %v210 = vunpack.c.l.b16 %v35
    %v211 = vunpack.c.h.b16 %v35
    %v212 = vunpack.c.l.b16 %v36
    %v213 = vunpack.c.h.b16 %v36
    %v214 = vunpack.c.l.b16 %v37
    %v215 = vunpack.c.h.b16 %v37
    %v216 = vunpack.c.l.b16 %v38
    %v217 = vunpack.c.h.b16 %v38
    %v218 = vunpack.c.l.b16 %v39
    %v219 = vunpack.c.h.b16 %v39
    %v220 = vunpack.c.l.b16 %v40
    %v221 = vunpack.c.h.b16 %v40
    %v222 = vunpack.c.l.b16 %v41
    %v223 = vunpack.c.h.b16 %v41
    %v224 = vunpack.c.l.b16 %v42
    %v225 = vunpack.c.h.b16 %v42
    %v226 = vunpack.c.l.b16 %v43
    %v227 = vunpack.c.h.b16 %v43
    %v228 = vunpack.c.l.b16 %v44
    %v229 = vunpack.c.h.b16 %v44
    %v230 = vunpack.c.l.b16 %v45
    %v231 = vunpack.c.h.b16 %v45
    %v232 = vunpack.c.l.b16 %v46
    %v233 = vunpack.c.h.b16 %v46
    %v234 = vunpack.c.l.b16 %v47
    %v235 = vunpack.c.h.b16 %v47
    %v236 = vunpack.c.l.b16 %v48
    %v237 = vunpack.c.h.b16 %v48
    %v238 = vunpack.c.l.b16 %v49
    %v239 = vunpack.c.h.b16 %v49
    %v240 = vunpack.c.l.b16 %v50
    %v241 = vunpack.c.h.b16 %v50
    %v242 = vunpack.c.l.b16 %v51
    %v243 = vunpack.c.h.b16 %v51
    %v244 = vunpack.c.l.b16 %v52
    %v245 = vunpack.c.h.b16 %v52
    %v246 = vunpack.c.l.b16 %v53
    %v247 = vunpack.c.h.b16 %v53
    %v248 = vunpack.c.l.b16 %v54
    %v249 = vunpack.c.h.b16 %v54
    %v250 = vunpack.c.l.b16 %v55
    %v251 = vunpack.c.h.b16 %v55
    %v252 = vunpack.c.l.b16 %v56
    %v253 = vunpack.c.h.b16 %v56
    %v254 = vunpack.c.l.b16 %v57
    %v255 = vunpack.c.h.b16 %v57
    %v256 = vunpack.c.l.b16 %v58
    %v257 = vunpack.c.h.b16 %v58
    %v258 = vunpack.c.l.b16 %v59
    %v259 = vunpack.c.h.b16 %v59
    %v260 = vunpack.c.l.b16 %v60
    %v261 = vunpack.c.h.b16 %v60
    %v262 = vunpack.c.l.b16 %v61
    %v263 = vunpack.c.h.b16 %v61
    %v264 = vunpack.c.l.b16 %v62
    %v265 = vunpack.c.h.b16 %v62
    %v266 = vunpack.c.l.b16 %v63
    %v267 = vunpack.c.h.b16 %v63
    %v268 = vunpack.c.l.b16 %v64
    %v269 = vunpack.c.h.b16 %v64
    %v270 = vunpack.c.l.b16 %v65
    %v271 = vunpack.c.h.b16 %v65
    %v272 = vunpack.c.l.b16 %v66
    %v273 = vunpack.c.h.b16 %v66
    %v274 = vunpack.c.l.b16 %v67
    %v275 = vunpack.c.h.b16 %v67
    %v276 = vunpack.c.l.b16 %v68
    %v277 = vunpack.c.h.b16 %v68
    %v278 = vunpack.c.l.b16 %v69
    %v279 = vunpack.c.h.b16 %v69
    %v280 = vunpack.c.l.b16 %v70
    %v281 = vunpack.c.h.b16 %v70
    %v282 = vunpack.c.l.b16 %v71
    %v283 = vunpack.c.h.b16 %v71
    %v284 = vunpack.c.l.b16 %v72
    %v285 = vunpack.c.h.b16 %v72
    %v286 = vunpack.c.l.b16 %v73
    %v287 = vunpack.c.h.b16 %v73
    %v288 = vunpack.c.l.b16 %v74
    %v289 = vunpack.c.h.b16 %v74
    %v290 = vunpack.c.l.b16 %v75
    %v291 = vunpack.c.h.b16 %v75
    %v292 = vunpack.c.l.b16 %v76
    %v293 = vunpack.c.h.b16 %v76
    %v294 = vunpack.c.l.b16 %v77
    %v295 = vunpack.c.h.b16 %v77
    %v296 = vunpack.c.l.b16 %v78
    %v297 = vunpack.c.h.b16 %v78
    %v298 = vunpack.c.l.b16 %v79
    %v299 = vunpack.c.h.b16 %v79
    %v300 = vunpack.c.l.b16 %v80
    %v301 = vunpack.c.h.b16 %v80
    %v302 = vunpack.c.l.b16 %v81
    %v303 = vunpack.c.h.b16 %v81
    %v304 = vunpack.c.l.b16 %v82
    %v305 = vunpack.c.h.b16 %v82
    %v306 = vunpack.c.l.b16 %v83
    %v307 = vunpack.c.h.b16 %v83
    %v308 = vunpack.c.l.b16 %v84
    %v309 = vunpack.c.h.b16 %v84
    %v310 = vunpack.c.l.b16 %v85
    %v311 = vunpack.c.h.b16 %v85
    %v312 = vpack.c.b16 %v186, %v184
    %v313 = vpack.c.b16 %v187, %v185
    %v314 = vpack.c.b16 %v190, %v188
    %v315 = vpack.c.b16 %v191, %v189
    %v316 = vpack.c.b16 %v194, %v192
    %v317 = vpack.c.b16 %v195, %v193
    %v318 = vpack.c.b16 %v198, %v196
    %v319 = vpack.c.b16 %v199, %v197
    %v320 = vpack.c.b16 %v202, %v200
    %v321 = vpack.c.b16 %v203, %v201
    %v322 = vpack.c.b16 %v206, %v204
    %v323 = vpack.c.b16 %v207, %v205
    %v324 = vpack.c.b16 %v210, %v208
    %v325 = vpack.c.b16 %v211, %v209
    %v326 = vpack.c.b16 %v214, %v212
    %v327 = vpack.c.b16 %v215, %v213
    %v328 = vpack.c.b16 %v218, %v216
    %v329 = vpack.c.b16 %v219, %v217
    %v330 = vpack.c.b16 %v222, %v220
    %v331 = vpack.c.b16 %v223, %v221
    %v332 = vpack.c.b16 %v226, %v224
    %v333 = vpack.c.b16 %v227, %v225
    %v334 = vpack.c.b16 %v230, %v228
    %v335 = vpack.c.b16 %v231, %v229
    %v336 = vpack.c.b16 %v234, %v232
    %v337 = vpack.c.b16 %v235, %v233
    %v338 = vpack.c.b16 %v238, %v236
    %v339 = vpack.c.b16 %v239, %v237
    %v340 = vpack.c.b16 %v242, %v240
    %v341 = vpack.c.b16 %v243, %v241
    %v342 = vpack.c.b16 %v246, %v244
    %v343 = vpack.c.b16 %v247, %v245
    %v344 = vpack.c.b16 %v250, %v248
    %v345 = vpack.c.b16 %v251, %v249
    %v346 = vpack.c.b16 %v254, %v252
    %v347 = vpack.c.b16 %v255, %v253
    %v348 = vpack.c.b16 %v258, %v256
    %v349 = vpack.c.b16 %v259, %v257
    %v350 = vpack.c.b16 %v262, %v260
    %v351 = vpack.c.b16 %v263, %v261
    %v352 = vpack.c.b16 %v266, %v264
    %v353 = vpack.c.b16 %v267, %v265
    %v354 = vpack.c.b16 %v270, %v268
    %v355 = vpack.c.b16 %v271, %v269
    %v356 = vpack.c.b16 %v274, %v272
    %v357 = vpack.c.b16 %v275, %v273
    %v358 = vpack.c.b16 %v278, %v276
    %v359 = vpack.c.b16 %v279, %v277
    %v360 = vpack.c.b16 %v282, %v280
    %v361 = vpack.c.b16 %v283, %v281
    %v362 = vpack.c.b16 %v286, %v284
    %v363 = vpack.c.b16 %v287, %v285
    %v364 = vpack.c.b16 %v290, %v288
    %v365 = vpack.c.b16 %v291, %v289
    %v366 = vpack.c.b16 %v294, %v292
    %v367 = vpack.c.b16 %v295, %v293
    %v368 = vpack.c.b16 %v298, %v296
    %v369 = vpack.c.b16 %v299, %v297
    %v370 = vpack.c.b16 %v302, %v300
    %v371 = vpack.c.b16 %v303, %v301
    %v372 = vpack.c.b16 %v306, %v304
    %v373 = vpack.c.b16 %v307, %v305
    %v374 = vpack.c.b16 %v310, %v308
    %v375 = vpack.c.b16 %v311, %v309
    %440 = vmatprep.subr.bf16.mxu0 %v327
    %441 = vmatpush1.bf16.msra.mxu0 %v326
    %442 = vmatprep.subr.bf16.mxu0 %v325
    %443 = vmatpush1.bf16.msra.mxu0 %v324
    %444 = vmatprep.subr.bf16.mxu0 %v323
    %445 = vmatpush1.bf16.msra.mxu0 %v322
    %446 = vmatprep.subr.bf16.mxu0 %v321
    %447 = vmatpush1.bf16.msra.mxu0 %v320
    %448 = vmatprep.subr.bf16.mxu0 %v319
    %449 = vmatpush1.bf16.msra.mxu0 %v318
    %450 = vmatprep.subr.bf16.mxu0 %v317
    %451 = vmatpush1.bf16.msra.mxu0 %v316
    %452 = vmatprep.subr.bf16.mxu0 %v315
    %453 = vmatpush1.bf16.msra.mxu0 %v314
    %454 = vmatprep.subr.bf16.mxu0 %v313
    %455 = vmatpush1.bf16.msra.mxu0 %v312
    %456 = vmatprep.subr.bf16.mxu0 %v343
    %457 = vmatpush2.bf16.msra.mxu0 %v342
    %458 = vmatprep.subr.bf16.mxu0 %v341
    %459 = vmatpush2.bf16.msra.mxu0 %v340
    %460 = vmatprep.subr.bf16.mxu0 %v339
    %461 = vmatpush2.bf16.msra.mxu0 %v338
    %462 = vmatprep.subr.bf16.mxu0 %v337
    %463 = vmatpush2.bf16.msra.mxu0 %v336
    %464 = vmatprep.subr.bf16.mxu0 %v335
    %465 = vmatpush2.bf16.msra.mxu0 %v334
    %466 = vmatprep.subr.bf16.mxu0 %v333
    %467 = vmatpush2.bf16.msra.mxu0 %v332
    %468 = vmatprep.subr.bf16.mxu0 %v331
    %469 = vmatpush2.bf16.msra.mxu0 %v330
    %470 = vmatprep.subr.bf16.mxu0 %v329
    %471 = vmatpush2.bf16.msra.mxu0 %v328
    %472 = vmatprep.mubr.bf16.mxu0 %v114
    %473 = vmatmul.mubr.bf16.gmra.mxu0 %v106
    %v474 = vpop.f32.mrf.mxu0
    %v475 = vadd.f32 %v91, %v474
    %v476 = vpop.f32.mrf.mxu0
    %v477 = vadd.f32 %v95, %v476
    %v478 = vpop.f32.mrf.mxu0
    %v479 = vpop.f32.mrf.mxu0
    %480 = vdwg.mxu0
    %481 = vmatprep.subr.bf16.mxu0 %v359
    %482 = vmatpush1.bf16.msra.mxu0 %v358
    %483 = vmatprep.subr.bf16.mxu0 %v357
    %484 = vmatpush1.bf16.msra.mxu0 %v356
    %485 = vmatprep.subr.bf16.mxu0 %v355
    %486 = vmatpush1.bf16.msra.mxu0 %v354
    %487 = vmatprep.subr.bf16.mxu0 %v353
    %488 = vmatpush1.bf16.msra.mxu0 %v352
    %489 = vmatprep.subr.bf16.mxu0 %v351
    %490 = vmatpush1.bf16.msra.mxu0 %v350
    %491 = vmatprep.subr.bf16.mxu0 %v349
    %492 = vmatpush1.bf16.msra.mxu0 %v348
    %493 = vmatprep.subr.bf16.mxu0 %v347
    %494 = vmatpush1.bf16.msra.mxu0 %v346
    %495 = vmatprep.subr.bf16.mxu0 %v345
    %496 = vmatpush1.bf16.msra.mxu0 %v344
    %497 = vmatprep.subr.bf16.mxu0 %v375
    %498 = vmatpush2.bf16.msra.mxu0 %v374
    %499 = vmatprep.subr.bf16.mxu0 %v373
    %500 = vmatpush2.bf16.msra.mxu0 %v372
    %501 = vmatprep.subr.bf16.mxu0 %v371
    %502 = vmatpush2.bf16.msra.mxu0 %v370
    %503 = vmatprep.subr.bf16.mxu0 %v369
    %504 = vmatpush2.bf16.msra.mxu0 %v368
    %505 = vmatprep.subr.bf16.mxu0 %v367
    %506 = vmatpush2.bf16.msra.mxu0 %v366
    %507 = vmatprep.subr.bf16.mxu0 %v365
    %508 = vmatpush2.bf16.msra.mxu0 %v364
    %509 = vmatprep.subr.bf16.mxu0 %v363
    %510 = vmatpush2.bf16.msra.mxu0 %v362
    %511 = vmatprep.subr.bf16.mxu0 %v361
    %512 = vmatpush2.bf16.msra.mxu0 %v360
    %513 = vmatprep.mubr.bf16.mxu0 %v115
    %514 = vmatmul.mubr.bf16.gmra.mxu0 %v113
    %v515 = vpop.f32.mrf.mxu0
    %v516 = vadd.f32 %v475, %v515
    %v517 = vpop.f32.mrf.mxu0
    %v518 = vadd.f32 %v477, %v517
    %v519 = vpop.f32.mrf.mxu0
    %v520 = vpop.f32.mrf.mxu0
    %521 = vdwg.mxu0
    %vm522 = vcmask 1043456
    %v523 = vsel %vm522, %v516, 0.0
    %v524 = vrot.slane %v523, 4
    %v525 = vadd.f32 %v523, %v524
    %v526 = vrot.slane %v525, 2
    %v527 = vadd.f32 %v525, %v526
    %v528 = vrot.slane %v527, 1
    %v529 = vadd.f32 %v527, %v528
    %v530 = vsel %vm522, %v518, 0.0
    %v531 = vrot.slane %v530, 4
    %v532 = vadd.f32 %v530, %v531
    %v533 = vrot.slane %v532, 2
    %v534 = vadd.f32 %v532, %v533
    %v535 = vrot.slane %v534, 1
    %v536 = vadd.f32 %v534, %v535
    %v537 = vrcp.pop 4.0
    %v538 = vmul.f32 %v529, %v537
    %v539 = vmul.f32 %v536, %v537
    %v540 = vsub.f32 %v516, %v538
    %v541 = vsub.f32 %v518, %v539
    %v542 = vmul.f32 %v540, %v540
    %v543 = vmul.f32 %v541, %v541
    %v544 = vsel %vm522, %v542, 0.0
    %v545 = vrot.slane %v544, 4
    %v546 = vadd.f32 %v544, %v545
    %v547 = vrot.slane %v546, 2
    %v548 = vadd.f32 %v546, %v547
    %v549 = vrot.slane %v548, 1
    %v550 = vadd.f32 %v548, %v549
    %v551 = vsel %vm522, %v543, 0.0
    %v552 = vrot.slane %v551, 4
    %v553 = vadd.f32 %v551, %v552
    %v554 = vrot.slane %v553, 2
    %v555 = vadd.f32 %v553, %v554
    %v556 = vrot.slane %v555, 1
    %v557 = vadd.f32 %v555, %v556
    %v558 = vmul.f32 %v550, %v537
    %v559 = vmul.f32 %v557, %v537
    %v560 = vadd.f32 %v558, 1e-05
    %v561 = vadd.f32 %v559, 1e-05
    %v562 = vrsqrt.pop %v560
    %v563 = vrsqrt.pop %v561
    %v564 = vmul.f32 %v540, %v562
    %v565 = vmul.f32 %v541, %v563
    %v566 = vld [vmem:[%s3] sm:$0x3]
    %v568 = vlaneseq
    %v569 = vshrl.u32 %v568, 7
    %v570 = vsub.s32 0, %v569
    %v571 = vrot.slane %v566, %v570
    %v572 = vlaneseq
    %v573 = vshrl.u32 %v572, 7
    %v574 = vsub.s32 1, %v573
    %v575 = vrot.slane %v566, %v574
    %v578 = vmul.f32 %v564, %v571
    %v579 = vmul.f32 %v565, %v575
    %v580 = vld [vmem:[%s4] sm:$0x3]
    %v582 = vlaneseq
    %v583 = vshrl.u32 %v582, 7
    %v584 = vsub.s32 0, %v583
    %v585 = vrot.slane %v580, %v584
    %v586 = vlaneseq
    %v587 = vshrl.u32 %v586, 7
    %v588 = vsub.s32 1, %v587
    %v589 = vrot.slane %v580, %v588
    %v592 = vadd.f32 %v578, %v585
    %v593 = vadd.f32 %v579, %v589
    %v594 = vmax.f32 %v592, 0.0
    %v595 = vmax.f32 %v593, 0.0
    %v598 = vcombine.low %v594, %v595
    %600 = vst [vmem:[#allocation2] sm:$0xff] %v598
    // Predicated region
    $region22: #{avgmax_attention.5} parent=1 // pred_check
      _
    $region23: #{avgmax_attention.5} parent=1 // pred_check_branch
      %602 = sbr.rel (0) target = $region25
    $region24: #{avgmax_attention.5} parent=1 // pred_region
      %s604 = ssub.s32 128, 128
      %605 = vsyncadd [#allocation3], %s604
      %s607 = sshll.u32 [#allocation2], 4
      %s608 = int_to_ptr.vmem [resolvable:$true] %s607
      %610 = dma.vmem_to_hbm [thread:$0]  %s608, 128, %s5, [#allocation3]
    $region25: #{avgmax_attention.5} parent=1 // pred_fallthru
      _
    // Predicated region
    $region26: #{avgmax_attention.5} parent=1 // pred_check
      _
    $region27: #{avgmax_attention.5} parent=1 // pred_check_branch
      %612 = sbr.rel (0) target = $region29
    $region28: #{avgmax_attention.5} parent=1 // pred_region
      %613 = dma.done [#allocation3], 128
    $region29: #{avgmax_attention.5} parent=1 // pred_fallthru
      _
    %614 = vsyncpa [#allocation3], 1

// kernel: avgmax_attention.3
$region0: #{avgmax_attention.3}
  #allocation0 [shape = 'u32[]', space=smem, size = 0x4, offset = 0x4, fixed_abs, tag = 'smem constant byte address 0x4 - core index']
  #allocation1 [shape = 'u32[144,128]{1,0:T(1,128)}', space=vmem, size = 0x12000, scoped, tag = 'internal scratch']
  %s0 = inlined_call_operand.vmem [shape: f32[4,256,256], index: 0, kind: input, shape index: {}]
  %s1 = inlined_call_operand.vmem [shape: f32[4,256], index: 1, kind: output, shape index: {0}]
  %s2 = inlined_call_operand.vmem [shape: f32[4,256], index: 2, kind: output, shape index: {1}]
  %3 = xla_tuple %s1, %s2
  %s4 = sld [smem:[#allocation0]]
  $region22: #{avgmax_attention.3} parent=0
    _
  %s6 = ssub.s32 1, %s4
  %s7 = scalar_select 0, %s6, %s4
  // Predicated region
  $region2: #{avgmax_attention.3} parent=0 // pred_check
    _
  $region3: #{avgmax_attention.3} parent=0 // pred_check_branch
    %9 = sbr.rel (0) target = $region5
  $region4: #{avgmax_attention.3} parent=0 // pred_region
    _
  $region5: #{avgmax_attention.3} parent=0 // pred_fallthru
    _
  %v10 = vld [vmem:[%s0] sm:$0xff]
  %v11 = vld [vmem:[%s0 + $0x8] sm:$0xff]
  %v12 = vld [vmem:[%s0 + $0x10] sm:$0xff]
  %v13 = vld [vmem:[%s0 + $0x18] sm:$0xff]
  %v14 = vld [vmem:[%s0 + $0x20] sm:$0xff]
  %v15 = vld [vmem:[%s0 + $0x28] sm:$0xff]
  %v16 = vld [vmem:[%s0 + $0x30] sm:$0xff]
  %v17 = vld [vmem:[%s0 + $0x38] sm:$0xff]
  %v18 = vld [vmem:[%s0 + $0x40] sm:$0xff]
  %v19 = vld [vmem:[%s0 + $0x48] sm:$0xff]
  %v20 = vld [vmem:[%s0 + $0x50] sm:$0xff]
  %v21 = vld [vmem:[%s0 + $0x58] sm:$0xff]
  %v22 = vld [vmem:[%s0 + $0x60] sm:$0xff]
  %v23 = vld [vmem:[%s0 + $0x68] sm:$0xff]
  %v24 = vld [vmem:[%s0 + $0x70] sm:$0xff]
  %v25 = vld [vmem:[%s0 + $0x78] sm:$0xff]
  %v26 = vld [vmem:[%s0 + $0x80] sm:$0xff]
  %v27 = vld [vmem:[%s0 + $0x88] sm:$0xff]
  %v28 = vld [vmem:[%s0 + $0x90] sm:$0xff]
  %v29 = vld [vmem:[%s0 + $0x98] sm:$0xff]
  %v30 = vld [vmem:[%s0 + $0xa0] sm:$0xff]
  %v31 = vld [vmem:[%s0 + $0xa8] sm:$0xff]
  %v32 = vld [vmem:[%s0 + $0xb0] sm:$0xff]
  %v33 = vld [vmem:[%s0 + $0xb8] sm:$0xff]
  %v34 = vld [vmem:[%s0 + $0xc0] sm:$0xff]
  %v35 = vld [vmem:[%s0 + $0xc8] sm:$0xff]
  %v36 = vld [vmem:[%s0 + $0xd0] sm:$0xff]
  %v37 = vld [vmem:[%s0 + $0xd8] sm:$0xff]
  %v38 = vld [vmem:[%s0 + $0xe0] sm:$0xff]
  %v39 = vld [vmem:[%s0 + $0xe8] sm:$0xff]
  %v40 = vld [vmem:[%s0 + $0xf0] sm:$0xff]
  %v41 = vld [vmem:[%s0 + $0xf8] sm:$0xff]
  %v42 = vld [vmem:[%s0 + $0x100] sm:$0xff]
  %v43 = vld [vmem:[%s0 + $0x108] sm:$0xff]
  %v44 = vld [vmem:[%s0 + $0x110] sm:$0xff]
  %v45 = vld [vmem:[%s0 + $0x118] sm:$0xff]
  %v46 = vld [vmem:[%s0 + $0x120] sm:$0xff]
  %v47 = vld [vmem:[%s0 + $0x128] sm:$0xff]
  %v48 = vld [vmem:[%s0 + $0x130] sm:$0xff]
  %v49 = vld [vmem:[%s0 + $0x138] sm:$0xff]
  %v50 = vld [vmem:[%s0 + $0x140] sm:$0xff]
  %v51 = vld [vmem:[%s0 + $0x148] sm:$0xff]
  %v52 = vld [vmem:[%s0 + $0x150] sm:$0xff]
  %v53 = vld [vmem:[%s0 + $0x158] sm:$0xff]
  %v54 = vld [vmem:[%s0 + $0x160] sm:$0xff]
  %v55 = vld [vmem:[%s0 + $0x168] sm:$0xff]
  %v56 = vld [vmem:[%s0 + $0x170] sm:$0xff]
  %v57 = vld [vmem:[%s0 + $0x178] sm:$0xff]
  %v58 = vld [vmem:[%s0 + $0x180] sm:$0xff]
  %v59 = vld [vmem:[%s0 + $0x188] sm:$0xff]
  %v60 = vld [vmem:[%s0 + $0x190] sm:$0xff]
  %v61 = vld [vmem:[%s0 + $0x198] sm:$0xff]
  %v62 = vld [vmem:[%s0 + $0x1a0] sm:$0xff]
  %v63 = vld [vmem:[%s0 + $0x1a8] sm:$0xff]
  %v64 = vld [vmem:[%s0 + $0x1b0] sm:$0xff]
  %v65 = vld [vmem:[%s0 + $0x1b8] sm:$0xff]
  %v66 = vld [vmem:[%s0 + $0x1c0] sm:$0xff]
  %v67 = vld [vmem:[%s0 + $0x1c8] sm:$0xff]
  %v68 = vld [vmem:[%s0 + $0x1d0] sm:$0xff]
  %v69 = vld [vmem:[%s0 + $0x1d8] sm:$0xff]
  %v70 = vld [vmem:[%s0 + $0x1e0] sm:$0xff]
  %v71 = vld [vmem:[%s0 + $0x1e8] sm:$0xff]
  %v72 = vld [vmem:[%s0 + $0x1f0] sm:$0xff]
  %v73 = vld [vmem:[%s0 + $0x1f8] sm:$0xff]
  %v74 = vld [vmem:[%s0 + $0x200] sm:$0xff]
  %v75 = vld [vmem:[%s0 + $0x208] sm:$0xff]
  %v76 = vld [vmem:[%s0 + $0x210] sm:$0xff]
  %v77 = vld [vmem:[%s0 + $0x218] sm:$0xff]
  %v78 = vld [vmem:[%s0 + $0x220] sm:$0xff]
  %v79 = vld [vmem:[%s0 + $0x228] sm:$0xff]
  %v80 = vld [vmem:[%s0 + $0x230] sm:$0xff]
  %v81 = vld [vmem:[%s0 + $0x238] sm:$0xff]
  %v82 = vld [vmem:[%s0 + $0x240] sm:$0xff]
  %v83 = vld [vmem:[%s0 + $0x248] sm:$0xff]
  %v84 = vld [vmem:[%s0 + $0x250] sm:$0xff]
  %v85 = vld [vmem:[%s0 + $0x258] sm:$0xff]
  %v86 = vld [vmem:[%s0 + $0x260] sm:$0xff]
  %v87 = vld [vmem:[%s0 + $0x268] sm:$0xff]
  %v88 = vld [vmem:[%s0 + $0x270] sm:$0xff]
  %v89 = vld [vmem:[%s0 + $0x278] sm:$0xff]
  %v90 = vld [vmem:[%s0 + $0x280] sm:$0xff]
  %v91 = vld [vmem:[%s0 + $0x288] sm:$0xff]
  %v92 = vld [vmem:[%s0 + $0x290] sm:$0xff]
  %v93 = vld [vmem:[%s0 + $0x298] sm:$0xff]
  %v94 = vld [vmem:[%s0 + $0x2a0] sm:$0xff]
  %v95 = vld [vmem:[%s0 + $0x2a8] sm:$0xff]
  %v96 = vld [vmem:[%s0 + $0x2b0] sm:$0xff]
  %v97 = vld [vmem:[%s0 + $0x2b8] sm:$0xff]
  %v98 = vld [vmem:[%s0 + $0x2c0] sm:$0xff]
  %v99 = vld [vmem:[%s0 + $0x2c8] sm:$0xff]
  %v100 = vld [vmem:[%s0 + $0x2d0] sm:$0xff]
  %v101 = vld [vmem:[%s0 + $0x2d8] sm:$0xff]
  %v102 = vld [vmem:[%s0 + $0x2e0] sm:$0xff]
  %v103 = vld [vmem:[%s0 + $0x2e8] sm:$0xff]
  %v104 = vld [vmem:[%s0 + $0x2f0] sm:$0xff]
  %v105 = vld [vmem:[%s0 + $0x2f8] sm:$0xff]
  %v106 = vld [vmem:[%s0 + $0x300] sm:$0xff]
  %v107 = vld [vmem:[%s0 + $0x308] sm:$0xff]
  %v108 = vld [vmem:[%s0 + $0x310] sm:$0xff]
  %v109 = vld [vmem:[%s0 + $0x318] sm:$0xff]
  %v110 = vld [vmem:[%s0 + $0x320] sm:$0xff]
  %v111 = vld [vmem:[%s0 + $0x328] sm:$0xff]
  %v112 = vld [vmem:[%s0 + $0x330] sm:$0xff]
  %v113 = vld [vmem:[%s0 + $0x338] sm:$0xff]
  %v114 = vld [vmem:[%s0 + $0x340] sm:$0xff]
  %v115 = vld [vmem:[%s0 + $0x348] sm:$0xff]
  %v116 = vld [vmem:[%s0 + $0x350] sm:$0xff]
  %v117 = vld [vmem:[%s0 + $0x358] sm:$0xff]
  %v118 = vld [vmem:[%s0 + $0x360] sm:$0xff]
  %v119 = vld [vmem:[%s0 + $0x368] sm:$0xff]
  %v120 = vld [vmem:[%s0 + $0x370] sm:$0xff]
  %v121 = vld [vmem:[%s0 + $0x378] sm:$0xff]
  %v122 = vld [vmem:[%s0 + $0x380] sm:$0xff]
  %v123 = vld [vmem:[%s0 + $0x388] sm:$0xff]
  %v124 = vld [vmem:[%s0 + $0x390] sm:$0xff]
  %v125 = vld [vmem:[%s0 + $0x398] sm:$0xff]
  %v126 = vld [vmem:[%s0 + $0x3a0] sm:$0xff]
  %v127 = vld [vmem:[%s0 + $0x3a8] sm:$0xff]
  %v128 = vld [vmem:[%s0 + $0x3b0] sm:$0xff]
  %v129 = vld [vmem:[%s0 + $0x3b8] sm:$0xff]
  %v130 = vld [vmem:[%s0 + $0x3c0] sm:$0xff]
  %v131 = vld [vmem:[%s0 + $0x3c8] sm:$0xff]
  %v132 = vld [vmem:[%s0 + $0x3d0] sm:$0xff]
  %v133 = vld [vmem:[%s0 + $0x3d8] sm:$0xff]
  %v134 = vld [vmem:[%s0 + $0x3e0] sm:$0xff]
  %v135 = vld [vmem:[%s0 + $0x3e8] sm:$0xff]
  %v136 = vld [vmem:[%s0 + $0x3f0] sm:$0xff]
  %v137 = vld [vmem:[%s0 + $0x3f8] sm:$0xff]
  %v138 = vld [vmem:[%s0 + $0x400] sm:$0xff]
  %v139 = vld [vmem:[%s0 + $0x408] sm:$0xff]
  %v140 = vld [vmem:[%s0 + $0x410] sm:$0xff]
  %v141 = vld [vmem:[%s0 + $0x418] sm:$0xff]
  %v142 = vld [vmem:[%s0 + $0x420] sm:$0xff]
  %v143 = vld [vmem:[%s0 + $0x428] sm:$0xff]
  %v144 = vld [vmem:[%s0 + $0x430] sm:$0xff]
  %v145 = vld [vmem:[%s0 + $0x438] sm:$0xff]
  %v146 = vld [vmem:[%s0 + $0x440] sm:$0xff]
  %v147 = vld [vmem:[%s0 + $0x448] sm:$0xff]
  %v148 = vld [vmem:[%s0 + $0x450] sm:$0xff]
  %v149 = vld [vmem:[%s0 + $0x458] sm:$0xff]
  %v150 = vld [vmem:[%s0 + $0x460] sm:$0xff]
  %v151 = vld [vmem:[%s0 + $0x468] sm:$0xff]
  %v152 = vld [vmem:[%s0 + $0x470] sm:$0xff]
  %v153 = vld [vmem:[%s0 + $0x478] sm:$0xff]
  %v154 = vld [vmem:[%s0 + $0x480] sm:$0xff]
  %v155 = vld [vmem:[%s0 + $0x488] sm:$0xff]
  %v156 = vld [vmem:[%s0 + $0x490] sm:$0xff]
  %v157 = vld [vmem:[%s0 + $0x498] sm:$0xff]
  %v158 = vld [vmem:[%s0 + $0x4a0] sm:$0xff]
  %v159 = vld [vmem:[%s0 + $0x4a8] sm:$0xff]
  %v160 = vld [vmem:[%s0 + $0x4b0] sm:$0xff]
  %v161 = vld [vmem:[%s0 + $0x4b8] sm:$0xff]
  %v162 = vld [vmem:[%s0 + $0x4c0] sm:$0xff]
  %v163 = vld [vmem:[%s0 + $0x4c8] sm:$0xff]
  %v164 = vld [vmem:[%s0 + $0x4d0] sm:$0xff]
  %v165 = vld [vmem:[%s0 + $0x4d8] sm:$0xff]
  %v166 = vld [vmem:[%s0 + $0x4e0] sm:$0xff]
  %v167 = vld [vmem:[%s0 + $0x4e8] sm:$0xff]
  %v168 = vld [vmem:[%s0 + $0x4f0] sm:$0xff]
  %v169 = vld [vmem:[%s0 + $0x4f8] sm:$0xff]
  %v170 = vld [vmem:[%s0 + $0x500] sm:$0xff]
  %v171 = vld [vmem:[%s0 + $0x508] sm:$0xff]
  %v172 = vld [vmem:[%s0 + $0x510] sm:$0xff]
  %v173 = vld [vmem:[%s0 + $0x518] sm:$0xff]
  %v174 = vld [vmem:[%s0 + $0x520] sm:$0xff]
  %v175 = vld [vmem:[%s0 + $0x528] sm:$0xff]
  %v176 = vld [vmem:[%s0 + $0x530] sm:$0xff]
  %v177 = vld [vmem:[%s0 + $0x538] sm:$0xff]
  %v178 = vld [vmem:[%s0 + $0x540] sm:$0xff]
  %v179 = vld [vmem:[%s0 + $0x548] sm:$0xff]
  %v180 = vld [vmem:[%s0 + $0x550] sm:$0xff]
  %v181 = vld [vmem:[%s0 + $0x558] sm:$0xff]
  %v182 = vld [vmem:[%s0 + $0x560] sm:$0xff]
  %v183 = vld [vmem:[%s0 + $0x568] sm:$0xff]
  %v184 = vld [vmem:[%s0 + $0x570] sm:$0xff]
  %v185 = vld [vmem:[%s0 + $0x578] sm:$0xff]
  %v186 = vld [vmem:[%s0 + $0x580] sm:$0xff]
  %v187 = vld [vmem:[%s0 + $0x588] sm:$0xff]
  %v188 = vld [vmem:[%s0 + $0x590] sm:$0xff]
  %v189 = vld [vmem:[%s0 + $0x598] sm:$0xff]
  %v190 = vld [vmem:[%s0 + $0x5a0] sm:$0xff]
  %v191 = vld [vmem:[%s0 + $0x5a8] sm:$0xff]
  %v192 = vld [vmem:[%s0 + $0x5b0] sm:$0xff]
  %v193 = vld [vmem:[%s0 + $0x5b8] sm:$0xff]
  %v194 = vld [vmem:[%s0 + $0x5c0] sm:$0xff]
  %v195 = vld [vmem:[%s0 + $0x5c8] sm:$0xff]
  %v196 = vld [vmem:[%s0 + $0x5d0] sm:$0xff]
  %v197 = vld [vmem:[%s0 + $0x5d8] sm:$0xff]
  %v198 = vld [vmem:[%s0 + $0x5e0] sm:$0xff]
  %v199 = vld [vmem:[%s0 + $0x5e8] sm:$0xff]
  %v200 = vld [vmem:[%s0 + $0x5f0] sm:$0xff]
  %v201 = vld [vmem:[%s0 + $0x5f8] sm:$0xff]
  %v202 = vld [vmem:[%s0 + $0x600] sm:$0xff]
  %v203 = vld [vmem:[%s0 + $0x608] sm:$0xff]
  %v204 = vld [vmem:[%s0 + $0x610] sm:$0xff]
  %v205 = vld [vmem:[%s0 + $0x618] sm:$0xff]
  %v206 = vld [vmem:[%s0 + $0x620] sm:$0xff]
  %v207 = vld [vmem:[%s0 + $0x628] sm:$0xff]
  %v208 = vld [vmem:[%s0 + $0x630] sm:$0xff]
  %v209 = vld [vmem:[%s0 + $0x638] sm:$0xff]
  %v210 = vld [vmem:[%s0 + $0x640] sm:$0xff]
  %v211 = vld [vmem:[%s0 + $0x648] sm:$0xff]
  %v212 = vld [vmem:[%s0 + $0x650] sm:$0xff]
  %v213 = vld [vmem:[%s0 + $0x658] sm:$0xff]
  %v214 = vld [vmem:[%s0 + $0x660] sm:$0xff]
  %v215 = vld [vmem:[%s0 + $0x668] sm:$0xff]
  %v216 = vld [vmem:[%s0 + $0x670] sm:$0xff]
  %v217 = vld [vmem:[%s0 + $0x678] sm:$0xff]
  %v218 = vld [vmem:[%s0 + $0x680] sm:$0xff]
  %v219 = vld [vmem:[%s0 + $0x688] sm:$0xff]
  %v220 = vld [vmem:[%s0 + $0x690] sm:$0xff]
  %v221 = vld [vmem:[%s0 + $0x698] sm:$0xff]
  %v222 = vld [vmem:[%s0 + $0x6a0] sm:$0xff]
  %v223 = vld [vmem:[%s0 + $0x6a8] sm:$0xff]
  %v224 = vld [vmem:[%s0 + $0x6b0] sm:$0xff]
  %v225 = vld [vmem:[%s0 + $0x6b8] sm:$0xff]
  %v226 = vld [vmem:[%s0 + $0x6c0] sm:$0xff]
  %v227 = vld [vmem:[%s0 + $0x6c8] sm:$0xff]
  %v228 = vld [vmem:[%s0 + $0x6d0] sm:$0xff]
  %v229 = vld [vmem:[%s0 + $0x6d8] sm:$0xff]
  %v230 = vld [vmem:[%s0 + $0x6e0] sm:$0xff]
  %v231 = vld [vmem:[%s0 + $0x6e8] sm:$0xff]
  %v232 = vld [vmem:[%s0 + $0x6f0] sm:$0xff]
  %v233 = vld [vmem:[%s0 + $0x6f8] sm:$0xff]
  %v234 = vld [vmem:[%s0 + $0x700] sm:$0xff]
  %v235 = vld [vmem:[%s0 + $0x708] sm:$0xff]
  %v236 = vld [vmem:[%s0 + $0x710] sm:$0xff]
  %v237 = vld [vmem:[%s0 + $0x718] sm:$0xff]
  %v238 = vld [vmem:[%s0 + $0x720] sm:$0xff]
  %v239 = vld [vmem:[%s0 + $0x728] sm:$0xff]
  %v240 = vld [vmem:[%s0 + $0x730] sm:$0xff]
  %v241 = vld [vmem:[%s0 + $0x738] sm:$0xff]
  %v242 = vld [vmem:[%s0 + $0x740] sm:$0xff]
  %v243 = vld [vmem:[%s0 + $0x748] sm:$0xff]
  %v244 = vld [vmem:[%s0 + $0x750] sm:$0xff]
  %v245 = vld [vmem:[%s0 + $0x758] sm:$0xff]
  %v246 = vld [vmem:[%s0 + $0x760] sm:$0xff]
  %v247 = vld [vmem:[%s0 + $0x768] sm:$0xff]
  %v248 = vld [vmem:[%s0 + $0x770] sm:$0xff]
  %v249 = vld [vmem:[%s0 + $0x778] sm:$0xff]
  %v250 = vld [vmem:[%s0 + $0x780] sm:$0xff]
  %v251 = vld [vmem:[%s0 + $0x788] sm:$0xff]
  %v252 = vld [vmem:[%s0 + $0x790] sm:$0xff]
  %v253 = vld [vmem:[%s0 + $0x798] sm:$0xff]
  %v254 = vld [vmem:[%s0 + $0x7a0] sm:$0xff]
  %v255 = vld [vmem:[%s0 + $0x7a8] sm:$0xff]
  %v256 = vld [vmem:[%s0 + $0x7b0] sm:$0xff]
  %v257 = vld [vmem:[%s0 + $0x7b8] sm:$0xff]
  %v258 = vld [vmem:[%s0 + $0x7c0] sm:$0xff]
  %v259 = vld [vmem:[%s0 + $0x7c8] sm:$0xff]
  %v260 = vld [vmem:[%s0 + $0x7d0] sm:$0xff]
  %v261 = vld [vmem:[%s0 + $0x7d8] sm:$0xff]
  %v262 = vld [vmem:[%s0 + $0x7e0] sm:$0xff]
  %v263 = vld [vmem:[%s0 + $0x7e8] sm:$0xff]
  %v264 = vld [vmem:[%s0 + $0x7f0] sm:$0xff]
  %v265 = vld [vmem:[%s0 + $0x7f8] sm:$0xff]
  %v266 = vadd.f32 %v10, %v11
  %267 = vadd.xlane.f32.xlu0 %v266
  %v268 = vpop.xlane.xlu0 %267
  %v269 = vadd.f32 %v12, %v13
  %270 = vadd.xlane.f32.xlu0 %v269
  %v271 = vpop.xlane.xlu0 %270
  %v272 = vadd.f32 %v14, %v15
  %273 = vadd.xlane.f32.xlu0 %v272
  %v274 = vpop.xlane.xlu0 %273
  %v275 = vadd.f32 %v16, %v17
  %276 = vadd.xlane.f32.xlu0 %v275
  %v277 = vpop.xlane.xlu0 %276
  %v278 = vadd.f32 %v18, %v19
  %279 = vadd.xlane.f32.xlu0 %v278
  %v280 = vpop.xlane.xlu0 %279
  %v281 = vadd.f32 %v20, %v21
  %282 = vadd.xlane.f32.xlu0 %v281
  %v283 = vpop.xlane.xlu0 %282
  %v284 = vadd.f32 %v22, %v23
  %285 = vadd.xlane.f32.xlu0 %v284
  %v286 = vpop.xlane.xlu0 %285
  %v287 = vadd.f32 %v24, %v25
  %288 = vadd.xlane.f32.xlu0 %v287
  %v289 = vpop.xlane.xlu0 %288
  %v290 = vadd.f32 %v26, %v27
  %291 = vadd.xlane.f32.xlu0 %v290
  %v292 = vpop.xlane.xlu0 %291
  %v293 = vadd.f32 %v28, %v29
  %294 = vadd.xlane.f32.xlu0 %v293
  %v295 = vpop.xlane.xlu0 %294
  %v296 = vadd.f32 %v30, %v31
  %297 = vadd.xlane.f32.xlu0 %v296
  %v298 = vpop.xlane.xlu0 %297
  %v299 = vadd.f32 %v32, %v33
  %300 = vadd.xlane.f32.xlu0 %v299
  %v301 = vpop.xlane.xlu0 %300
  %v302 = vadd.f32 %v34, %v35
  %303 = vadd.xlane.f32.xlu0 %v302
  %v304 = vpop.xlane.xlu0 %303
  %v305 = vadd.f32 %v36, %v37
  %306 = vadd.xlane.f32.xlu0 %v305
  %v307 = vpop.xlane.xlu0 %306
  %v308 = vadd.f32 %v38, %v39
  %309 = vadd.xlane.f32.xlu0 %v308
  %v310 = vpop.xlane.xlu0 %309
  %v311 = vadd.f32 %v40, %v41
  %312 = vadd.xlane.f32.xlu0 %v311
  %v313 = vpop.xlane.xlu0 %312
  %v314 = vadd.f32 %v42, %v43
  %315 = vadd.xlane.f32.xlu0 %v314
  %v316 = vpop.xlane.xlu0 %315
  %v317 = vadd.f32 %v44, %v45
  %318 = vadd.xlane.f32.xlu0 %v317
  %v319 = vpop.xlane.xlu0 %318
  %v320 = vadd.f32 %v46, %v47
  %321 = vadd.xlane.f32.xlu0 %v320
  %v322 = vpop.xlane.xlu0 %321
  %v323 = vadd.f32 %v48, %v49
  %324 = vadd.xlane.f32.xlu0 %v323
  %v325 = vpop.xlane.xlu0 %324
  %v326 = vadd.f32 %v50, %v51
  %327 = vadd.xlane.f32.xlu0 %v326
  %v328 = vpop.xlane.xlu0 %327
  %v329 = vadd.f32 %v52, %v53
  %330 = vadd.xlane.f32.xlu0 %v329
  %v331 = vpop.xlane.xlu0 %330
  %v332 = vadd.f32 %v54, %v55
  %333 = vadd.xlane.f32.xlu0 %v332
  %v334 = vpop.xlane.xlu0 %333
  %v335 = vadd.f32 %v56, %v57
  %336 = vadd.xlane.f32.xlu0 %v335
  %v337 = vpop.xlane.xlu0 %336
  %v338 = vadd.f32 %v58, %v59
  %339 = vadd.xlane.f32.xlu0 %v338
  %v340 = vpop.xlane.xlu0 %339
  %v341 = vadd.f32 %v60, %v61
  %342 = vadd.xlane.f32.xlu0 %v341
  %v343 = vpop.xlane.xlu0 %342
  %v344 = vadd.f32 %v62, %v63
  %345 = vadd.xlane.f32.xlu0 %v344
  %v346 = vpop.xlane.xlu0 %345
  %v347 = vadd.f32 %v64, %v65
  %348 = vadd.xlane.f32.xlu0 %v347
  %v349 = vpop.xlane.xlu0 %348
  %v350 = vadd.f32 %v66, %v67
  %351 = vadd.xlane.f32.xlu0 %v350
  %v352 = vpop.xlane.xlu0 %351
  %v353 = vadd.f32 %v68, %v69
  %354 = vadd.xlane.f32.xlu0 %v353
  %v355 = vpop.xlane.xlu0 %354
  %v356 = vadd.f32 %v70, %v71
  %357 = vadd.xlane.f32.xlu0 %v356
  %v358 = vpop.xlane.xlu0 %357
  %v359 = vadd.f32 %v72, %v73
  %360 = vadd.xlane.f32.xlu0 %v359
  %v361 = vpop.xlane.xlu0 %360
  %v362 = vadd.f32 %v74, %v75
  %363 = vadd.xlane.f32.xlu0 %v362
  %v364 = vpop.xlane.xlu0 %363
  %v365 = vadd.f32 %v76, %v77
  %366 = vadd.xlane.f32.xlu0 %v365
  %v367 = vpop.xlane.xlu0 %366
  %v368 = vadd.f32 %v78, %v79
  %369 = vadd.xlane.f32.xlu0 %v368
  %v370 = vpop.xlane.xlu0 %369
  %v371 = vadd.f32 %v80, %v81
  %372 = vadd.xlane.f32.xlu0 %v371
  %v373 = vpop.xlane.xlu0 %372
  %v374 = vadd.f32 %v82, %v83
  %375 = vadd.xlane.f32.xlu0 %v374
  %v376 = vpop.xlane.xlu0 %375
  %v377 = vadd.f32 %v84, %v85
  %378 = vadd.xlane.f32.xlu0 %v377
  %v379 = vpop.xlane.xlu0 %378
  %v380 = vadd.f32 %v86, %v87
  %381 = vadd.xlane.f32.xlu0 %v380
  %v382 = vpop.xlane.xlu0 %381
  %v383 = vadd.f32 %v88, %v89
  %384 = vadd.xlane.f32.xlu0 %v383
  %v385 = vpop.xlane.xlu0 %384
  %v386 = vadd.f32 %v90, %v91
  %387 = vadd.xlane.f32.xlu0 %v386
  %v388 = vpop.xlane.xlu0 %387
  %v389 = vadd.f32 %v92, %v93
  %390 = vadd.xlane.f32.xlu0 %v389
  %v391 = vpop.xlane.xlu0 %390
  %v392 = vadd.f32 %v94, %v95
  %393 = vadd.xlane.f32.xlu0 %v392
  %v394 = vpop.xlane.xlu0 %393
  %v395 = vadd.f32 %v96, %v97
  %396 = vadd.xlane.f32.xlu0 %v395
  %v397 = vpop.xlane.xlu0 %396
  %v398 = vadd.f32 %v98, %v99
  %399 = vadd.xlane.f32.xlu0 %v398
  %v400 = vpop.xlane.xlu0 %399
  %v401 = vadd.f32 %v100, %v101
  %402 = vadd.xlane.f32.xlu0 %v401
  %v403 = vpop.xlane.xlu0 %402
  %v404 = vadd.f32 %v102, %v103
  %405 = vadd.xlane.f32.xlu0 %v404
  %v406 = vpop.xlane.xlu0 %405
  %v407 = vadd.f32 %v104, %v105
  %408 = vadd.xlane.f32.xlu0 %v407
  %v409 = vpop.xlane.xlu0 %408
  %v410 = vadd.f32 %v106, %v107
  %411 = vadd.xlane.f32.xlu0 %v410
  %v412 = vpop.xlane.xlu0 %411
  %v413 = vadd.f32 %v108, %v109
  %414 = vadd.xlane.f32.xlu0 %v413
  %v415 = vpop.xlane.xlu0 %414
  %v416 = vadd.f32 %v110, %v111
  %417 = vadd.xlane.f32.xlu0 %v416
  %v418 = vpop.xlane.xlu0 %417
  %v419 = vadd.f32 %v112, %v113
  %420 = vadd.xlane.f32.xlu0 %v419
  %v421 = vpop.xlane.xlu0 %420
  %v422 = vadd.f32 %v114, %v115
  %423 = vadd.xlane.f32.xlu0 %v422
  %v424 = vpop.xlane.xlu0 %423
  %v425 = vadd.f32 %v116, %v117
  %426 = vadd.xlane.f32.xlu0 %v425
  %v427 = vpop.xlane.xlu0 %426
  %v428 = vadd.f32 %v118, %v119
  %429 = vadd.xlane.f32.xlu0 %v428
  %v430 = vpop.xlane.xlu0 %429
  %v431 = vadd.f32 %v120, %v121
  %432 = vadd.xlane.f32.xlu0 %v431
  %v433 = vpop.xlane.xlu0 %432
  %v434 = vadd.f32 %v122, %v123
  %435 = vadd.xlane.f32.xlu0 %v434
  %v436 = vpop.xlane.xlu0 %435
  %v437 = vadd.f32 %v124, %v125
  %438 = vadd.xlane.f32.xlu0 %v437
  %v439 = vpop.xlane.xlu0 %438
  %v440 = vadd.f32 %v126, %v127
  %441 = vadd.xlane.f32.xlu0 %v440
  %v442 = vpop.xlane.xlu0 %441
  %v443 = vadd.f32 %v128, %v129
  %444 = vadd.xlane.f32.xlu0 %v443
  %v445 = vpop.xlane.xlu0 %444
  %v446 = vadd.f32 %v130, %v131
  %447 = vadd.xlane.f32.xlu0 %v446
  %v448 = vpop.xlane.xlu0 %447
  %v449 = vadd.f32 %v132, %v133
  %450 = vadd.xlane.f32.xlu0 %v449
  %v451 = vpop.xlane.xlu0 %450
  %v452 = vadd.f32 %v134, %v135
  %453 = vadd.xlane.f32.xlu0 %v452
  %v454 = vpop.xlane.xlu0 %453
  %v455 = vadd.f32 %v136, %v137
  %456 = vadd.xlane.f32.xlu0 %v455
  %v457 = vpop.xlane.xlu0 %456
  %v458 = vadd.f32 %v138, %v139
  %459 = vadd.xlane.f32.xlu0 %v458
  %v460 = vpop.xlane.xlu0 %459
  %v461 = vadd.f32 %v140, %v141
  %462 = vadd.xlane.f32.xlu0 %v461
  %v463 = vpop.xlane.xlu0 %462
  %v464 = vadd.f32 %v142, %v143
  %465 = vadd.xlane.f32.xlu0 %v464
  %v466 = vpop.xlane.xlu0 %465
  %v467 = vadd.f32 %v144, %v145
  %468 = vadd.xlane.f32.xlu0 %v467
  %v469 = vpop.xlane.xlu0 %468
  %v470 = vadd.f32 %v146, %v147
  %471 = vadd.xlane.f32.xlu0 %v470
  %v472 = vpop.xlane.xlu0 %471
  %v473 = vadd.f32 %v148, %v149
  %474 = vadd.xlane.f32.xlu0 %v473
  %v475 = vpop.xlane.xlu0 %474
  %v476 = vadd.f32 %v150, %v151
  %477 = vadd.xlane.f32.xlu0 %v476
  %v478 = vpop.xlane.xlu0 %477
  %v479 = vadd.f32 %v152, %v153
  %480 = vadd.xlane.f32.xlu0 %v479
  %v481 = vpop.xlane.xlu0 %480
  %v482 = vadd.f32 %v154, %v155
  %483 = vadd.xlane.f32.xlu0 %v482
  %v484 = vpop.xlane.xlu0 %483
  %v485 = vadd.f32 %v156, %v157
  %486 = vadd.xlane.f32.xlu0 %v485
  %v487 = vpop.xlane.xlu0 %486
  %v488 = vadd.f32 %v158, %v159
  %489 = vadd.xlane.f32.xlu0 %v488
  %v490 = vpop.xlane.xlu0 %489
  %v491 = vadd.f32 %v160, %v161
  %492 = vadd.xlane.f32.xlu0 %v491
  %v493 = vpop.xlane.xlu0 %492
  %v494 = vadd.f32 %v162, %v163
  %495 = vadd.xlane.f32.xlu0 %v494
  %v496 = vpop.xlane.xlu0 %495
  %v497 = vadd.f32 %v164, %v165
  %498 = vadd.xlane.f32.xlu0 %v497
  %v499 = vpop.xlane.xlu0 %498
  %v500 = vadd.f32 %v166, %v167
  %501 = vadd.xlane.f32.xlu0 %v500
  %v502 = vpop.xlane.xlu0 %501
  %v503 = vadd.f32 %v168, %v169
  %504 = vadd.xlane.f32.xlu0 %v503
  %v505 = vpop.xlane.xlu0 %504
  %v506 = vadd.f32 %v170, %v171
  %507 = vadd.xlane.f32.xlu0 %v506
  %v508 = vpop.xlane.xlu0 %507
  %v509 = vadd.f32 %v172, %v173
  %510 = vadd.xlane.f32.xlu0 %v509
  %v511 = vpop.xlane.xlu0 %510
  %v512 = vadd.f32 %v174, %v175
  %513 = vadd.xlane.f32.xlu0 %v512
  %v514 = vpop.xlane.xlu0 %513
  %v515 = vadd.f32 %v176, %v177
  %516 = vadd.xlane.f32.xlu0 %v515
  %v517 = vpop.xlane.xlu0 %516
  %v518 = vadd.f32 %v178, %v179
  %519 = vadd.xlane.f32.xlu0 %v518
  %v520 = vpop.xlane.xlu0 %519
  %v521 = vadd.f32 %v180, %v181
  %522 = vadd.xlane.f32.xlu0 %v521
  %v523 = vpop.xlane.xlu0 %522
  %v524 = vadd.f32 %v182, %v183
  %525 = vadd.xlane.f32.xlu0 %v524
  %v526 = vpop.xlane.xlu0 %525
  %v527 = vadd.f32 %v184, %v185
  %528 = vadd.xlane.f32.xlu0 %v527
  %v529 = vpop.xlane.xlu0 %528
  %v530 = vadd.f32 %v186, %v187
  %531 = vadd.xlane.f32.xlu0 %v530
  %v532 = vpop.xlane.xlu0 %531
  %v533 = vadd.f32 %v188, %v189
  %534 = vadd.xlane.f32.xlu0 %v533
  %v535 = vpop.xlane.xlu0 %534
  %v536 = vadd.f32 %v190, %v191
  %537 = vadd.xlane.f32.xlu0 %v536
  %v538 = vpop.xlane.xlu0 %537
  %v539 = vadd.f32 %v192, %v193
  %540 = vadd.xlane.f32.xlu0 %v539
  %v541 = vpop.xlane.xlu0 %540
  %v542 = vadd.f32 %v194, %v195
  %543 = vadd.xlane.f32.xlu0 %v542
  %v544 = vpop.xlane.xlu0 %543
  %v545 = vadd.f32 %v196, %v197
  %546 = vadd.xlane.f32.xlu0 %v545
  %v547 = vpop.xlane.xlu0 %546
  %v548 = vadd.f32 %v198, %v199
  %549 = vadd.xlane.f32.xlu0 %v548
  %v550 = vpop.xlane.xlu0 %549
  %v551 = vadd.f32 %v200, %v201
  %552 = vadd.xlane.f32.xlu0 %v551
  %v553 = vpop.xlane.xlu0 %552
  %v554 = vadd.f32 %v202, %v203
  %555 = vadd.xlane.f32.xlu0 %v554
  %v556 = vpop.xlane.xlu0 %555
  %v557 = vadd.f32 %v204, %v205
  %558 = vadd.xlane.f32.xlu0 %v557
  %v559 = vpop.xlane.xlu0 %558
  %v560 = vadd.f32 %v206, %v207
  %561 = vadd.xlane.f32.xlu0 %v560
  %v562 = vpop.xlane.xlu0 %561
  %v563 = vadd.f32 %v208, %v209
  %564 = vadd.xlane.f32.xlu0 %v563
  %v565 = vpop.xlane.xlu0 %564
  %v566 = vadd.f32 %v210, %v211
  %567 = vadd.xlane.f32.xlu0 %v566
  %v568 = vpop.xlane.xlu0 %567
  %v569 = vadd.f32 %v212, %v213
  %570 = vadd.xlane.f32.xlu0 %v569
  %v571 = vpop.xlane.xlu0 %570
  %v572 = vadd.f32 %v214, %v215
  %573 = vadd.xlane.f32.xlu0 %v572
  %v574 = vpop.xlane.xlu0 %573
  %v575 = vadd.f32 %v216, %v217
  %576 = vadd.xlane.f32.xlu0 %v575
  %v577 = vpop.xlane.xlu0 %576
  %v578 = vadd.f32 %v218, %v219
  %579 = vadd.xlane.f32.xlu0 %v578
  %v580 = vpop.xlane.xlu0 %579
  %v581 = vadd.f32 %v220, %v221
  %582 = vadd.xlane.f32.xlu0 %v581
  %v583 = vpop.xlane.xlu0 %582
  %v584 = vadd.f32 %v222, %v223
  %585 = vadd.xlane.f32.xlu0 %v584
  %v586 = vpop.xlane.xlu0 %585
  %v587 = vadd.f32 %v224, %v225
  %588 = vadd.xlane.f32.xlu0 %v587
  %v589 = vpop.xlane.xlu0 %588
  %v590 = vadd.f32 %v226, %v227
  %591 = vadd.xlane.f32.xlu0 %v590
  %v592 = vpop.xlane.xlu0 %591
  %v593 = vadd.f32 %v228, %v229
  %594 = vadd.xlane.f32.xlu0 %v593
  %v595 = vpop.xlane.xlu0 %594
  %v596 = vadd.f32 %v230, %v231
  %597 = vadd.xlane.f32.xlu0 %v596
  %v598 = vpop.xlane.xlu0 %597
  %v599 = vadd.f32 %v232, %v233
  %600 = vadd.xlane.f32.xlu0 %v599
  %v601 = vpop.xlane.xlu0 %600
  %v602 = vadd.f32 %v234, %v235
  %603 = vadd.xlane.f32.xlu0 %v602
  %v604 = vpop.xlane.xlu0 %603
  %v605 = vadd.f32 %v236, %v237
  %606 = vadd.xlane.f32.xlu0 %v605
  %v607 = vpop.xlane.xlu0 %606
  %v608 = vadd.f32 %v238, %v239
  %609 = vadd.xlane.f32.xlu0 %v608
  %v610 = vpop.xlane.xlu0 %609
  %v611 = vadd.f32 %v240, %v241
  %612 = vadd.xlane.f32.xlu0 %v611
  %v613 = vpop.xlane.xlu0 %612
  %v614 = vadd.f32 %v242, %v243
  %615 = vadd.xlane.f32.xlu0 %v614
  %v616 = vpop.xlane.xlu0 %615
  %v617 = vadd.f32 %v244, %v245
  %618 = vadd.xlane.f32.xlu0 %v617
  %v619 = vpop.xlane.xlu0 %618
  %v620 = vadd.f32 %v246, %v247
  %621 = vadd.xlane.f32.xlu0 %v620
  %v622 = vpop.xlane.xlu0 %621
  %v623 = vadd.f32 %v248, %v249
  %624 = vadd.xlane.f32.xlu0 %v623
  %v625 = vpop.xlane.xlu0 %624
  %v626 = vadd.f32 %v250, %v251
  %627 = vadd.xlane.f32.xlu0 %v626
  %v628 = vpop.xlane.xlu0 %627
  %v629 = vadd.f32 %v252, %v253
  %630 = vadd.xlane.f32.xlu0 %v629
  %v631 = vpop.xlane.xlu0 %630
  %v632 = vadd.f32 %v254, %v255
  %633 = vadd.xlane.f32.xlu0 %v632
  %v634 = vpop.xlane.xlu0 %633
  %v635 = vadd.f32 %v256, %v257
  %636 = vadd.xlane.f32.xlu0 %v635
  %v637 = vpop.xlane.xlu0 %636
  %v638 = vadd.f32 %v258, %v259
  %639 = vadd.xlane.f32.xlu0 %v638
  %v640 = vpop.xlane.xlu0 %639
  %v641 = vadd.f32 %v260, %v261
  %642 = vadd.xlane.f32.xlu0 %v641
  %v643 = vpop.xlane.xlu0 %642
  %v644 = vadd.f32 %v262, %v263
  %645 = vadd.xlane.f32.xlu0 %v644
  %v646 = vpop.xlane.xlu0 %645
  %v647 = vadd.f32 %v264, %v265
  %648 = vadd.xlane.f32.xlu0 %v647
  %v649 = vpop.xlane.xlu0 %648
  %v650 = vrcp.pop 256.0
  %v651 = vmul.f32 %v268, %v650
  %v652 = vmul.f32 %v271, %v650
  %v653 = vmul.f32 %v274, %v650
  %v654 = vmul.f32 %v277, %v650
  %v655 = vmul.f32 %v280, %v650
  %v656 = vmul.f32 %v283, %v650
  %v657 = vmul.f32 %v286, %v650
  %v658 = vmul.f32 %v289, %v650
  %v659 = vmul.f32 %v292, %v650
  %v660 = vmul.f32 %v295, %v650
  %v661 = vmul.f32 %v298, %v650
  %v662 = vmul.f32 %v301, %v650
  %v663 = vmul.f32 %v304, %v650
  %v664 = vmul.f32 %v307, %v650
  %v665 = vmul.f32 %v310, %v650
  %v666 = vmul.f32 %v313, %v650
  %v667 = vmul.f32 %v316, %v650
  %v668 = vmul.f32 %v319, %v650
  %v669 = vmul.f32 %v322, %v650
  %v670 = vmul.f32 %v325, %v650
  %v671 = vmul.f32 %v328, %v650
  %v672 = vmul.f32 %v331, %v650
  %v673 = vmul.f32 %v334, %v650
  %v674 = vmul.f32 %v337, %v650
  %v675 = vmul.f32 %v340, %v650
  %v676 = vmul.f32 %v343, %v650
  %v677 = vmul.f32 %v346, %v650
  %v678 = vmul.f32 %v349, %v650
  %v679 = vmul.f32 %v352, %v650
  %v680 = vmul.f32 %v355, %v650
  %v681 = vmul.f32 %v358, %v650
  %v682 = vmul.f32 %v361, %v650
  %v683 = vmul.f32 %v364, %v650
  %v684 = vmul.f32 %v367, %v650
  %v685 = vmul.f32 %v370, %v650
  %v686 = vmul.f32 %v373, %v650
  %v687 = vmul.f32 %v376, %v650
  %v688 = vmul.f32 %v379, %v650
  %v689 = vmul.f32 %v382, %v650
  %v690 = vmul.f32 %v385, %v650
  %v691 = vmul.f32 %v388, %v650
  %v692 = vmul.f32 %v391, %v650
  %v693 = vmul.f32 %v394, %v650
  %v694 = vmul.f32 %v397, %v650
  %v695 = vmul.f32 %v400, %v650
  %v696 = vmul.f32 %v403, %v650
  %v697 = vmul.f32 %v406, %v650
  %v698 = vmul.f32 %v409, %v650
  %v699 = vmul.f32 %v412, %v650
  %v700 = vmul.f32 %v415, %v650
  %v701 = vmul.f32 %v418, %v650
  %v702 = vmul.f32 %v421, %v650
  %v703 = vmul.f32 %v424, %v650
  %v704 = vmul.f32 %v427, %v650
  %v705 = vmul.f32 %v430, %v650
  %v706 = vmul.f32 %v433, %v650
  %v707 = vmul.f32 %v436, %v650
  %v708 = vmul.f32 %v439, %v650
  %v709 = vmul.f32 %v442, %v650
  %v710 = vmul.f32 %v445, %v650
  %v711 = vmul.f32 %v448, %v650
  %v712 = vmul.f32 %v451, %v650
  %v713 = vmul.f32 %v454, %v650
  %v714 = vmul.f32 %v457, %v650
  %v715 = vmul.f32 %v460, %v650
  %v716 = vmul.f32 %v463, %v650
  %v717 = vmul.f32 %v466, %v650
  %v718 = vmul.f32 %v469, %v650
  %v719 = vmul.f32 %v472, %v650
  %v720 = vmul.f32 %v475, %v650
  %v721 = vmul.f32 %v478, %v650
  %v722 = vmul.f32 %v481, %v650
  %v723 = vmul.f32 %v484, %v650
  %v724 = vmul.f32 %v487, %v650
  %v725 = vmul.f32 %v490, %v650
  %v726 = vmul.f32 %v493, %v650
  %v727 = vmul.f32 %v496, %v650
  %v728 = vmul.f32 %v499, %v650
  %v729 = vmul.f32 %v502, %v650
  %v730 = vmul.f32 %v505, %v650
  %v731 = vmul.f32 %v508, %v650
  %v732 = vmul.f32 %v511, %v650
  %v733 = vmul.f32 %v514, %v650
  %v734 = vmul.f32 %v517, %v650
  %v735 = vmul.f32 %v520, %v650
  %v736 = vmul.f32 %v523, %v650
  %v737 = vmul.f32 %v526, %v650
  %v738 = vmul.f32 %v529, %v650
  %v739 = vmul.f32 %v532, %v650
  %v740 = vmul.f32 %v535, %v650
  %v741 = vmul.f32 %v538, %v650
  %v742 = vmul.f32 %v541, %v650
  %v743 = vmul.f32 %v544, %v650
  %v744 = vmul.f32 %v547, %v650
  %v745 = vmul.f32 %v550, %v650
  %v746 = vmul.f32 %v553, %v650
  %v747 = vmul.f32 %v556, %v650
  %v748 = vmul.f32 %v559, %v650
  %v749 = vmul.f32 %v562, %v650
  %v750 = vmul.f32 %v565, %v650
  %v751 = vmul.f32 %v568, %v650
  %v752 = vmul.f32 %v571, %v650
  %v753 = vmul.f32 %v574, %v650
  %v754 = vmul.f32 %v577, %v650
  %v755 = vmul.f32 %v580, %v650
  %v756 = vmul.f32 %v583, %v650
  %v757 = vmul.f32 %v586, %v650
  %v758 = vmul.f32 %v589, %v650
  %v759 = vmul.f32 %v592, %v650
  %v760 = vmul.f32 %v595, %v650
  %v761 = vmul.f32 %v598, %v650
  %v762 = vmul.f32 %v601, %v650
  %v763 = vmul.f32 %v604, %v650
  %v764 = vmul.f32 %v607, %v650
  %v765 = vmul.f32 %v610, %v650
  %v766 = vmul.f32 %v613, %v650
  %v767 = vmul.f32 %v616, %v650
  %v768 = vmul.f32 %v619, %v650
  %v769 = vmul.f32 %v622, %v650
  %v770 = vmul.f32 %v625, %v650
  %v771 = vmul.f32 %v628, %v650
  %v772 = vmul.f32 %v631, %v650
  %v773 = vmul.f32 %v634, %v650
  %v774 = vmul.f32 %v637, %v650
  %v775 = vmul.f32 %v640, %v650
  %v776 = vmul.f32 %v643, %v650
  %v777 = vmul.f32 %v646, %v650
  %v778 = vmul.f32 %v649, %v650
  %v908 = vunpack.c.l.s4 839922192
  %v909 = vunpack.c.0.s8 %v908
  %v910 = vlaneseq
  %v911 = vshrl.u32 %v910, 7
  %v912 = vsub.s32 %v909, %v911
  %v913 = vrot.slane %v651, %v912
  %v915 = vunpack.c.l.s4 1985246804
  %v916 = vunpack.c.0.s8 %v915
  %v917 = vlaneseq
  %v918 = vshrl.u32 %v917, 7
  %v919 = vsub.s32 %v916, %v918
  %v920 = vrot.slane %v651, %v919
  %v922 = vunpack.c.l.s4 839922192
  %v923 = vunpack.c.0.s8 %v922
  %v924 = vlaneseq
  %v925 = vshrl.u32 %v924, 7
  %v926 = vsub.s32 %v923, %v925
  %v927 = vrot.slane %v652, %v926
  %v929 = vunpack.c.l.s4 1985246804
  %v930 = vunpack.c.0.s8 %v929
  %v931 = vlaneseq
  %v932 = vshrl.u32 %v931, 7
  %v933 = vsub.s32 %v930, %v932
  %v934 = vrot.slane %v652, %v933
  %v936 = vunpack.c.l.s4 839922192
  %v937 = vunpack.c.0.s8 %v936
  %v938 = vlaneseq
  %v939 = vshrl.u32 %v938, 7
  %v940 = vsub.s32 %v937, %v939
  %v941 = vrot.slane %v653, %v940
  %v943 = vunpack.c.l.s4 1985246804
  %v944 = vunpack.c.0.s8 %v943
  %v945 = vlaneseq
  %v946 = vshrl.u32 %v945, 7
  %v947 = vsub.s32 %v944, %v946
  %v948 = vrot.slane %v653, %v947
  %v950 = vunpack.c.l.s4 839922192
  %v951 = vunpack.c.0.s8 %v950
  %v952 = vlaneseq
  %v953 = vshrl.u32 %v952, 7
  %v954 = vsub.s32 %v951, %v953
  %v955 = vrot.slane %v654, %v954
  %v957 = vunpack.c.l.s4 1985246804
  %v958 = vunpack.c.0.s8 %v957
  %v959 = vlaneseq
  %v960 = vshrl.u32 %v959, 7
  %v961 = vsub.s32 %v958, %v960
  %v962 = vrot.slane %v654, %v961
  %v964 = vunpack.c.l.s4 839922192
  %v965 = vunpack.c.0.s8 %v964
  %v966 = vlaneseq
  %v967 = vshrl.u32 %v966, 7
  %v968 = vsub.s32 %v965, %v967
  %v969 = vrot.slane %v655, %v968
  %v971 = vunpack.c.l.s4 1985246804
  %v972 = vunpack.c.0.s8 %v971
  %v973 = vlaneseq
  %v974 = vshrl.u32 %v973, 7
  %v975 = vsub.s32 %v972, %v974
  %v976 = vrot.slane %v655, %v975
  %v978 = vunpack.c.l.s4 839922192
  %v979 = vunpack.c.0.s8 %v978
  %v980 = vlaneseq
  %v981 = vshrl.u32 %v980, 7
  %v982 = vsub.s32 %v979, %v981
  %v983 = vrot.slane %v656, %v982
  %v985 = vunpack.c.l.s4 1985246804
  %v986 = vunpack.c.0.s8 %v985
  %v987 = vlaneseq
  %v988 = vshrl.u32 %v987, 7
  %v989 = vsub.s32 %v986, %v988
  %v990 = vrot.slane %v656, %v989
  %v992 = vunpack.c.l.s4 839922192
  %v993 = vunpack.c.0.s8 %v992
  %v994 = vlaneseq
  %v995 = vshrl.u32 %v994, 7
  %v996 = vsub.s32 %v993, %v995
  %v997 = vrot.slane %v657, %v996
  %v999 = vunpack.c.l.s4 1985246804
  %v1000 = vunpack.c.0.s8 %v999
  %v1001 = vlaneseq
  %v1002 = vshrl.u32 %v1001, 7
  %v1003 = vsub.s32 %v1000, %v1002
  %v1004 = vrot.slane %v657, %v1003
  %v1006 = vunpack.c.l.s4 839922192
  %v1007 = vunpack.c.0.s8 %v1006
  %v1008 = vlaneseq
  %v1009 = vshrl.u32 %v1008, 7
  %v1010 = vsub.s32 %v1007, %v1009
  %v1011 = vrot.slane %v658, %v1010
  %v1013 = vunpack.c.l.s4 1985246804
  %v1014 = vunpack.c.0.s8 %v1013
  %v1015 = vlaneseq
  %v1016 = vshrl.u32 %v1015, 7
  %v1017 = vsub.s32 %v1014, %v1016
  %v1018 = vrot.slane %v658, %v1017
  %v1020 = vunpack.c.l.s4 839922192
  %v1021 = vunpack.c.0.s8 %v1020
  %v1022 = vlaneseq
  %v1023 = vshrl.u32 %v1022, 7
  %v1024 = vsub.s32 %v1021, %v1023
  %v1025 = vrot.slane %v659, %v1024
  %v1027 = vunpack.c.l.s4 1985246804
  %v1028 = vunpack.c.0.s8 %v1027
  %v1029 = vlaneseq
  %v1030 = vshrl.u32 %v1029, 7
  %v1031 = vsub.s32 %v1028, %v1030
  %v1032 = vrot.slane %v659, %v1031
  %v1034 = vunpack.c.l.s4 839922192
  %v1035 = vunpack.c.0.s8 %v1034
  %v1036 = vlaneseq
  %v1037 = vshrl.u32 %v1036, 7
  %v1038 = vsub.s32 %v1035, %v1037
  %v1039 = vrot.slane %v660, %v1038
  %v1041 = vunpack.c.l.s4 1985246804
  %v1042 = vunpack.c.0.s8 %v1041
  %v1043 = vlaneseq
  %v1044 = vshrl.u32 %v1043, 7
  %v1045 = vsub.s32 %v1042, %v1044
  %v1046 = vrot.slane %v660, %v1045
  %v1048 = vunpack.c.l.s4 839922192
  %v1049 = vunpack.c.0.s8 %v1048
  %v1050 = vlaneseq
  %v1051 = vshrl.u32 %v1050, 7
  %v1052 = vsub.s32 %v1049, %v1051
  %v1053 = vrot.slane %v661, %v1052
  %v1055 = vunpack.c.l.s4 1985246804
  %v1056 = vunpack.c.0.s8 %v1055
  %v1057 = vlaneseq
  %v1058 = vshrl.u32 %v1057, 7
  %v1059 = vsub.s32 %v1056, %v1058
  %v1060 = vrot.slane %v661, %v1059
  %v1062 = vunpack.c.l.s4 839922192
  %v1063 = vunpack.c.0.s8 %v1062
  %v1064 = vlaneseq
  %v1065 = vshrl.u32 %v1064, 7
  %v1066 = vsub.s32 %v1063, %v1065
  %v1067 = vrot.slane %v662, %v1066
  %v1069 = vunpack.c.l.s4 1985246804
  %v1070 = vunpack.c.0.s8 %v1069
  %v1071 = vlaneseq
  %v1072 = vshrl.u32 %v1071, 7
  %v1073 = vsub.s32 %v1070, %v1072
  %v1074 = vrot.slane %v662, %v1073
  %v1076 = vunpack.c.l.s4 839922192
  %v1077 = vunpack.c.0.s8 %v1076
  %v1078 = vlaneseq
  %v1079 = vshrl.u32 %v1078, 7
  %v1080 = vsub.s32 %v1077, %v1079
  %v1081 = vrot.slane %v663, %v1080
  %v1083 = vunpack.c.l.s4 1985246804
  %v1084 = vunpack.c.0.s8 %v1083
  %v1085 = vlaneseq
  %v1086 = vshrl.u32 %v1085, 7
  %v1087 = vsub.s32 %v1084, %v1086
  %v1088 = vrot.slane %v663, %v1087
  %v1090 = vunpack.c.l.s4 839922192
  %v1091 = vunpack.c.0.s8 %v1090
  %v1092 = vlaneseq
  %v1093 = vshrl.u32 %v1092, 7
  %v1094 = vsub.s32 %v1091, %v1093
  %v1095 = vrot.slane %v664, %v1094
  %v1097 = vunpack.c.l.s4 1985246804
  %v1098 = vunpack.c.0.s8 %v1097
  %v1099 = vlaneseq
  %v1100 = vshrl.u32 %v1099, 7
  %v1101 = vsub.s32 %v1098, %v1100
  %v1102 = vrot.slane %v664, %v1101
  %v1104 = vunpack.c.l.s4 839922192
  %v1105 = vunpack.c.0.s8 %v1104
  %v1106 = vlaneseq
  %v1107 = vshrl.u32 %v1106, 7
  %v1108 = vsub.s32 %v1105, %v1107
  %v1109 = vrot.slane %v665, %v1108
  %v1111 = vunpack.c.l.s4 1985246804
  %v1112 = vunpack.c.0.s8 %v1111
  %v1113 = vlaneseq
  %v1114 = vshrl.u32 %v1113, 7
  %v1115 = vsub.s32 %v1112, %v1114
  %v1116 = vrot.slane %v665, %v1115
  %v1118 = vunpack.c.l.s4 839922192
  %v1119 = vunpack.c.0.s8 %v1118
  %v1120 = vlaneseq
  %v1121 = vshrl.u32 %v1120, 7
  %v1122 = vsub.s32 %v1119, %v1121
  %v1123 = vrot.slane %v666, %v1122
  %v1125 = vunpack.c.l.s4 1985246804
  %v1126 = vunpack.c.0.s8 %v1125
  %v1127 = vlaneseq
  %v1128 = vshrl.u32 %v1127, 7
  %v1129 = vsub.s32 %v1126, %v1128
  %v1130 = vrot.slane %v666, %v1129
  %v1132 = vunpack.c.l.s4 839922192
  %v1133 = vunpack.c.0.s8 %v1132
  %v1134 = vlaneseq
  %v1135 = vshrl.u32 %v1134, 7
  %v1136 = vsub.s32 %v1133, %v1135
  %v1137 = vrot.slane %v667, %v1136
  %v1139 = vunpack.c.l.s4 1985246804
  %v1140 = vunpack.c.0.s8 %v1139
  %v1141 = vlaneseq
  %v1142 = vshrl.u32 %v1141, 7
  %v1143 = vsub.s32 %v1140, %v1142
  %v1144 = vrot.slane %v667, %v1143
  %v1146 = vunpack.c.l.s4 839922192
  %v1147 = vunpack.c.0.s8 %v1146
  %v1148 = vlaneseq
  %v1149 = vshrl.u32 %v1148, 7
  %v1150 = vsub.s32 %v1147, %v1149
  %v1151 = vrot.slane %v668, %v1150
  %v1153 = vunpack.c.l.s4 1985246804
  %v1154 = vunpack.c.0.s8 %v1153
  %v1155 = vlaneseq
  %v1156 = vshrl.u32 %v1155, 7
  %v1157 = vsub.s32 %v1154, %v1156
  %v1158 = vrot.slane %v668, %v1157
  %v1160 = vunpack.c.l.s4 839922192
  %v1161 = vunpack.c.0.s8 %v1160
  %v1162 = vlaneseq
  %v1163 = vshrl.u32 %v1162, 7
  %v1164 = vsub.s32 %v1161, %v1163
  %v1165 = vrot.slane %v669, %v1164
  %v1167 = vunpack.c.l.s4 1985246804
  %v1168 = vunpack.c.0.s8 %v1167
  %v1169 = vlaneseq
  %v1170 = vshrl.u32 %v1169, 7
  %v1171 = vsub.s32 %v1168, %v1170
  %v1172 = vrot.slane %v669, %v1171
  %v1174 = vunpack.c.l.s4 839922192
  %v1175 = vunpack.c.0.s8 %v1174
  %v1176 = vlaneseq
  %v1177 = vshrl.u32 %v1176, 7
  %v1178 = vsub.s32 %v1175, %v1177
  %v1179 = vrot.slane %v670, %v1178
  %v1181 = vunpack.c.l.s4 1985246804
  %v1182 = vunpack.c.0.s8 %v1181
  %v1183 = vlaneseq
  %v1184 = vshrl.u32 %v1183, 7
  %v1185 = vsub.s32 %v1182, %v1184
  %v1186 = vrot.slane %v670, %v1185
  %v1188 = vunpack.c.l.s4 839922192
  %v1189 = vunpack.c.0.s8 %v1188
  %v1190 = vlaneseq
  %v1191 = vshrl.u32 %v1190, 7
  %v1192 = vsub.s32 %v1189, %v1191
  %v1193 = vrot.slane %v671, %v1192
  %v1195 = vunpack.c.l.s4 1985246804
  %v1196 = vunpack.c.0.s8 %v1195
  %v1197 = vlaneseq
  %v1198 = vshrl.u32 %v1197, 7
  %v1199 = vsub.s32 %v1196, %v1198
  %v1200 = vrot.slane %v671, %v1199
  %v1202 = vunpack.c.l.s4 839922192
  %v1203 = vunpack.c.0.s8 %v1202
  %v1204 = vlaneseq
  %v1205 = vshrl.u32 %v1204, 7
  %v1206 = vsub.s32 %v1203, %v1205
  %v1207 = vrot.slane %v672, %v1206
  %v1209 = vunpack.c.l.s4 1985246804
  %v1210 = vunpack.c.0.s8 %v1209
  %v1211 = vlaneseq
  %v1212 = vshrl.u32 %v1211, 7
  %v1213 = vsub.s32 %v1210, %v1212
  %v1214 = vrot.slane %v672, %v1213
  %v1216 = vunpack.c.l.s4 839922192
  %v1217 = vunpack.c.0.s8 %v1216
  %v1218 = vlaneseq
  %v1219 = vshrl.u32 %v1218, 7
  %v1220 = vsub.s32 %v1217, %v1219
  %v1221 = vrot.slane %v673, %v1220
  %v1223 = vunpack.c.l.s4 1985246804
  %v1224 = vunpack.c.0.s8 %v1223
  %v1225 = vlaneseq
  %v1226 = vshrl.u32 %v1225, 7
  %v1227 = vsub.s32 %v1224, %v1226
  %v1228 = vrot.slane %v673, %v1227
  %v1230 = vunpack.c.l.s4 839922192
  %v1231 = vunpack.c.0.s8 %v1230
  %v1232 = vlaneseq
  %v1233 = vshrl.u32 %v1232, 7
  %v1234 = vsub.s32 %v1231, %v1233
  %v1235 = vrot.slane %v674, %v1234
  %v1237 = vunpack.c.l.s4 1985246804
  %v1238 = vunpack.c.0.s8 %v1237
  %v1239 = vlaneseq
  %v1240 = vshrl.u32 %v1239, 7
  %v1241 = vsub.s32 %v1238, %v1240
  %v1242 = vrot.slane %v674, %v1241
  %v1244 = vunpack.c.l.s4 839922192
  %v1245 = vunpack.c.0.s8 %v1244
  %v1246 = vlaneseq
  %v1247 = vshrl.u32 %v1246, 7
  %v1248 = vsub.s32 %v1245, %v1247
  %v1249 = vrot.slane %v675, %v1248
  %v1251 = vunpack.c.l.s4 1985246804
  %v1252 = vunpack.c.0.s8 %v1251
  %v1253 = vlaneseq
  %v1254 = vshrl.u32 %v1253, 7
  %v1255 = vsub.s32 %v1252, %v1254
  %v1256 = vrot.slane %v675, %v1255
  %v1258 = vunpack.c.l.s4 839922192
  %v1259 = vunpack.c.0.s8 %v1258
  %v1260 = vlaneseq
  %v1261 = vshrl.u32 %v1260, 7
  %v1262 = vsub.s32 %v1259, %v1261
  %v1263 = vrot.slane %v676, %v1262
  %v1265 = vunpack.c.l.s4 1985246804
  %v1266 = vunpack.c.0.s8 %v1265
  %v1267 = vlaneseq
  %v1268 = vshrl.u32 %v1267, 7
  %v1269 = vsub.s32 %v1266, %v1268
  %v1270 = vrot.slane %v676, %v1269
  %v1272 = vunpack.c.l.s4 839922192
  %v1273 = vunpack.c.0.s8 %v1272
  %v1274 = vlaneseq
  %v1275 = vshrl.u32 %v1274, 7
  %v1276 = vsub.s32 %v1273, %v1275
  %v1277 = vrot.slane %v677, %v1276
  %v1279 = vunpack.c.l.s4 1985246804
  %v1280 = vunpack.c.0.s8 %v1279
  %v1281 = vlaneseq
  %v1282 = vshrl.u32 %v1281, 7
  %v1283 = vsub.s32 %v1280, %v1282
  %v1284 = vrot.slane %v677, %v1283
  %v1286 = vunpack.c.l.s4 839922192
  %v1287 = vunpack.c.0.s8 %v1286
  %v1288 = vlaneseq
  %v1289 = vshrl.u32 %v1288, 7
  %v1290 = vsub.s32 %v1287, %v1289
  %v1291 = vrot.slane %v678, %v1290
  %v1293 = vunpack.c.l.s4 1985246804
  %v1294 = vunpack.c.0.s8 %v1293
  %v1295 = vlaneseq
  %v1296 = vshrl.u32 %v1295, 7
  %v1297 = vsub.s32 %v1294, %v1296
  %v1298 = vrot.slane %v678, %v1297
  %v1300 = vunpack.c.l.s4 839922192
  %v1301 = vunpack.c.0.s8 %v1300
  %v1302 = vlaneseq
  %v1303 = vshrl.u32 %v1302, 7
  %v1304 = vsub.s32 %v1301, %v1303
  %v1305 = vrot.slane %v679, %v1304
  %v1307 = vunpack.c.l.s4 1985246804
  %v1308 = vunpack.c.0.s8 %v1307
  %v1309 = vlaneseq
  %v1310 = vshrl.u32 %v1309, 7
  %v1311 = vsub.s32 %v1308, %v1310
  %v1312 = vrot.slane %v679, %v1311
  %v1314 = vunpack.c.l.s4 839922192
  %v1315 = vunpack.c.0.s8 %v1314
  %v1316 = vlaneseq
  %v1317 = vshrl.u32 %v1316, 7
  %v1318 = vsub.s32 %v1315, %v1317
  %v1319 = vrot.slane %v680, %v1318
  %v1321 = vunpack.c.l.s4 1985246804
  %v1322 = vunpack.c.0.s8 %v1321
  %v1323 = vlaneseq
  %v1324 = vshrl.u32 %v1323, 7
  %v1325 = vsub.s32 %v1322, %v1324
  %v1326 = vrot.slane %v680, %v1325
  %v1328 = vunpack.c.l.s4 839922192
  %v1329 = vunpack.c.0.s8 %v1328
  %v1330 = vlaneseq
  %v1331 = vshrl.u32 %v1330, 7
  %v1332 = vsub.s32 %v1329, %v1331
  %v1333 = vrot.slane %v681, %v1332
  %v1335 = vunpack.c.l.s4 1985246804
  %v1336 = vunpack.c.0.s8 %v1335
  %v1337 = vlaneseq
  %v1338 = vshrl.u32 %v1337, 7
  %v1339 = vsub.s32 %v1336, %v1338
  %v1340 = vrot.slane %v681, %v1339
  %v1342 = vunpack.c.l.s4 839922192
  %v1343 = vunpack.c.0.s8 %v1342
  %v1344 = vlaneseq
  %v1345 = vshrl.u32 %v1344, 7
  %v1346 = vsub.s32 %v1343, %v1345
  %v1347 = vrot.slane %v682, %v1346
  %v1349 = vunpack.c.l.s4 1985246804
  %v1350 = vunpack.c.0.s8 %v1349
  %v1351 = vlaneseq
  %v1352 = vshrl.u32 %v1351, 7
  %v1353 = vsub.s32 %v1350, %v1352
  %v1354 = vrot.slane %v682, %v1353
  %v1356 = vunpack.c.l.s4 839922192
  %v1357 = vunpack.c.0.s8 %v1356
  %v1358 = vlaneseq
  %v1359 = vshrl.u32 %v1358, 7
  %v1360 = vsub.s32 %v1357, %v1359
  %v1361 = vrot.slane %v683, %v1360
  %v1363 = vunpack.c.l.s4 1985246804
  %v1364 = vunpack.c.0.s8 %v1363
  %v1365 = vlaneseq
  %v1366 = vshrl.u32 %v1365, 7
  %v1367 = vsub.s32 %v1364, %v1366
  %v1368 = vrot.slane %v683, %v1367
  %v1370 = vunpack.c.l.s4 839922192
  %v1371 = vunpack.c.0.s8 %v1370
  %v1372 = vlaneseq
  %v1373 = vshrl.u32 %v1372, 7
  %v1374 = vsub.s32 %v1371, %v1373
  %v1375 = vrot.slane %v684, %v1374
  %v1377 = vunpack.c.l.s4 1985246804
  %v1378 = vunpack.c.0.s8 %v1377
  %v1379 = vlaneseq
  %v1380 = vshrl.u32 %v1379, 7
  %v1381 = vsub.s32 %v1378, %v1380
  %v1382 = vrot.slane %v684, %v1381
  %v1384 = vunpack.c.l.s4 839922192
  %v1385 = vunpack.c.0.s8 %v1384
  %v1386 = vlaneseq
  %v1387 = vshrl.u32 %v1386, 7
  %v1388 = vsub.s32 %v1385, %v1387
  %v1389 = vrot.slane %v685, %v1388
  %v1391 = vunpack.c.l.s4 1985246804
  %v1392 = vunpack.c.0.s8 %v1391
  %v1393 = vlaneseq
  %v1394 = vshrl.u32 %v1393, 7
  %v1395 = vsub.s32 %v1392, %v1394
  %v1396 = vrot.slane %v685, %v1395
  %v1398 = vunpack.c.l.s4 839922192
  %v1399 = vunpack.c.0.s8 %v1398
  %v1400 = vlaneseq
  %v1401 = vshrl.u32 %v1400, 7
  %v1402 = vsub.s32 %v1399, %v1401
  %v1403 = vrot.slane %v686, %v1402
  %v1405 = vunpack.c.l.s4 1985246804
  %v1406 = vunpack.c.0.s8 %v1405
  %v1407 = vlaneseq
  %v1408 = vshrl.u32 %v1407, 7
  %v1409 = vsub.s32 %v1406, %v1408
  %v1410 = vrot.slane %v686, %v1409
  %v1412 = vunpack.c.l.s4 839922192
  %v1413 = vunpack.c.0.s8 %v1412
  %v1414 = vlaneseq
  %v1415 = vshrl.u32 %v1414, 7
  %v1416 = vsub.s32 %v1413, %v1415
  %v1417 = vrot.slane %v687, %v1416
  %v1419 = vunpack.c.l.s4 1985246804
  %v1420 = vunpack.c.0.s8 %v1419
  %v1421 = vlaneseq
  %v1422 = vshrl.u32 %v1421, 7
  %v1423 = vsub.s32 %v1420, %v1422
  %v1424 = vrot.slane %v687, %v1423
  %v1426 = vunpack.c.l.s4 839922192
  %v1427 = vunpack.c.0.s8 %v1426
  %v1428 = vlaneseq
  %v1429 = vshrl.u32 %v1428, 7
  %v1430 = vsub.s32 %v1427, %v1429
  %v1431 = vrot.slane %v688, %v1430
  %v1433 = vunpack.c.l.s4 1985246804
  %v1434 = vunpack.c.0.s8 %v1433
  %v1435 = vlaneseq
  %v1436 = vshrl.u32 %v1435, 7
  %v1437 = vsub.s32 %v1434, %v1436
  %v1438 = vrot.slane %v688, %v1437
  %v1440 = vunpack.c.l.s4 839922192
  %v1441 = vunpack.c.0.s8 %v1440
  %v1442 = vlaneseq
  %v1443 = vshrl.u32 %v1442, 7
  %v1444 = vsub.s32 %v1441, %v1443
  %v1445 = vrot.slane %v689, %v1444
  %v1447 = vunpack.c.l.s4 1985246804
  %v1448 = vunpack.c.0.s8 %v1447
  %v1449 = vlaneseq
  %v1450 = vshrl.u32 %v1449, 7
  %v1451 = vsub.s32 %v1448, %v1450
  %v1452 = vrot.slane %v689, %v1451
  %v1454 = vunpack.c.l.s4 839922192
  %v1455 = vunpack.c.0.s8 %v1454
  %v1456 = vlaneseq
  %v1457 = vshrl.u32 %v1456, 7
  %v1458 = vsub.s32 %v1455, %v1457
  %v1459 = vrot.slane %v690, %v1458
  %v1461 = vunpack.c.l.s4 1985246804
  %v1462 = vunpack.c.0.s8 %v1461
  %v1463 = vlaneseq
  %v1464 = vshrl.u32 %v1463, 7
  %v1465 = vsub.s32 %v1462, %v1464
  %v1466 = vrot.slane %v690, %v1465
  %v1468 = vunpack.c.l.s4 839922192
  %v1469 = vunpack.c.0.s8 %v1468
  %v1470 = vlaneseq
  %v1471 = vshrl.u32 %v1470, 7
  %v1472 = vsub.s32 %v1469, %v1471
  %v1473 = vrot.slane %v691, %v1472
  %v1475 = vunpack.c.l.s4 1985246804
  %v1476 = vunpack.c.0.s8 %v1475
  %v1477 = vlaneseq
  %v1478 = vshrl.u32 %v1477, 7
  %v1479 = vsub.s32 %v1476, %v1478
  %v1480 = vrot.slane %v691, %v1479
  %v1482 = vunpack.c.l.s4 839922192
  %v1483 = vunpack.c.0.s8 %v1482
  %v1484 = vlaneseq
  %v1485 = vshrl.u32 %v1484, 7
  %v1486 = vsub.s32 %v1483, %v1485
  %v1487 = vrot.slane %v692, %v1486
  %v1489 = vunpack.c.l.s4 1985246804
  %v1490 = vunpack.c.0.s8 %v1489
  %v1491 = vlaneseq
  %v1492 = vshrl.u32 %v1491, 7
  %v1493 = vsub.s32 %v1490, %v1492
  %v1494 = vrot.slane %v692, %v1493
  %v1496 = vunpack.c.l.s4 839922192
  %v1497 = vunpack.c.0.s8 %v1496
  %v1498 = vlaneseq
  %v1499 = vshrl.u32 %v1498, 7
  %v1500 = vsub.s32 %v1497, %v1499
  %v1501 = vrot.slane %v693, %v1500
  %v1503 = vunpack.c.l.s4 1985246804
  %v1504 = vunpack.c.0.s8 %v1503
  %v1505 = vlaneseq
  %v1506 = vshrl.u32 %v1505, 7
  %v1507 = vsub.s32 %v1504, %v1506
  %v1508 = vrot.slane %v693, %v1507
  %v1510 = vunpack.c.l.s4 839922192
  %v1511 = vunpack.c.0.s8 %v1510
  %v1512 = vlaneseq
  %v1513 = vshrl.u32 %v1512, 7
  %v1514 = vsub.s32 %v1511, %v1513
  %v1515 = vrot.slane %v694, %v1514
  %v1517 = vunpack.c.l.s4 1985246804
  %v1518 = vunpack.c.0.s8 %v1517
  %v1519 = vlaneseq
  %v1520 = vshrl.u32 %v1519, 7
  %v1521 = vsub.s32 %v1518, %v1520
  %v1522 = vrot.slane %v694, %v1521
  %v1524 = vunpack.c.l.s4 839922192
  %v1525 = vunpack.c.0.s8 %v1524
  %v1526 = vlaneseq
  %v1527 = vshrl.u32 %v1526, 7
  %v1528 = vsub.s32 %v1525, %v1527
  %v1529 = vrot.slane %v695, %v1528
  %v1531 = vunpack.c.l.s4 1985246804
  %v1532 = vunpack.c.0.s8 %v1531
  %v1533 = vlaneseq
  %v1534 = vshrl.u32 %v1533, 7
  %v1535 = vsub.s32 %v1532, %v1534
  %v1536 = vrot.slane %v695, %v1535
  %v1538 = vunpack.c.l.s4 839922192
  %v1539 = vunpack.c.0.s8 %v1538
  %v1540 = vlaneseq
  %v1541 = vshrl.u32 %v1540, 7
  %v1542 = vsub.s32 %v1539, %v1541
  %v1543 = vrot.slane %v696, %v1542
  %v1545 = vunpack.c.l.s4 1985246804
  %v1546 = vunpack.c.0.s8 %v1545
  %v1547 = vlaneseq
  %v1548 = vshrl.u32 %v1547, 7
  %v1549 = vsub.s32 %v1546, %v1548
  %v1550 = vrot.slane %v696, %v1549
  %v1552 = vunpack.c.l.s4 839922192
  %v1553 = vunpack.c.0.s8 %v1552
  %v1554 = vlaneseq
  %v1555 = vshrl.u32 %v1554, 7
  %v1556 = vsub.s32 %v1553, %v1555
  %v1557 = vrot.slane %v697, %v1556
  %v1559 = vunpack.c.l.s4 1985246804
  %v1560 = vunpack.c.0.s8 %v1559
  %v1561 = vlaneseq
  %v1562 = vshrl.u32 %v1561, 7
  %v1563 = vsub.s32 %v1560, %v1562
  %v1564 = vrot.slane %v697, %v1563
  %v1566 = vunpack.c.l.s4 839922192
  %v1567 = vunpack.c.0.s8 %v1566
  %v1568 = vlaneseq
  %v1569 = vshrl.u32 %v1568, 7
  %v1570 = vsub.s32 %v1567, %v1569
  %v1571 = vrot.slane %v698, %v1570
  %v1573 = vunpack.c.l.s4 1985246804
  %v1574 = vunpack.c.0.s8 %v1573
  %v1575 = vlaneseq
  %v1576 = vshrl.u32 %v1575, 7
  %v1577 = vsub.s32 %v1574, %v1576
  %v1578 = vrot.slane %v698, %v1577
  %v1580 = vunpack.c.l.s4 839922192
  %v1581 = vunpack.c.0.s8 %v1580
  %v1582 = vlaneseq
  %v1583 = vshrl.u32 %v1582, 7
  %v1584 = vsub.s32 %v1581, %v1583
  %v1585 = vrot.slane %v699, %v1584
  %v1587 = vunpack.c.l.s4 1985246804
  %v1588 = vunpack.c.0.s8 %v1587
  %v1589 = vlaneseq
  %v1590 = vshrl.u32 %v1589, 7
  %v1591 = vsub.s32 %v1588, %v1590
  %v1592 = vrot.slane %v699, %v1591
  %v1594 = vunpack.c.l.s4 839922192
  %v1595 = vunpack.c.0.s8 %v1594
  %v1596 = vlaneseq
  %v1597 = vshrl.u32 %v1596, 7
  %v1598 = vsub.s32 %v1595, %v1597
  %v1599 = vrot.slane %v700, %v1598
  %v1601 = vunpack.c.l.s4 1985246804
  %v1602 = vunpack.c.0.s8 %v1601
  %v1603 = vlaneseq
  %v1604 = vshrl.u32 %v1603, 7
  %v1605 = vsub.s32 %v1602, %v1604
  %v1606 = vrot.slane %v700, %v1605
  %v1608 = vunpack.c.l.s4 839922192
  %v1609 = vunpack.c.0.s8 %v1608
  %v1610 = vlaneseq
  %v1611 = vshrl.u32 %v1610, 7
  %v1612 = vsub.s32 %v1609, %v1611
  %v1613 = vrot.slane %v701, %v1612
  %v1615 = vunpack.c.l.s4 1985246804
  %v1616 = vunpack.c.0.s8 %v1615
  %v1617 = vlaneseq
  %v1618 = vshrl.u32 %v1617, 7
  %v1619 = vsub.s32 %v1616, %v1618
  %v1620 = vrot.slane %v701, %v1619
  %v1622 = vunpack.c.l.s4 839922192
  %v1623 = vunpack.c.0.s8 %v1622
  %v1624 = vlaneseq
  %v1625 = vshrl.u32 %v1624, 7
  %v1626 = vsub.s32 %v1623, %v1625
  %v1627 = vrot.slane %v702, %v1626
  %v1629 = vunpack.c.l.s4 1985246804
  %v1630 = vunpack.c.0.s8 %v1629
  %v1631 = vlaneseq
  %v1632 = vshrl.u32 %v1631, 7
  %v1633 = vsub.s32 %v1630, %v1632
  %v1634 = vrot.slane %v702, %v1633
  %v1636 = vunpack.c.l.s4 839922192
  %v1637 = vunpack.c.0.s8 %v1636
  %v1638 = vlaneseq
  %v1639 = vshrl.u32 %v1638, 7
  %v1640 = vsub.s32 %v1637, %v1639
  %v1641 = vrot.slane %v703, %v1640
  %v1643 = vunpack.c.l.s4 1985246804
  %v1644 = vunpack.c.0.s8 %v1643
  %v1645 = vlaneseq
  %v1646 = vshrl.u32 %v1645, 7
  %v1647 = vsub.s32 %v1644, %v1646
  %v1648 = vrot.slane %v703, %v1647
  %v1650 = vunpack.c.l.s4 839922192
  %v1651 = vunpack.c.0.s8 %v1650
  %v1652 = vlaneseq
  %v1653 = vshrl.u32 %v1652, 7
  %v1654 = vsub.s32 %v1651, %v1653
  %v1655 = vrot.slane %v704, %v1654
  %v1657 = vunpack.c.l.s4 1985246804
  %v1658 = vunpack.c.0.s8 %v1657
  %v1659 = vlaneseq
  %v1660 = vshrl.u32 %v1659, 7
  %v1661 = vsub.s32 %v1658, %v1660
  %v1662 = vrot.slane %v704, %v1661
  %v1664 = vunpack.c.l.s4 839922192
  %v1665 = vunpack.c.0.s8 %v1664
  %v1666 = vlaneseq
  %v1667 = vshrl.u32 %v1666, 7
  %v1668 = vsub.s32 %v1665, %v1667
  %v1669 = vrot.slane %v705, %v1668
  %v1671 = vunpack.c.l.s4 1985246804
  %v1672 = vunpack.c.0.s8 %v1671
  %v1673 = vlaneseq
  %v1674 = vshrl.u32 %v1673, 7
  %v1675 = vsub.s32 %v1672, %v1674
  %v1676 = vrot.slane %v705, %v1675
  %v1678 = vunpack.c.l.s4 839922192
  %v1679 = vunpack.c.0.s8 %v1678
  %v1680 = vlaneseq
  %v1681 = vshrl.u32 %v1680, 7
  %v1682 = vsub.s32 %v1679, %v1681
  %v1683 = vrot.slane %v706, %v1682
  %v1685 = vunpack.c.l.s4 1985246804
  %v1686 = vunpack.c.0.s8 %v1685
  %v1687 = vlaneseq
  %v1688 = vshrl.u32 %v1687, 7
  %v1689 = vsub.s32 %v1686, %v1688
  %v1690 = vrot.slane %v706, %v1689
  %v1692 = vunpack.c.l.s4 839922192
  %v1693 = vunpack.c.0.s8 %v1692
  %v1694 = vlaneseq
  %v1695 = vshrl.u32 %v1694, 7
  %v1696 = vsub.s32 %v1693, %v1695
  %v1697 = vrot.slane %v707, %v1696
  %v1699 = vunpack.c.l.s4 1985246804
  %v1700 = vunpack.c.0.s8 %v1699
  %v1701 = vlaneseq
  %v1702 = vshrl.u32 %v1701, 7
  %v1703 = vsub.s32 %v1700, %v1702
  %v1704 = vrot.slane %v707, %v1703
  %v1706 = vunpack.c.l.s4 839922192
  %v1707 = vunpack.c.0.s8 %v1706
  %v1708 = vlaneseq
  %v1709 = vshrl.u32 %v1708, 7
  %v1710 = vsub.s32 %v1707, %v1709
  %v1711 = vrot.slane %v708, %v1710
  %v1713 = vunpack.c.l.s4 1985246804
  %v1714 = vunpack.c.0.s8 %v1713
  %v1715 = vlaneseq
  %v1716 = vshrl.u32 %v1715, 7
  %v1717 = vsub.s32 %v1714, %v1716
  %v1718 = vrot.slane %v708, %v1717
  %v1720 = vunpack.c.l.s4 839922192
  %v1721 = vunpack.c.0.s8 %v1720
  %v1722 = vlaneseq
  %v1723 = vshrl.u32 %v1722, 7
  %v1724 = vsub.s32 %v1721, %v1723
  %v1725 = vrot.slane %v709, %v1724
  %v1727 = vunpack.c.l.s4 1985246804
  %v1728 = vunpack.c.0.s8 %v1727
  %v1729 = vlaneseq
  %v1730 = vshrl.u32 %v1729, 7
  %v1731 = vsub.s32 %v1728, %v1730
  %v1732 = vrot.slane %v709, %v1731
  %v1734 = vunpack.c.l.s4 839922192
  %v1735 = vunpack.c.0.s8 %v1734
  %v1736 = vlaneseq
  %v1737 = vshrl.u32 %v1736, 7
  %v1738 = vsub.s32 %v1735, %v1737
  %v1739 = vrot.slane %v710, %v1738
  %v1741 = vunpack.c.l.s4 1985246804
  %v1742 = vunpack.c.0.s8 %v1741
  %v1743 = vlaneseq
  %v1744 = vshrl.u32 %v1743, 7
  %v1745 = vsub.s32 %v1742, %v1744
  %v1746 = vrot.slane %v710, %v1745
  %v1748 = vunpack.c.l.s4 839922192
  %v1749 = vunpack.c.0.s8 %v1748
  %v1750 = vlaneseq
  %v1751 = vshrl.u32 %v1750, 7
  %v1752 = vsub.s32 %v1749, %v1751
  %v1753 = vrot.slane %v711, %v1752
  %v1755 = vunpack.c.l.s4 1985246804
  %v1756 = vunpack.c.0.s8 %v1755
  %v1757 = vlaneseq
  %v1758 = vshrl.u32 %v1757, 7
  %v1759 = vsub.s32 %v1756, %v1758
  %v1760 = vrot.slane %v711, %v1759
  %v1762 = vunpack.c.l.s4 839922192
  %v1763 = vunpack.c.0.s8 %v1762
  %v1764 = vlaneseq
  %v1765 = vshrl.u32 %v1764, 7
  %v1766 = vsub.s32 %v1763, %v1765
  %v1767 = vrot.slane %v712, %v1766
  %v1769 = vunpack.c.l.s4 1985246804
  %v1770 = vunpack.c.0.s8 %v1769
  %v1771 = vlaneseq
  %v1772 = vshrl.u32 %v1771, 7
  %v1773 = vsub.s32 %v1770, %v1772
  %v1774 = vrot.slane %v712, %v1773
  %v1776 = vunpack.c.l.s4 839922192
  %v1777 = vunpack.c.0.s8 %v1776
  %v1778 = vlaneseq
  %v1779 = vshrl.u32 %v1778, 7
  %v1780 = vsub.s32 %v1777, %v1779
  %v1781 = vrot.slane %v713, %v1780
  %v1783 = vunpack.c.l.s4 1985246804
  %v1784 = vunpack.c.0.s8 %v1783
  %v1785 = vlaneseq
  %v1786 = vshrl.u32 %v1785, 7
  %v1787 = vsub.s32 %v1784, %v1786
  %v1788 = vrot.slane %v713, %v1787
  %v1790 = vunpack.c.l.s4 839922192
  %v1791 = vunpack.c.0.s8 %v1790
  %v1792 = vlaneseq
  %v1793 = vshrl.u32 %v1792, 7
  %v1794 = vsub.s32 %v1791, %v1793
  %v1795 = vrot.slane %v714, %v1794
  %v1797 = vunpack.c.l.s4 1985246804
  %v1798 = vunpack.c.0.s8 %v1797
  %v1799 = vlaneseq
  %v1800 = vshrl.u32 %v1799, 7
  %v1801 = vsub.s32 %v1798, %v1800
  %v1802 = vrot.slane %v714, %v1801
  %v1804 = vunpack.c.l.s4 839922192
  %v1805 = vunpack.c.0.s8 %v1804
  %v1806 = vlaneseq
  %v1807 = vshrl.u32 %v1806, 7
  %v1808 = vsub.s32 %v1805, %v1807
  %v1809 = vrot.slane %v715, %v1808
  %v1811 = vunpack.c.l.s4 1985246804
  %v1812 = vunpack.c.0.s8 %v1811
  %v1813 = vlaneseq
  %v1814 = vshrl.u32 %v1813, 7
  %v1815 = vsub.s32 %v1812, %v1814
  %v1816 = vrot.slane %v715, %v1815
  %v1818 = vunpack.c.l.s4 839922192
  %v1819 = vunpack.c.0.s8 %v1818
  %v1820 = vlaneseq
  %v1821 = vshrl.u32 %v1820, 7
  %v1822 = vsub.s32 %v1819, %v1821
  %v1823 = vrot.slane %v716, %v1822
  %v1825 = vunpack.c.l.s4 1985246804
  %v1826 = vunpack.c.0.s8 %v1825
  %v1827 = vlaneseq
  %v1828 = vshrl.u32 %v1827, 7
  %v1829 = vsub.s32 %v1826, %v1828
  %v1830 = vrot.slane %v716, %v1829
  %v1832 = vunpack.c.l.s4 839922192
  %v1833 = vunpack.c.0.s8 %v1832
  %v1834 = vlaneseq
  %v1835 = vshrl.u32 %v1834, 7
  %v1836 = vsub.s32 %v1833, %v1835
  %v1837 = vrot.slane %v717, %v1836
  %v1839 = vunpack.c.l.s4 1985246804
  %v1840 = vunpack.c.0.s8 %v1839
  %v1841 = vlaneseq
  %v1842 = vshrl.u32 %v1841, 7
  %v1843 = vsub.s32 %v1840, %v1842
  %v1844 = vrot.slane %v717, %v1843
  %v1846 = vunpack.c.l.s4 839922192
  %v1847 = vunpack.c.0.s8 %v1846
  %v1848 = vlaneseq
  %v1849 = vshrl.u32 %v1848, 7
  %v1850 = vsub.s32 %v1847, %v1849
  %v1851 = vrot.slane %v718, %v1850
  %v1853 = vunpack.c.l.s4 1985246804
  %v1854 = vunpack.c.0.s8 %v1853
  %v1855 = vlaneseq
  %v1856 = vshrl.u32 %v1855, 7
  %v1857 = vsub.s32 %v1854, %v1856
  %v1858 = vrot.slane %v718, %v1857
  %v1860 = vunpack.c.l.s4 839922192
  %v1861 = vunpack.c.0.s8 %v1860
  %v1862 = vlaneseq
  %v1863 = vshrl.u32 %v1862, 7
  %v1864 = vsub.s32 %v1861, %v1863
  %v1865 = vrot.slane %v719, %v1864
  %v1867 = vunpack.c.l.s4 1985246804
  %v1868 = vunpack.c.0.s8 %v1867
  %v1869 = vlaneseq
  %v1870 = vshrl.u32 %v1869, 7
  %v1871 = vsub.s32 %v1868, %v1870
  %v1872 = vrot.slane %v719, %v1871
  %v1874 = vunpack.c.l.s4 839922192
  %v1875 = vunpack.c.0.s8 %v1874
  %v1876 = vlaneseq
  %v1877 = vshrl.u32 %v1876, 7
  %v1878 = vsub.s32 %v1875, %v1877
  %v1879 = vrot.slane %v720, %v1878
  %v1881 = vunpack.c.l.s4 1985246804
  %v1882 = vunpack.c.0.s8 %v1881
  %v1883 = vlaneseq
  %v1884 = vshrl.u32 %v1883, 7
  %v1885 = vsub.s32 %v1882, %v1884
  %v1886 = vrot.slane %v720, %v1885
  %v1888 = vunpack.c.l.s4 839922192
  %v1889 = vunpack.c.0.s8 %v1888
  %v1890 = vlaneseq
  %v1891 = vshrl.u32 %v1890, 7
  %v1892 = vsub.s32 %v1889, %v1891
  %v1893 = vrot.slane %v721, %v1892
  %v1895 = vunpack.c.l.s4 1985246804
  %v1896 = vunpack.c.0.s8 %v1895
  %v1897 = vlaneseq
  %v1898 = vshrl.u32 %v1897, 7
  %v1899 = vsub.s32 %v1896, %v1898
  %v1900 = vrot.slane %v721, %v1899
  %v1902 = vunpack.c.l.s4 839922192
  %v1903 = vunpack.c.0.s8 %v1902
  %v1904 = vlaneseq
  %v1905 = vshrl.u32 %v1904, 7
  %v1906 = vsub.s32 %v1903, %v1905
  %v1907 = vrot.slane %v722, %v1906
  %v1909 = vunpack.c.l.s4 1985246804
  %v1910 = vunpack.c.0.s8 %v1909
  %v1911 = vlaneseq
  %v1912 = vshrl.u32 %v1911, 7
  %v1913 = vsub.s32 %v1910, %v1912
  %v1914 = vrot.slane %v722, %v1913
  %v1916 = vunpack.c.l.s4 839922192
  %v1917 = vunpack.c.0.s8 %v1916
  %v1918 = vlaneseq
  %v1919 = vshrl.u32 %v1918, 7
  %v1920 = vsub.s32 %v1917, %v1919
  %v1921 = vrot.slane %v723, %v1920
  %v1923 = vunpack.c.l.s4 1985246804
  %v1924 = vunpack.c.0.s8 %v1923
  %v1925 = vlaneseq
  %v1926 = vshrl.u32 %v1925, 7
  %v1927 = vsub.s32 %v1924, %v1926
  %v1928 = vrot.slane %v723, %v1927
  %v1930 = vunpack.c.l.s4 839922192
  %v1931 = vunpack.c.0.s8 %v1930
  %v1932 = vlaneseq
  %v1933 = vshrl.u32 %v1932, 7
  %v1934 = vsub.s32 %v1931, %v1933
  %v1935 = vrot.slane %v724, %v1934
  %v1937 = vunpack.c.l.s4 1985246804
  %v1938 = vunpack.c.0.s8 %v1937
  %v1939 = vlaneseq
  %v1940 = vshrl.u32 %v1939, 7
  %v1941 = vsub.s32 %v1938, %v1940
  %v1942 = vrot.slane %v724, %v1941
  %v1944 = vunpack.c.l.s4 839922192
  %v1945 = vunpack.c.0.s8 %v1944
  %v1946 = vlaneseq
  %v1947 = vshrl.u32 %v1946, 7
  %v1948 = vsub.s32 %v1945, %v1947
  %v1949 = vrot.slane %v725, %v1948
  %v1951 = vunpack.c.l.s4 1985246804
  %v1952 = vunpack.c.0.s8 %v1951
  %v1953 = vlaneseq
  %v1954 = vshrl.u32 %v1953, 7
  %v1955 = vsub.s32 %v1952, %v1954
  %v1956 = vrot.slane %v725, %v1955
  %v1958 = vunpack.c.l.s4 839922192
  %v1959 = vunpack.c.0.s8 %v1958
  %v1960 = vlaneseq
  %v1961 = vshrl.u32 %v1960, 7
  %v1962 = vsub.s32 %v1959, %v1961
  %v1963 = vrot.slane %v726, %v1962
  %v1965 = vunpack.c.l.s4 1985246804
  %v1966 = vunpack.c.0.s8 %v1965
  %v1967 = vlaneseq
  %v1968 = vshrl.u32 %v1967, 7
  %v1969 = vsub.s32 %v1966, %v1968
  %v1970 = vrot.slane %v726, %v1969
  %v1972 = vunpack.c.l.s4 839922192
  %v1973 = vunpack.c.0.s8 %v1972
  %v1974 = vlaneseq
  %v1975 = vshrl.u32 %v1974, 7
  %v1976 = vsub.s32 %v1973, %v1975
  %v1977 = vrot.slane %v727, %v1976
  %v1979 = vunpack.c.l.s4 1985246804
  %v1980 = vunpack.c.0.s8 %v1979
  %v1981 = vlaneseq
  %v1982 = vshrl.u32 %v1981, 7
  %v1983 = vsub.s32 %v1980, %v1982
  %v1984 = vrot.slane %v727, %v1983
  %v1986 = vunpack.c.l.s4 839922192
  %v1987 = vunpack.c.0.s8 %v1986
  %v1988 = vlaneseq
  %v1989 = vshrl.u32 %v1988, 7
  %v1990 = vsub.s32 %v1987, %v1989
  %v1991 = vrot.slane %v728, %v1990
  %v1993 = vunpack.c.l.s4 1985246804
  %v1994 = vunpack.c.0.s8 %v1993
  %v1995 = vlaneseq
  %v1996 = vshrl.u32 %v1995, 7
  %v1997 = vsub.s32 %v1994, %v1996
  %v1998 = vrot.slane %v728, %v1997
  %v2000 = vunpack.c.l.s4 839922192
  %v2001 = vunpack.c.0.s8 %v2000
  %v2002 = vlaneseq
  %v2003 = vshrl.u32 %v2002, 7
  %v2004 = vsub.s32 %v2001, %v2003
  %v2005 = vrot.slane %v729, %v2004
  %v2007 = vunpack.c.l.s4 1985246804
  %v2008 = vunpack.c.0.s8 %v2007
  %v2009 = vlaneseq
  %v2010 = vshrl.u32 %v2009, 7
  %v2011 = vsub.s32 %v2008, %v2010
  %v2012 = vrot.slane %v729, %v2011
  %v2014 = vunpack.c.l.s4 839922192
  %v2015 = vunpack.c.0.s8 %v2014
  %v2016 = vlaneseq
  %v2017 = vshrl.u32 %v2016, 7
  %v2018 = vsub.s32 %v2015, %v2017
  %v2019 = vrot.slane %v730, %v2018
  %v2021 = vunpack.c.l.s4 1985246804
  %v2022 = vunpack.c.0.s8 %v2021
  %v2023 = vlaneseq
  %v2024 = vshrl.u32 %v2023, 7
  %v2025 = vsub.s32 %v2022, %v2024
  %v2026 = vrot.slane %v730, %v2025
  %v2028 = vunpack.c.l.s4 839922192
  %v2029 = vunpack.c.0.s8 %v2028
  %v2030 = vlaneseq
  %v2031 = vshrl.u32 %v2030, 7
  %v2032 = vsub.s32 %v2029, %v2031
  %v2033 = vrot.slane %v731, %v2032
  %v2035 = vunpack.c.l.s4 1985246804
  %v2036 = vunpack.c.0.s8 %v2035
  %v2037 = vlaneseq
  %v2038 = vshrl.u32 %v2037, 7
  %v2039 = vsub.s32 %v2036, %v2038
  %v2040 = vrot.slane %v731, %v2039
  %v2042 = vunpack.c.l.s4 839922192
  %v2043 = vunpack.c.0.s8 %v2042
  %v2044 = vlaneseq
  %v2045 = vshrl.u32 %v2044, 7
  %v2046 = vsub.s32 %v2043, %v2045
  %v2047 = vrot.slane %v732, %v2046
  %v2049 = vunpack.c.l.s4 1985246804
  %v2050 = vunpack.c.0.s8 %v2049
  %v2051 = vlaneseq
  %v2052 = vshrl.u32 %v2051, 7
  %v2053 = vsub.s32 %v2050, %v2052
  %v2054 = vrot.slane %v732, %v2053
  %v2056 = vunpack.c.l.s4 839922192
  %v2057 = vunpack.c.0.s8 %v2056
  %v2058 = vlaneseq
  %v2059 = vshrl.u32 %v2058, 7
  %v2060 = vsub.s32 %v2057, %v2059
  %v2061 = vrot.slane %v733, %v2060
  %v2063 = vunpack.c.l.s4 1985246804
  %v2064 = vunpack.c.0.s8 %v2063
  %v2065 = vlaneseq
  %v2066 = vshrl.u32 %v2065, 7
  %v2067 = vsub.s32 %v2064, %v2066
  %v2068 = vrot.slane %v733, %v2067
  %v2070 = vunpack.c.l.s4 839922192
  %v2071 = vunpack.c.0.s8 %v2070
  %v2072 = vlaneseq
  %v2073 = vshrl.u32 %v2072, 7
  %v2074 = vsub.s32 %v2071, %v2073
  %v2075 = vrot.slane %v734, %v2074
  %v2077 = vunpack.c.l.s4 1985246804
  %v2078 = vunpack.c.0.s8 %v2077
  %v2079 = vlaneseq
  %v2080 = vshrl.u32 %v2079, 7
  %v2081 = vsub.s32 %v2078, %v2080
  %v2082 = vrot.slane %v734, %v2081
  %v2084 = vunpack.c.l.s4 839922192
  %v2085 = vunpack.c.0.s8 %v2084
  %v2086 = vlaneseq
  %v2087 = vshrl.u32 %v2086, 7
  %v2088 = vsub.s32 %v2085, %v2087
  %v2089 = vrot.slane %v735, %v2088
  %v2091 = vunpack.c.l.s4 1985246804
  %v2092 = vunpack.c.0.s8 %v2091
  %v2093 = vlaneseq
  %v2094 = vshrl.u32 %v2093, 7
  %v2095 = vsub.s32 %v2092, %v2094
  %v2096 = vrot.slane %v735, %v2095
  %v2098 = vunpack.c.l.s4 839922192
  %v2099 = vunpack.c.0.s8 %v2098
  %v2100 = vlaneseq
  %v2101 = vshrl.u32 %v2100, 7
  %v2102 = vsub.s32 %v2099, %v2101
  %v2103 = vrot.slane %v736, %v2102
  %v2105 = vunpack.c.l.s4 1985246804
  %v2106 = vunpack.c.0.s8 %v2105
  %v2107 = vlaneseq
  %v2108 = vshrl.u32 %v2107, 7
  %v2109 = vsub.s32 %v2106, %v2108
  %v2110 = vrot.slane %v736, %v2109
  %v2112 = vunpack.c.l.s4 839922192
  %v2113 = vunpack.c.0.s8 %v2112
  %v2114 = vlaneseq
  %v2115 = vshrl.u32 %v2114, 7
  %v2116 = vsub.s32 %v2113, %v2115
  %v2117 = vrot.slane %v737, %v2116
  %v2119 = vunpack.c.l.s4 1985246804
  %v2120 = vunpack.c.0.s8 %v2119
  %v2121 = vlaneseq
  %v2122 = vshrl.u32 %v2121, 7
  %v2123 = vsub.s32 %v2120, %v2122
  %v2124 = vrot.slane %v737, %v2123
  %v2126 = vunpack.c.l.s4 839922192
  %v2127 = vunpack.c.0.s8 %v2126
  %v2128 = vlaneseq
  %v2129 = vshrl.u32 %v2128, 7
  %v2130 = vsub.s32 %v2127, %v2129
  %v2131 = vrot.slane %v738, %v2130
  %v2133 = vunpack.c.l.s4 1985246804
  %v2134 = vunpack.c.0.s8 %v2133
  %v2135 = vlaneseq
  %v2136 = vshrl.u32 %v2135, 7
  %v2137 = vsub.s32 %v2134, %v2136
  %v2138 = vrot.slane %v738, %v2137
  %v2140 = vunpack.c.l.s4 839922192
  %v2141 = vunpack.c.0.s8 %v2140
  %v2142 = vlaneseq
  %v2143 = vshrl.u32 %v2142, 7
  %v2144 = vsub.s32 %v2141, %v2143
  %v2145 = vrot.slane %v739, %v2144
  %v2147 = vunpack.c.l.s4 1985246804
  %v2148 = vunpack.c.0.s8 %v2147
  %v2149 = vlaneseq
  %v2150 = vshrl.u32 %v2149, 7
  %v2151 = vsub.s32 %v2148, %v2150
  %v2152 = vrot.slane %v739, %v2151
  %v2154 = vunpack.c.l.s4 839922192
  %v2155 = vunpack.c.0.s8 %v2154
  %v2156 = vlaneseq
  %v2157 = vshrl.u32 %v2156, 7
  %v2158 = vsub.s32 %v2155, %v2157
  %v2159 = vrot.slane %v740, %v2158
  %v2161 = vunpack.c.l.s4 1985246804
  %v2162 = vunpack.c.0.s8 %v2161
  %v2163 = vlaneseq
  %v2164 = vshrl.u32 %v2163, 7
  %v2165 = vsub.s32 %v2162, %v2164
  %v2166 = vrot.slane %v740, %v2165
  %v2168 = vunpack.c.l.s4 839922192
  %v2169 = vunpack.c.0.s8 %v2168
  %v2170 = vlaneseq
  %v2171 = vshrl.u32 %v2170, 7
  %v2172 = vsub.s32 %v2169, %v2171
  %v2173 = vrot.slane %v741, %v2172
  %v2175 = vunpack.c.l.s4 1985246804
  %v2176 = vunpack.c.0.s8 %v2175
  %v2177 = vlaneseq
  %v2178 = vshrl.u32 %v2177, 7
  %v2179 = vsub.s32 %v2176, %v2178
  %v2180 = vrot.slane %v741, %v2179
  %v2182 = vunpack.c.l.s4 839922192
  %v2183 = vunpack.c.0.s8 %v2182
  %v2184 = vlaneseq
  %v2185 = vshrl.u32 %v2184, 7
  %v2186 = vsub.s32 %v2183, %v2185
  %v2187 = vrot.slane %v742, %v2186
  %v2189 = vunpack.c.l.s4 1985246804
  %v2190 = vunpack.c.0.s8 %v2189
  %v2191 = vlaneseq
  %v2192 = vshrl.u32 %v2191, 7
  %v2193 = vsub.s32 %v2190, %v2192
  %v2194 = vrot.slane %v742, %v2193
  %v2196 = vunpack.c.l.s4 839922192
  %v2197 = vunpack.c.0.s8 %v2196
  %v2198 = vlaneseq
  %v2199 = vshrl.u32 %v2198, 7
  %v2200 = vsub.s32 %v2197, %v2199
  %v2201 = vrot.slane %v743, %v2200
  %v2203 = vunpack.c.l.s4 1985246804
  %v2204 = vunpack.c.0.s8 %v2203
  %v2205 = vlaneseq
  %v2206 = vshrl.u32 %v2205, 7
  %v2207 = vsub.s32 %v2204, %v2206
  %v2208 = vrot.slane %v743, %v2207
  %v2210 = vunpack.c.l.s4 839922192
  %v2211 = vunpack.c.0.s8 %v2210
  %v2212 = vlaneseq
  %v2213 = vshrl.u32 %v2212, 7
  %v2214 = vsub.s32 %v2211, %v2213
  %v2215 = vrot.slane %v744, %v2214
  %v2217 = vunpack.c.l.s4 1985246804
  %v2218 = vunpack.c.0.s8 %v2217
  %v2219 = vlaneseq
  %v2220 = vshrl.u32 %v2219, 7
  %v2221 = vsub.s32 %v2218, %v2220
  %v2222 = vrot.slane %v744, %v2221
  %v2224 = vunpack.c.l.s4 839922192
  %v2225 = vunpack.c.0.s8 %v2224
  %v2226 = vlaneseq
  %v2227 = vshrl.u32 %v2226, 7
  %v2228 = vsub.s32 %v2225, %v2227
  %v2229 = vrot.slane %v745, %v2228
  %v2231 = vunpack.c.l.s4 1985246804
  %v2232 = vunpack.c.0.s8 %v2231
  %v2233 = vlaneseq
  %v2234 = vshrl.u32 %v2233, 7
  %v2235 = vsub.s32 %v2232, %v2234
  %v2236 = vrot.slane %v745, %v2235
  %v2238 = vunpack.c.l.s4 839922192
  %v2239 = vunpack.c.0.s8 %v2238
  %v2240 = vlaneseq
  %v2241 = vshrl.u32 %v2240, 7
  %v2242 = vsub.s32 %v2239, %v2241
  %v2243 = vrot.slane %v746, %v2242
  %v2245 = vunpack.c.l.s4 1985246804
  %v2246 = vunpack.c.0.s8 %v2245
  %v2247 = vlaneseq
  %v2248 = vshrl.u32 %v2247, 7
  %v2249 = vsub.s32 %v2246, %v2248
  %v2250 = vrot.slane %v746, %v2249
  %v2252 = vunpack.c.l.s4 839922192
  %v2253 = vunpack.c.0.s8 %v2252
  %v2254 = vlaneseq
  %v2255 = vshrl.u32 %v2254, 7
  %v2256 = vsub.s32 %v2253, %v2255
  %v2257 = vrot.slane %v747, %v2256
  %v2259 = vunpack.c.l.s4 1985246804
  %v2260 = vunpack.c.0.s8 %v2259
  %v2261 = vlaneseq
  %v2262 = vshrl.u32 %v2261, 7
  %v2263 = vsub.s32 %v2260, %v2262
  %v2264 = vrot.slane %v747, %v2263
  %v2266 = vunpack.c.l.s4 839922192
  %v2267 = vunpack.c.0.s8 %v2266
  %v2268 = vlaneseq
  %v2269 = vshrl.u32 %v2268, 7
  %v2270 = vsub.s32 %v2267, %v2269
  %v2271 = vrot.slane %v748, %v2270
  %v2273 = vunpack.c.l.s4 1985246804
  %v2274 = vunpack.c.0.s8 %v2273
  %v2275 = vlaneseq
  %v2276 = vshrl.u32 %v2275, 7
  %v2277 = vsub.s32 %v2274, %v2276
  %v2278 = vrot.slane %v748, %v2277
  %v2280 = vunpack.c.l.s4 839922192
  %v2281 = vunpack.c.0.s8 %v2280
  %v2282 = vlaneseq
  %v2283 = vshrl.u32 %v2282, 7
  %v2284 = vsub.s32 %v2281, %v2283
  %v2285 = vrot.slane %v749, %v2284
  %v2287 = vunpack.c.l.s4 1985246804
  %v2288 = vunpack.c.0.s8 %v2287
  %v2289 = vlaneseq
  %v2290 = vshrl.u32 %v2289, 7
  %v2291 = vsub.s32 %v2288, %v2290
  %v2292 = vrot.slane %v749, %v2291
  %v2294 = vunpack.c.l.s4 839922192
  %v2295 = vunpack.c.0.s8 %v2294
  %v2296 = vlaneseq
  %v2297 = vshrl.u32 %v2296, 7
  %v2298 = vsub.s32 %v2295, %v2297
  %v2299 = vrot.slane %v750, %v2298
  %v2301 = vunpack.c.l.s4 1985246804
  %v2302 = vunpack.c.0.s8 %v2301
  %v2303 = vlaneseq
  %v2304 = vshrl.u32 %v2303, 7
  %v2305 = vsub.s32 %v2302, %v2304
  %v2306 = vrot.slane %v750, %v2305
  %v2308 = vunpack.c.l.s4 839922192
  %v2309 = vunpack.c.0.s8 %v2308
  %v2310 = vlaneseq
  %v2311 = vshrl.u32 %v2310, 7
  %v2312 = vsub.s32 %v2309, %v2311
  %v2313 = vrot.slane %v751, %v2312
  %v2315 = vunpack.c.l.s4 1985246804
  %v2316 = vunpack.c.0.s8 %v2315
  %v2317 = vlaneseq
  %v2318 = vshrl.u32 %v2317, 7
  %v2319 = vsub.s32 %v2316, %v2318
  %v2320 = vrot.slane %v751, %v2319
  %v2322 = vunpack.c.l.s4 839922192
  %v2323 = vunpack.c.0.s8 %v2322
  %v2324 = vlaneseq
  %v2325 = vshrl.u32 %v2324, 7
  %v2326 = vsub.s32 %v2323, %v2325
  %v2327 = vrot.slane %v752, %v2326
  %v2329 = vunpack.c.l.s4 1985246804
  %v2330 = vunpack.c.0.s8 %v2329
  %v2331 = vlaneseq
  %v2332 = vshrl.u32 %v2331, 7
  %v2333 = vsub.s32 %v2330, %v2332
  %v2334 = vrot.slane %v752, %v2333
  %v2336 = vunpack.c.l.s4 839922192
  %v2337 = vunpack.c.0.s8 %v2336
  %v2338 = vlaneseq
  %v2339 = vshrl.u32 %v2338, 7
  %v2340 = vsub.s32 %v2337, %v2339
  %v2341 = vrot.slane %v753, %v2340
  %v2343 = vunpack.c.l.s4 1985246804
  %v2344 = vunpack.c.0.s8 %v2343
  %v2345 = vlaneseq
  %v2346 = vshrl.u32 %v2345, 7
  %v2347 = vsub.s32 %v2344, %v2346
  %v2348 = vrot.slane %v753, %v2347
  %v2350 = vunpack.c.l.s4 839922192
  %v2351 = vunpack.c.0.s8 %v2350
  %v2352 = vlaneseq
  %v2353 = vshrl.u32 %v2352, 7
  %v2354 = vsub.s32 %v2351, %v2353
  %v2355 = vrot.slane %v754, %v2354
  %v2357 = vunpack.c.l.s4 1985246804
  %v2358 = vunpack.c.0.s8 %v2357
  %v2359 = vlaneseq
  %v2360 = vshrl.u32 %v2359, 7
  %v2361 = vsub.s32 %v2358, %v2360
  %v2362 = vrot.slane %v754, %v2361
  %v2364 = vunpack.c.l.s4 839922192
  %v2365 = vunpack.c.0.s8 %v2364
  %v2366 = vlaneseq
  %v2367 = vshrl.u32 %v2366, 7
  %v2368 = vsub.s32 %v2365, %v2367
  %v2369 = vrot.slane %v755, %v2368
  %v2371 = vunpack.c.l.s4 1985246804
  %v2372 = vunpack.c.0.s8 %v2371
  %v2373 = vlaneseq
  %v2374 = vshrl.u32 %v2373, 7
  %v2375 = vsub.s32 %v2372, %v2374
  %v2376 = vrot.slane %v755, %v2375
  %v2378 = vunpack.c.l.s4 839922192
  %v2379 = vunpack.c.0.s8 %v2378
  %v2380 = vlaneseq
  %v2381 = vshrl.u32 %v2380, 7
  %v2382 = vsub.s32 %v2379, %v2381
  %v2383 = vrot.slane %v756, %v2382
  %v2385 = vunpack.c.l.s4 1985246804
  %v2386 = vunpack.c.0.s8 %v2385
  %v2387 = vlaneseq
  %v2388 = vshrl.u32 %v2387, 7
  %v2389 = vsub.s32 %v2386, %v2388
  %v2390 = vrot.slane %v756, %v2389
  %v2392 = vunpack.c.l.s4 839922192
  %v2393 = vunpack.c.0.s8 %v2392
  %v2394 = vlaneseq
  %v2395 = vshrl.u32 %v2394, 7
  %v2396 = vsub.s32 %v2393, %v2395
  %v2397 = vrot.slane %v757, %v2396
  %v2399 = vunpack.c.l.s4 1985246804
  %v2400 = vunpack.c.0.s8 %v2399
  %v2401 = vlaneseq
  %v2402 = vshrl.u32 %v2401, 7
  %v2403 = vsub.s32 %v2400, %v2402
  %v2404 = vrot.slane %v757, %v2403
  %v2406 = vunpack.c.l.s4 839922192
  %v2407 = vunpack.c.0.s8 %v2406
  %v2408 = vlaneseq
  %v2409 = vshrl.u32 %v2408, 7
  %v2410 = vsub.s32 %v2407, %v2409
  %v2411 = vrot.slane %v758, %v2410
  %v2413 = vunpack.c.l.s4 1985246804
  %v2414 = vunpack.c.0.s8 %v2413
  %v2415 = vlaneseq
  %v2416 = vshrl.u32 %v2415, 7
  %v2417 = vsub.s32 %v2414, %v2416
  %v2418 = vrot.slane %v758, %v2417
  %v2420 = vunpack.c.l.s4 839922192
  %v2421 = vunpack.c.0.s8 %v2420
  %v2422 = vlaneseq
  %v2423 = vshrl.u32 %v2422, 7
  %v2424 = vsub.s32 %v2421, %v2423
  %v2425 = vrot.slane %v759, %v2424
  %v2427 = vunpack.c.l.s4 1985246804
  %v2428 = vunpack.c.0.s8 %v2427
  %v2429 = vlaneseq
  %v2430 = vshrl.u32 %v2429, 7
  %v2431 = vsub.s32 %v2428, %v2430
  %v2432 = vrot.slane %v759, %v2431
  %v2434 = vunpack.c.l.s4 839922192
  %v2435 = vunpack.c.0.s8 %v2434
  %v2436 = vlaneseq
  %v2437 = vshrl.u32 %v2436, 7
  %v2438 = vsub.s32 %v2435, %v2437
  %v2439 = vrot.slane %v760, %v2438
  %v2441 = vunpack.c.l.s4 1985246804
  %v2442 = vunpack.c.0.s8 %v2441
  %v2443 = vlaneseq
  %v2444 = vshrl.u32 %v2443, 7
  %v2445 = vsub.s32 %v2442, %v2444
  %v2446 = vrot.slane %v760, %v2445
  %v2448 = vunpack.c.l.s4 839922192
  %v2449 = vunpack.c.0.s8 %v2448
  %v2450 = vlaneseq
  %v2451 = vshrl.u32 %v2450, 7
  %v2452 = vsub.s32 %v2449, %v2451
  %v2453 = vrot.slane %v761, %v2452
  %v2455 = vunpack.c.l.s4 1985246804
  %v2456 = vunpack.c.0.s8 %v2455
  %v2457 = vlaneseq
  %v2458 = vshrl.u32 %v2457, 7
  %v2459 = vsub.s32 %v2456, %v2458
  %v2460 = vrot.slane %v761, %v2459
  %v2462 = vunpack.c.l.s4 839922192
  %v2463 = vunpack.c.0.s8 %v2462
  %v2464 = vlaneseq
  %v2465 = vshrl.u32 %v2464, 7
  %v2466 = vsub.s32 %v2463, %v2465
  %v2467 = vrot.slane %v762, %v2466
  %v2469 = vunpack.c.l.s4 1985246804
  %v2470 = vunpack.c.0.s8 %v2469
  %v2471 = vlaneseq
  %v2472 = vshrl.u32 %v2471, 7
  %v2473 = vsub.s32 %v2470, %v2472
  %v2474 = vrot.slane %v762, %v2473
  %v2476 = vunpack.c.l.s4 839922192
  %v2477 = vunpack.c.0.s8 %v2476
  %v2478 = vlaneseq
  %v2479 = vshrl.u32 %v2478, 7
  %v2480 = vsub.s32 %v2477, %v2479
  %v2481 = vrot.slane %v763, %v2480
  %v2483 = vunpack.c.l.s4 1985246804
  %v2484 = vunpack.c.0.s8 %v2483
  %v2485 = vlaneseq
  %v2486 = vshrl.u32 %v2485, 7
  %v2487 = vsub.s32 %v2484, %v2486
  %v2488 = vrot.slane %v763, %v2487
  %v2490 = vunpack.c.l.s4 839922192
  %v2491 = vunpack.c.0.s8 %v2490
  %v2492 = vlaneseq
  %v2493 = vshrl.u32 %v2492, 7
  %v2494 = vsub.s32 %v2491, %v2493
  %v2495 = vrot.slane %v764, %v2494
  %v2497 = vunpack.c.l.s4 1985246804
  %v2498 = vunpack.c.0.s8 %v2497
  %v2499 = vlaneseq
  %v2500 = vshrl.u32 %v2499, 7
  %v2501 = vsub.s32 %v2498, %v2500
  %v2502 = vrot.slane %v764, %v2501
  %v2504 = vunpack.c.l.s4 839922192
  %v2505 = vunpack.c.0.s8 %v2504
  %v2506 = vlaneseq
  %v2507 = vshrl.u32 %v2506, 7
  %v2508 = vsub.s32 %v2505, %v2507
  %v2509 = vrot.slane %v765, %v2508
  %v2511 = vunpack.c.l.s4 1985246804
  %v2512 = vunpack.c.0.s8 %v2511
  %v2513 = vlaneseq
  %v2514 = vshrl.u32 %v2513, 7
  %v2515 = vsub.s32 %v2512, %v2514
  %v2516 = vrot.slane %v765, %v2515
  %v2518 = vunpack.c.l.s4 839922192
  %v2519 = vunpack.c.0.s8 %v2518
  %v2520 = vlaneseq
  %v2521 = vshrl.u32 %v2520, 7
  %v2522 = vsub.s32 %v2519, %v2521
  %v2523 = vrot.slane %v766, %v2522
  %v2525 = vunpack.c.l.s4 1985246804
  %v2526 = vunpack.c.0.s8 %v2525
  %v2527 = vlaneseq
  %v2528 = vshrl.u32 %v2527, 7
  %v2529 = vsub.s32 %v2526, %v2528
  %v2530 = vrot.slane %v766, %v2529
  %v2532 = vunpack.c.l.s4 839922192
  %v2533 = vunpack.c.0.s8 %v2532
  %v2534 = vlaneseq
  %v2535 = vshrl.u32 %v2534, 7
  %v2536 = vsub.s32 %v2533, %v2535
  %v2537 = vrot.slane %v767, %v2536
  %v2539 = vunpack.c.l.s4 1985246804
  %v2540 = vunpack.c.0.s8 %v2539
  %v2541 = vlaneseq
  %v2542 = vshrl.u32 %v2541, 7
  %v2543 = vsub.s32 %v2540, %v2542
  %v2544 = vrot.slane %v767, %v2543
  %v2546 = vunpack.c.l.s4 839922192
  %v2547 = vunpack.c.0.s8 %v2546
  %v2548 = vlaneseq
  %v2549 = vshrl.u32 %v2548, 7
  %v2550 = vsub.s32 %v2547, %v2549
  %v2551 = vrot.slane %v768, %v2550
  %v2553 = vunpack.c.l.s4 1985246804
  %v2554 = vunpack.c.0.s8 %v2553
  %v2555 = vlaneseq
  %v2556 = vshrl.u32 %v2555, 7
  %v2557 = vsub.s32 %v2554, %v2556
  %v2558 = vrot.slane %v768, %v2557
  %v2560 = vunpack.c.l.s4 839922192
  %v2561 = vunpack.c.0.s8 %v2560
  %v2562 = vlaneseq
  %v2563 = vshrl.u32 %v2562, 7
  %v2564 = vsub.s32 %v2561, %v2563
  %v2565 = vrot.slane %v769, %v2564
  %v2567 = vunpack.c.l.s4 1985246804
  %v2568 = vunpack.c.0.s8 %v2567
  %v2569 = vlaneseq
  %v2570 = vshrl.u32 %v2569, 7
  %v2571 = vsub.s32 %v2568, %v2570
  %v2572 = vrot.slane %v769, %v2571
  %v2574 = vunpack.c.l.s4 839922192
  %v2575 = vunpack.c.0.s8 %v2574
  %v2576 = vlaneseq
  %v2577 = vshrl.u32 %v2576, 7
  %v2578 = vsub.s32 %v2575, %v2577
  %v2579 = vrot.slane %v770, %v2578
  %v2581 = vunpack.c.l.s4 1985246804
  %v2582 = vunpack.c.0.s8 %v2581
  %v2583 = vlaneseq
  %v2584 = vshrl.u32 %v2583, 7
  %v2585 = vsub.s32 %v2582, %v2584
  %v2586 = vrot.slane %v770, %v2585
  %v2588 = vunpack.c.l.s4 839922192
  %v2589 = vunpack.c.0.s8 %v2588
  %v2590 = vlaneseq
  %v2591 = vshrl.u32 %v2590, 7
  %v2592 = vsub.s32 %v2589, %v2591
  %v2593 = vrot.slane %v771, %v2592
  %v2595 = vunpack.c.l.s4 1985246804
  %v2596 = vunpack.c.0.s8 %v2595
  %v2597 = vlaneseq
  %v2598 = vshrl.u32 %v2597, 7
  %v2599 = vsub.s32 %v2596, %v2598
  %v2600 = vrot.slane %v771, %v2599
  %v2602 = vunpack.c.l.s4 839922192
  %v2603 = vunpack.c.0.s8 %v2602
  %v2604 = vlaneseq
  %v2605 = vshrl.u32 %v2604, 7
  %v2606 = vsub.s32 %v2603, %v2605
  %v2607 = vrot.slane %v772, %v2606
  %v2609 = vunpack.c.l.s4 1985246804
  %v2610 = vunpack.c.0.s8 %v2609
  %v2611 = vlaneseq
  %v2612 = vshrl.u32 %v2611, 7
  %v2613 = vsub.s32 %v2610, %v2612
  %v2614 = vrot.slane %v772, %v2613
  %v2616 = vunpack.c.l.s4 839922192
  %v2617 = vunpack.c.0.s8 %v2616
  %v2618 = vlaneseq
  %v2619 = vshrl.u32 %v2618, 7
  %v2620 = vsub.s32 %v2617, %v2619
  %v2621 = vrot.slane %v773, %v2620
  %v2623 = vunpack.c.l.s4 1985246804
  %v2624 = vunpack.c.0.s8 %v2623
  %v2625 = vlaneseq
  %v2626 = vshrl.u32 %v2625, 7
  %v2627 = vsub.s32 %v2624, %v2626
  %v2628 = vrot.slane %v773, %v2627
  %v2630 = vunpack.c.l.s4 839922192
  %v2631 = vunpack.c.0.s8 %v2630
  %v2632 = vlaneseq
  %v2633 = vshrl.u32 %v2632, 7
  %v2634 = vsub.s32 %v2631, %v2633
  %v2635 = vrot.slane %v774, %v2634
  %v2637 = vunpack.c.l.s4 1985246804
  %v2638 = vunpack.c.0.s8 %v2637
  %v2639 = vlaneseq
  %v2640 = vshrl.u32 %v2639, 7
  %v2641 = vsub.s32 %v2638, %v2640
  %v2642 = vrot.slane %v774, %v2641
  %v2644 = vunpack.c.l.s4 839922192
  %v2645 = vunpack.c.0.s8 %v2644
  %v2646 = vlaneseq
  %v2647 = vshrl.u32 %v2646, 7
  %v2648 = vsub.s32 %v2645, %v2647
  %v2649 = vrot.slane %v775, %v2648
  %v2651 = vunpack.c.l.s4 1985246804
  %v2652 = vunpack.c.0.s8 %v2651
  %v2653 = vlaneseq
  %v2654 = vshrl.u32 %v2653, 7
  %v2655 = vsub.s32 %v2652, %v2654
  %v2656 = vrot.slane %v775, %v2655
  %v2658 = vunpack.c.l.s4 839922192
  %v2659 = vunpack.c.0.s8 %v2658
  %v2660 = vlaneseq
  %v2661 = vshrl.u32 %v2660, 7
  %v2662 = vsub.s32 %v2659, %v2661
  %v2663 = vrot.slane %v776, %v2662
  %v2665 = vunpack.c.l.s4 1985246804
  %v2666 = vunpack.c.0.s8 %v2665
  %v2667 = vlaneseq
  %v2668 = vshrl.u32 %v2667, 7
  %v2669 = vsub.s32 %v2666, %v2668
  %v2670 = vrot.slane %v776, %v2669
  %v2672 = vunpack.c.l.s4 839922192
  %v2673 = vunpack.c.0.s8 %v2672
  %v2674 = vlaneseq
  %v2675 = vshrl.u32 %v2674, 7
  %v2676 = vsub.s32 %v2673, %v2675
  %v2677 = vrot.slane %v777, %v2676
  %v2679 = vunpack.c.l.s4 1985246804
  %v2680 = vunpack.c.0.s8 %v2679
  %v2681 = vlaneseq
  %v2682 = vshrl.u32 %v2681, 7
  %v2683 = vsub.s32 %v2680, %v2682
  %v2684 = vrot.slane %v777, %v2683
  %v2686 = vunpack.c.l.s4 839922192
  %v2687 = vunpack.c.0.s8 %v2686
  %v2688 = vlaneseq
  %v2689 = vshrl.u32 %v2688, 7
  %v2690 = vsub.s32 %v2687, %v2689
  %v2691 = vrot.slane %v778, %v2690
  %v2693 = vunpack.c.l.s4 1985246804
  %v2694 = vunpack.c.0.s8 %v2693
  %v2695 = vlaneseq
  %v2696 = vshrl.u32 %v2695, 7
  %v2697 = vsub.s32 %v2694, %v2696
  %v2698 = vrot.slane %v778, %v2697
  %v2699 = vcombine.low %v913, %v920
  %v2700 = vcombine.low %v927, %v934
  %v2701 = vcombine.low %v941, %v948
  %v2702 = vcombine.low %v955, %v962
  %v2703 = vcombine.low %v969, %v976
  %v2704 = vcombine.low %v983, %v990
  %v2705 = vcombine.low %v997, %v1004
  %v2706 = vcombine.low %v1011, %v1018
  %v2707 = vcombine.low %v1025, %v1032
  %v2708 = vcombine.low %v1039, %v1046
  %v2709 = vcombine.low %v1053, %v1060
  %v2710 = vcombine.low %v1067, %v1074
  %v2711 = vcombine.low %v1081, %v1088
  %v2712 = vcombine.low %v1095, %v1102
  %v2713 = vcombine.low %v1109, %v1116
  %v2714 = vcombine.low %v1123, %v1130
  %v2715 = vcombine.low %v1137, %v1144
  %v2716 = vcombine.low %v1151, %v1158
  %v2717 = vcombine.low %v1165, %v1172
  %v2718 = vcombine.low %v1179, %v1186
  %v2719 = vcombine.low %v1193, %v1200
  %v2720 = vcombine.low %v1207, %v1214
  %v2721 = vcombine.low %v1221, %v1228
  %v2722 = vcombine.low %v1235, %v1242
  %v2723 = vcombine.low %v1249, %v1256
  %v2724 = vcombine.low %v1263, %v1270
  %v2725 = vcombine.low %v1277, %v1284
  %v2726 = vcombine.low %v1291, %v1298
  %v2727 = vcombine.low %v1305, %v1312
  %v2728 = vcombine.low %v1319, %v1326
  %v2729 = vcombine.low %v1333, %v1340
  %v2730 = vcombine.low %v1347, %v1354
  %v2731 = vcombine.low %v1361, %v1368
  %v2732 = vcombine.low %v1375, %v1382
  %v2733 = vcombine.low %v1389, %v1396
  %v2734 = vcombine.low %v1403, %v1410
  %v2735 = vcombine.low %v1417, %v1424
  %v2736 = vcombine.low %v1431, %v1438
  %v2737 = vcombine.low %v1445, %v1452
  %v2738 = vcombine.low %v1459, %v1466
  %v2739 = vcombine.low %v1473, %v1480
  %v2740 = vcombine.low %v1487, %v1494
  %v2741 = vcombine.low %v1501, %v1508
  %v2742 = vcombine.low %v1515, %v1522
  %v2743 = vcombine.low %v1529, %v1536
  %v2744 = vcombine.low %v1543, %v1550
  %v2745 = vcombine.low %v1557, %v1564
  %v2746 = vcombine.low %v1571, %v1578
  %v2747 = vcombine.low %v1585, %v1592
  %v2748 = vcombine.low %v1599, %v1606
  %v2749 = vcombine.low %v1613, %v1620
  %v2750 = vcombine.low %v1627, %v1634
  %v2751 = vcombine.low %v1641, %v1648
  %v2752 = vcombine.low %v1655, %v1662
  %v2753 = vcombine.low %v1669, %v1676
  %v2754 = vcombine.low %v1683, %v1690
  %v2755 = vcombine.low %v1697, %v1704
  %v2756 = vcombine.low %v1711, %v1718
  %v2757 = vcombine.low %v1725, %v1732
  %v2758 = vcombine.low %v1739, %v1746
  %v2759 = vcombine.low %v1753, %v1760
  %v2760 = vcombine.low %v1767, %v1774
  %v2761 = vcombine.low %v1781, %v1788
  %v2762 = vcombine.low %v1795, %v1802
  %v2763 = vcombine.low %v1809, %v1816
  %v2764 = vcombine.low %v1823, %v1830
  %v2765 = vcombine.low %v1837, %v1844
  %v2766 = vcombine.low %v1851, %v1858
  %v2767 = vcombine.low %v1865, %v1872
  %v2768 = vcombine.low %v1879, %v1886
  %v2769 = vcombine.low %v1893, %v1900
  %v2770 = vcombine.low %v1907, %v1914
  %v2771 = vcombine.low %v1921, %v1928
  %v2772 = vcombine.low %v1935, %v1942
  %v2773 = vcombine.low %v1949, %v1956
  %v2774 = vcombine.low %v1963, %v1970
  %v2775 = vcombine.low %v1977, %v1984
  %v2776 = vcombine.low %v1991, %v1998
  %v2777 = vcombine.low %v2005, %v2012
  %v2778 = vcombine.low %v2019, %v2026
  %v2779 = vcombine.low %v2033, %v2040
  %v2780 = vcombine.low %v2047, %v2054
  %v2781 = vcombine.low %v2061, %v2068
  %v2782 = vcombine.low %v2075, %v2082
  %v2783 = vcombine.low %v2089, %v2096
  %v2784 = vcombine.low %v2103, %v2110
  %v2785 = vcombine.low %v2117, %v2124
  %v2786 = vcombine.low %v2131, %v2138
  %v2787 = vcombine.low %v2145, %v2152
  %v2788 = vcombine.low %v2159, %v2166
  %v2789 = vcombine.low %v2173, %v2180
  %v2790 = vcombine.low %v2187, %v2194
  %v2791 = vcombine.low %v2201, %v2208
  %v2792 = vcombine.low %v2215, %v2222
  %v2793 = vcombine.low %v2229, %v2236
  %v2794 = vcombine.low %v2243, %v2250
  %v2795 = vcombine.low %v2257, %v2264
  %v2796 = vcombine.low %v2271, %v2278
  %v2797 = vcombine.low %v2285, %v2292
  %v2798 = vcombine.low %v2299, %v2306
  %v2799 = vcombine.low %v2313, %v2320
  %v2800 = vcombine.low %v2327, %v2334
  %v2801 = vcombine.low %v2341, %v2348
  %v2802 = vcombine.low %v2355, %v2362
  %v2803 = vcombine.low %v2369, %v2376
  %v2804 = vcombine.low %v2383, %v2390
  %v2805 = vcombine.low %v2397, %v2404
  %v2806 = vcombine.low %v2411, %v2418
  %v2807 = vcombine.low %v2425, %v2432
  %v2808 = vcombine.low %v2439, %v2446
  %v2809 = vcombine.low %v2453, %v2460
  %v2810 = vcombine.low %v2467, %v2474
  %v2811 = vcombine.low %v2481, %v2488
  %v2812 = vcombine.low %v2495, %v2502
  %v2813 = vcombine.low %v2509, %v2516
  %v2814 = vcombine.low %v2523, %v2530
  %v2815 = vcombine.low %v2537, %v2544
  %v2816 = vcombine.low %v2551, %v2558
  %v2817 = vcombine.low %v2565, %v2572
  %v2818 = vcombine.low %v2579, %v2586
  %v2819 = vcombine.low %v2593, %v2600
  %v2820 = vcombine.low %v2607, %v2614
  %v2821 = vcombine.low %v2621, %v2628
  %v2822 = vcombine.low %v2635, %v2642
  %v2823 = vcombine.low %v2649, %v2656
  %v2824 = vcombine.low %v2663, %v2670
  %v2825 = vcombine.low %v2677, %v2684
  %v2826 = vcombine.low %v2691, %v2698
  %2827 = vset.pattern.permute.xlu0 0
  %2828 = vperm.xlu0 %2827, %v2699
  %v2829 = vpop.permute.xlu0 %2828
  %2830 = vset.pattern.permute.xlu0 0
  %2831 = vperm.xlu0 %2830, %v2700
  %v2832 = vpop.permute.xlu0 %2831
  %2833 = vset.pattern.permute.xlu0 0
  %2834 = vperm.xlu0 %2833, %v2701
  %v2835 = vpop.permute.xlu0 %2834
  %2836 = vset.pattern.permute.xlu0 0
  %2837 = vperm.xlu0 %2836, %v2702
  %v2838 = vpop.permute.xlu0 %2837
  %2839 = vset.pattern.permute.xlu0 0
  %2840 = vperm.xlu0 %2839, %v2703
  %v2841 = vpop.permute.xlu0 %2840
  %2842 = vset.pattern.permute.xlu0 0
  %2843 = vperm.xlu0 %2842, %v2704
  %v2844 = vpop.permute.xlu0 %2843
  %2845 = vset.pattern.permute.xlu0 0
  %2846 = vperm.xlu0 %2845, %v2705
  %v2847 = vpop.permute.xlu0 %2846
  %2848 = vset.pattern.permute.xlu0 0
  %2849 = vperm.xlu0 %2848, %v2706
  %v2850 = vpop.permute.xlu0 %2849
  %2851 = vset.pattern.permute.xlu0 0
  %2852 = vperm.xlu0 %2851, %v2707
  %v2853 = vpop.permute.xlu0 %2852
  %2854 = vset.pattern.permute.xlu0 0
  %2855 = vperm.xlu0 %2854, %v2708
  %v2856 = vpop.permute.xlu0 %2855
  %2857 = vset.pattern.permute.xlu0 0
  %2858 = vperm.xlu0 %2857, %v2709
  %v2859 = vpop.permute.xlu0 %2858
  %2860 = vset.pattern.permute.xlu0 0
  %2861 = vperm.xlu0 %2860, %v2710
  %v2862 = vpop.permute.xlu0 %2861
  %2863 = vset.pattern.permute.xlu0 0
  %2864 = vperm.xlu0 %2863, %v2711
  %v2865 = vpop.permute.xlu0 %2864
  %2866 = vset.pattern.permute.xlu0 0
  %2867 = vperm.xlu0 %2866, %v2712
  %v2868 = vpop.permute.xlu0 %2867
  %2869 = vset.pattern.permute.xlu0 0
  %2870 = vperm.xlu0 %2869, %v2713
  %v2871 = vpop.permute.xlu0 %2870
  %2872 = vset.pattern.permute.xlu0 0
  %2873 = vperm.xlu0 %2872, %v2714
  %v2874 = vpop.permute.xlu0 %2873
  %2875 = vset.pattern.permute.xlu0 0
  %2876 = vperm.xlu0 %2875, %v2715
  %v2877 = vpop.permute.xlu0 %2876
  %2878 = vset.pattern.permute.xlu0 0
  %2879 = vperm.xlu0 %2878, %v2716
  %v2880 = vpop.permute.xlu0 %2879
  %2881 = vset.pattern.permute.xlu0 0
  %2882 = vperm.xlu0 %2881, %v2717
  %v2883 = vpop.permute.xlu0 %2882
  %2884 = vset.pattern.permute.xlu0 0
  %2885 = vperm.xlu0 %2884, %v2718
  %v2886 = vpop.permute.xlu0 %2885
  %2887 = vset.pattern.permute.xlu0 0
  %2888 = vperm.xlu0 %2887, %v2719
  %v2889 = vpop.permute.xlu0 %2888
  %2890 = vset.pattern.permute.xlu0 0
  %2891 = vperm.xlu0 %2890, %v2720
  %v2892 = vpop.permute.xlu0 %2891
  %2893 = vset.pattern.permute.xlu0 0
  %2894 = vperm.xlu0 %2893, %v2721
  %v2895 = vpop.permute.xlu0 %2894
  %2896 = vset.pattern.permute.xlu0 0
  %2897 = vperm.xlu0 %2896, %v2722
  %v2898 = vpop.permute.xlu0 %2897
  %2899 = vset.pattern.permute.xlu0 0
  %2900 = vperm.xlu0 %2899, %v2723
  %v2901 = vpop.permute.xlu0 %2900
  %2902 = vset.pattern.permute.xlu0 0
  %2903 = vperm.xlu0 %2902, %v2724
  %v2904 = vpop.permute.xlu0 %2903
  %2905 = vset.pattern.permute.xlu0 0
  %2906 = vperm.xlu0 %2905, %v2725
  %v2907 = vpop.permute.xlu0 %2906
  %2908 = vset.pattern.permute.xlu0 0
  %2909 = vperm.xlu0 %2908, %v2726
  %v2910 = vpop.permute.xlu0 %2909
  %2911 = vset.pattern.permute.xlu0 0
  %2912 = vperm.xlu0 %2911, %v2727
  %v2913 = vpop.permute.xlu0 %2912
  %2914 = vset.pattern.permute.xlu0 0
  %2915 = vperm.xlu0 %2914, %v2728
  %v2916 = vpop.permute.xlu0 %2915
  %2917 = vset.pattern.permute.xlu0 0
  %2918 = vperm.xlu0 %2917, %v2729
  %v2919 = vpop.permute.xlu0 %2918
  %2920 = vset.pattern.permute.xlu0 0
  %2921 = vperm.xlu0 %2920, %v2730
  %v2922 = vpop.permute.xlu0 %2921
  %2923 = vset.pattern.permute.xlu0 0
  %2924 = vperm.xlu0 %2923, %v2731
  %v2925 = vpop.permute.xlu0 %2924
  %2926 = vset.pattern.permute.xlu0 0
  %2927 = vperm.xlu0 %2926, %v2732
  %v2928 = vpop.permute.xlu0 %2927
  %2929 = vset.pattern.permute.xlu0 0
  %2930 = vperm.xlu0 %2929, %v2733
  %v2931 = vpop.permute.xlu0 %2930
  %2932 = vset.pattern.permute.xlu0 0
  %2933 = vperm.xlu0 %2932, %v2734
  %v2934 = vpop.permute.xlu0 %2933
  %2935 = vset.pattern.permute.xlu0 0
  %2936 = vperm.xlu0 %2935, %v2735
  %v2937 = vpop.permute.xlu0 %2936
  %2938 = vset.pattern.permute.xlu0 0
  %2939 = vperm.xlu0 %2938, %v2736
  %v2940 = vpop.permute.xlu0 %2939
  %2941 = vset.pattern.permute.xlu0 0
  %2942 = vperm.xlu0 %2941, %v2737
  %v2943 = vpop.permute.xlu0 %2942
  %2944 = vset.pattern.permute.xlu0 0
  %2945 = vperm.xlu0 %2944, %v2738
  %v2946 = vpop.permute.xlu0 %2945
  %2947 = vset.pattern.permute.xlu0 0
  %2948 = vperm.xlu0 %2947, %v2739
  %v2949 = vpop.permute.xlu0 %2948
  %2950 = vset.pattern.permute.xlu0 0
  %2951 = vperm.xlu0 %2950, %v2740
  %v2952 = vpop.permute.xlu0 %2951
  %2953 = vset.pattern.permute.xlu0 0
  %2954 = vperm.xlu0 %2953, %v2741
  %v2955 = vpop.permute.xlu0 %2954
  %2956 = vset.pattern.permute.xlu0 0
  %2957 = vperm.xlu0 %2956, %v2742
  %v2958 = vpop.permute.xlu0 %2957
  %2959 = vset.pattern.permute.xlu0 0
  %2960 = vperm.xlu0 %2959, %v2743
  %v2961 = vpop.permute.xlu0 %2960
  %2962 = vset.pattern.permute.xlu0 0
  %2963 = vperm.xlu0 %2962, %v2744
  %v2964 = vpop.permute.xlu0 %2963
  %2965 = vset.pattern.permute.xlu0 0
  %2966 = vperm.xlu0 %2965, %v2745
  %v2967 = vpop.permute.xlu0 %2966
  %2968 = vset.pattern.permute.xlu0 0
  %2969 = vperm.xlu0 %2968, %v2746
  %v2970 = vpop.permute.xlu0 %2969
  %2971 = vset.pattern.permute.xlu0 0
  %2972 = vperm.xlu0 %2971, %v2747
  %v2973 = vpop.permute.xlu0 %2972
  %2974 = vset.pattern.permute.xlu0 0
  %2975 = vperm.xlu0 %2974, %v2748
  %v2976 = vpop.permute.xlu0 %2975
  %2977 = vset.pattern.permute.xlu0 0
  %2978 = vperm.xlu0 %2977, %v2749
  %v2979 = vpop.permute.xlu0 %2978
  %2980 = vset.pattern.permute.xlu0 0
  %2981 = vperm.xlu0 %2980, %v2750
  %v2982 = vpop.permute.xlu0 %2981
  %2983 = vset.pattern.permute.xlu0 0
  %2984 = vperm.xlu0 %2983, %v2751
  %v2985 = vpop.permute.xlu0 %2984
  %2986 = vset.pattern.permute.xlu0 0
  %2987 = vperm.xlu0 %2986, %v2752
  %v2988 = vpop.permute.xlu0 %2987
  %2989 = vset.pattern.permute.xlu0 0
  %2990 = vperm.xlu0 %2989, %v2753
  %v2991 = vpop.permute.xlu0 %2990
  %2992 = vset.pattern.permute.xlu0 0
  %2993 = vperm.xlu0 %2992, %v2754
  %v2994 = vpop.permute.xlu0 %2993
  %2995 = vset.pattern.permute.xlu0 0
  %2996 = vperm.xlu0 %2995, %v2755
  %v2997 = vpop.permute.xlu0 %2996
  %2998 = vset.pattern.permute.xlu0 0
  %2999 = vperm.xlu0 %2998, %v2756
  %v3000 = vpop.permute.xlu0 %2999
  %3001 = vset.pattern.permute.xlu0 0
  %3002 = vperm.xlu0 %3001, %v2757
  %v3003 = vpop.permute.xlu0 %3002
  %3004 = vset.pattern.permute.xlu0 0
  %3005 = vperm.xlu0 %3004, %v2758
  %v3006 = vpop.permute.xlu0 %3005
  %3007 = vset.pattern.permute.xlu0 0
  %3008 = vperm.xlu0 %3007, %v2759
  %v3009 = vpop.permute.xlu0 %3008
  %3010 = vset.pattern.permute.xlu0 0
  %3011 = vperm.xlu0 %3010, %v2760
  %v3012 = vpop.permute.xlu0 %3011
  %3013 = vset.pattern.permute.xlu0 0
  %3014 = vperm.xlu0 %3013, %v2761
  %v3015 = vpop.permute.xlu0 %3014
  %3016 = vset.pattern.permute.xlu0 0
  %3017 = vperm.xlu0 %3016, %v2762
  %v3018 = vpop.permute.xlu0 %3017
  %3019 = vset.pattern.permute.xlu0 0
  %3020 = vperm.xlu0 %3019, %v2763
  %v3021 = vpop.permute.xlu0 %3020
  %3022 = vset.pattern.permute.xlu0 0
  %3023 = vperm.xlu0 %3022, %v2764
  %v3024 = vpop.permute.xlu0 %3023
  %3025 = vset.pattern.permute.xlu0 0
  %3026 = vperm.xlu0 %3025, %v2765
  %v3027 = vpop.permute.xlu0 %3026
  %3028 = vset.pattern.permute.xlu0 0
  %3029 = vperm.xlu0 %3028, %v2766
  %v3030 = vpop.permute.xlu0 %3029
  %3031 = vset.pattern.permute.xlu0 0
  %3032 = vperm.xlu0 %3031, %v2767
  %v3033 = vpop.permute.xlu0 %3032
  %3034 = vset.pattern.permute.xlu0 0
  %3035 = vperm.xlu0 %3034, %v2768
  %v3036 = vpop.permute.xlu0 %3035
  %3037 = vset.pattern.permute.xlu0 0
  %3038 = vperm.xlu0 %3037, %v2769
  %v3039 = vpop.permute.xlu0 %3038
  %3040 = vset.pattern.permute.xlu0 0
  %3041 = vperm.xlu0 %3040, %v2770
  %v3042 = vpop.permute.xlu0 %3041
  %3043 = vset.pattern.permute.xlu0 0
  %3044 = vperm.xlu0 %3043, %v2771
  %v3045 = vpop.permute.xlu0 %3044
  %3046 = vset.pattern.permute.xlu0 0
  %3047 = vperm.xlu0 %3046, %v2772
  %v3048 = vpop.permute.xlu0 %3047
  %3049 = vset.pattern.permute.xlu0 0
  %3050 = vperm.xlu0 %3049, %v2773
  %v3051 = vpop.permute.xlu0 %3050
  %3052 = vset.pattern.permute.xlu0 0
  %3053 = vperm.xlu0 %3052, %v2774
  %v3054 = vpop.permute.xlu0 %3053
  %3055 = vset.pattern.permute.xlu0 0
  %3056 = vperm.xlu0 %3055, %v2775
  %v3057 = vpop.permute.xlu0 %3056
  %3058 = vset.pattern.permute.xlu0 0
  %3059 = vperm.xlu0 %3058, %v2776
  %v3060 = vpop.permute.xlu0 %3059
  %3061 = vset.pattern.permute.xlu0 0
  %3062 = vperm.xlu0 %3061, %v2777
  %v3063 = vpop.permute.xlu0 %3062
  %3064 = vset.pattern.permute.xlu0 0
  %3065 = vperm.xlu0 %3064, %v2778
  %v3066 = vpop.permute.xlu0 %3065
  %3067 = vset.pattern.permute.xlu0 0
  %3068 = vperm.xlu0 %3067, %v2779
  %v3069 = vpop.permute.xlu0 %3068
  %3070 = vset.pattern.permute.xlu0 0
  %3071 = vperm.xlu0 %3070, %v2780
  %v3072 = vpop.permute.xlu0 %3071
  %3073 = vset.pattern.permute.xlu0 0
  %3074 = vperm.xlu0 %3073, %v2781
  %v3075 = vpop.permute.xlu0 %3074
  %3076 = vset.pattern.permute.xlu0 0
  %3077 = vperm.xlu0 %3076, %v2782
  %v3078 = vpop.permute.xlu0 %3077
  %3079 = vset.pattern.permute.xlu0 0
  %3080 = vperm.xlu0 %3079, %v2783
  %v3081 = vpop.permute.xlu0 %3080
  %3082 = vset.pattern.permute.xlu0 0
  %3083 = vperm.xlu0 %3082, %v2784
  %v3084 = vpop.permute.xlu0 %3083
  %3085 = vset.pattern.permute.xlu0 0
  %3086 = vperm.xlu0 %3085, %v2785
  %v3087 = vpop.permute.xlu0 %3086
  %3088 = vset.pattern.permute.xlu0 0
  %3089 = vperm.xlu0 %3088, %v2786
  %v3090 = vpop.permute.xlu0 %3089
  %3091 = vset.pattern.permute.xlu0 0
  %3092 = vperm.xlu0 %3091, %v2787
  %v3093 = vpop.permute.xlu0 %3092
  %3094 = vset.pattern.permute.xlu0 0
  %3095 = vperm.xlu0 %3094, %v2788
  %v3096 = vpop.permute.xlu0 %3095
  %3097 = vset.pattern.permute.xlu0 0
  %3098 = vperm.xlu0 %3097, %v2789
  %v3099 = vpop.permute.xlu0 %3098
  %3100 = vset.pattern.permute.xlu0 0
  %3101 = vperm.xlu0 %3100, %v2790
  %v3102 = vpop.permute.xlu0 %3101
  %3103 = vset.pattern.permute.xlu0 0
  %3104 = vperm.xlu0 %3103, %v2791
  %v3105 = vpop.permute.xlu0 %3104
  %3106 = vset.pattern.permute.xlu0 0
  %3107 = vperm.xlu0 %3106, %v2792
  %v3108 = vpop.permute.xlu0 %3107
  %3109 = vset.pattern.permute.xlu0 0
  %3110 = vperm.xlu0 %3109, %v2793
  %v3111 = vpop.permute.xlu0 %3110
  %3112 = vset.pattern.permute.xlu0 0
  %3113 = vperm.xlu0 %3112, %v2794
  %v3114 = vpop.permute.xlu0 %3113
  %3115 = vset.pattern.permute.xlu0 0
  %3116 = vperm.xlu0 %3115, %v2795
  %v3117 = vpop.permute.xlu0 %3116
  %3118 = vset.pattern.permute.xlu0 0
  %3119 = vperm.xlu0 %3118, %v2796
  %v3120 = vpop.permute.xlu0 %3119
  %3121 = vset.pattern.permute.xlu0 0
  %3122 = vperm.xlu0 %3121, %v2797
  %v3123 = vpop.permute.xlu0 %3122
  %3124 = vset.pattern.permute.xlu0 0
  %3125 = vperm.xlu0 %3124, %v2798
  %v3126 = vpop.permute.xlu0 %3125
  %3127 = vset.pattern.permute.xlu0 0
  %3128 = vperm.xlu0 %3127, %v2799
  %v3129 = vpop.permute.xlu0 %3128
  %3130 = vset.pattern.permute.xlu0 0
  %3131 = vperm.xlu0 %3130, %v2800
  %v3132 = vpop.permute.xlu0 %3131
  %3133 = vset.pattern.permute.xlu0 0
  %3134 = vperm.xlu0 %3133, %v2801
  %v3135 = vpop.permute.xlu0 %3134
  %3136 = vset.pattern.permute.xlu0 0
  %3137 = vperm.xlu0 %3136, %v2802
  %v3138 = vpop.permute.xlu0 %3137
  %3139 = vset.pattern.permute.xlu0 0
  %3140 = vperm.xlu0 %3139, %v2803
  %v3141 = vpop.permute.xlu0 %3140
  %3142 = vset.pattern.permute.xlu0 0
  %3143 = vperm.xlu0 %3142, %v2804
  %v3144 = vpop.permute.xlu0 %3143
  %3145 = vset.pattern.permute.xlu0 0
  %3146 = vperm.xlu0 %3145, %v2805
  %v3147 = vpop.permute.xlu0 %3146
  %3148 = vset.pattern.permute.xlu0 0
  %3149 = vperm.xlu0 %3148, %v2806
  %v3150 = vpop.permute.xlu0 %3149
  %3151 = vset.pattern.permute.xlu0 0
  %3152 = vperm.xlu0 %3151, %v2807
  %v3153 = vpop.permute.xlu0 %3152
  %3154 = vset.pattern.permute.xlu0 0
  %3155 = vperm.xlu0 %3154, %v2808
  %v3156 = vpop.permute.xlu0 %3155
  %3157 = vset.pattern.permute.xlu0 0
  %3158 = vperm.xlu0 %3157, %v2809
  %v3159 = vpop.permute.xlu0 %3158
  %3160 = vset.pattern.permute.xlu0 0
  %3161 = vperm.xlu0 %3160, %v2810
  %v3162 = vpop.permute.xlu0 %3161
  %3163 = vset.pattern.permute.xlu0 0
  %3164 = vperm.xlu0 %3163, %v2811
  %v3165 = vpop.permute.xlu0 %3164
  %3166 = vset.pattern.permute.xlu0 0
  %3167 = vperm.xlu0 %3166, %v2812
  %v3168 = vpop.permute.xlu0 %3167
  %3169 = vset.pattern.permute.xlu0 0
  %3170 = vperm.xlu0 %3169, %v2813
  %v3171 = vpop.permute.xlu0 %3170
  %3172 = vset.pattern.permute.xlu0 0
  %3173 = vperm.xlu0 %3172, %v2814
  %v3174 = vpop.permute.xlu0 %3173
  %3175 = vset.pattern.permute.xlu0 0
  %3176 = vperm.xlu0 %3175, %v2815
  %v3177 = vpop.permute.xlu0 %3176
  %3178 = vset.pattern.permute.xlu0 0
  %3179 = vperm.xlu0 %3178, %v2816
  %v3180 = vpop.permute.xlu0 %3179
  %3181 = vset.pattern.permute.xlu0 0
  %3182 = vperm.xlu0 %3181, %v2817
  %v3183 = vpop.permute.xlu0 %3182
  %3184 = vset.pattern.permute.xlu0 0
  %3185 = vperm.xlu0 %3184, %v2818
  %v3186 = vpop.permute.xlu0 %3185
  %3187 = vset.pattern.permute.xlu0 0
  %3188 = vperm.xlu0 %3187, %v2819
  %v3189 = vpop.permute.xlu0 %3188
  %3190 = vset.pattern.permute.xlu0 0
  %3191 = vperm.xlu0 %3190, %v2820
  %v3192 = vpop.permute.xlu0 %3191
  %3193 = vset.pattern.permute.xlu0 0
  %3194 = vperm.xlu0 %3193, %v2821
  %v3195 = vpop.permute.xlu0 %3194
  %3196 = vset.pattern.permute.xlu0 0
  %3197 = vperm.xlu0 %3196, %v2822
  %v3198 = vpop.permute.xlu0 %3197
  %3199 = vset.pattern.permute.xlu0 0
  %3200 = vperm.xlu0 %3199, %v2823
  %v3201 = vpop.permute.xlu0 %3200
  %3202 = vset.pattern.permute.xlu0 0
  %3203 = vperm.xlu0 %3202, %v2824
  %v3204 = vpop.permute.xlu0 %3203
  %3205 = vset.pattern.permute.xlu0 0
  %3206 = vperm.xlu0 %3205, %v2825
  %v3207 = vpop.permute.xlu0 %3206
  %3208 = vset.pattern.permute.xlu0 0
  %3209 = vperm.xlu0 %3208, %v2826
  %v3210 = vpop.permute.xlu0 %3209
  %v3211 = vlaneseq
  %v3212 = vand.u32 %v3211, 127
  %v3213 = vlaneseq
  %v3214 = vshrl.u32 %v3213, 7
  %v3215 = vsub.s32 %v3212, %v3214
  %v3216 = vrot.slane %v2829, %v3215
  %v3217 = vadd.s32 %v3212, 4294967288
  %v3218 = vlaneseq
  %v3219 = vshrl.u32 %v3218, 7
  %v3220 = vsub.s32 %v3217, %v3219
  %v3221 = vrot.slane %v2832, %v3220
  %vm3222 = vcmask 130112
  %v3223 = vsel %vm3222, %v3221, %v3216
  %v3224 = vadd.s32 %v3212, 4294967280
  %v3225 = vlaneseq
  %v3226 = vshrl.u32 %v3225, 7
  %v3227 = vsub.s32 %v3224, %v3226
  %v3228 = vrot.slane %v2835, %v3227
  %vm3229 = vcmask 195712
  %v3230 = vsel %vm3229, %v3228, %v3223
  %v3231 = vadd.s32 %v3212, 4294967272
  %v3232 = vlaneseq
  %v3233 = vshrl.u32 %v3232, 7
  %v3234 = vsub.s32 %v3231, %v3233
  %v3235 = vrot.slane %v2838, %v3234
  %vm3236 = vcmask 261312
  %v3237 = vsel %vm3236, %v3235, %v3230
  %v3238 = vadd.s32 %v3212, 4294967264
  %v3239 = vlaneseq
  %v3240 = vshrl.u32 %v3239, 7
  %v3241 = vsub.s32 %v3238, %v3240
  %v3242 = vrot.slane %v2841, %v3241
  %vm3243 = vcmask 326912
  %v3244 = vsel %vm3243, %v3242, %v3237
  %v3245 = vadd.s32 %v3212, 4294967256
  %v3246 = vlaneseq
  %v3247 = vshrl.u32 %v3246, 7
  %v3248 = vsub.s32 %v3245, %v3247
  %v3249 = vrot.slane %v2844, %v3248
  %vm3250 = vcmask 392512
  %v3251 = vsel %vm3250, %v3249, %v3244
  %v3252 = vadd.s32 %v3212, 4294967248
  %v3253 = vlaneseq
  %v3254 = vshrl.u32 %v3253, 7
  %v3255 = vsub.s32 %v3252, %v3254
  %v3256 = vrot.slane %v2847, %v3255
  %vm3257 = vcmask 458112
  %v3258 = vsel %vm3257, %v3256, %v3251
  %v3259 = vadd.s32 %v3212, 4294967240
  %v3260 = vlaneseq
  %v3261 = vshrl.u32 %v3260, 7
  %v3262 = vsub.s32 %v3259, %v3261
  %v3263 = vrot.slane %v2850, %v3262
  %vm3264 = vcmask 523712
  %v3265 = vsel %vm3264, %v3263, %v3258
  %v3266 = vadd.s32 %v3212, 4294967232
  %v3267 = vlaneseq
  %v3268 = vshrl.u32 %v3267, 7
  %v3269 = vsub.s32 %v3266, %v3268
  %v3270 = vrot.slane %v2853, %v3269
  %vm3271 = vcmask 589312
  %v3272 = vsel %vm3271, %v3270, %v3265
  %v3273 = vadd.s32 %v3212, 4294967224
  %v3274 = vlaneseq
  %v3275 = vshrl.u32 %v3274, 7
  %v3276 = vsub.s32 %v3273, %v3275
  %v3277 = vrot.slane %v2856, %v3276
  %vm3278 = vcmask 654912
  %v3279 = vsel %vm3278, %v3277, %v3272
  %v3280 = vadd.s32 %v3212, 4294967216
  %v3281 = vlaneseq
  %v3282 = vshrl.u32 %v3281, 7
  %v3283 = vsub.s32 %v3280, %v3282
  %v3284 = vrot.slane %v2859, %v3283
  %vm3285 = vcmask 720512
  %v3286 = vsel %vm3285, %v3284, %v3279
  %v3287 = vadd.s32 %v3212, 4294967208
  %v3288 = vlaneseq
  %v3289 = vshrl.u32 %v3288, 7
  %v3290 = vsub.s32 %v3287, %v3289
  %v3291 = vrot.slane %v2862, %v3290
  %vm3292 = vcmask 786112
  %v3293 = vsel %vm3292, %v3291, %v3286
  %v3294 = vadd.s32 %v3212, 4294967200
  %v3295 = vlaneseq
  %v3296 = vshrl.u32 %v3295, 7
  %v3297 = vsub.s32 %v3294, %v3296
  %v3298 = vrot.slane %v2865, %v3297
  %vm3299 = vcmask 851712
  %v3300 = vsel %vm3299, %v3298, %v3293
  %v3301 = vadd.s32 %v3212, 4294967192
  %v3302 = vlaneseq
  %v3303 = vshrl.u32 %v3302, 7
  %v3304 = vsub.s32 %v3301, %v3303
  %v3305 = vrot.slane %v2868, %v3304
  %vm3306 = vcmask 917312
  %v3307 = vsel %vm3306, %v3305, %v3300
  %v3308 = vadd.s32 %v3212, 4294967184
  %v3309 = vlaneseq
  %v3310 = vshrl.u32 %v3309, 7
  %v3311 = vsub.s32 %v3308, %v3310
  %v3312 = vrot.slane %v2871, %v3311
  %vm3313 = vcmask 982912
  %v3314 = vsel %vm3313, %v3312, %v3307
  %v3315 = vadd.s32 %v3212, 4294967176
  %v3316 = vlaneseq
  %v3317 = vshrl.u32 %v3316, 7
  %v3318 = vsub.s32 %v3315, %v3317
  %v3319 = vrot.slane %v2874, %v3318
  %vm3320 = vcmask 1048512
  %v3321 = vsel %vm3320, %v3319, %v3314
  %v3322 = vlaneseq
  %v3323 = vshrl.u32 %v3322, 7
  %v3324 = vsub.s32 %v3212, %v3323
  %v3325 = vrot.slane %v2877, %v3324
  %v3326 = vlaneseq
  %v3327 = vshrl.u32 %v3326, 7
  %v3328 = vsub.s32 %v3217, %v3327
  %v3329 = vrot.slane %v2880, %v3328
  %v3330 = vsel %vm3222, %v3329, %v3325
  %v3331 = vlaneseq
  %v3332 = vshrl.u32 %v3331, 7
  %v3333 = vsub.s32 %v3224, %v3332
  %v3334 = vrot.slane %v2883, %v3333
  %v3335 = vsel %vm3229, %v3334, %v3330
  %v3336 = vlaneseq
  %v3337 = vshrl.u32 %v3336, 7
  %v3338 = vsub.s32 %v3231, %v3337
  %v3339 = vrot.slane %v2886, %v3338
  %v3340 = vsel %vm3236, %v3339, %v3335
  %v3341 = vlaneseq
  %v3342 = vshrl.u32 %v3341, 7
  %v3343 = vsub.s32 %v3238, %v3342
  %v3344 = vrot.slane %v2889, %v3343
  %v3345 = vsel %vm3243, %v3344, %v3340
  %v3346 = vlaneseq
  %v3347 = vshrl.u32 %v3346, 7
  %v3348 = vsub.s32 %v3245, %v3347
  %v3349 = vrot.slane %v2892, %v3348
  %v3350 = vsel %vm3250, %v3349, %v3345
  %v3351 = vlaneseq
  %v3352 = vshrl.u32 %v3351, 7
  %v3353 = vsub.s32 %v3252, %v3352
  %v3354 = vrot.slane %v2895, %v3353
  %v3355 = vsel %vm3257, %v3354, %v3350
  %v3356 = vlaneseq
  %v3357 = vshrl.u32 %v3356, 7
  %v3358 = vsub.s32 %v3259, %v3357
  %v3359 = vrot.slane %v2898, %v3358
  %v3360 = vsel %vm3264, %v3359, %v3355
  %v3361 = vlaneseq
  %v3362 = vshrl.u32 %v3361, 7
  %v3363 = vsub.s32 %v3266, %v3362
  %v3364 = vrot.slane %v2901, %v3363
  %v3365 = vsel %vm3271, %v3364, %v3360
  %v3366 = vlaneseq
  %v3367 = vshrl.u32 %v3366, 7
  %v3368 = vsub.s32 %v3273, %v3367
  %v3369 = vrot.slane %v2904, %v3368
  %v3370 = vsel %vm3278, %v3369, %v3365
  %v3371 = vlaneseq
  %v3372 = vshrl.u32 %v3371, 7
  %v3373 = vsub.s32 %v3280, %v3372
  %v3374 = vrot.slane %v2907, %v3373
  %v3375 = vsel %vm3285, %v3374, %v3370
  %v3376 = vlaneseq
  %v3377 = vshrl.u32 %v3376, 7
  %v3378 = vsub.s32 %v3287, %v3377
  %v3379 = vrot.slane %v2910, %v3378
  %v3380 = vsel %vm3292, %v3379, %v3375
  %v3381 = vlaneseq
  %v3382 = vshrl.u32 %v3381, 7
  %v3383 = vsub.s32 %v3294, %v3382
  %v3384 = vrot.slane %v2913, %v3383
  %v3385 = vsel %vm3299, %v3384, %v3380
  %v3386 = vlaneseq
  %v3387 = vshrl.u32 %v3386, 7
  %v3388 = vsub.s32 %v3301, %v3387
  %v3389 = vrot.slane %v2916, %v3388
  %v3390 = vsel %vm3306, %v3389, %v3385
  %v3391 = vlaneseq
  %v3392 = vshrl.u32 %v3391, 7
  %v3393 = vsub.s32 %v3308, %v3392
  %v3394 = vrot.slane %v2919, %v3393
  %v3395 = vsel %vm3313, %v3394, %v3390
  %v3396 = vlaneseq
  %v3397 = vshrl.u32 %v3396, 7
  %v3398 = vsub.s32 %v3315, %v3397
  %v3399 = vrot.slane %v2922, %v3398
  %v3400 = vsel %vm3320, %v3399, %v3395
  %v3401 = vlaneseq
  %v3402 = vshrl.u32 %v3401, 7
  %v3403 = vsub.s32 %v3212, %v3402
  %v3404 = vrot.slane %v2925, %v3403
  %v3405 = vlaneseq
  %v3406 = vshrl.u32 %v3405, 7
  %v3407 = vsub.s32 %v3217, %v3406
  %v3408 = vrot.slane %v2928, %v3407
  %v3409 = vsel %vm3222, %v3408, %v3404
  %v3410 = vlaneseq
  %v3411 = vshrl.u32 %v3410, 7
  %v3412 = vsub.s32 %v3224, %v3411
  %v3413 = vrot.slane %v2931, %v3412
  %v3414 = vsel %vm3229, %v3413, %v3409
  %v3415 = vlaneseq
  %v3416 = vshrl.u32 %v3415, 7
  %v3417 = vsub.s32 %v3231, %v3416
  %v3418 = vrot.slane %v2934, %v3417
  %v3419 = vsel %vm3236, %v3418, %v3414
  %v3420 = vlaneseq
  %v3421 = vshrl.u32 %v3420, 7
  %v3422 = vsub.s32 %v3238, %v3421
  %v3423 = vrot.slane %v2937, %v3422
  %v3424 = vsel %vm3243, %v3423, %v3419
  %v3425 = vlaneseq
  %v3426 = vshrl.u32 %v3425, 7
  %v3427 = vsub.s32 %v3245, %v3426
  %v3428 = vrot.slane %v2940, %v3427
  %v3429 = vsel %vm3250, %v3428, %v3424
  %v3430 = vlaneseq
  %v3431 = vshrl.u32 %v3430, 7
  %v3432 = vsub.s32 %v3252, %v3431
  %v3433 = vrot.slane %v2943, %v3432
  %v3434 = vsel %vm3257, %v3433, %v3429
  %v3435 = vlaneseq
  %v3436 = vshrl.u32 %v3435, 7
  %v3437 = vsub.s32 %v3259, %v3436
  %v3438 = vrot.slane %v2946, %v3437
  %v3439 = vsel %vm3264, %v3438, %v3434
  %v3440 = vlaneseq
  %v3441 = vshrl.u32 %v3440, 7
  %v3442 = vsub.s32 %v3266, %v3441
  %v3443 = vrot.slane %v2949, %v3442
  %v3444 = vsel %vm3271, %v3443, %v3439
  %v3445 = vlaneseq
  %v3446 = vshrl.u32 %v3445, 7
  %v3447 = vsub.s32 %v3273, %v3446
  %v3448 = vrot.slane %v2952, %v3447
  %v3449 = vsel %vm3278, %v3448, %v3444
  %v3450 = vlaneseq
  %v3451 = vshrl.u32 %v3450, 7
  %v3452 = vsub.s32 %v3280, %v3451
  %v3453 = vrot.slane %v2955, %v3452
  %v3454 = vsel %vm3285, %v3453, %v3449
  %v3455 = vlaneseq
  %v3456 = vshrl.u32 %v3455, 7
  %v3457 = vsub.s32 %v3287, %v3456
  %v3458 = vrot.slane %v2958, %v3457
  %v3459 = vsel %vm3292, %v3458, %v3454
  %v3460 = vlaneseq
  %v3461 = vshrl.u32 %v3460, 7
  %v3462 = vsub.s32 %v3294, %v3461
  %v3463 = vrot.slane %v2961, %v3462
  %v3464 = vsel %vm3299, %v3463, %v3459
  %v3465 = vlaneseq
  %v3466 = vshrl.u32 %v3465, 7
  %v3467 = vsub.s32 %v3301, %v3466
  %v3468 = vrot.slane %v2964, %v3467
  %v3469 = vsel %vm3306, %v3468, %v3464
  %v3470 = vlaneseq
  %v3471 = vshrl.u32 %v3470, 7
  %v3472 = vsub.s32 %v3308, %v3471
  %v3473 = vrot.slane %v2967, %v3472
  %v3474 = vsel %vm3313, %v3473, %v3469
  %v3475 = vlaneseq
  %v3476 = vshrl.u32 %v3475, 7
  %v3477 = vsub.s32 %v3315, %v3476
  %v3478 = vrot.slane %v2970, %v3477
  %v3479 = vsel %vm3320, %v3478, %v3474
  %v3480 = vlaneseq
  %v3481 = vshrl.u32 %v3480, 7
  %v3482 = vsub.s32 %v3212, %v3481
  %v3483 = vrot.slane %v2973, %v3482
  %v3484 = vlaneseq
  %v3485 = vshrl.u32 %v3484, 7
  %v3486 = vsub.s32 %v3217, %v3485
  %v3487 = vrot.slane %v2976, %v3486
  %v3488 = vsel %vm3222, %v3487, %v3483
  %v3489 = vlaneseq
  %v3490 = vshrl.u32 %v3489, 7
  %v3491 = vsub.s32 %v3224, %v3490
  %v3492 = vrot.slane %v2979, %v3491
  %v3493 = vsel %vm3229, %v3492, %v3488
  %v3494 = vlaneseq
  %v3495 = vshrl.u32 %v3494, 7
  %v3496 = vsub.s32 %v3231, %v3495
  %v3497 = vrot.slane %v2982, %v3496
  %v3498 = vsel %vm3236, %v3497, %v3493
  %v3499 = vlaneseq
  %v3500 = vshrl.u32 %v3499, 7
  %v3501 = vsub.s32 %v3238, %v3500
  %v3502 = vrot.slane %v2985, %v3501
  %v3503 = vsel %vm3243, %v3502, %v3498
  %v3504 = vlaneseq
  %v3505 = vshrl.u32 %v3504, 7
  %v3506 = vsub.s32 %v3245, %v3505
  %v3507 = vrot.slane %v2988, %v3506
  %v3508 = vsel %vm3250, %v3507, %v3503
  %v3509 = vlaneseq
  %v3510 = vshrl.u32 %v3509, 7
  %v3511 = vsub.s32 %v3252, %v3510
  %v3512 = vrot.slane %v2991, %v3511
  %v3513 = vsel %vm3257, %v3512, %v3508
  %v3514 = vlaneseq
  %v3515 = vshrl.u32 %v3514, 7
  %v3516 = vsub.s32 %v3259, %v3515
  %v3517 = vrot.slane %v2994, %v3516
  %v3518 = vsel %vm3264, %v3517, %v3513
  %v3519 = vlaneseq
  %v3520 = vshrl.u32 %v3519, 7
  %v3521 = vsub.s32 %v3266, %v3520
  %v3522 = vrot.slane %v2997, %v3521
  %v3523 = vsel %vm3271, %v3522, %v3518
  %v3524 = vlaneseq
  %v3525 = vshrl.u32 %v3524, 7
  %v3526 = vsub.s32 %v3273, %v3525
  %v3527 = vrot.slane %v3000, %v3526
  %v3528 = vsel %vm3278, %v3527, %v3523
  %v3529 = vlaneseq
  %v3530 = vshrl.u32 %v3529, 7
  %v3531 = vsub.s32 %v3280, %v3530
  %v3532 = vrot.slane %v3003, %v3531
  %v3533 = vsel %vm3285, %v3532, %v3528
  %v3534 = vlaneseq
  %v3535 = vshrl.u32 %v3534, 7
  %v3536 = vsub.s32 %v3287, %v3535
  %v3537 = vrot.slane %v3006, %v3536
  %v3538 = vsel %vm3292, %v3537, %v3533
  %v3539 = vlaneseq
  %v3540 = vshrl.u32 %v3539, 7
  %v3541 = vsub.s32 %v3294, %v3540
  %v3542 = vrot.slane %v3009, %v3541
  %v3543 = vsel %vm3299, %v3542, %v3538
  %v3544 = vlaneseq
  %v3545 = vshrl.u32 %v3544, 7
  %v3546 = vsub.s32 %v3301, %v3545
  %v3547 = vrot.slane %v3012, %v3546
  %v3548 = vsel %vm3306, %v3547, %v3543
  %v3549 = vlaneseq
  %v3550 = vshrl.u32 %v3549, 7
  %v3551 = vsub.s32 %v3308, %v3550
  %v3552 = vrot.slane %v3015, %v3551
  %v3553 = vsel %vm3313, %v3552, %v3548
  %v3554 = vlaneseq
  %v3555 = vshrl.u32 %v3554, 7
  %v3556 = vsub.s32 %v3315, %v3555
  %v3557 = vrot.slane %v3018, %v3556
  %v3558 = vsel %vm3320, %v3557, %v3553
  %v3559 = vlaneseq
  %v3560 = vshrl.u32 %v3559, 7
  %v3561 = vsub.s32 %v3212, %v3560
  %v3562 = vrot.slane %v3021, %v3561
  %v3563 = vlaneseq
  %v3564 = vshrl.u32 %v3563, 7
  %v3565 = vsub.s32 %v3217, %v3564
  %v3566 = vrot.slane %v3024, %v3565
  %v3567 = vsel %vm3222, %v3566, %v3562
  %v3568 = vlaneseq
  %v3569 = vshrl.u32 %v3568, 7
  %v3570 = vsub.s32 %v3224, %v3569
  %v3571 = vrot.slane %v3027, %v3570
  %v3572 = vsel %vm3229, %v3571, %v3567
  %v3573 = vlaneseq
  %v3574 = vshrl.u32 %v3573, 7
  %v3575 = vsub.s32 %v3231, %v3574
  %v3576 = vrot.slane %v3030, %v3575
  %v3577 = vsel %vm3236, %v3576, %v3572
  %v3578 = vlaneseq
  %v3579 = vshrl.u32 %v3578, 7
  %v3580 = vsub.s32 %v3238, %v3579
  %v3581 = vrot.slane %v3033, %v3580
  %v3582 = vsel %vm3243, %v3581, %v3577
  %v3583 = vlaneseq
  %v3584 = vshrl.u32 %v3583, 7
  %v3585 = vsub.s32 %v3245, %v3584
  %v3586 = vrot.slane %v3036, %v3585
  %v3587 = vsel %vm3250, %v3586, %v3582
  %v3588 = vlaneseq
  %v3589 = vshrl.u32 %v3588, 7
  %v3590 = vsub.s32 %v3252, %v3589
  %v3591 = vrot.slane %v3039, %v3590
  %v3592 = vsel %vm3257, %v3591, %v3587
  %v3593 = vlaneseq
  %v3594 = vshrl.u32 %v3593, 7
  %v3595 = vsub.s32 %v3259, %v3594
  %v3596 = vrot.slane %v3042, %v3595
  %v3597 = vsel %vm3264, %v3596, %v3592
  %v3598 = vlaneseq
  %v3599 = vshrl.u32 %v3598, 7
  %v3600 = vsub.s32 %v3266, %v3599
  %v3601 = vrot.slane %v3045, %v3600
  %v3602 = vsel %vm3271, %v3601, %v3597
  %v3603 = vlaneseq
  %v3604 = vshrl.u32 %v3603, 7
  %v3605 = vsub.s32 %v3273, %v3604
  %v3606 = vrot.slane %v3048, %v3605
  %v3607 = vsel %vm3278, %v3606, %v3602
  %v3608 = vlaneseq
  %v3609 = vshrl.u32 %v3608, 7
  %v3610 = vsub.s32 %v3280, %v3609
  %v3611 = vrot.slane %v3051, %v3610
  %v3612 = vsel %vm3285, %v3611, %v3607
  %v3613 = vlaneseq
  %v3614 = vshrl.u32 %v3613, 7
  %v3615 = vsub.s32 %v3287, %v3614
  %v3616 = vrot.slane %v3054, %v3615
  %v3617 = vsel %vm3292, %v3616, %v3612
  %v3618 = vlaneseq
  %v3619 = vshrl.u32 %v3618, 7
  %v3620 = vsub.s32 %v3294, %v3619
  %v3621 = vrot.slane %v3057, %v3620
  %v3622 = vsel %vm3299, %v3621, %v3617
  %v3623 = vlaneseq
  %v3624 = vshrl.u32 %v3623, 7
  %v3625 = vsub.s32 %v3301, %v3624
  %v3626 = vrot.slane %v3060, %v3625
  %v3627 = vsel %vm3306, %v3626, %v3622
  %v3628 = vlaneseq
  %v3629 = vshrl.u32 %v3628, 7
  %v3630 = vsub.s32 %v3308, %v3629
  %v3631 = vrot.slane %v3063, %v3630
  %v3632 = vsel %vm3313, %v3631, %v3627
  %v3633 = vlaneseq
  %v3634 = vshrl.u32 %v3633, 7
  %v3635 = vsub.s32 %v3315, %v3634
  %v3636 = vrot.slane %v3066, %v3635
  %v3637 = vsel %vm3320, %v3636, %v3632
  %v3638 = vlaneseq
  %v3639 = vshrl.u32 %v3638, 7
  %v3640 = vsub.s32 %v3212, %v3639
  %v3641 = vrot.slane %v3069, %v3640
  %v3642 = vlaneseq
  %v3643 = vshrl.u32 %v3642, 7
  %v3644 = vsub.s32 %v3217, %v3643
  %v3645 = vrot.slane %v3072, %v3644
  %v3646 = vsel %vm3222, %v3645, %v3641
  %v3647 = vlaneseq
  %v3648 = vshrl.u32 %v3647, 7
  %v3649 = vsub.s32 %v3224, %v3648
  %v3650 = vrot.slane %v3075, %v3649
  %v3651 = vsel %vm3229, %v3650, %v3646
  %v3652 = vlaneseq
  %v3653 = vshrl.u32 %v3652, 7
  %v3654 = vsub.s32 %v3231, %v3653
  %v3655 = vrot.slane %v3078, %v3654
  %v3656 = vsel %vm3236, %v3655, %v3651
  %v3657 = vlaneseq
  %v3658 = vshrl.u32 %v3657, 7
  %v3659 = vsub.s32 %v3238, %v3658
  %v3660 = vrot.slane %v3081, %v3659
  %v3661 = vsel %vm3243, %v3660, %v3656
  %v3662 = vlaneseq
  %v3663 = vshrl.u32 %v3662, 7
  %v3664 = vsub.s32 %v3245, %v3663
  %v3665 = vrot.slane %v3084, %v3664
  %v3666 = vsel %vm3250, %v3665, %v3661
  %v3667 = vlaneseq
  %v3668 = vshrl.u32 %v3667, 7
  %v3669 = vsub.s32 %v3252, %v3668
  %v3670 = vrot.slane %v3087, %v3669
  %v3671 = vsel %vm3257, %v3670, %v3666
  %v3672 = vlaneseq
  %v3673 = vshrl.u32 %v3672, 7
  %v3674 = vsub.s32 %v3259, %v3673
  %v3675 = vrot.slane %v3090, %v3674
  %v3676 = vsel %vm3264, %v3675, %v3671
  %v3677 = vlaneseq
  %v3678 = vshrl.u32 %v3677, 7
  %v3679 = vsub.s32 %v3266, %v3678
  %v3680 = vrot.slane %v3093, %v3679
  %v3681 = vsel %vm3271, %v3680, %v3676
  %v3682 = vlaneseq
  %v3683 = vshrl.u32 %v3682, 7
  %v3684 = vsub.s32 %v3273, %v3683
  %v3685 = vrot.slane %v3096, %v3684
  %v3686 = vsel %vm3278, %v3685, %v3681
  %v3687 = vlaneseq
  %v3688 = vshrl.u32 %v3687, 7
  %v3689 = vsub.s32 %v3280, %v3688
  %v3690 = vrot.slane %v3099, %v3689
  %v3691 = vsel %vm3285, %v3690, %v3686
  %v3692 = vlaneseq
  %v3693 = vshrl.u32 %v3692, 7
  %v3694 = vsub.s32 %v3287, %v3693
  %v3695 = vrot.slane %v3102, %v3694
  %v3696 = vsel %vm3292, %v3695, %v3691
  %v3697 = vlaneseq
  %v3698 = vshrl.u32 %v3697, 7
  %v3699 = vsub.s32 %v3294, %v3698
  %v3700 = vrot.slane %v3105, %v3699
  %v3701 = vsel %vm3299, %v3700, %v3696
  %v3702 = vlaneseq
  %v3703 = vshrl.u32 %v3702, 7
  %v3704 = vsub.s32 %v3301, %v3703
  %v3705 = vrot.slane %v3108, %v3704
  %v3706 = vsel %vm3306, %v3705, %v3701
  %v3707 = vlaneseq
  %v3708 = vshrl.u32 %v3707, 7
  %v3709 = vsub.s32 %v3308, %v3708
  %v3710 = vrot.slane %v3111, %v3709
  %v3711 = vsel %vm3313, %v3710, %v3706
  %v3712 = vlaneseq
  %v3713 = vshrl.u32 %v3712, 7
  %v3714 = vsub.s32 %v3315, %v3713
  %v3715 = vrot.slane %v3114, %v3714
  %v3716 = vsel %vm3320, %v3715, %v3711
  %v3717 = vlaneseq
  %v3718 = vshrl.u32 %v3717, 7
  %v3719 = vsub.s32 %v3212, %v3718
  %v3720 = vrot.slane %v3117, %v3719
  %v3721 = vlaneseq
  %v3722 = vshrl.u32 %v3721, 7
  %v3723 = vsub.s32 %v3217, %v3722
  %v3724 = vrot.slane %v3120, %v3723
  %v3725 = vsel %vm3222, %v3724, %v3720
  %v3726 = vlaneseq
  %v3727 = vshrl.u32 %v3726, 7
  %v3728 = vsub.s32 %v3224, %v3727
  %v3729 = vrot.slane %v3123, %v3728
  %v3730 = vsel %vm3229, %v3729, %v3725
  %v3731 = vlaneseq
  %v3732 = vshrl.u32 %v3731, 7
  %v3733 = vsub.s32 %v3231, %v3732
  %v3734 = vrot.slane %v3126, %v3733
  %v3735 = vsel %vm3236, %v3734, %v3730
  %v3736 = vlaneseq
  %v3737 = vshrl.u32 %v3736, 7
  %v3738 = vsub.s32 %v3238, %v3737
  %v3739 = vrot.slane %v3129, %v3738
  %v3740 = vsel %vm3243, %v3739, %v3735
  %v3741 = vlaneseq
  %v3742 = vshrl.u32 %v3741, 7
  %v3743 = vsub.s32 %v3245, %v3742
  %v3744 = vrot.slane %v3132, %v3743
  %v3745 = vsel %vm3250, %v3744, %v3740
  %v3746 = vlaneseq
  %v3747 = vshrl.u32 %v3746, 7
  %v3748 = vsub.s32 %v3252, %v3747
  %v3749 = vrot.slane %v3135, %v3748
  %v3750 = vsel %vm3257, %v3749, %v3745
  %v3751 = vlaneseq
  %v3752 = vshrl.u32 %v3751, 7
  %v3753 = vsub.s32 %v3259, %v3752
  %v3754 = vrot.slane %v3138, %v3753
  %v3755 = vsel %vm3264, %v3754, %v3750
  %v3756 = vlaneseq
  %v3757 = vshrl.u32 %v3756, 7
  %v3758 = vsub.s32 %v3266, %v3757
  %v3759 = vrot.slane %v3141, %v3758
  %v3760 = vsel %vm3271, %v3759, %v3755
  %v3761 = vlaneseq
  %v3762 = vshrl.u32 %v3761, 7
  %v3763 = vsub.s32 %v3273, %v3762
  %v3764 = vrot.slane %v3144, %v3763
  %v3765 = vsel %vm3278, %v3764, %v3760
  %v3766 = vlaneseq
  %v3767 = vshrl.u32 %v3766, 7
  %v3768 = vsub.s32 %v3280, %v3767
  %v3769 = vrot.slane %v3147, %v3768
  %v3770 = vsel %vm3285, %v3769, %v3765
  %v3771 = vlaneseq
  %v3772 = vshrl.u32 %v3771, 7
  %v3773 = vsub.s32 %v3287, %v3772
  %v3774 = vrot.slane %v3150, %v3773
  %v3775 = vsel %vm3292, %v3774, %v3770
  %v3776 = vlaneseq
  %v3777 = vshrl.u32 %v3776, 7
  %v3778 = vsub.s32 %v3294, %v3777
  %v3779 = vrot.slane %v3153, %v3778
  %v3780 = vsel %vm3299, %v3779, %v3775
  %v3781 = vlaneseq
  %v3782 = vshrl.u32 %v3781, 7
  %v3783 = vsub.s32 %v3301, %v3782
  %v3784 = vrot.slane %v3156, %v3783
  %v3785 = vsel %vm3306, %v3784, %v3780
  %v3786 = vlaneseq
  %v3787 = vshrl.u32 %v3786, 7
  %v3788 = vsub.s32 %v3308, %v3787
  %v3789 = vrot.slane %v3159, %v3788
  %v3790 = vsel %vm3313, %v3789, %v3785
  %v3791 = vlaneseq
  %v3792 = vshrl.u32 %v3791, 7
  %v3793 = vsub.s32 %v3315, %v3792
  %v3794 = vrot.slane %v3162, %v3793
  %v3795 = vsel %vm3320, %v3794, %v3790
  %v3796 = vlaneseq
  %v3797 = vshrl.u32 %v3796, 7
  %v3798 = vsub.s32 %v3212, %v3797
  %v3799 = vrot.slane %v3165, %v3798
  %v3800 = vlaneseq
  %v3801 = vshrl.u32 %v3800, 7
  %v3802 = vsub.s32 %v3217, %v3801
  %v3803 = vrot.slane %v3168, %v3802
  %v3804 = vsel %vm3222, %v3803, %v3799
  %v3805 = vlaneseq
  %v3806 = vshrl.u32 %v3805, 7
  %v3807 = vsub.s32 %v3224, %v3806
  %v3808 = vrot.slane %v3171, %v3807
  %v3809 = vsel %vm3229, %v3808, %v3804
  %v3810 = vlaneseq
  %v3811 = vshrl.u32 %v3810, 7
  %v3812 = vsub.s32 %v3231, %v3811
  %v3813 = vrot.slane %v3174, %v3812
  %v3814 = vsel %vm3236, %v3813, %v3809
  %v3815 = vlaneseq
  %v3816 = vshrl.u32 %v3815, 7
  %v3817 = vsub.s32 %v3238, %v3816
  %v3818 = vrot.slane %v3177, %v3817
  %v3819 = vsel %vm3243, %v3818, %v3814
  %v3820 = vlaneseq
  %v3821 = vshrl.u32 %v3820, 7
  %v3822 = vsub.s32 %v3245, %v3821
  %v3823 = vrot.slane %v3180, %v3822
  %v3824 = vsel %vm3250, %v3823, %v3819
  %v3825 = vlaneseq
  %v3826 = vshrl.u32 %v3825, 7
  %v3827 = vsub.s32 %v3252, %v3826
  %v3828 = vrot.slane %v3183, %v3827
  %v3829 = vsel %vm3257, %v3828, %v3824
  %v3830 = vlaneseq
  %v3831 = vshrl.u32 %v3830, 7
  %v3832 = vsub.s32 %v3259, %v3831
  %v3833 = vrot.slane %v3186, %v3832
  %v3834 = vsel %vm3264, %v3833, %v3829
  %v3835 = vlaneseq
  %v3836 = vshrl.u32 %v3835, 7
  %v3837 = vsub.s32 %v3266, %v3836
  %v3838 = vrot.slane %v3189, %v3837
  %v3839 = vsel %vm3271, %v3838, %v3834
  %v3840 = vlaneseq
  %v3841 = vshrl.u32 %v3840, 7
  %v3842 = vsub.s32 %v3273, %v3841
  %v3843 = vrot.slane %v3192, %v3842
  %v3844 = vsel %vm3278, %v3843, %v3839
  %v3845 = vlaneseq
  %v3846 = vshrl.u32 %v3845, 7
  %v3847 = vsub.s32 %v3280, %v3846
  %v3848 = vrot.slane %v3195, %v3847
  %v3849 = vsel %vm3285, %v3848, %v3844
  %v3850 = vlaneseq
  %v3851 = vshrl.u32 %v3850, 7
  %v3852 = vsub.s32 %v3287, %v3851
  %v3853 = vrot.slane %v3198, %v3852
  %v3854 = vsel %vm3292, %v3853, %v3849
  %v3855 = vlaneseq
  %v3856 = vshrl.u32 %v3855, 7
  %v3857 = vsub.s32 %v3294, %v3856
  %v3858 = vrot.slane %v3201, %v3857
  %v3859 = vsel %vm3299, %v3858, %v3854
  %v3860 = vlaneseq
  %v3861 = vshrl.u32 %v3860, 7
  %v3862 = vsub.s32 %v3301, %v3861
  %v3863 = vrot.slane %v3204, %v3862
  %v3864 = vsel %vm3306, %v3863, %v3859
  %v3865 = vlaneseq
  %v3866 = vshrl.u32 %v3865, 7
  %v3867 = vsub.s32 %v3308, %v3866
  %v3868 = vrot.slane %v3207, %v3867
  %v3869 = vsel %vm3313, %v3868, %v3864
  %v3870 = vlaneseq
  %v3871 = vshrl.u32 %v3870, 7
  %v3872 = vsub.s32 %v3315, %v3871
  %v3873 = vrot.slane %v3210, %v3872
  %v3874 = vsel %vm3320, %v3873, %v3869
  %vm3875 = vcmask 1041409
  %v3876 = vsel %vm3875, %v3479, %v3321
  %vm3877 = vcmask 1042434
  %v3878 = vsel %vm3877, %v3637, %v3876
  %vm3879 = vcmask 1043459
  %v3880 = vsel %vm3879, %v3795, %v3878
  %v3881 = vsel %vm3875, %v3558, %v3400
  %v3882 = vsel %vm3877, %v3716, %v3881
  %v3883 = vsel %vm3879, %v3874, %v3882
  %v3884 = vcombine.low %v3880, %v3883
  %3886 = vst [vmem:[%s1] sm:$0xff] %v3884
  %v3887 = vmax.f32 %v10, %v11
  %3888 = vmax.xlane.f32.xlu0 %v3887
  %v3889 = vpop.xlane.xlu0 %3888
  %v3890 = vmax.f32 %v12, %v13
  %3891 = vmax.xlane.f32.xlu0 %v3890
  %v3892 = vpop.xlane.xlu0 %3891
  %v3893 = vmax.f32 %v14, %v15
  %3894 = vmax.xlane.f32.xlu0 %v3893
  %v3895 = vpop.xlane.xlu0 %3894
  %v3896 = vmax.f32 %v16, %v17
  %3897 = vmax.xlane.f32.xlu0 %v3896
  %v3898 = vpop.xlane.xlu0 %3897
  %v3899 = vmax.f32 %v18, %v19
  %3900 = vmax.xlane.f32.xlu0 %v3899
  %v3901 = vpop.xlane.xlu0 %3900
  %v3902 = vmax.f32 %v20, %v21
  %3903 = vmax.xlane.f32.xlu0 %v3902
  %v3904 = vpop.xlane.xlu0 %3903
  %v3905 = vmax.f32 %v22, %v23
  %3906 = vmax.xlane.f32.xlu0 %v3905
  %v3907 = vpop.xlane.xlu0 %3906
  %v3908 = vmax.f32 %v24, %v25
  %3909 = vmax.xlane.f32.xlu0 %v3908
  %v3910 = vpop.xlane.xlu0 %3909
  %v3911 = vmax.f32 %v26, %v27
  %3912 = vmax.xlane.f32.xlu0 %v3911
  %v3913 = vpop.xlane.xlu0 %3912
  %v3914 = vmax.f32 %v28, %v29
  %3915 = vmax.xlane.f32.xlu0 %v3914
  %v3916 = vpop.xlane.xlu0 %3915
  %v3917 = vmax.f32 %v30, %v31
  %3918 = vmax.xlane.f32.xlu0 %v3917
  %v3919 = vpop.xlane.xlu0 %3918
  %v3920 = vmax.f32 %v32, %v33
  %3921 = vmax.xlane.f32.xlu0 %v3920
  %v3922 = vpop.xlane.xlu0 %3921
  %v3923 = vmax.f32 %v34, %v35
  %3924 = vmax.xlane.f32.xlu0 %v3923
  %v3925 = vpop.xlane.xlu0 %3924
  %v3926 = vmax.f32 %v36, %v37
  %3927 = vmax.xlane.f32.xlu0 %v3926
  %v3928 = vpop.xlane.xlu0 %3927
  %v3929 = vmax.f32 %v38, %v39
  %3930 = vmax.xlane.f32.xlu0 %v3929
  %v3931 = vpop.xlane.xlu0 %3930
  %v3932 = vmax.f32 %v40, %v41
  %3933 = vmax.xlane.f32.xlu0 %v3932
  %v3934 = vpop.xlane.xlu0 %3933
  %v3935 = vmax.f32 %v42, %v43
  %3936 = vmax.xlane.f32.xlu0 %v3935
  %v3937 = vpop.xlane.xlu0 %3936
  %v3938 = vmax.f32 %v44, %v45
  %3939 = vmax.xlane.f32.xlu0 %v3938
  %v3940 = vpop.xlane.xlu0 %3939
  %v3941 = vmax.f32 %v46, %v47
  %3942 = vmax.xlane.f32.xlu0 %v3941
  %v3943 = vpop.xlane.xlu0 %3942
  %v3944 = vmax.f32 %v48, %v49
  %3945 = vmax.xlane.f32.xlu0 %v3944
  %v3946 = vpop.xlane.xlu0 %3945
  %v3947 = vmax.f32 %v50, %v51
  %3948 = vmax.xlane.f32.xlu0 %v3947
  %v3949 = vpop.xlane.xlu0 %3948
  %v3950 = vmax.f32 %v52, %v53
  %3951 = vmax.xlane.f32.xlu0 %v3950
  %v3952 = vpop.xlane.xlu0 %3951
  %v3953 = vmax.f32 %v54, %v55
  %3954 = vmax.xlane.f32.xlu0 %v3953
  %v3955 = vpop.xlane.xlu0 %3954
  %v3956 = vmax.f32 %v56, %v57
  %3957 = vmax.xlane.f32.xlu0 %v3956
  %v3958 = vpop.xlane.xlu0 %3957
  %v3959 = vmax.f32 %v58, %v59
  %3960 = vmax.xlane.f32.xlu0 %v3959
  %v3961 = vpop.xlane.xlu0 %3960
  %v3962 = vmax.f32 %v60, %v61
  %3963 = vmax.xlane.f32.xlu0 %v3962
  %v3964 = vpop.xlane.xlu0 %3963
  %v3965 = vmax.f32 %v62, %v63
  %3966 = vmax.xlane.f32.xlu0 %v3965
  %v3967 = vpop.xlane.xlu0 %3966
  %v3968 = vmax.f32 %v64, %v65
  %3969 = vmax.xlane.f32.xlu0 %v3968
  %v3970 = vpop.xlane.xlu0 %3969
  %v3971 = vmax.f32 %v66, %v67
  %3972 = vmax.xlane.f32.xlu0 %v3971
  %v3973 = vpop.xlane.xlu0 %3972
  %v3974 = vmax.f32 %v68, %v69
  %3975 = vmax.xlane.f32.xlu0 %v3974
  %v3976 = vpop.xlane.xlu0 %3975
  %v3977 = vmax.f32 %v70, %v71
  %3978 = vmax.xlane.f32.xlu0 %v3977
  %v3979 = vpop.xlane.xlu0 %3978
  %v3980 = vmax.f32 %v72, %v73
  %3981 = vmax.xlane.f32.xlu0 %v3980
  %v3982 = vpop.xlane.xlu0 %3981
  %v3983 = vmax.f32 %v74, %v75
  %3984 = vmax.xlane.f32.xlu0 %v3983
  %v3985 = vpop.xlane.xlu0 %3984
  %v3986 = vmax.f32 %v76, %v77
  %3987 = vmax.xlane.f32.xlu0 %v3986
  %v3988 = vpop.xlane.xlu0 %3987
  %v3989 = vmax.f32 %v78, %v79
  %3990 = vmax.xlane.f32.xlu0 %v3989
  %v3991 = vpop.xlane.xlu0 %3990
  %v3992 = vmax.f32 %v80, %v81
  %3993 = vmax.xlane.f32.xlu0 %v3992
  %v3994 = vpop.xlane.xlu0 %3993
  %v3995 = vmax.f32 %v82, %v83
  %3996 = vmax.xlane.f32.xlu0 %v3995
  %v3997 = vpop.xlane.xlu0 %3996
  %v3998 = vmax.f32 %v84, %v85
  %3999 = vmax.xlane.f32.xlu0 %v3998
  %v4000 = vpop.xlane.xlu0 %3999
  %v4001 = vmax.f32 %v86, %v87
  %4002 = vmax.xlane.f32.xlu0 %v4001
  %v4003 = vpop.xlane.xlu0 %4002
  %v4004 = vmax.f32 %v88, %v89
  %4005 = vmax.xlane.f32.xlu0 %v4004
  %v4006 = vpop.xlane.xlu0 %4005
  %v4007 = vmax.f32 %v90, %v91
  %4008 = vmax.xlane.f32.xlu0 %v4007
  %v4009 = vpop.xlane.xlu0 %4008
  %v4010 = vmax.f32 %v92, %v93
  %4011 = vmax.xlane.f32.xlu0 %v4010
  %v4012 = vpop.xlane.xlu0 %4011
  %v4013 = vmax.f32 %v94, %v95
  %4014 = vmax.xlane.f32.xlu0 %v4013
  %v4015 = vpop.xlane.xlu0 %4014
  %v4016 = vmax.f32 %v96, %v97
  %4017 = vmax.xlane.f32.xlu0 %v4016
  %v4018 = vpop.xlane.xlu0 %4017
  %v4019 = vmax.f32 %v98, %v99
  %4020 = vmax.xlane.f32.xlu0 %v4019
  %v4021 = vpop.xlane.xlu0 %4020
  %v4022 = vmax.f32 %v100, %v101
  %4023 = vmax.xlane.f32.xlu0 %v4022
  %v4024 = vpop.xlane.xlu0 %4023
  %v4025 = vmax.f32 %v102, %v103
  %4026 = vmax.xlane.f32.xlu0 %v4025
  %v4027 = vpop.xlane.xlu0 %4026
  %v4028 = vmax.f32 %v104, %v105
  %4029 = vmax.xlane.f32.xlu0 %v4028
  %v4030 = vpop.xlane.xlu0 %4029
  %v4031 = vmax.f32 %v106, %v107
  %4032 = vmax.xlane.f32.xlu0 %v4031
  %v4033 = vpop.xlane.xlu0 %4032
  %v4034 = vmax.f32 %v108, %v109
  %4035 = vmax.xlane.f32.xlu0 %v4034
  %v4036 = vpop.xlane.xlu0 %4035
  %v4037 = vmax.f32 %v110, %v111
  %4038 = vmax.xlane.f32.xlu0 %v4037
  %v4039 = vpop.xlane.xlu0 %4038
  %v4040 = vmax.f32 %v112, %v113
  %4041 = vmax.xlane.f32.xlu0 %v4040
  %v4042 = vpop.xlane.xlu0 %4041
  %v4043 = vmax.f32 %v114, %v115
  %4044 = vmax.xlane.f32.xlu0 %v4043
  %v4045 = vpop.xlane.xlu0 %4044
  %v4046 = vmax.f32 %v116, %v117
  %4047 = vmax.xlane.f32.xlu0 %v4046
  %v4048 = vpop.xlane.xlu0 %4047
  %v4049 = vmax.f32 %v118, %v119
  %4050 = vmax.xlane.f32.xlu0 %v4049
  %v4051 = vpop.xlane.xlu0 %4050
  %v4052 = vmax.f32 %v120, %v121
  %4053 = vmax.xlane.f32.xlu0 %v4052
  %v4054 = vpop.xlane.xlu0 %4053
  %v4055 = vmax.f32 %v122, %v123
  %4056 = vmax.xlane.f32.xlu0 %v4055
  %v4057 = vpop.xlane.xlu0 %4056
  %v4058 = vmax.f32 %v124, %v125
  %4059 = vmax.xlane.f32.xlu0 %v4058
  %v4060 = vpop.xlane.xlu0 %4059
  %v4061 = vmax.f32 %v126, %v127
  %4062 = vmax.xlane.f32.xlu0 %v4061
  %v4063 = vpop.xlane.xlu0 %4062
  %v4064 = vmax.f32 %v128, %v129
  %4065 = vmax.xlane.f32.xlu0 %v4064
  %v4066 = vpop.xlane.xlu0 %4065
  %v4067 = vmax.f32 %v130, %v131
  %4068 = vmax.xlane.f32.xlu0 %v4067
  %v4069 = vpop.xlane.xlu0 %4068
  %v4070 = vmax.f32 %v132, %v133
  %4071 = vmax.xlane.f32.xlu0 %v4070
  %v4072 = vpop.xlane.xlu0 %4071
  %v4073 = vmax.f32 %v134, %v135
  %4074 = vmax.xlane.f32.xlu0 %v4073
  %v4075 = vpop.xlane.xlu0 %4074
  %v4076 = vmax.f32 %v136, %v137
  %4077 = vmax.xlane.f32.xlu0 %v4076
  %v4078 = vpop.xlane.xlu0 %4077
  %v4079 = vmax.f32 %v138, %v139
  %4080 = vmax.xlane.f32.xlu0 %v4079
  %v4081 = vpop.xlane.xlu0 %4080
  %v4082 = vmax.f32 %v140, %v141
  %4083 = vmax.xlane.f32.xlu0 %v4082
  %v4084 = vpop.xlane.xlu0 %4083
  %v4085 = vmax.f32 %v142, %v143
  %4086 = vmax.xlane.f32.xlu0 %v4085
  %v4087 = vpop.xlane.xlu0 %4086
  %v4088 = vmax.f32 %v144, %v145
  %4089 = vmax.xlane.f32.xlu0 %v4088
  %v4090 = vpop.xlane.xlu0 %4089
  %v4091 = vmax.f32 %v146, %v147
  %4092 = vmax.xlane.f32.xlu0 %v4091
  %v4093 = vpop.xlane.xlu0 %4092
  %v4094 = vmax.f32 %v148, %v149
  %4095 = vmax.xlane.f32.xlu0 %v4094
  %v4096 = vpop.xlane.xlu0 %4095
  %v4097 = vmax.f32 %v150, %v151
  %4098 = vmax.xlane.f32.xlu0 %v4097
  %v4099 = vpop.xlane.xlu0 %4098
  %v4100 = vmax.f32 %v152, %v153
  %4101 = vmax.xlane.f32.xlu0 %v4100
  %v4102 = vpop.xlane.xlu0 %4101
  %v4103 = vmax.f32 %v154, %v155
  %4104 = vmax.xlane.f32.xlu0 %v4103
  %v4105 = vpop.xlane.xlu0 %4104
  %v4106 = vmax.f32 %v156, %v157
  %4107 = vmax.xlane.f32.xlu0 %v4106
  %v4108 = vpop.xlane.xlu0 %4107
  %v4109 = vmax.f32 %v158, %v159
  %4110 = vmax.xlane.f32.xlu0 %v4109
  %v4111 = vpop.xlane.xlu0 %4110
  %v4112 = vmax.f32 %v160, %v161
  %4113 = vmax.xlane.f32.xlu0 %v4112
  %v4114 = vpop.xlane.xlu0 %4113
  %v4115 = vmax.f32 %v162, %v163
  %4116 = vmax.xlane.f32.xlu0 %v4115
  %v4117 = vpop.xlane.xlu0 %4116
  %v4118 = vmax.f32 %v164, %v165
  %4119 = vmax.xlane.f32.xlu0 %v4118
  %v4120 = vpop.xlane.xlu0 %4119
  %v4121 = vmax.f32 %v166, %v167
  %4122 = vmax.xlane.f32.xlu0 %v4121
  %v4123 = vpop.xlane.xlu0 %4122
  %v4124 = vmax.f32 %v168, %v169
  %4125 = vmax.xlane.f32.xlu0 %v4124
  %v4126 = vpop.xlane.xlu0 %4125
  %v4127 = vmax.f32 %v170, %v171
  %4128 = vmax.xlane.f32.xlu0 %v4127
  %v4129 = vpop.xlane.xlu0 %4128
  %v4130 = vmax.f32 %v172, %v173
  %4131 = vmax.xlane.f32.xlu0 %v4130
  %v4132 = vpop.xlane.xlu0 %4131
  %v4133 = vmax.f32 %v174, %v175
  %4134 = vmax.xlane.f32.xlu0 %v4133
  %v4135 = vpop.xlane.xlu0 %4134
  %v4136 = vmax.f32 %v176, %v177
  %4137 = vmax.xlane.f32.xlu0 %v4136
  %v4138 = vpop.xlane.xlu0 %4137
  %v4139 = vmax.f32 %v178, %v179
  %4140 = vmax.xlane.f32.xlu0 %v4139
  %v4141 = vpop.xlane.xlu0 %4140
  %v4142 = vmax.f32 %v180, %v181
  %4143 = vmax.xlane.f32.xlu0 %v4142
  %v4144 = vpop.xlane.xlu0 %4143
  %v4145 = vmax.f32 %v182, %v183
  %4146 = vmax.xlane.f32.xlu0 %v4145
  %v4147 = vpop.xlane.xlu0 %4146
  %v4148 = vmax.f32 %v184, %v185
  %4149 = vmax.xlane.f32.xlu0 %v4148
  %v4150 = vpop.xlane.xlu0 %4149
  %v4151 = vmax.f32 %v186, %v187
  %4152 = vmax.xlane.f32.xlu0 %v4151
  %v4153 = vpop.xlane.xlu0 %4152
  %v4154 = vmax.f32 %v188, %v189
  %4155 = vmax.xlane.f32.xlu0 %v4154
  %v4156 = vpop.xlane.xlu0 %4155
  %v4157 = vmax.f32 %v190, %v191
  %4158 = vmax.xlane.f32.xlu0 %v4157
  %v4159 = vpop.xlane.xlu0 %4158
  %v4160 = vmax.f32 %v192, %v193
  %4161 = vmax.xlane.f32.xlu0 %v4160
  %v4162 = vpop.xlane.xlu0 %4161
  %v4163 = vmax.f32 %v194, %v195
  %4164 = vmax.xlane.f32.xlu0 %v4163
  %v4165 = vpop.xlane.xlu0 %4164
  %v4166 = vmax.f32 %v196, %v197
  %4167 = vmax.xlane.f32.xlu0 %v4166
  %v4168 = vpop.xlane.xlu0 %4167
  %v4169 = vmax.f32 %v198, %v199
  %4170 = vmax.xlane.f32.xlu0 %v4169
  %v4171 = vpop.xlane.xlu0 %4170
  %v4172 = vmax.f32 %v200, %v201
  %4173 = vmax.xlane.f32.xlu0 %v4172
  %v4174 = vpop.xlane.xlu0 %4173
  %v4175 = vmax.f32 %v202, %v203
  %4176 = vmax.xlane.f32.xlu0 %v4175
  %v4177 = vpop.xlane.xlu0 %4176
  %v4178 = vmax.f32 %v204, %v205
  %4179 = vmax.xlane.f32.xlu0 %v4178
  %v4180 = vpop.xlane.xlu0 %4179
  %v4181 = vmax.f32 %v206, %v207
  %4182 = vmax.xlane.f32.xlu0 %v4181
  %v4183 = vpop.xlane.xlu0 %4182
  %v4184 = vmax.f32 %v208, %v209
  %4185 = vmax.xlane.f32.xlu0 %v4184
  %v4186 = vpop.xlane.xlu0 %4185
  %v4187 = vmax.f32 %v210, %v211
  %4188 = vmax.xlane.f32.xlu0 %v4187
  %v4189 = vpop.xlane.xlu0 %4188
  %v4190 = vmax.f32 %v212, %v213
  %4191 = vmax.xlane.f32.xlu0 %v4190
  %v4192 = vpop.xlane.xlu0 %4191
  %v4193 = vmax.f32 %v214, %v215
  %4194 = vmax.xlane.f32.xlu0 %v4193
  %v4195 = vpop.xlane.xlu0 %4194
  %v4196 = vmax.f32 %v216, %v217
  %4197 = vmax.xlane.f32.xlu0 %v4196
  %v4198 = vpop.xlane.xlu0 %4197
  %v4199 = vmax.f32 %v218, %v219
  %4200 = vmax.xlane.f32.xlu0 %v4199
  %v4201 = vpop.xlane.xlu0 %4200
  %v4202 = vmax.f32 %v220, %v221
  %4203 = vmax.xlane.f32.xlu0 %v4202
  %v4204 = vpop.xlane.xlu0 %4203
  %v4205 = vmax.f32 %v222, %v223
  %4206 = vmax.xlane.f32.xlu0 %v4205
  %v4207 = vpop.xlane.xlu0 %4206
  %v4208 = vmax.f32 %v224, %v225
  %4209 = vmax.xlane.f32.xlu0 %v4208
  %v4210 = vpop.xlane.xlu0 %4209
  %v4211 = vmax.f32 %v226, %v227
  %4212 = vmax.xlane.f32.xlu0 %v4211
  %v4213 = vpop.xlane.xlu0 %4212
  %v4214 = vmax.f32 %v228, %v229
  %4215 = vmax.xlane.f32.xlu0 %v4214
  %v4216 = vpop.xlane.xlu0 %4215
  %v4217 = vmax.f32 %v230, %v231
  %4218 = vmax.xlane.f32.xlu0 %v4217
  %v4219 = vpop.xlane.xlu0 %4218
  %v4220 = vmax.f32 %v232, %v233
  %4221 = vmax.xlane.f32.xlu0 %v4220
  %v4222 = vpop.xlane.xlu0 %4221
  %v4223 = vmax.f32 %v234, %v235
  %4224 = vmax.xlane.f32.xlu0 %v4223
  %v4225 = vpop.xlane.xlu0 %4224
  %v4226 = vmax.f32 %v236, %v237
  %4227 = vmax.xlane.f32.xlu0 %v4226
  %v4228 = vpop.xlane.xlu0 %4227
  %v4229 = vmax.f32 %v238, %v239
  %4230 = vmax.xlane.f32.xlu0 %v4229
  %v4231 = vpop.xlane.xlu0 %4230
  %v4232 = vmax.f32 %v240, %v241
  %4233 = vmax.xlane.f32.xlu0 %v4232
  %v4234 = vpop.xlane.xlu0 %4233
  %v4235 = vmax.f32 %v242, %v243
  %4236 = vmax.xlane.f32.xlu0 %v4235
  %v4237 = vpop.xlane.xlu0 %4236
  %v4238 = vmax.f32 %v244, %v245
  %4239 = vmax.xlane.f32.xlu0 %v4238
  %v4240 = vpop.xlane.xlu0 %4239
  %v4241 = vmax.f32 %v246, %v247
  %4242 = vmax.xlane.f32.xlu0 %v4241
  %v4243 = vpop.xlane.xlu0 %4242
  %v4244 = vmax.f32 %v248, %v249
  %4245 = vmax.xlane.f32.xlu0 %v4244
  %v4246 = vpop.xlane.xlu0 %4245
  %v4247 = vmax.f32 %v250, %v251
  %4248 = vmax.xlane.f32.xlu0 %v4247
  %v4249 = vpop.xlane.xlu0 %4248
  %v4250 = vmax.f32 %v252, %v253
  %4251 = vmax.xlane.f32.xlu0 %v4250
  %v4252 = vpop.xlane.xlu0 %4251
  %v4253 = vmax.f32 %v254, %v255
  %4254 = vmax.xlane.f32.xlu0 %v4253
  %v4255 = vpop.xlane.xlu0 %4254
  %v4256 = vmax.f32 %v256, %v257
  %4257 = vmax.xlane.f32.xlu0 %v4256
  %v4258 = vpop.xlane.xlu0 %4257
  %v4259 = vmax.f32 %v258, %v259
  %4260 = vmax.xlane.f32.xlu0 %v4259
  %v4261 = vpop.xlane.xlu0 %4260
  %v4262 = vmax.f32 %v260, %v261
  %4263 = vmax.xlane.f32.xlu0 %v4262
  %v4264 = vpop.xlane.xlu0 %4263
  %v4265 = vmax.f32 %v262, %v263
  %4266 = vmax.xlane.f32.xlu0 %v4265
  %v4267 = vpop.xlane.xlu0 %4266
  %v4268 = vmax.f32 %v264, %v265
  %4269 = vmax.xlane.f32.xlu0 %v4268
  %v4270 = vpop.xlane.xlu0 %4269
  %v4400 = vunpack.c.l.s4 839922192
  %v4401 = vunpack.c.0.s8 %v4400
  %v4402 = vlaneseq
  %v4403 = vshrl.u32 %v4402, 7
  %v4404 = vsub.s32 %v4401, %v4403
  %v4405 = vrot.slane %v3889, %v4404
  %v4407 = vunpack.c.l.s4 1985246804
  %v4408 = vunpack.c.0.s8 %v4407
  %v4409 = vlaneseq
  %v4410 = vshrl.u32 %v4409, 7
  %v4411 = vsub.s32 %v4408, %v4410
  %v4412 = vrot.slane %v3889, %v4411
  %v4414 = vunpack.c.l.s4 839922192
  %v4415 = vunpack.c.0.s8 %v4414
  %v4416 = vlaneseq
  %v4417 = vshrl.u32 %v4416, 7
  %v4418 = vsub.s32 %v4415, %v4417
  %v4419 = vrot.slane %v3892, %v4418
  %v4421 = vunpack.c.l.s4 1985246804
  %v4422 = vunpack.c.0.s8 %v4421
  %v4423 = vlaneseq
  %v4424 = vshrl.u32 %v4423, 7
  %v4425 = vsub.s32 %v4422, %v4424
  %v4426 = vrot.slane %v3892, %v4425
  %v4428 = vunpack.c.l.s4 839922192
  %v4429 = vunpack.c.0.s8 %v4428
  %v4430 = vlaneseq
  %v4431 = vshrl.u32 %v4430, 7
  %v4432 = vsub.s32 %v4429, %v4431
  %v4433 = vrot.slane %v3895, %v4432
  %v4435 = vunpack.c.l.s4 1985246804
  %v4436 = vunpack.c.0.s8 %v4435
  %v4437 = vlaneseq
  %v4438 = vshrl.u32 %v4437, 7
  %v4439 = vsub.s32 %v4436, %v4438
  %v4440 = vrot.slane %v3895, %v4439
  %v4442 = vunpack.c.l.s4 839922192
  %v4443 = vunpack.c.0.s8 %v4442
  %v4444 = vlaneseq
  %v4445 = vshrl.u32 %v4444, 7
  %v4446 = vsub.s32 %v4443, %v4445
  %v4447 = vrot.slane %v3898, %v4446
  %v4449 = vunpack.c.l.s4 1985246804
  %v4450 = vunpack.c.0.s8 %v4449
  %v4451 = vlaneseq
  %v4452 = vshrl.u32 %v4451, 7
  %v4453 = vsub.s32 %v4450, %v4452
  %v4454 = vrot.slane %v3898, %v4453
  %v4456 = vunpack.c.l.s4 839922192
  %v4457 = vunpack.c.0.s8 %v4456
  %v4458 = vlaneseq
  %v4459 = vshrl.u32 %v4458, 7
  %v4460 = vsub.s32 %v4457, %v4459
  %v4461 = vrot.slane %v3901, %v4460
  %v4463 = vunpack.c.l.s4 1985246804
  %v4464 = vunpack.c.0.s8 %v4463
  %v4465 = vlaneseq
  %v4466 = vshrl.u32 %v4465, 7
  %v4467 = vsub.s32 %v4464, %v4466
  %v4468 = vrot.slane %v3901, %v4467
  %v4470 = vunpack.c.l.s4 839922192
  %v4471 = vunpack.c.0.s8 %v4470
  %v4472 = vlaneseq
  %v4473 = vshrl.u32 %v4472, 7
  %v4474 = vsub.s32 %v4471, %v4473
  %v4475 = vrot.slane %v3904, %v4474
  %v4477 = vunpack.c.l.s4 1985246804
  %v4478 = vunpack.c.0.s8 %v4477
  %v4479 = vlaneseq
  %v4480 = vshrl.u32 %v4479, 7
  %v4481 = vsub.s32 %v4478, %v4480
  %v4482 = vrot.slane %v3904, %v4481
  %v4484 = vunpack.c.l.s4 839922192
  %v4485 = vunpack.c.0.s8 %v4484
  %v4486 = vlaneseq
  %v4487 = vshrl.u32 %v4486, 7
  %v4488 = vsub.s32 %v4485, %v4487
  %v4489 = vrot.slane %v3907, %v4488
  %v4491 = vunpack.c.l.s4 1985246804
  %v4492 = vunpack.c.0.s8 %v4491
  %v4493 = vlaneseq
  %v4494 = vshrl.u32 %v4493, 7
  %v4495 = vsub.s32 %v4492, %v4494
  %v4496 = vrot.slane %v3907, %v4495
  %v4498 = vunpack.c.l.s4 839922192
  %v4499 = vunpack.c.0.s8 %v4498
  %v4500 = vlaneseq
  %v4501 = vshrl.u32 %v4500, 7
  %v4502 = vsub.s32 %v4499, %v4501
  %v4503 = vrot.slane %v3910, %v4502
  %v4505 = vunpack.c.l.s4 1985246804
  %v4506 = vunpack.c.0.s8 %v4505
  %v4507 = vlaneseq
  %v4508 = vshrl.u32 %v4507, 7
  %v4509 = vsub.s32 %v4506, %v4508
  %v4510 = vrot.slane %v3910, %v4509
  %v4512 = vunpack.c.l.s4 839922192
  %v4513 = vunpack.c.0.s8 %v4512
  %v4514 = vlaneseq
  %v4515 = vshrl.u32 %v4514, 7
  %v4516 = vsub.s32 %v4513, %v4515
  %v4517 = vrot.slane %v3913, %v4516
  %v4519 = vunpack.c.l.s4 1985246804
  %v4520 = vunpack.c.0.s8 %v4519
  %v4521 = vlaneseq
  %v4522 = vshrl.u32 %v4521, 7
  %v4523 = vsub.s32 %v4520, %v4522
  %v4524 = vrot.slane %v3913, %v4523
  %v4526 = vunpack.c.l.s4 839922192
  %v4527 = vunpack.c.0.s8 %v4526
  %v4528 = vlaneseq
  %v4529 = vshrl.u32 %v4528, 7
  %v4530 = vsub.s32 %v4527, %v4529
  %v4531 = vrot.slane %v3916, %v4530
  %v4533 = vunpack.c.l.s4 1985246804
  %v4534 = vunpack.c.0.s8 %v4533
  %v4535 = vlaneseq
  %v4536 = vshrl.u32 %v4535, 7
  %v4537 = vsub.s32 %v4534, %v4536
  %v4538 = vrot.slane %v3916, %v4537
  %v4540 = vunpack.c.l.s4 839922192
  %v4541 = vunpack.c.0.s8 %v4540
  %v4542 = vlaneseq
  %v4543 = vshrl.u32 %v4542, 7
  %v4544 = vsub.s32 %v4541, %v4543
  %v4545 = vrot.slane %v3919, %v4544
  %v4547 = vunpack.c.l.s4 1985246804
  %v4548 = vunpack.c.0.s8 %v4547
  %v4549 = vlaneseq
  %v4550 = vshrl.u32 %v4549, 7
  %v4551 = vsub.s32 %v4548, %v4550
  %v4552 = vrot.slane %v3919, %v4551
  %v4554 = vunpack.c.l.s4 839922192
  %v4555 = vunpack.c.0.s8 %v4554
  %v4556 = vlaneseq
  %v4557 = vshrl.u32 %v4556, 7
  %v4558 = vsub.s32 %v4555, %v4557
  %v4559 = vrot.slane %v3922, %v4558
  %v4561 = vunpack.c.l.s4 1985246804
  %v4562 = vunpack.c.0.s8 %v4561
  %v4563 = vlaneseq
  %v4564 = vshrl.u32 %v4563, 7
  %v4565 = vsub.s32 %v4562, %v4564
  %v4566 = vrot.slane %v3922, %v4565
  %v4568 = vunpack.c.l.s4 839922192
  %v4569 = vunpack.c.0.s8 %v4568
  %v4570 = vlaneseq
  %v4571 = vshrl.u32 %v4570, 7
  %v4572 = vsub.s32 %v4569, %v4571
  %v4573 = vrot.slane %v3925, %v4572
  %v4575 = vunpack.c.l.s4 1985246804
  %v4576 = vunpack.c.0.s8 %v4575
  %v4577 = vlaneseq
  %v4578 = vshrl.u32 %v4577, 7
  %v4579 = vsub.s32 %v4576, %v4578
  %v4580 = vrot.slane %v3925, %v4579
  %v4582 = vunpack.c.l.s4 839922192
  %v4583 = vunpack.c.0.s8 %v4582
  %v4584 = vlaneseq
  %v4585 = vshrl.u32 %v4584, 7
  %v4586 = vsub.s32 %v4583, %v4585
  %v4587 = vrot.slane %v3928, %v4586
  %v4589 = vunpack.c.l.s4 1985246804
  %v4590 = vunpack.c.0.s8 %v4589
  %v4591 = vlaneseq
  %v4592 = vshrl.u32 %v4591, 7
  %v4593 = vsub.s32 %v4590, %v4592
  %v4594 = vrot.slane %v3928, %v4593
  %v4596 = vunpack.c.l.s4 839922192
  %v4597 = vunpack.c.0.s8 %v4596
  %v4598 = vlaneseq
  %v4599 = vshrl.u32 %v4598, 7
  %v4600 = vsub.s32 %v4597, %v4599
  %v4601 = vrot.slane %v3931, %v4600
  %v4603 = vunpack.c.l.s4 1985246804
  %v4604 = vunpack.c.0.s8 %v4603
  %v4605 = vlaneseq
  %v4606 = vshrl.u32 %v4605, 7
  %v4607 = vsub.s32 %v4604, %v4606
  %v4608 = vrot.slane %v3931, %v4607
  %v4610 = vunpack.c.l.s4 839922192
  %v4611 = vunpack.c.0.s8 %v4610
  %v4612 = vlaneseq
  %v4613 = vshrl.u32 %v4612, 7
  %v4614 = vsub.s32 %v4611, %v4613
  %v4615 = vrot.slane %v3934, %v4614
  %v4617 = vunpack.c.l.s4 1985246804
  %v4618 = vunpack.c.0.s8 %v4617
  %v4619 = vlaneseq
  %v4620 = vshrl.u32 %v4619, 7
  %v4621 = vsub.s32 %v4618, %v4620
  %v4622 = vrot.slane %v3934, %v4621
  %v4624 = vunpack.c.l.s4 839922192
  %v4625 = vunpack.c.0.s8 %v4624
  %v4626 = vlaneseq
  %v4627 = vshrl.u32 %v4626, 7
  %v4628 = vsub.s32 %v4625, %v4627
  %v4629 = vrot.slane %v3937, %v4628
  %v4631 = vunpack.c.l.s4 1985246804
  %v4632 = vunpack.c.0.s8 %v4631
  %v4633 = vlaneseq
  %v4634 = vshrl.u32 %v4633, 7
  %v4635 = vsub.s32 %v4632, %v4634
  %v4636 = vrot.slane %v3937, %v4635
  %v4638 = vunpack.c.l.s4 839922192
  %v4639 = vunpack.c.0.s8 %v4638
  %v4640 = vlaneseq
  %v4641 = vshrl.u32 %v4640, 7
  %v4642 = vsub.s32 %v4639, %v4641
  %v4643 = vrot.slane %v3940, %v4642
  %v4645 = vunpack.c.l.s4 1985246804
  %v4646 = vunpack.c.0.s8 %v4645
  %v4647 = vlaneseq
  %v4648 = vshrl.u32 %v4647, 7
  %v4649 = vsub.s32 %v4646, %v4648
  %v4650 = vrot.slane %v3940, %v4649
  %v4652 = vunpack.c.l.s4 839922192
  %v4653 = vunpack.c.0.s8 %v4652
  %v4654 = vlaneseq
  %v4655 = vshrl.u32 %v4654, 7
  %v4656 = vsub.s32 %v4653, %v4655
  %v4657 = vrot.slane %v3943, %v4656
  %v4659 = vunpack.c.l.s4 1985246804
  %v4660 = vunpack.c.0.s8 %v4659
  %v4661 = vlaneseq
  %v4662 = vshrl.u32 %v4661, 7
  %v4663 = vsub.s32 %v4660, %v4662
  %v4664 = vrot.slane %v3943, %v4663
  %v4666 = vunpack.c.l.s4 839922192
  %v4667 = vunpack.c.0.s8 %v4666
  %v4668 = vlaneseq
  %v4669 = vshrl.u32 %v4668, 7
  %v4670 = vsub.s32 %v4667, %v4669
  %v4671 = vrot.slane %v3946, %v4670
  %v4673 = vunpack.c.l.s4 1985246804
  %v4674 = vunpack.c.0.s8 %v4673
  %v4675 = vlaneseq
  %v4676 = vshrl.u32 %v4675, 7
  %v4677 = vsub.s32 %v4674, %v4676
  %v4678 = vrot.slane %v3946, %v4677
  %v4680 = vunpack.c.l.s4 839922192
  %v4681 = vunpack.c.0.s8 %v4680
  %v4682 = vlaneseq
  %v4683 = vshrl.u32 %v4682, 7
  %v4684 = vsub.s32 %v4681, %v4683
  %v4685 = vrot.slane %v3949, %v4684
  %v4687 = vunpack.c.l.s4 1985246804
  %v4688 = vunpack.c.0.s8 %v4687
  %v4689 = vlaneseq
  %v4690 = vshrl.u32 %v4689, 7
  %v4691 = vsub.s32 %v4688, %v4690
  %v4692 = vrot.slane %v3949, %v4691
  %v4694 = vunpack.c.l.s4 839922192
  %v4695 = vunpack.c.0.s8 %v4694
  %v4696 = vlaneseq
  %v4697 = vshrl.u32 %v4696, 7
  %v4698 = vsub.s32 %v4695, %v4697
  %v4699 = vrot.slane %v3952, %v4698
  %v4701 = vunpack.c.l.s4 1985246804
  %v4702 = vunpack.c.0.s8 %v4701
  %v4703 = vlaneseq
  %v4704 = vshrl.u32 %v4703, 7
  %v4705 = vsub.s32 %v4702, %v4704
  %v4706 = vrot.slane %v3952, %v4705
  %v4708 = vunpack.c.l.s4 839922192
  %v4709 = vunpack.c.0.s8 %v4708
  %v4710 = vlaneseq
  %v4711 = vshrl.u32 %v4710, 7
  %v4712 = vsub.s32 %v4709, %v4711
  %v4713 = vrot.slane %v3955, %v4712
  %v4715 = vunpack.c.l.s4 1985246804
  %v4716 = vunpack.c.0.s8 %v4715
  %v4717 = vlaneseq
  %v4718 = vshrl.u32 %v4717, 7
  %v4719 = vsub.s32 %v4716, %v4718
  %v4720 = vrot.slane %v3955, %v4719
  %v4722 = vunpack.c.l.s4 839922192
  %v4723 = vunpack.c.0.s8 %v4722
  %v4724 = vlaneseq
  %v4725 = vshrl.u32 %v4724, 7
  %v4726 = vsub.s32 %v4723, %v4725
  %v4727 = vrot.slane %v3958, %v4726
  %v4729 = vunpack.c.l.s4 1985246804
  %v4730 = vunpack.c.0.s8 %v4729
  %v4731 = vlaneseq
  %v4732 = vshrl.u32 %v4731, 7
  %v4733 = vsub.s32 %v4730, %v4732
  %v4734 = vrot.slane %v3958, %v4733
  %v4736 = vunpack.c.l.s4 839922192
  %v4737 = vunpack.c.0.s8 %v4736
  %v4738 = vlaneseq
  %v4739 = vshrl.u32 %v4738, 7
  %v4740 = vsub.s32 %v4737, %v4739
  %v4741 = vrot.slane %v3961, %v4740
  %v4743 = vunpack.c.l.s4 1985246804
  %v4744 = vunpack.c.0.s8 %v4743
  %v4745 = vlaneseq
  %v4746 = vshrl.u32 %v4745, 7
  %v4747 = vsub.s32 %v4744, %v4746
  %v4748 = vrot.slane %v3961, %v4747
  %v4750 = vunpack.c.l.s4 839922192
  %v4751 = vunpack.c.0.s8 %v4750
  %v4752 = vlaneseq
  %v4753 = vshrl.u32 %v4752, 7
  %v4754 = vsub.s32 %v4751, %v4753
  %v4755 = vrot.slane %v3964, %v4754
  %v4757 = vunpack.c.l.s4 1985246804
  %v4758 = vunpack.c.0.s8 %v4757
  %v4759 = vlaneseq
  %v4760 = vshrl.u32 %v4759, 7
  %v4761 = vsub.s32 %v4758, %v4760
  %v4762 = vrot.slane %v3964, %v4761
  %v4764 = vunpack.c.l.s4 839922192
  %v4765 = vunpack.c.0.s8 %v4764
  %v4766 = vlaneseq
  %v4767 = vshrl.u32 %v4766, 7
  %v4768 = vsub.s32 %v4765, %v4767
  %v4769 = vrot.slane %v3967, %v4768
  %v4771 = vunpack.c.l.s4 1985246804
  %v4772 = vunpack.c.0.s8 %v4771
  %v4773 = vlaneseq
  %v4774 = vshrl.u32 %v4773, 7
  %v4775 = vsub.s32 %v4772, %v4774
  %v4776 = vrot.slane %v3967, %v4775
  %v4778 = vunpack.c.l.s4 839922192
  %v4779 = vunpack.c.0.s8 %v4778
  %v4780 = vlaneseq
  %v4781 = vshrl.u32 %v4780, 7
  %v4782 = vsub.s32 %v4779, %v4781
  %v4783 = vrot.slane %v3970, %v4782
  %v4785 = vunpack.c.l.s4 1985246804
  %v4786 = vunpack.c.0.s8 %v4785
  %v4787 = vlaneseq
  %v4788 = vshrl.u32 %v4787, 7
  %v4789 = vsub.s32 %v4786, %v4788
  %v4790 = vrot.slane %v3970, %v4789
  %v4792 = vunpack.c.l.s4 839922192
  %v4793 = vunpack.c.0.s8 %v4792
  %v4794 = vlaneseq
  %v4795 = vshrl.u32 %v4794, 7
  %v4796 = vsub.s32 %v4793, %v4795
  %v4797 = vrot.slane %v3973, %v4796
  %v4799 = vunpack.c.l.s4 1985246804
  %v4800 = vunpack.c.0.s8 %v4799
  %v4801 = vlaneseq
  %v4802 = vshrl.u32 %v4801, 7
  %v4803 = vsub.s32 %v4800, %v4802
  %v4804 = vrot.slane %v3973, %v4803
  %v4806 = vunpack.c.l.s4 839922192
  %v4807 = vunpack.c.0.s8 %v4806
  %v4808 = vlaneseq
  %v4809 = vshrl.u32 %v4808, 7
  %v4810 = vsub.s32 %v4807, %v4809
  %v4811 = vrot.slane %v3976, %v4810
  %v4813 = vunpack.c.l.s4 1985246804
  %v4814 = vunpack.c.0.s8 %v4813
  %v4815 = vlaneseq
  %v4816 = vshrl.u32 %v4815, 7
  %v4817 = vsub.s32 %v4814, %v4816
  %v4818 = vrot.slane %v3976, %v4817
  %v4820 = vunpack.c.l.s4 839922192
  %v4821 = vunpack.c.0.s8 %v4820
  %v4822 = vlaneseq
  %v4823 = vshrl.u32 %v4822, 7
  %v4824 = vsub.s32 %v4821, %v4823
  %v4825 = vrot.slane %v3979, %v4824
  %v4827 = vunpack.c.l.s4 1985246804
  %v4828 = vunpack.c.0.s8 %v4827
  %v4829 = vlaneseq
  %v4830 = vshrl.u32 %v4829, 7
  %v4831 = vsub.s32 %v4828, %v4830
  %v4832 = vrot.slane %v3979, %v4831
  %v4834 = vunpack.c.l.s4 839922192
  %v4835 = vunpack.c.0.s8 %v4834
  %v4836 = vlaneseq
  %v4837 = vshrl.u32 %v4836, 7
  %v4838 = vsub.s32 %v4835, %v4837
  %v4839 = vrot.slane %v3982, %v4838
  %v4841 = vunpack.c.l.s4 1985246804
  %v4842 = vunpack.c.0.s8 %v4841
  %v4843 = vlaneseq
  %v4844 = vshrl.u32 %v4843, 7
  %v4845 = vsub.s32 %v4842, %v4844
  %v4846 = vrot.slane %v3982, %v4845
  %v4848 = vunpack.c.l.s4 839922192
  %v4849 = vunpack.c.0.s8 %v4848
  %v4850 = vlaneseq
  %v4851 = vshrl.u32 %v4850, 7
  %v4852 = vsub.s32 %v4849, %v4851
  %v4853 = vrot.slane %v3985, %v4852
  %v4855 = vunpack.c.l.s4 1985246804
  %v4856 = vunpack.c.0.s8 %v4855
  %v4857 = vlaneseq
  %v4858 = vshrl.u32 %v4857, 7
  %v4859 = vsub.s32 %v4856, %v4858
  %v4860 = vrot.slane %v3985, %v4859
  %v4862 = vunpack.c.l.s4 839922192
  %v4863 = vunpack.c.0.s8 %v4862
  %v4864 = vlaneseq
  %v4865 = vshrl.u32 %v4864, 7
  %v4866 = vsub.s32 %v4863, %v4865
  %v4867 = vrot.slane %v3988, %v4866
  %v4869 = vunpack.c.l.s4 1985246804
  %v4870 = vunpack.c.0.s8 %v4869
  %v4871 = vlaneseq
  %v4872 = vshrl.u32 %v4871, 7
  %v4873 = vsub.s32 %v4870, %v4872
  %v4874 = vrot.slane %v3988, %v4873
  %v4876 = vunpack.c.l.s4 839922192
  %v4877 = vunpack.c.0.s8 %v4876
  %v4878 = vlaneseq
  %v4879 = vshrl.u32 %v4878, 7
  %v4880 = vsub.s32 %v4877, %v4879
  %v4881 = vrot.slane %v3991, %v4880
  %v4883 = vunpack.c.l.s4 1985246804
  %v4884 = vunpack.c.0.s8 %v4883
  %v4885 = vlaneseq
  %v4886 = vshrl.u32 %v4885, 7
  %v4887 = vsub.s32 %v4884, %v4886
  %v4888 = vrot.slane %v3991, %v4887
  %v4890 = vunpack.c.l.s4 839922192
  %v4891 = vunpack.c.0.s8 %v4890
  %v4892 = vlaneseq
  %v4893 = vshrl.u32 %v4892, 7
  %v4894 = vsub.s32 %v4891, %v4893
  %v4895 = vrot.slane %v3994, %v4894
  %v4897 = vunpack.c.l.s4 1985246804
  %v4898 = vunpack.c.0.s8 %v4897
  %v4899 = vlaneseq
  %v4900 = vshrl.u32 %v4899, 7
  %v4901 = vsub.s32 %v4898, %v4900
  %v4902 = vrot.slane %v3994, %v4901
  %v4904 = vunpack.c.l.s4 839922192
  %v4905 = vunpack.c.0.s8 %v4904
  %v4906 = vlaneseq
  %v4907 = vshrl.u32 %v4906, 7
  %v4908 = vsub.s32 %v4905, %v4907
  %v4909 = vrot.slane %v3997, %v4908
  %v4911 = vunpack.c.l.s4 1985246804
  %v4912 = vunpack.c.0.s8 %v4911
  %v4913 = vlaneseq
  %v4914 = vshrl.u32 %v4913, 7
  %v4915 = vsub.s32 %v4912, %v4914
  %v4916 = vrot.slane %v3997, %v4915
  %v4918 = vunpack.c.l.s4 839922192
  %v4919 = vunpack.c.0.s8 %v4918
  %v4920 = vlaneseq
  %v4921 = vshrl.u32 %v4920, 7
  %v4922 = vsub.s32 %v4919, %v4921
  %v4923 = vrot.slane %v4000, %v4922
  %v4925 = vunpack.c.l.s4 1985246804
  %v4926 = vunpack.c.0.s8 %v4925
  %v4927 = vlaneseq
  %v4928 = vshrl.u32 %v4927, 7
  %v4929 = vsub.s32 %v4926, %v4928
  %v4930 = vrot.slane %v4000, %v4929
  %v4932 = vunpack.c.l.s4 839922192
  %v4933 = vunpack.c.0.s8 %v4932
  %v4934 = vlaneseq
  %v4935 = vshrl.u32 %v4934, 7
  %v4936 = vsub.s32 %v4933, %v4935
  %v4937 = vrot.slane %v4003, %v4936
  %v4939 = vunpack.c.l.s4 1985246804
  %v4940 = vunpack.c.0.s8 %v4939
  %v4941 = vlaneseq
  %v4942 = vshrl.u32 %v4941, 7
  %v4943 = vsub.s32 %v4940, %v4942
  %v4944 = vrot.slane %v4003, %v4943
  %v4946 = vunpack.c.l.s4 839922192
  %v4947 = vunpack.c.0.s8 %v4946
  %v4948 = vlaneseq
  %v4949 = vshrl.u32 %v4948, 7
  %v4950 = vsub.s32 %v4947, %v4949
  %v4951 = vrot.slane %v4006, %v4950
  %v4953 = vunpack.c.l.s4 1985246804
  %v4954 = vunpack.c.0.s8 %v4953
  %v4955 = vlaneseq
  %v4956 = vshrl.u32 %v4955, 7
  %v4957 = vsub.s32 %v4954, %v4956
  %v4958 = vrot.slane %v4006, %v4957
  %v4960 = vunpack.c.l.s4 839922192
  %v4961 = vunpack.c.0.s8 %v4960
  %v4962 = vlaneseq
  %v4963 = vshrl.u32 %v4962, 7
  %v4964 = vsub.s32 %v4961, %v4963
  %v4965 = vrot.slane %v4009, %v4964
  %v4967 = vunpack.c.l.s4 1985246804
  %v4968 = vunpack.c.0.s8 %v4967
  %v4969 = vlaneseq
  %v4970 = vshrl.u32 %v4969, 7
  %v4971 = vsub.s32 %v4968, %v4970
  %v4972 = vrot.slane %v4009, %v4971
  %v4974 = vunpack.c.l.s4 839922192
  %v4975 = vunpack.c.0.s8 %v4974
  %v4976 = vlaneseq
  %v4977 = vshrl.u32 %v4976, 7
  %v4978 = vsub.s32 %v4975, %v4977
  %v4979 = vrot.slane %v4012, %v4978
  %v4981 = vunpack.c.l.s4 1985246804
  %v4982 = vunpack.c.0.s8 %v4981
  %v4983 = vlaneseq
  %v4984 = vshrl.u32 %v4983, 7
  %v4985 = vsub.s32 %v4982, %v4984
  %v4986 = vrot.slane %v4012, %v4985
  %v4988 = vunpack.c.l.s4 839922192
  %v4989 = vunpack.c.0.s8 %v4988
  %v4990 = vlaneseq
  %v4991 = vshrl.u32 %v4990, 7
  %v4992 = vsub.s32 %v4989, %v4991
  %v4993 = vrot.slane %v4015, %v4992
  %v4995 = vunpack.c.l.s4 1985246804
  %v4996 = vunpack.c.0.s8 %v4995
  %v4997 = vlaneseq
  %v4998 = vshrl.u32 %v4997, 7
  %v4999 = vsub.s32 %v4996, %v4998
  %v5000 = vrot.slane %v4015, %v4999
  %v5002 = vunpack.c.l.s4 839922192
  %v5003 = vunpack.c.0.s8 %v5002
  %v5004 = vlaneseq
  %v5005 = vshrl.u32 %v5004, 7
  %v5006 = vsub.s32 %v5003, %v5005
  %v5007 = vrot.slane %v4018, %v5006
  %v5009 = vunpack.c.l.s4 1985246804
  %v5010 = vunpack.c.0.s8 %v5009
  %v5011 = vlaneseq
  %v5012 = vshrl.u32 %v5011, 7
  %v5013 = vsub.s32 %v5010, %v5012
  %v5014 = vrot.slane %v4018, %v5013
  %v5016 = vunpack.c.l.s4 839922192
  %v5017 = vunpack.c.0.s8 %v5016
  %v5018 = vlaneseq
  %v5019 = vshrl.u32 %v5018, 7
  %v5020 = vsub.s32 %v5017, %v5019
  %v5021 = vrot.slane %v4021, %v5020
  %v5023 = vunpack.c.l.s4 1985246804
  %v5024 = vunpack.c.0.s8 %v5023
  %v5025 = vlaneseq
  %v5026 = vshrl.u32 %v5025, 7
  %v5027 = vsub.s32 %v5024, %v5026
  %v5028 = vrot.slane %v4021, %v5027
  %v5030 = vunpack.c.l.s4 839922192
  %v5031 = vunpack.c.0.s8 %v5030
  %v5032 = vlaneseq
  %v5033 = vshrl.u32 %v5032, 7
  %v5034 = vsub.s32 %v5031, %v5033
  %v5035 = vrot.slane %v4024, %v5034
  %v5037 = vunpack.c.l.s4 1985246804
  %v5038 = vunpack.c.0.s8 %v5037
  %v5039 = vlaneseq
  %v5040 = vshrl.u32 %v5039, 7
  %v5041 = vsub.s32 %v5038, %v5040
  %v5042 = vrot.slane %v4024, %v5041
  %v5044 = vunpack.c.l.s4 839922192
  %v5045 = vunpack.c.0.s8 %v5044
  %v5046 = vlaneseq
  %v5047 = vshrl.u32 %v5046, 7
  %v5048 = vsub.s32 %v5045, %v5047
  %v5049 = vrot.slane %v4027, %v5048
  %v5051 = vunpack.c.l.s4 1985246804
  %v5052 = vunpack.c.0.s8 %v5051
  %v5053 = vlaneseq
  %v5054 = vshrl.u32 %v5053, 7
  %v5055 = vsub.s32 %v5052, %v5054
  %v5056 = vrot.slane %v4027, %v5055
  %v5058 = vunpack.c.l.s4 839922192
  %v5059 = vunpack.c.0.s8 %v5058
  %v5060 = vlaneseq
  %v5061 = vshrl.u32 %v5060, 7
  %v5062 = vsub.s32 %v5059, %v5061
  %v5063 = vrot.slane %v4030, %v5062
  %v5065 = vunpack.c.l.s4 1985246804
  %v5066 = vunpack.c.0.s8 %v5065
  %v5067 = vlaneseq
  %v5068 = vshrl.u32 %v5067, 7
  %v5069 = vsub.s32 %v5066, %v5068
  %v5070 = vrot.slane %v4030, %v5069
  %v5072 = vunpack.c.l.s4 839922192
  %v5073 = vunpack.c.0.s8 %v5072
  %v5074 = vlaneseq
  %v5075 = vshrl.u32 %v5074, 7
  %v5076 = vsub.s32 %v5073, %v5075
  %v5077 = vrot.slane %v4033, %v5076
  %v5079 = vunpack.c.l.s4 1985246804
  %v5080 = vunpack.c.0.s8 %v5079
  %v5081 = vlaneseq
  %v5082 = vshrl.u32 %v5081, 7
  %v5083 = vsub.s32 %v5080, %v5082
  %v5084 = vrot.slane %v4033, %v5083
  %v5086 = vunpack.c.l.s4 839922192
  %v5087 = vunpack.c.0.s8 %v5086
  %v5088 = vlaneseq
  %v5089 = vshrl.u32 %v5088, 7
  %v5090 = vsub.s32 %v5087, %v5089
  %v5091 = vrot.slane %v4036, %v5090
  %v5093 = vunpack.c.l.s4 1985246804
  %v5094 = vunpack.c.0.s8 %v5093
  %v5095 = vlaneseq
  %v5096 = vshrl.u32 %v5095, 7
  %v5097 = vsub.s32 %v5094, %v5096
  %v5098 = vrot.slane %v4036, %v5097
  %v5100 = vunpack.c.l.s4 839922192
  %v5101 = vunpack.c.0.s8 %v5100
  %v5102 = vlaneseq
  %v5103 = vshrl.u32 %v5102, 7
  %v5104 = vsub.s32 %v5101, %v5103
  %v5105 = vrot.slane %v4039, %v5104
  %v5107 = vunpack.c.l.s4 1985246804
  %v5108 = vunpack.c.0.s8 %v5107
  %v5109 = vlaneseq
  %v5110 = vshrl.u32 %v5109, 7
  %v5111 = vsub.s32 %v5108, %v5110
  %v5112 = vrot.slane %v4039, %v5111
  %v5114 = vunpack.c.l.s4 839922192
  %v5115 = vunpack.c.0.s8 %v5114
  %v5116 = vlaneseq
  %v5117 = vshrl.u32 %v5116, 7
  %v5118 = vsub.s32 %v5115, %v5117
  %v5119 = vrot.slane %v4042, %v5118
  %v5121 = vunpack.c.l.s4 1985246804
  %v5122 = vunpack.c.0.s8 %v5121
  %v5123 = vlaneseq
  %v5124 = vshrl.u32 %v5123, 7
  %v5125 = vsub.s32 %v5122, %v5124
  %v5126 = vrot.slane %v4042, %v5125
  %v5128 = vunpack.c.l.s4 839922192
  %v5129 = vunpack.c.0.s8 %v5128
  %v5130 = vlaneseq
  %v5131 = vshrl.u32 %v5130, 7
  %v5132 = vsub.s32 %v5129, %v5131
  %v5133 = vrot.slane %v4045, %v5132
  %v5135 = vunpack.c.l.s4 1985246804
  %v5136 = vunpack.c.0.s8 %v5135
  %v5137 = vlaneseq
  %v5138 = vshrl.u32 %v5137, 7
  %v5139 = vsub.s32 %v5136, %v5138
  %v5140 = vrot.slane %v4045, %v5139
  %v5142 = vunpack.c.l.s4 839922192
  %v5143 = vunpack.c.0.s8 %v5142
  %v5144 = vlaneseq
  %v5145 = vshrl.u32 %v5144, 7
  %v5146 = vsub.s32 %v5143, %v5145
  %v5147 = vrot.slane %v4048, %v5146
  %v5149 = vunpack.c.l.s4 1985246804
  %v5150 = vunpack.c.0.s8 %v5149
  %v5151 = vlaneseq
  %v5152 = vshrl.u32 %v5151, 7
  %v5153 = vsub.s32 %v5150, %v5152
  %v5154 = vrot.slane %v4048, %v5153
  %v5156 = vunpack.c.l.s4 839922192
  %v5157 = vunpack.c.0.s8 %v5156
  %v5158 = vlaneseq
  %v5159 = vshrl.u32 %v5158, 7
  %v5160 = vsub.s32 %v5157, %v5159
  %v5161 = vrot.slane %v4051, %v5160
  %v5163 = vunpack.c.l.s4 1985246804
  %v5164 = vunpack.c.0.s8 %v5163
  %v5165 = vlaneseq
  %v5166 = vshrl.u32 %v5165, 7
  %v5167 = vsub.s32 %v5164, %v5166
  %v5168 = vrot.slane %v4051, %v5167
  %v5170 = vunpack.c.l.s4 839922192
  %v5171 = vunpack.c.0.s8 %v5170
  %v5172 = vlaneseq
  %v5173 = vshrl.u32 %v5172, 7
  %v5174 = vsub.s32 %v5171, %v5173
  %v5175 = vrot.slane %v4054, %v5174
  %v5177 = vunpack.c.l.s4 1985246804
  %v5178 = vunpack.c.0.s8 %v5177
  %v5179 = vlaneseq
  %v5180 = vshrl.u32 %v5179, 7
  %v5181 = vsub.s32 %v5178, %v5180
  %v5182 = vrot.slane %v4054, %v5181
  %v5184 = vunpack.c.l.s4 839922192
  %v5185 = vunpack.c.0.s8 %v5184
  %v5186 = vlaneseq
  %v5187 = vshrl.u32 %v5186, 7
  %v5188 = vsub.s32 %v5185, %v5187
  %v5189 = vrot.slane %v4057, %v5188
  %v5191 = vunpack.c.l.s4 1985246804
  %v5192 = vunpack.c.0.s8 %v5191
  %v5193 = vlaneseq
  %v5194 = vshrl.u32 %v5193, 7
  %v5195 = vsub.s32 %v5192, %v5194
  %v5196 = vrot.slane %v4057, %v5195
  %v5198 = vunpack.c.l.s4 839922192
  %v5199 = vunpack.c.0.s8 %v5198
  %v5200 = vlaneseq
  %v5201 = vshrl.u32 %v5200, 7
  %v5202 = vsub.s32 %v5199, %v5201
  %v5203 = vrot.slane %v4060, %v5202
  %v5205 = vunpack.c.l.s4 1985246804
  %v5206 = vunpack.c.0.s8 %v5205
  %v5207 = vlaneseq
  %v5208 = vshrl.u32 %v5207, 7
  %v5209 = vsub.s32 %v5206, %v5208
  %v5210 = vrot.slane %v4060, %v5209
  %v5212 = vunpack.c.l.s4 839922192
  %v5213 = vunpack.c.0.s8 %v5212
  %v5214 = vlaneseq
  %v5215 = vshrl.u32 %v5214, 7
  %v5216 = vsub.s32 %v5213, %v5215
  %v5217 = vrot.slane %v4063, %v5216
  %v5219 = vunpack.c.l.s4 1985246804
  %v5220 = vunpack.c.0.s8 %v5219
  %v5221 = vlaneseq
  %v5222 = vshrl.u32 %v5221, 7
  %v5223 = vsub.s32 %v5220, %v5222
  %v5224 = vrot.slane %v4063, %v5223
  %v5226 = vunpack.c.l.s4 839922192
  %v5227 = vunpack.c.0.s8 %v5226
  %v5228 = vlaneseq
  %v5229 = vshrl.u32 %v5228, 7
  %v5230 = vsub.s32 %v5227, %v5229
  %v5231 = vrot.slane %v4066, %v5230
  %v5233 = vunpack.c.l.s4 1985246804
  %v5234 = vunpack.c.0.s8 %v5233
  %v5235 = vlaneseq
  %v5236 = vshrl.u32 %v5235, 7
  %v5237 = vsub.s32 %v5234, %v5236
  %v5238 = vrot.slane %v4066, %v5237
  %v5240 = vunpack.c.l.s4 839922192
  %v5241 = vunpack.c.0.s8 %v5240
  %v5242 = vlaneseq
  %v5243 = vshrl.u32 %v5242, 7
  %v5244 = vsub.s32 %v5241, %v5243
  %v5245 = vrot.slane %v4069, %v5244
  %v5247 = vunpack.c.l.s4 1985246804
  %v5248 = vunpack.c.0.s8 %v5247
  %v5249 = vlaneseq
  %v5250 = vshrl.u32 %v5249, 7
  %v5251 = vsub.s32 %v5248, %v5250
  %v5252 = vrot.slane %v4069, %v5251
  %v5254 = vunpack.c.l.s4 839922192
  %v5255 = vunpack.c.0.s8 %v5254
  %v5256 = vlaneseq
  %v5257 = vshrl.u32 %v5256, 7
  %v5258 = vsub.s32 %v5255, %v5257
  %v5259 = vrot.slane %v4072, %v5258
  %v5261 = vunpack.c.l.s4 1985246804
  %v5262 = vunpack.c.0.s8 %v5261
  %v5263 = vlaneseq
  %v5264 = vshrl.u32 %v5263, 7
  %v5265 = vsub.s32 %v5262, %v5264
  %v5266 = vrot.slane %v4072, %v5265
  %v5268 = vunpack.c.l.s4 839922192
  %v5269 = vunpack.c.0.s8 %v5268
  %v5270 = vlaneseq
  %v5271 = vshrl.u32 %v5270, 7
  %v5272 = vsub.s32 %v5269, %v5271
  %v5273 = vrot.slane %v4075, %v5272
  %v5275 = vunpack.c.l.s4 1985246804
  %v5276 = vunpack.c.0.s8 %v5275
  %v5277 = vlaneseq
  %v5278 = vshrl.u32 %v5277, 7
  %v5279 = vsub.s32 %v5276, %v5278
  %v5280 = vrot.slane %v4075, %v5279
  %v5282 = vunpack.c.l.s4 839922192
  %v5283 = vunpack.c.0.s8 %v5282
  %v5284 = vlaneseq
  %v5285 = vshrl.u32 %v5284, 7
  %v5286 = vsub.s32 %v5283, %v5285
  %v5287 = vrot.slane %v4078, %v5286
  %v5289 = vunpack.c.l.s4 1985246804
  %v5290 = vunpack.c.0.s8 %v5289
  %v5291 = vlaneseq
  %v5292 = vshrl.u32 %v5291, 7
  %v5293 = vsub.s32 %v5290, %v5292
  %v5294 = vrot.slane %v4078, %v5293
  %v5296 = vunpack.c.l.s4 839922192
  %v5297 = vunpack.c.0.s8 %v5296
  %v5298 = vlaneseq
  %v5299 = vshrl.u32 %v5298, 7
  %v5300 = vsub.s32 %v5297, %v5299
  %v5301 = vrot.slane %v4081, %v5300
  %v5303 = vunpack.c.l.s4 1985246804
  %v5304 = vunpack.c.0.s8 %v5303
  %v5305 = vlaneseq
  %v5306 = vshrl.u32 %v5305, 7
  %v5307 = vsub.s32 %v5304, %v5306
  %v5308 = vrot.slane %v4081, %v5307
  %v5310 = vunpack.c.l.s4 839922192
  %v5311 = vunpack.c.0.s8 %v5310
  %v5312 = vlaneseq
  %v5313 = vshrl.u32 %v5312, 7
  %v5314 = vsub.s32 %v5311, %v5313
  %v5315 = vrot.slane %v4084, %v5314
  %v5317 = vunpack.c.l.s4 1985246804
  %v5318 = vunpack.c.0.s8 %v5317
  %v5319 = vlaneseq
  %v5320 = vshrl.u32 %v5319, 7
  %v5321 = vsub.s32 %v5318, %v5320
  %v5322 = vrot.slane %v4084, %v5321
  %v5324 = vunpack.c.l.s4 839922192
  %v5325 = vunpack.c.0.s8 %v5324
  %v5326 = vlaneseq
  %v5327 = vshrl.u32 %v5326, 7
  %v5328 = vsub.s32 %v5325, %v5327
  %v5329 = vrot.slane %v4087, %v5328
  %v5331 = vunpack.c.l.s4 1985246804
  %v5332 = vunpack.c.0.s8 %v5331
  %v5333 = vlaneseq
  %v5334 = vshrl.u32 %v5333, 7
  %v5335 = vsub.s32 %v5332, %v5334
  %v5336 = vrot.slane %v4087, %v5335
  %v5338 = vunpack.c.l.s4 839922192
  %v5339 = vunpack.c.0.s8 %v5338
  %v5340 = vlaneseq
  %v5341 = vshrl.u32 %v5340, 7
  %v5342 = vsub.s32 %v5339, %v5341
  %v5343 = vrot.slane %v4090, %v5342
  %v5345 = vunpack.c.l.s4 1985246804
  %v5346 = vunpack.c.0.s8 %v5345
  %v5347 = vlaneseq
  %v5348 = vshrl.u32 %v5347, 7
  %v5349 = vsub.s32 %v5346, %v5348
  %v5350 = vrot.slane %v4090, %v5349
  %v5352 = vunpack.c.l.s4 839922192
  %v5353 = vunpack.c.0.s8 %v5352
  %v5354 = vlaneseq
  %v5355 = vshrl.u32 %v5354, 7
  %v5356 = vsub.s32 %v5353, %v5355
  %v5357 = vrot.slane %v4093, %v5356
  %v5359 = vunpack.c.l.s4 1985246804
  %v5360 = vunpack.c.0.s8 %v5359
  %v5361 = vlaneseq
  %v5362 = vshrl.u32 %v5361, 7
  %v5363 = vsub.s32 %v5360, %v5362
  %v5364 = vrot.slane %v4093, %v5363
  %v5366 = vunpack.c.l.s4 839922192
  %v5367 = vunpack.c.0.s8 %v5366
  %v5368 = vlaneseq
  %v5369 = vshrl.u32 %v5368, 7
  %v5370 = vsub.s32 %v5367, %v5369
  %v5371 = vrot.slane %v4096, %v5370
  %v5373 = vunpack.c.l.s4 1985246804
  %v5374 = vunpack.c.0.s8 %v5373
  %v5375 = vlaneseq
  %v5376 = vshrl.u32 %v5375, 7
  %v5377 = vsub.s32 %v5374, %v5376
  %v5378 = vrot.slane %v4096, %v5377
  %v5380 = vunpack.c.l.s4 839922192
  %v5381 = vunpack.c.0.s8 %v5380
  %v5382 = vlaneseq
  %v5383 = vshrl.u32 %v5382, 7
  %v5384 = vsub.s32 %v5381, %v5383
  %v5385 = vrot.slane %v4099, %v5384
  %v5387 = vunpack.c.l.s4 1985246804
  %v5388 = vunpack.c.0.s8 %v5387
  %v5389 = vlaneseq
  %v5390 = vshrl.u32 %v5389, 7
  %v5391 = vsub.s32 %v5388, %v5390
  %v5392 = vrot.slane %v4099, %v5391
  %v5394 = vunpack.c.l.s4 839922192
  %v5395 = vunpack.c.0.s8 %v5394
  %v5396 = vlaneseq
  %v5397 = vshrl.u32 %v5396, 7
  %v5398 = vsub.s32 %v5395, %v5397
  %v5399 = vrot.slane %v4102, %v5398
  %v5401 = vunpack.c.l.s4 1985246804
  %v5402 = vunpack.c.0.s8 %v5401
  %v5403 = vlaneseq
  %v5404 = vshrl.u32 %v5403, 7
  %v5405 = vsub.s32 %v5402, %v5404
  %v5406 = vrot.slane %v4102, %v5405
  %v5408 = vunpack.c.l.s4 839922192
  %v5409 = vunpack.c.0.s8 %v5408
  %v5410 = vlaneseq
  %v5411 = vshrl.u32 %v5410, 7
  %v5412 = vsub.s32 %v5409, %v5411
  %v5413 = vrot.slane %v4105, %v5412
  %v5415 = vunpack.c.l.s4 1985246804
  %v5416 = vunpack.c.0.s8 %v5415
  %v5417 = vlaneseq
  %v5418 = vshrl.u32 %v5417, 7
  %v5419 = vsub.s32 %v5416, %v5418
  %v5420 = vrot.slane %v4105, %v5419
  %v5422 = vunpack.c.l.s4 839922192
  %v5423 = vunpack.c.0.s8 %v5422
  %v5424 = vlaneseq
  %v5425 = vshrl.u32 %v5424, 7
  %v5426 = vsub.s32 %v5423, %v5425
  %v5427 = vrot.slane %v4108, %v5426
  %v5429 = vunpack.c.l.s4 1985246804
  %v5430 = vunpack.c.0.s8 %v5429
  %v5431 = vlaneseq
  %v5432 = vshrl.u32 %v5431, 7
  %v5433 = vsub.s32 %v5430, %v5432
  %v5434 = vrot.slane %v4108, %v5433
  %v5436 = vunpack.c.l.s4 839922192
  %v5437 = vunpack.c.0.s8 %v5436
  %v5438 = vlaneseq
  %v5439 = vshrl.u32 %v5438, 7
  %v5440 = vsub.s32 %v5437, %v5439
  %v5441 = vrot.slane %v4111, %v5440
  %v5443 = vunpack.c.l.s4 1985246804
  %v5444 = vunpack.c.0.s8 %v5443
  %v5445 = vlaneseq
  %v5446 = vshrl.u32 %v5445, 7
  %v5447 = vsub.s32 %v5444, %v5446
  %v5448 = vrot.slane %v4111, %v5447
  %v5450 = vunpack.c.l.s4 839922192
  %v5451 = vunpack.c.0.s8 %v5450
  %v5452 = vlaneseq
  %v5453 = vshrl.u32 %v5452, 7
  %v5454 = vsub.s32 %v5451, %v5453
  %v5455 = vrot.slane %v4114, %v5454
  %v5457 = vunpack.c.l.s4 1985246804
  %v5458 = vunpack.c.0.s8 %v5457
  %v5459 = vlaneseq
  %v5460 = vshrl.u32 %v5459, 7
  %v5461 = vsub.s32 %v5458, %v5460
  %v5462 = vrot.slane %v4114, %v5461
  %v5464 = vunpack.c.l.s4 839922192
  %v5465 = vunpack.c.0.s8 %v5464
  %v5466 = vlaneseq
  %v5467 = vshrl.u32 %v5466, 7
  %v5468 = vsub.s32 %v5465, %v5467
  %v5469 = vrot.slane %v4117, %v5468
  %v5471 = vunpack.c.l.s4 1985246804
  %v5472 = vunpack.c.0.s8 %v5471
  %v5473 = vlaneseq
  %v5474 = vshrl.u32 %v5473, 7
  %v5475 = vsub.s32 %v5472, %v5474
  %v5476 = vrot.slane %v4117, %v5475
  %v5478 = vunpack.c.l.s4 839922192
  %v5479 = vunpack.c.0.s8 %v5478
  %v5480 = vlaneseq
  %v5481 = vshrl.u32 %v5480, 7
  %v5482 = vsub.s32 %v5479, %v5481
  %v5483 = vrot.slane %v4120, %v5482
  %v5485 = vunpack.c.l.s4 1985246804
  %v5486 = vunpack.c.0.s8 %v5485
  %v5487 = vlaneseq
  %v5488 = vshrl.u32 %v5487, 7
  %v5489 = vsub.s32 %v5486, %v5488
  %v5490 = vrot.slane %v4120, %v5489
  %v5492 = vunpack.c.l.s4 839922192
  %v5493 = vunpack.c.0.s8 %v5492
  %v5494 = vlaneseq
  %v5495 = vshrl.u32 %v5494, 7
  %v5496 = vsub.s32 %v5493, %v5495
  %v5497 = vrot.slane %v4123, %v5496
  %v5499 = vunpack.c.l.s4 1985246804
  %v5500 = vunpack.c.0.s8 %v5499
  %v5501 = vlaneseq
  %v5502 = vshrl.u32 %v5501, 7
  %v5503 = vsub.s32 %v5500, %v5502
  %v5504 = vrot.slane %v4123, %v5503
  %v5506 = vunpack.c.l.s4 839922192
  %v5507 = vunpack.c.0.s8 %v5506
  %v5508 = vlaneseq
  %v5509 = vshrl.u32 %v5508, 7
  %v5510 = vsub.s32 %v5507, %v5509
  %v5511 = vrot.slane %v4126, %v5510
  %v5513 = vunpack.c.l.s4 1985246804
  %v5514 = vunpack.c.0.s8 %v5513
  %v5515 = vlaneseq
  %v5516 = vshrl.u32 %v5515, 7
  %v5517 = vsub.s32 %v5514, %v5516
  %v5518 = vrot.slane %v4126, %v5517
  %v5520 = vunpack.c.l.s4 839922192
  %v5521 = vunpack.c.0.s8 %v5520
  %v5522 = vlaneseq
  %v5523 = vshrl.u32 %v5522, 7
  %v5524 = vsub.s32 %v5521, %v5523
  %v5525 = vrot.slane %v4129, %v5524
  %v5527 = vunpack.c.l.s4 1985246804
  %v5528 = vunpack.c.0.s8 %v5527
  %v5529 = vlaneseq
  %v5530 = vshrl.u32 %v5529, 7
  %v5531 = vsub.s32 %v5528, %v5530
  %v5532 = vrot.slane %v4129, %v5531
  %v5534 = vunpack.c.l.s4 839922192
  %v5535 = vunpack.c.0.s8 %v5534
  %v5536 = vlaneseq
  %v5537 = vshrl.u32 %v5536, 7
  %v5538 = vsub.s32 %v5535, %v5537
  %v5539 = vrot.slane %v4132, %v5538
  %v5541 = vunpack.c.l.s4 1985246804
  %v5542 = vunpack.c.0.s8 %v5541
  %v5543 = vlaneseq
  %v5544 = vshrl.u32 %v5543, 7
  %v5545 = vsub.s32 %v5542, %v5544
  %v5546 = vrot.slane %v4132, %v5545
  %v5548 = vunpack.c.l.s4 839922192
  %v5549 = vunpack.c.0.s8 %v5548
  %v5550 = vlaneseq
  %v5551 = vshrl.u32 %v5550, 7
  %v5552 = vsub.s32 %v5549, %v5551
  %v5553 = vrot.slane %v4135, %v5552
  %v5555 = vunpack.c.l.s4 1985246804
  %v5556 = vunpack.c.0.s8 %v5555
  %v5557 = vlaneseq
  %v5558 = vshrl.u32 %v5557, 7
  %v5559 = vsub.s32 %v5556, %v5558
  %v5560 = vrot.slane %v4135, %v5559
  %v5562 = vunpack.c.l.s4 839922192
  %v5563 = vunpack.c.0.s8 %v5562
  %v5564 = vlaneseq
  %v5565 = vshrl.u32 %v5564, 7
  %v5566 = vsub.s32 %v5563, %v5565
  %v5567 = vrot.slane %v4138, %v5566
  %v5569 = vunpack.c.l.s4 1985246804
  %v5570 = vunpack.c.0.s8 %v5569
  %v5571 = vlaneseq
  %v5572 = vshrl.u32 %v5571, 7
  %v5573 = vsub.s32 %v5570, %v5572
  %v5574 = vrot.slane %v4138, %v5573
  %v5576 = vunpack.c.l.s4 839922192
  %v5577 = vunpack.c.0.s8 %v5576
  %v5578 = vlaneseq
  %v5579 = vshrl.u32 %v5578, 7
  %v5580 = vsub.s32 %v5577, %v5579
  %v5581 = vrot.slane %v4141, %v5580
  %v5583 = vunpack.c.l.s4 1985246804
  %v5584 = vunpack.c.0.s8 %v5583
  %v5585 = vlaneseq
  %v5586 = vshrl.u32 %v5585, 7
  %v5587 = vsub.s32 %v5584, %v5586
  %v5588 = vrot.slane %v4141, %v5587
  %v5590 = vunpack.c.l.s4 839922192
  %v5591 = vunpack.c.0.s8 %v5590
  %v5592 = vlaneseq
  %v5593 = vshrl.u32 %v5592, 7
  %v5594 = vsub.s32 %v5591, %v5593
  %v5595 = vrot.slane %v4144, %v5594
  %v5597 = vunpack.c.l.s4 1985246804
  %v5598 = vunpack.c.0.s8 %v5597
  %v5599 = vlaneseq
  %v5600 = vshrl.u32 %v5599, 7
  %v5601 = vsub.s32 %v5598, %v5600
  %v5602 = vrot.slane %v4144, %v5601
  %v5604 = vunpack.c.l.s4 839922192
  %v5605 = vunpack.c.0.s8 %v5604
  %v5606 = vlaneseq
  %v5607 = vshrl.u32 %v5606, 7
  %v5608 = vsub.s32 %v5605, %v5607
  %v5609 = vrot.slane %v4147, %v5608
  %v5611 = vunpack.c.l.s4 1985246804
  %v5612 = vunpack.c.0.s8 %v5611
  %v5613 = vlaneseq
  %v5614 = vshrl.u32 %v5613, 7
  %v5615 = vsub.s32 %v5612, %v5614
  %v5616 = vrot.slane %v4147, %v5615
  %v5618 = vunpack.c.l.s4 839922192
  %v5619 = vunpack.c.0.s8 %v5618
  %v5620 = vlaneseq
  %v5621 = vshrl.u32 %v5620, 7
  %v5622 = vsub.s32 %v5619, %v5621
  %v5623 = vrot.slane %v4150, %v5622
  %v5625 = vunpack.c.l.s4 1985246804
  %v5626 = vunpack.c.0.s8 %v5625
  %v5627 = vlaneseq
  %v5628 = vshrl.u32 %v5627, 7
  %v5629 = vsub.s32 %v5626, %v5628
  %v5630 = vrot.slane %v4150, %v5629
  %v5632 = vunpack.c.l.s4 839922192
  %v5633 = vunpack.c.0.s8 %v5632
  %v5634 = vlaneseq
  %v5635 = vshrl.u32 %v5634, 7
  %v5636 = vsub.s32 %v5633, %v5635
  %v5637 = vrot.slane %v4153, %v5636
  %v5639 = vunpack.c.l.s4 1985246804
  %v5640 = vunpack.c.0.s8 %v5639
  %v5641 = vlaneseq
  %v5642 = vshrl.u32 %v5641, 7
  %v5643 = vsub.s32 %v5640, %v5642
  %v5644 = vrot.slane %v4153, %v5643
  %v5646 = vunpack.c.l.s4 839922192
  %v5647 = vunpack.c.0.s8 %v5646
  %v5648 = vlaneseq
  %v5649 = vshrl.u32 %v5648, 7
  %v5650 = vsub.s32 %v5647, %v5649
  %v5651 = vrot.slane %v4156, %v5650
  %v5653 = vunpack.c.l.s4 1985246804
  %v5654 = vunpack.c.0.s8 %v5653
  %v5655 = vlaneseq
  %v5656 = vshrl.u32 %v5655, 7
  %v5657 = vsub.s32 %v5654, %v5656
  %v5658 = vrot.slane %v4156, %v5657
  %v5660 = vunpack.c.l.s4 839922192
  %v5661 = vunpack.c.0.s8 %v5660
  %v5662 = vlaneseq
  %v5663 = vshrl.u32 %v5662, 7
  %v5664 = vsub.s32 %v5661, %v5663
  %v5665 = vrot.slane %v4159, %v5664
  %v5667 = vunpack.c.l.s4 1985246804
  %v5668 = vunpack.c.0.s8 %v5667
  %v5669 = vlaneseq
  %v5670 = vshrl.u32 %v5669, 7
  %v5671 = vsub.s32 %v5668, %v5670
  %v5672 = vrot.slane %v4159, %v5671
  %v5674 = vunpack.c.l.s4 839922192
  %v5675 = vunpack.c.0.s8 %v5674
  %v5676 = vlaneseq
  %v5677 = vshrl.u32 %v5676, 7
  %v5678 = vsub.s32 %v5675, %v5677
  %v5679 = vrot.slane %v4162, %v5678
  %v5681 = vunpack.c.l.s4 1985246804
  %v5682 = vunpack.c.0.s8 %v5681
  %v5683 = vlaneseq
  %v5684 = vshrl.u32 %v5683, 7
  %v5685 = vsub.s32 %v5682, %v5684
  %v5686 = vrot.slane %v4162, %v5685
  %v5688 = vunpack.c.l.s4 839922192
  %v5689 = vunpack.c.0.s8 %v5688
  %v5690 = vlaneseq
  %v5691 = vshrl.u32 %v5690, 7
  %v5692 = vsub.s32 %v5689, %v5691
  %v5693 = vrot.slane %v4165, %v5692
  %v5695 = vunpack.c.l.s4 1985246804
  %v5696 = vunpack.c.0.s8 %v5695
  %v5697 = vlaneseq
  %v5698 = vshrl.u32 %v5697, 7
  %v5699 = vsub.s32 %v5696, %v5698
  %v5700 = vrot.slane %v4165, %v5699
  %v5702 = vunpack.c.l.s4 839922192
  %v5703 = vunpack.c.0.s8 %v5702
  %v5704 = vlaneseq
  %v5705 = vshrl.u32 %v5704, 7
  %v5706 = vsub.s32 %v5703, %v5705
  %v5707 = vrot.slane %v4168, %v5706
  %v5709 = vunpack.c.l.s4 1985246804
  %v5710 = vunpack.c.0.s8 %v5709
  %v5711 = vlaneseq
  %v5712 = vshrl.u32 %v5711, 7
  %v5713 = vsub.s32 %v5710, %v5712
  %v5714 = vrot.slane %v4168, %v5713
  %v5716 = vunpack.c.l.s4 839922192
  %v5717 = vunpack.c.0.s8 %v5716
  %v5718 = vlaneseq
  %v5719 = vshrl.u32 %v5718, 7
  %v5720 = vsub.s32 %v5717, %v5719
  %v5721 = vrot.slane %v4171, %v5720
  %v5723 = vunpack.c.l.s4 1985246804
  %v5724 = vunpack.c.0.s8 %v5723
  %v5725 = vlaneseq
  %v5726 = vshrl.u32 %v5725, 7
  %v5727 = vsub.s32 %v5724, %v5726
  %v5728 = vrot.slane %v4171, %v5727
  %v5730 = vunpack.c.l.s4 839922192
  %v5731 = vunpack.c.0.s8 %v5730
  %v5732 = vlaneseq
  %v5733 = vshrl.u32 %v5732, 7
  %v5734 = vsub.s32 %v5731, %v5733
  %v5735 = vrot.slane %v4174, %v5734
  %v5737 = vunpack.c.l.s4 1985246804
  %v5738 = vunpack.c.0.s8 %v5737
  %v5739 = vlaneseq
  %v5740 = vshrl.u32 %v5739, 7
  %v5741 = vsub.s32 %v5738, %v5740
  %v5742 = vrot.slane %v4174, %v5741
  %v5744 = vunpack.c.l.s4 839922192
  %v5745 = vunpack.c.0.s8 %v5744
  %v5746 = vlaneseq
  %v5747 = vshrl.u32 %v5746, 7
  %v5748 = vsub.s32 %v5745, %v5747
  %v5749 = vrot.slane %v4177, %v5748
  %v5751 = vunpack.c.l.s4 1985246804
  %v5752 = vunpack.c.0.s8 %v5751
  %v5753 = vlaneseq
  %v5754 = vshrl.u32 %v5753, 7
  %v5755 = vsub.s32 %v5752, %v5754
  %v5756 = vrot.slane %v4177, %v5755
  %v5758 = vunpack.c.l.s4 839922192
  %v5759 = vunpack.c.0.s8 %v5758
  %v5760 = vlaneseq
  %v5761 = vshrl.u32 %v5760, 7
  %v5762 = vsub.s32 %v5759, %v5761
  %v5763 = vrot.slane %v4180, %v5762
  %v5765 = vunpack.c.l.s4 1985246804
  %v5766 = vunpack.c.0.s8 %v5765
  %v5767 = vlaneseq
  %v5768 = vshrl.u32 %v5767, 7
  %v5769 = vsub.s32 %v5766, %v5768
  %v5770 = vrot.slane %v4180, %v5769
  %v5772 = vunpack.c.l.s4 839922192
  %v5773 = vunpack.c.0.s8 %v5772
  %v5774 = vlaneseq
  %v5775 = vshrl.u32 %v5774, 7
  %v5776 = vsub.s32 %v5773, %v5775
  %v5777 = vrot.slane %v4183, %v5776
  %v5779 = vunpack.c.l.s4 1985246804
  %v5780 = vunpack.c.0.s8 %v5779
  %v5781 = vlaneseq
  %v5782 = vshrl.u32 %v5781, 7
  %v5783 = vsub.s32 %v5780, %v5782
  %v5784 = vrot.slane %v4183, %v5783
  %v5786 = vunpack.c.l.s4 839922192
  %v5787 = vunpack.c.0.s8 %v5786
  %v5788 = vlaneseq
  %v5789 = vshrl.u32 %v5788, 7
  %v5790 = vsub.s32 %v5787, %v5789
  %v5791 = vrot.slane %v4186, %v5790
  %v5793 = vunpack.c.l.s4 1985246804
  %v5794 = vunpack.c.0.s8 %v5793
  %v5795 = vlaneseq
  %v5796 = vshrl.u32 %v5795, 7
  %v5797 = vsub.s32 %v5794, %v5796
  %v5798 = vrot.slane %v4186, %v5797
  %v5800 = vunpack.c.l.s4 839922192
  %v5801 = vunpack.c.0.s8 %v5800
  %v5802 = vlaneseq
  %v5803 = vshrl.u32 %v5802, 7
  %v5804 = vsub.s32 %v5801, %v5803
  %v5805 = vrot.slane %v4189, %v5804
  %v5807 = vunpack.c.l.s4 1985246804
  %v5808 = vunpack.c.0.s8 %v5807
  %v5809 = vlaneseq
  %v5810 = vshrl.u32 %v5809, 7
  %v5811 = vsub.s32 %v5808, %v5810
  %v5812 = vrot.slane %v4189, %v5811
  %v5814 = vunpack.c.l.s4 839922192
  %v5815 = vunpack.c.0.s8 %v5814
  %v5816 = vlaneseq
  %v5817 = vshrl.u32 %v5816, 7
  %v5818 = vsub.s32 %v5815, %v5817
  %v5819 = vrot.slane %v4192, %v5818
  %v5821 = vunpack.c.l.s4 1985246804
  %v5822 = vunpack.c.0.s8 %v5821
  %v5823 = vlaneseq
  %v5824 = vshrl.u32 %v5823, 7
  %v5825 = vsub.s32 %v5822, %v5824
  %v5826 = vrot.slane %v4192, %v5825
  %v5828 = vunpack.c.l.s4 839922192
  %v5829 = vunpack.c.0.s8 %v5828
  %v5830 = vlaneseq
  %v5831 = vshrl.u32 %v5830, 7
  %v5832 = vsub.s32 %v5829, %v5831
  %v5833 = vrot.slane %v4195, %v5832
  %v5835 = vunpack.c.l.s4 1985246804
  %v5836 = vunpack.c.0.s8 %v5835
  %v5837 = vlaneseq
  %v5838 = vshrl.u32 %v5837, 7
  %v5839 = vsub.s32 %v5836, %v5838
  %v5840 = vrot.slane %v4195, %v5839
  %v5842 = vunpack.c.l.s4 839922192
  %v5843 = vunpack.c.0.s8 %v5842
  %v5844 = vlaneseq
  %v5845 = vshrl.u32 %v5844, 7
  %v5846 = vsub.s32 %v5843, %v5845
  %v5847 = vrot.slane %v4198, %v5846
  %v5849 = vunpack.c.l.s4 1985246804
  %v5850 = vunpack.c.0.s8 %v5849
  %v5851 = vlaneseq
  %v5852 = vshrl.u32 %v5851, 7
  %v5853 = vsub.s32 %v5850, %v5852
  %v5854 = vrot.slane %v4198, %v5853
  %v5856 = vunpack.c.l.s4 839922192
  %v5857 = vunpack.c.0.s8 %v5856
  %v5858 = vlaneseq
  %v5859 = vshrl.u32 %v5858, 7
  %v5860 = vsub.s32 %v5857, %v5859
  %v5861 = vrot.slane %v4201, %v5860
  %v5863 = vunpack.c.l.s4 1985246804
  %v5864 = vunpack.c.0.s8 %v5863
  %v5865 = vlaneseq
  %v5866 = vshrl.u32 %v5865, 7
  %v5867 = vsub.s32 %v5864, %v5866
  %v5868 = vrot.slane %v4201, %v5867
  %v5870 = vunpack.c.l.s4 839922192
  %v5871 = vunpack.c.0.s8 %v5870
  %v5872 = vlaneseq
  %v5873 = vshrl.u32 %v5872, 7
  %v5874 = vsub.s32 %v5871, %v5873
  %v5875 = vrot.slane %v4204, %v5874
  %v5877 = vunpack.c.l.s4 1985246804
  %v5878 = vunpack.c.0.s8 %v5877
  %v5879 = vlaneseq
  %v5880 = vshrl.u32 %v5879, 7
  %v5881 = vsub.s32 %v5878, %v5880
  %v5882 = vrot.slane %v4204, %v5881
  %v5884 = vunpack.c.l.s4 839922192
  %v5885 = vunpack.c.0.s8 %v5884
  %v5886 = vlaneseq
  %v5887 = vshrl.u32 %v5886, 7
  %v5888 = vsub.s32 %v5885, %v5887
  %v5889 = vrot.slane %v4207, %v5888
  %v5891 = vunpack.c.l.s4 1985246804
  %v5892 = vunpack.c.0.s8 %v5891
  %v5893 = vlaneseq
  %v5894 = vshrl.u32 %v5893, 7
  %v5895 = vsub.s32 %v5892, %v5894
  %v5896 = vrot.slane %v4207, %v5895
  %v5898 = vunpack.c.l.s4 839922192
  %v5899 = vunpack.c.0.s8 %v5898
  %v5900 = vlaneseq
  %v5901 = vshrl.u32 %v5900, 7
  %v5902 = vsub.s32 %v5899, %v5901
  %v5903 = vrot.slane %v4210, %v5902
  %v5905 = vunpack.c.l.s4 1985246804
  %v5906 = vunpack.c.0.s8 %v5905
  %v5907 = vlaneseq
  %v5908 = vshrl.u32 %v5907, 7
  %v5909 = vsub.s32 %v5906, %v5908
  %v5910 = vrot.slane %v4210, %v5909
  %v5912 = vunpack.c.l.s4 839922192
  %v5913 = vunpack.c.0.s8 %v5912
  %v5914 = vlaneseq
  %v5915 = vshrl.u32 %v5914, 7
  %v5916 = vsub.s32 %v5913, %v5915
  %v5917 = vrot.slane %v4213, %v5916
  %v5919 = vunpack.c.l.s4 1985246804
  %v5920 = vunpack.c.0.s8 %v5919
  %v5921 = vlaneseq
  %v5922 = vshrl.u32 %v5921, 7
  %v5923 = vsub.s32 %v5920, %v5922
  %v5924 = vrot.slane %v4213, %v5923
  %v5926 = vunpack.c.l.s4 839922192
  %v5927 = vunpack.c.0.s8 %v5926
  %v5928 = vlaneseq
  %v5929 = vshrl.u32 %v5928, 7
  %v5930 = vsub.s32 %v5927, %v5929
  %v5931 = vrot.slane %v4216, %v5930
  %v5933 = vunpack.c.l.s4 1985246804
  %v5934 = vunpack.c.0.s8 %v5933
  %v5935 = vlaneseq
  %v5936 = vshrl.u32 %v5935, 7
  %v5937 = vsub.s32 %v5934, %v5936
  %v5938 = vrot.slane %v4216, %v5937
  %v5940 = vunpack.c.l.s4 839922192
  %v5941 = vunpack.c.0.s8 %v5940
  %v5942 = vlaneseq
  %v5943 = vshrl.u32 %v5942, 7
  %v5944 = vsub.s32 %v5941, %v5943
  %v5945 = vrot.slane %v4219, %v5944
  %v5947 = vunpack.c.l.s4 1985246804
  %v5948 = vunpack.c.0.s8 %v5947
  %v5949 = vlaneseq
  %v5950 = vshrl.u32 %v5949, 7
  %v5951 = vsub.s32 %v5948, %v5950
  %v5952 = vrot.slane %v4219, %v5951
  %v5954 = vunpack.c.l.s4 839922192
  %v5955 = vunpack.c.0.s8 %v5954
  %v5956 = vlaneseq
  %v5957 = vshrl.u32 %v5956, 7
  %v5958 = vsub.s32 %v5955, %v5957
  %v5959 = vrot.slane %v4222, %v5958
  %v5961 = vunpack.c.l.s4 1985246804
  %v5962 = vunpack.c.0.s8 %v5961
  %v5963 = vlaneseq
  %v5964 = vshrl.u32 %v5963, 7
  %v5965 = vsub.s32 %v5962, %v5964
  %v5966 = vrot.slane %v4222, %v5965
  %v5968 = vunpack.c.l.s4 839922192
  %v5969 = vunpack.c.0.s8 %v5968
  %v5970 = vlaneseq
  %v5971 = vshrl.u32 %v5970, 7
  %v5972 = vsub.s32 %v5969, %v5971
  %v5973 = vrot.slane %v4225, %v5972
  %v5975 = vunpack.c.l.s4 1985246804
  %v5976 = vunpack.c.0.s8 %v5975
  %v5977 = vlaneseq
  %v5978 = vshrl.u32 %v5977, 7
  %v5979 = vsub.s32 %v5976, %v5978
  %v5980 = vrot.slane %v4225, %v5979
  %v5982 = vunpack.c.l.s4 839922192
  %v5983 = vunpack.c.0.s8 %v5982
  %v5984 = vlaneseq
  %v5985 = vshrl.u32 %v5984, 7
  %v5986 = vsub.s32 %v5983, %v5985
  %v5987 = vrot.slane %v4228, %v5986
  %v5989 = vunpack.c.l.s4 1985246804
  %v5990 = vunpack.c.0.s8 %v5989
  %v5991 = vlaneseq
  %v5992 = vshrl.u32 %v5991, 7
  %v5993 = vsub.s32 %v5990, %v5992
  %v5994 = vrot.slane %v4228, %v5993
  %v5996 = vunpack.c.l.s4 839922192
  %v5997 = vunpack.c.0.s8 %v5996
  %v5998 = vlaneseq
  %v5999 = vshrl.u32 %v5998, 7
  %v6000 = vsub.s32 %v5997, %v5999
  %v6001 = vrot.slane %v4231, %v6000
  %v6003 = vunpack.c.l.s4 1985246804
  %v6004 = vunpack.c.0.s8 %v6003
  %v6005 = vlaneseq
  %v6006 = vshrl.u32 %v6005, 7
  %v6007 = vsub.s32 %v6004, %v6006
  %v6008 = vrot.slane %v4231, %v6007
  %v6010 = vunpack.c.l.s4 839922192
  %v6011 = vunpack.c.0.s8 %v6010
  %v6012 = vlaneseq
  %v6013 = vshrl.u32 %v6012, 7
  %v6014 = vsub.s32 %v6011, %v6013
  %v6015 = vrot.slane %v4234, %v6014
  %v6017 = vunpack.c.l.s4 1985246804
  %v6018 = vunpack.c.0.s8 %v6017
  %v6019 = vlaneseq
  %v6020 = vshrl.u32 %v6019, 7
  %v6021 = vsub.s32 %v6018, %v6020
  %v6022 = vrot.slane %v4234, %v6021
  %v6024 = vunpack.c.l.s4 839922192
  %v6025 = vunpack.c.0.s8 %v6024
  %v6026 = vlaneseq
  %v6027 = vshrl.u32 %v6026, 7
  %v6028 = vsub.s32 %v6025, %v6027
  %v6029 = vrot.slane %v4237, %v6028
  %v6031 = vunpack.c.l.s4 1985246804
  %v6032 = vunpack.c.0.s8 %v6031
  %v6033 = vlaneseq
  %v6034 = vshrl.u32 %v6033, 7
  %v6035 = vsub.s32 %v6032, %v6034
  %v6036 = vrot.slane %v4237, %v6035
  %v6038 = vunpack.c.l.s4 839922192
  %v6039 = vunpack.c.0.s8 %v6038
  %v6040 = vlaneseq
  %v6041 = vshrl.u32 %v6040, 7
  %v6042 = vsub.s32 %v6039, %v6041
  %v6043 = vrot.slane %v4240, %v6042
  %v6045 = vunpack.c.l.s4 1985246804
  %v6046 = vunpack.c.0.s8 %v6045
  %v6047 = vlaneseq
  %v6048 = vshrl.u32 %v6047, 7
  %v6049 = vsub.s32 %v6046, %v6048
  %v6050 = vrot.slane %v4240, %v6049
  %v6052 = vunpack.c.l.s4 839922192
  %v6053 = vunpack.c.0.s8 %v6052
  %v6054 = vlaneseq
  %v6055 = vshrl.u32 %v6054, 7
  %v6056 = vsub.s32 %v6053, %v6055
  %v6057 = vrot.slane %v4243, %v6056
  %v6059 = vunpack.c.l.s4 1985246804
  %v6060 = vunpack.c.0.s8 %v6059
  %v6061 = vlaneseq
  %v6062 = vshrl.u32 %v6061, 7
  %v6063 = vsub.s32 %v6060, %v6062
  %v6064 = vrot.slane %v4243, %v6063
  %v6066 = vunpack.c.l.s4 839922192
  %v6067 = vunpack.c.0.s8 %v6066
  %v6068 = vlaneseq
  %v6069 = vshrl.u32 %v6068, 7
  %v6070 = vsub.s32 %v6067, %v6069
  %v6071 = vrot.slane %v4246, %v6070
  %v6073 = vunpack.c.l.s4 1985246804
  %v6074 = vunpack.c.0.s8 %v6073
  %v6075 = vlaneseq
  %v6076 = vshrl.u32 %v6075, 7
  %v6077 = vsub.s32 %v6074, %v6076
  %v6078 = vrot.slane %v4246, %v6077
  %v6080 = vunpack.c.l.s4 839922192
  %v6081 = vunpack.c.0.s8 %v6080
  %v6082 = vlaneseq
  %v6083 = vshrl.u32 %v6082, 7
  %v6084 = vsub.s32 %v6081, %v6083
  %v6085 = vrot.slane %v4249, %v6084
  %v6087 = vunpack.c.l.s4 1985246804
  %v6088 = vunpack.c.0.s8 %v6087
  %v6089 = vlaneseq
  %v6090 = vshrl.u32 %v6089, 7
  %v6091 = vsub.s32 %v6088, %v6090
  %v6092 = vrot.slane %v4249, %v6091
  %v6094 = vunpack.c.l.s4 839922192
  %v6095 = vunpack.c.0.s8 %v6094
  %v6096 = vlaneseq
  %v6097 = vshrl.u32 %v6096, 7
  %v6098 = vsub.s32 %v6095, %v6097
  %v6099 = vrot.slane %v4252, %v6098
  %v6101 = vunpack.c.l.s4 1985246804
  %v6102 = vunpack.c.0.s8 %v6101
  %v6103 = vlaneseq
  %v6104 = vshrl.u32 %v6103, 7
  %v6105 = vsub.s32 %v6102, %v6104
  %v6106 = vrot.slane %v4252, %v6105
  %v6108 = vunpack.c.l.s4 839922192
  %v6109 = vunpack.c.0.s8 %v6108
  %v6110 = vlaneseq
  %v6111 = vshrl.u32 %v6110, 7
  %v6112 = vsub.s32 %v6109, %v6111
  %v6113 = vrot.slane %v4255, %v6112
  %v6115 = vunpack.c.l.s4 1985246804
  %v6116 = vunpack.c.0.s8 %v6115
  %v6117 = vlaneseq
  %v6118 = vshrl.u32 %v6117, 7
  %v6119 = vsub.s32 %v6116, %v6118
  %v6120 = vrot.slane %v4255, %v6119
  %v6122 = vunpack.c.l.s4 839922192
  %v6123 = vunpack.c.0.s8 %v6122
  %v6124 = vlaneseq
  %v6125 = vshrl.u32 %v6124, 7
  %v6126 = vsub.s32 %v6123, %v6125
  %v6127 = vrot.slane %v4258, %v6126
  %v6129 = vunpack.c.l.s4 1985246804
  %v6130 = vunpack.c.0.s8 %v6129
  %v6131 = vlaneseq
  %v6132 = vshrl.u32 %v6131, 7
  %v6133 = vsub.s32 %v6130, %v6132
  %v6134 = vrot.slane %v4258, %v6133
  %v6136 = vunpack.c.l.s4 839922192
  %v6137 = vunpack.c.0.s8 %v6136
  %v6138 = vlaneseq
  %v6139 = vshrl.u32 %v6138, 7
  %v6140 = vsub.s32 %v6137, %v6139
  %v6141 = vrot.slane %v4261, %v6140
  %v6143 = vunpack.c.l.s4 1985246804
  %v6144 = vunpack.c.0.s8 %v6143
  %v6145 = vlaneseq
  %v6146 = vshrl.u32 %v6145, 7
  %v6147 = vsub.s32 %v6144, %v6146
  %v6148 = vrot.slane %v4261, %v6147
  %v6150 = vunpack.c.l.s4 839922192
  %v6151 = vunpack.c.0.s8 %v6150
  %v6152 = vlaneseq
  %v6153 = vshrl.u32 %v6152, 7
  %v6154 = vsub.s32 %v6151, %v6153
  %v6155 = vrot.slane %v4264, %v6154
  %v6157 = vunpack.c.l.s4 1985246804
  %v6158 = vunpack.c.0.s8 %v6157
  %v6159 = vlaneseq
  %v6160 = vshrl.u32 %v6159, 7
  %v6161 = vsub.s32 %v6158, %v6160
  %v6162 = vrot.slane %v4264, %v6161
  %v6164 = vunpack.c.l.s4 839922192
  %v6165 = vunpack.c.0.s8 %v6164
  %v6166 = vlaneseq
  %v6167 = vshrl.u32 %v6166, 7
  %v6168 = vsub.s32 %v6165, %v6167
  %v6169 = vrot.slane %v4267, %v6168
  %v6171 = vunpack.c.l.s4 1985246804
  %v6172 = vunpack.c.0.s8 %v6171
  %v6173 = vlaneseq
  %v6174 = vshrl.u32 %v6173, 7
  %v6175 = vsub.s32 %v6172, %v6174
  %v6176 = vrot.slane %v4267, %v6175
  %v6178 = vunpack.c.l.s4 839922192
  %v6179 = vunpack.c.0.s8 %v6178
  %v6180 = vlaneseq
  %v6181 = vshrl.u32 %v6180, 7
  %v6182 = vsub.s32 %v6179, %v6181
  %v6183 = vrot.slane %v4270, %v6182
  %v6185 = vunpack.c.l.s4 1985246804
  %v6186 = vunpack.c.0.s8 %v6185
  %v6187 = vlaneseq
  %v6188 = vshrl.u32 %v6187, 7
  %v6189 = vsub.s32 %v6186, %v6188
  %v6190 = vrot.slane %v4270, %v6189
  %v6191 = vcombine.low %v4405, %v4412
  %v6192 = vcombine.low %v4419, %v4426
  %v6193 = vcombine.low %v4433, %v4440
  %v6194 = vcombine.low %v4447, %v4454
  %v6195 = vcombine.low %v4461, %v4468
  %v6196 = vcombine.low %v4475, %v4482
  %v6197 = vcombine.low %v4489, %v4496
  %v6198 = vcombine.low %v4503, %v4510
  %v6199 = vcombine.low %v4517, %v4524
  %v6200 = vcombine.low %v4531, %v4538
  %v6201 = vcombine.low %v4545, %v4552
  %v6202 = vcombine.low %v4559, %v4566
  %v6203 = vcombine.low %v4573, %v4580
  %v6204 = vcombine.low %v4587, %v4594
  %v6205 = vcombine.low %v4601, %v4608
  %v6206 = vcombine.low %v4615, %v4622
  %v6207 = vcombine.low %v4629, %v4636
  %v6208 = vcombine.low %v4643, %v4650
  %v6209 = vcombine.low %v4657, %v4664
  %v6210 = vcombine.low %v4671, %v4678
  %v6211 = vcombine.low %v4685, %v4692
  %v6212 = vcombine.low %v4699, %v4706
  %v6213 = vcombine.low %v4713, %v4720
  %v6214 = vcombine.low %v4727, %v4734
  %v6215 = vcombine.low %v4741, %v4748
  %v6216 = vcombine.low %v4755, %v4762
  %v6217 = vcombine.low %v4769, %v4776
  %v6218 = vcombine.low %v4783, %v4790
  %v6219 = vcombine.low %v4797, %v4804
  %v6220 = vcombine.low %v4811, %v4818
  %v6221 = vcombine.low %v4825, %v4832
  %v6222 = vcombine.low %v4839, %v4846
  %v6223 = vcombine.low %v4853, %v4860
  %v6224 = vcombine.low %v4867, %v4874
  %v6225 = vcombine.low %v4881, %v4888
  %v6226 = vcombine.low %v4895, %v4902
  %v6227 = vcombine.low %v4909, %v4916
  %v6228 = vcombine.low %v4923, %v4930
  %v6229 = vcombine.low %v4937, %v4944
  %v6230 = vcombine.low %v4951, %v4958
  %v6231 = vcombine.low %v4965, %v4972
  %v6232 = vcombine.low %v4979, %v4986
  %v6233 = vcombine.low %v4993, %v5000
  %v6234 = vcombine.low %v5007, %v5014
  %v6235 = vcombine.low %v5021, %v5028
  %v6236 = vcombine.low %v5035, %v5042
  %v6237 = vcombine.low %v5049, %v5056
  %v6238 = vcombine.low %v5063, %v5070
  %v6239 = vcombine.low %v5077, %v5084
  %v6240 = vcombine.low %v5091, %v5098
  %v6241 = vcombine.low %v5105, %v5112
  %v6242 = vcombine.low %v5119, %v5126
  %v6243 = vcombine.low %v5133, %v5140
  %v6244 = vcombine.low %v5147, %v5154
  %v6245 = vcombine.low %v5161, %v5168
  %v6246 = vcombine.low %v5175, %v5182
  %v6247 = vcombine.low %v5189, %v5196
  %v6248 = vcombine.low %v5203, %v5210
  %v6249 = vcombine.low %v5217, %v5224
  %v6250 = vcombine.low %v5231, %v5238
  %v6251 = vcombine.low %v5245, %v5252
  %v6252 = vcombine.low %v5259, %v5266
  %v6253 = vcombine.low %v5273, %v5280
  %v6254 = vcombine.low %v5287, %v5294
  %v6255 = vcombine.low %v5301, %v5308
  %v6256 = vcombine.low %v5315, %v5322
  %v6257 = vcombine.low %v5329, %v5336
  %v6258 = vcombine.low %v5343, %v5350
  %v6259 = vcombine.low %v5357, %v5364
  %v6260 = vcombine.low %v5371, %v5378
  %v6261 = vcombine.low %v5385, %v5392
  %v6262 = vcombine.low %v5399, %v5406
  %v6263 = vcombine.low %v5413, %v5420
  %v6264 = vcombine.low %v5427, %v5434
  %v6265 = vcombine.low %v5441, %v5448
  %v6266 = vcombine.low %v5455, %v5462
  %v6267 = vcombine.low %v5469, %v5476
  %v6268 = vcombine.low %v5483, %v5490
  %v6269 = vcombine.low %v5497, %v5504
  %v6270 = vcombine.low %v5511, %v5518
  %v6271 = vcombine.low %v5525, %v5532
  %v6272 = vcombine.low %v5539, %v5546
  %v6273 = vcombine.low %v5553, %v5560
  %v6274 = vcombine.low %v5567, %v5574
  %v6275 = vcombine.low %v5581, %v5588
  %v6276 = vcombine.low %v5595, %v5602
  %v6277 = vcombine.low %v5609, %v5616
  %v6278 = vcombine.low %v5623, %v5630
  %v6279 = vcombine.low %v5637, %v5644
  %v6280 = vcombine.low %v5651, %v5658
  %v6281 = vcombine.low %v5665, %v5672
  %v6282 = vcombine.low %v5679, %v5686
  %v6283 = vcombine.low %v5693, %v5700
  %v6284 = vcombine.low %v5707, %v5714
  %v6285 = vcombine.low %v5721, %v5728
  %v6286 = vcombine.low %v5735, %v5742
  %v6287 = vcombine.low %v5749, %v5756
  %v6288 = vcombine.low %v5763, %v5770
  %v6289 = vcombine.low %v5777, %v5784
  %v6290 = vcombine.low %v5791, %v5798
  %v6291 = vcombine.low %v5805, %v5812
  %v6292 = vcombine.low %v5819, %v5826
  %v6293 = vcombine.low %v5833, %v5840
  %v6294 = vcombine.low %v5847, %v5854
  %v6295 = vcombine.low %v5861, %v5868
  %v6296 = vcombine.low %v5875, %v5882
  %v6297 = vcombine.low %v5889, %v5896
  %v6298 = vcombine.low %v5903, %v5910
  %v6299 = vcombine.low %v5917, %v5924
  %v6300 = vcombine.low %v5931, %v5938
  %v6301 = vcombine.low %v5945, %v5952
  %v6302 = vcombine.low %v5959, %v5966
  %v6303 = vcombine.low %v5973, %v5980
  %v6304 = vcombine.low %v5987, %v5994
  %v6305 = vcombine.low %v6001, %v6008
  %v6306 = vcombine.low %v6015, %v6022
  %v6307 = vcombine.low %v6029, %v6036
  %v6308 = vcombine.low %v6043, %v6050
  %v6309 = vcombine.low %v6057, %v6064
  %v6310 = vcombine.low %v6071, %v6078
  %v6311 = vcombine.low %v6085, %v6092
  %v6312 = vcombine.low %v6099, %v6106
  %v6313 = vcombine.low %v6113, %v6120
  %v6314 = vcombine.low %v6127, %v6134
  %v6315 = vcombine.low %v6141, %v6148
  %v6316 = vcombine.low %v6155, %v6162
  %v6317 = vcombine.low %v6169, %v6176
  %v6318 = vcombine.low %v6183, %v6190
  %6319 = vset.pattern.permute.xlu0 0
  %6320 = vperm.xlu0 %6319, %v6191
  %v6321 = vpop.permute.xlu0 %6320
  %6322 = vset.pattern.permute.xlu0 0
  %6323 = vperm.xlu0 %6322, %v6192
  %v6324 = vpop.permute.xlu0 %6323
  %6325 = vset.pattern.permute.xlu0 0
  %6326 = vperm.xlu0 %6325, %v6193
  %v6327 = vpop.permute.xlu0 %6326
  %6328 = vset.pattern.permute.xlu0 0
  %6329 = vperm.xlu0 %6328, %v6194
  %v6330 = vpop.permute.xlu0 %6329
  %6331 = vset.pattern.permute.xlu0 0
  %6332 = vperm.xlu0 %6331, %v6195
  %v6333 = vpop.permute.xlu0 %6332
  %6334 = vset.pattern.permute.xlu0 0
  %6335 = vperm.xlu0 %6334, %v6196
  %v6336 = vpop.permute.xlu0 %6335
  %6337 = vset.pattern.permute.xlu0 0
  %6338 = vperm.xlu0 %6337, %v6197
  %v6339 = vpop.permute.xlu0 %6338
  %6340 = vset.pattern.permute.xlu0 0
  %6341 = vperm.xlu0 %6340, %v6198
  %v6342 = vpop.permute.xlu0 %6341
  %6343 = vset.pattern.permute.xlu0 0
  %6344 = vperm.xlu0 %6343, %v6199
  %v6345 = vpop.permute.xlu0 %6344
  %6346 = vset.pattern.permute.xlu0 0
  %6347 = vperm.xlu0 %6346, %v6200
  %v6348 = vpop.permute.xlu0 %6347
  %6349 = vset.pattern.permute.xlu0 0
  %6350 = vperm.xlu0 %6349, %v6201
  %v6351 = vpop.permute.xlu0 %6350
  %6352 = vset.pattern.permute.xlu0 0
  %6353 = vperm.xlu0 %6352, %v6202
  %v6354 = vpop.permute.xlu0 %6353
  %6355 = vset.pattern.permute.xlu0 0
  %6356 = vperm.xlu0 %6355, %v6203
  %v6357 = vpop.permute.xlu0 %6356
  %6358 = vset.pattern.permute.xlu0 0
  %6359 = vperm.xlu0 %6358, %v6204
  %v6360 = vpop.permute.xlu0 %6359
  %6361 = vset.pattern.permute.xlu0 0
  %6362 = vperm.xlu0 %6361, %v6205
  %v6363 = vpop.permute.xlu0 %6362
  %6364 = vset.pattern.permute.xlu0 0
  %6365 = vperm.xlu0 %6364, %v6206
  %v6366 = vpop.permute.xlu0 %6365
  %6367 = vset.pattern.permute.xlu0 0
  %6368 = vperm.xlu0 %6367, %v6207
  %v6369 = vpop.permute.xlu0 %6368
  %6370 = vset.pattern.permute.xlu0 0
  %6371 = vperm.xlu0 %6370, %v6208
  %v6372 = vpop.permute.xlu0 %6371
  %6373 = vset.pattern.permute.xlu0 0
  %6374 = vperm.xlu0 %6373, %v6209
  %v6375 = vpop.permute.xlu0 %6374
  %6376 = vset.pattern.permute.xlu0 0
  %6377 = vperm.xlu0 %6376, %v6210
  %v6378 = vpop.permute.xlu0 %6377
  %6379 = vset.pattern.permute.xlu0 0
  %6380 = vperm.xlu0 %6379, %v6211
  %v6381 = vpop.permute.xlu0 %6380
  %6382 = vset.pattern.permute.xlu0 0
  %6383 = vperm.xlu0 %6382, %v6212
  %v6384 = vpop.permute.xlu0 %6383
  %6385 = vset.pattern.permute.xlu0 0
  %6386 = vperm.xlu0 %6385, %v6213
  %v6387 = vpop.permute.xlu0 %6386
  %6388 = vset.pattern.permute.xlu0 0
  %6389 = vperm.xlu0 %6388, %v6214
  %v6390 = vpop.permute.xlu0 %6389
  %6391 = vset.pattern.permute.xlu0 0
  %6392 = vperm.xlu0 %6391, %v6215
  %v6393 = vpop.permute.xlu0 %6392
  %6394 = vset.pattern.permute.xlu0 0
  %6395 = vperm.xlu0 %6394, %v6216
  %v6396 = vpop.permute.xlu0 %6395
  %6397 = vset.pattern.permute.xlu0 0
  %6398 = vperm.xlu0 %6397, %v6217
  %v6399 = vpop.permute.xlu0 %6398
  %6400 = vset.pattern.permute.xlu0 0
  %6401 = vperm.xlu0 %6400, %v6218
  %v6402 = vpop.permute.xlu0 %6401
  %6403 = vset.pattern.permute.xlu0 0
  %6404 = vperm.xlu0 %6403, %v6219
  %v6405 = vpop.permute.xlu0 %6404
  %6406 = vset.pattern.permute.xlu0 0
  %6407 = vperm.xlu0 %6406, %v6220
  %v6408 = vpop.permute.xlu0 %6407
  %6409 = vset.pattern.permute.xlu0 0
  %6410 = vperm.xlu0 %6409, %v6221
  %v6411 = vpop.permute.xlu0 %6410
  %6412 = vset.pattern.permute.xlu0 0
  %6413 = vperm.xlu0 %6412, %v6222
  %v6414 = vpop.permute.xlu0 %6413
  %6415 = vset.pattern.permute.xlu0 0
  %6416 = vperm.xlu0 %6415, %v6223
  %v6417 = vpop.permute.xlu0 %6416
  %6418 = vset.pattern.permute.xlu0 0
  %6419 = vperm.xlu0 %6418, %v6224
  %v6420 = vpop.permute.xlu0 %6419
  %6421 = vset.pattern.permute.xlu0 0
  %6422 = vperm.xlu0 %6421, %v6225
  %v6423 = vpop.permute.xlu0 %6422
  %6424 = vset.pattern.permute.xlu0 0
  %6425 = vperm.xlu0 %6424, %v6226
  %v6426 = vpop.permute.xlu0 %6425
  %6427 = vset.pattern.permute.xlu0 0
  %6428 = vperm.xlu0 %6427, %v6227
  %v6429 = vpop.permute.xlu0 %6428
  %6430 = vset.pattern.permute.xlu0 0
  %6431 = vperm.xlu0 %6430, %v6228
  %v6432 = vpop.permute.xlu0 %6431
  %6433 = vset.pattern.permute.xlu0 0
  %6434 = vperm.xlu0 %6433, %v6229
  %v6435 = vpop.permute.xlu0 %6434
  %6436 = vset.pattern.permute.xlu0 0
  %6437 = vperm.xlu0 %6436, %v6230
  %v6438 = vpop.permute.xlu0 %6437
  %6439 = vset.pattern.permute.xlu0 0
  %6440 = vperm.xlu0 %6439, %v6231
  %v6441 = vpop.permute.xlu0 %6440
  %6442 = vset.pattern.permute.xlu0 0
  %6443 = vperm.xlu0 %6442, %v6232
  %v6444 = vpop.permute.xlu0 %6443
  %6445 = vset.pattern.permute.xlu0 0
  %6446 = vperm.xlu0 %6445, %v6233
  %v6447 = vpop.permute.xlu0 %6446
  %6448 = vset.pattern.permute.xlu0 0
  %6449 = vperm.xlu0 %6448, %v6234
  %v6450 = vpop.permute.xlu0 %6449
  %6451 = vset.pattern.permute.xlu0 0
  %6452 = vperm.xlu0 %6451, %v6235
  %v6453 = vpop.permute.xlu0 %6452
  %6454 = vset.pattern.permute.xlu0 0
  %6455 = vperm.xlu0 %6454, %v6236
  %v6456 = vpop.permute.xlu0 %6455
  %6457 = vset.pattern.permute.xlu0 0
  %6458 = vperm.xlu0 %6457, %v6237
  %v6459 = vpop.permute.xlu0 %6458
  %6460 = vset.pattern.permute.xlu0 0
  %6461 = vperm.xlu0 %6460, %v6238
  %v6462 = vpop.permute.xlu0 %6461
  %6463 = vset.pattern.permute.xlu0 0
  %6464 = vperm.xlu0 %6463, %v6239
  %v6465 = vpop.permute.xlu0 %6464
  %6466 = vset.pattern.permute.xlu0 0
  %6467 = vperm.xlu0 %6466, %v6240
  %v6468 = vpop.permute.xlu0 %6467
  %6469 = vset.pattern.permute.xlu0 0
  %6470 = vperm.xlu0 %6469, %v6241
  %v6471 = vpop.permute.xlu0 %6470
  %6472 = vset.pattern.permute.xlu0 0
  %6473 = vperm.xlu0 %6472, %v6242
  %v6474 = vpop.permute.xlu0 %6473
  %6475 = vset.pattern.permute.xlu0 0
  %6476 = vperm.xlu0 %6475, %v6243
  %v6477 = vpop.permute.xlu0 %6476
  %6478 = vset.pattern.permute.xlu0 0
  %6479 = vperm.xlu0 %6478, %v6244
  %v6480 = vpop.permute.xlu0 %6479
  %6481 = vset.pattern.permute.xlu0 0
  %6482 = vperm.xlu0 %6481, %v6245
  %v6483 = vpop.permute.xlu0 %6482
  %6484 = vset.pattern.permute.xlu0 0
  %6485 = vperm.xlu0 %6484, %v6246
  %v6486 = vpop.permute.xlu0 %6485
  %6487 = vset.pattern.permute.xlu0 0
  %6488 = vperm.xlu0 %6487, %v6247
  %v6489 = vpop.permute.xlu0 %6488
  %6490 = vset.pattern.permute.xlu0 0
  %6491 = vperm.xlu0 %6490, %v6248
  %v6492 = vpop.permute.xlu0 %6491
  %6493 = vset.pattern.permute.xlu0 0
  %6494 = vperm.xlu0 %6493, %v6249
  %v6495 = vpop.permute.xlu0 %6494
  %6496 = vset.pattern.permute.xlu0 0
  %6497 = vperm.xlu0 %6496, %v6250
  %v6498 = vpop.permute.xlu0 %6497
  %6499 = vset.pattern.permute.xlu0 0
  %6500 = vperm.xlu0 %6499, %v6251
  %v6501 = vpop.permute.xlu0 %6500
  %6502 = vset.pattern.permute.xlu0 0
  %6503 = vperm.xlu0 %6502, %v6252
  %v6504 = vpop.permute.xlu0 %6503
  %6505 = vset.pattern.permute.xlu0 0
  %6506 = vperm.xlu0 %6505, %v6253
  %v6507 = vpop.permute.xlu0 %6506
  %6508 = vset.pattern.permute.xlu0 0
  %6509 = vperm.xlu0 %6508, %v6254
  %v6510 = vpop.permute.xlu0 %6509
  %6511 = vset.pattern.permute.xlu0 0
  %6512 = vperm.xlu0 %6511, %v6255
  %v6513 = vpop.permute.xlu0 %6512
  %6514 = vset.pattern.permute.xlu0 0
  %6515 = vperm.xlu0 %6514, %v6256
  %v6516 = vpop.permute.xlu0 %6515
  %6517 = vset.pattern.permute.xlu0 0
  %6518 = vperm.xlu0 %6517, %v6257
  %v6519 = vpop.permute.xlu0 %6518
  %6520 = vset.pattern.permute.xlu0 0
  %6521 = vperm.xlu0 %6520, %v6258
  %v6522 = vpop.permute.xlu0 %6521
  %6523 = vset.pattern.permute.xlu0 0
  %6524 = vperm.xlu0 %6523, %v6259
  %v6525 = vpop.permute.xlu0 %6524
  %6526 = vset.pattern.permute.xlu0 0
  %6527 = vperm.xlu0 %6526, %v6260
  %v6528 = vpop.permute.xlu0 %6527
  %6529 = vset.pattern.permute.xlu0 0
  %6530 = vperm.xlu0 %6529, %v6261
  %v6531 = vpop.permute.xlu0 %6530
  %6532 = vset.pattern.permute.xlu0 0
  %6533 = vperm.xlu0 %6532, %v6262
  %v6534 = vpop.permute.xlu0 %6533
  %6535 = vset.pattern.permute.xlu0 0
  %6536 = vperm.xlu0 %6535, %v6263
  %v6537 = vpop.permute.xlu0 %6536
  %6538 = vset.pattern.permute.xlu0 0
  %6539 = vperm.xlu0 %6538, %v6264
  %v6540 = vpop.permute.xlu0 %6539
  %6541 = vset.pattern.permute.xlu0 0
  %6542 = vperm.xlu0 %6541, %v6265
  %v6543 = vpop.permute.xlu0 %6542
  %6544 = vset.pattern.permute.xlu0 0
  %6545 = vperm.xlu0 %6544, %v6266
  %v6546 = vpop.permute.xlu0 %6545
  %6547 = vset.pattern.permute.xlu0 0
  %6548 = vperm.xlu0 %6547, %v6267
  %v6549 = vpop.permute.xlu0 %6548
  %6550 = vset.pattern.permute.xlu0 0
  %6551 = vperm.xlu0 %6550, %v6268
  %v6552 = vpop.permute.xlu0 %6551
  %6553 = vset.pattern.permute.xlu0 0
  %6554 = vperm.xlu0 %6553, %v6269
  %v6555 = vpop.permute.xlu0 %6554
  %6556 = vset.pattern.permute.xlu0 0
  %6557 = vperm.xlu0 %6556, %v6270
  %v6558 = vpop.permute.xlu0 %6557
  %6559 = vset.pattern.permute.xlu0 0
  %6560 = vperm.xlu0 %6559, %v6271
  %v6561 = vpop.permute.xlu0 %6560
  %6562 = vset.pattern.permute.xlu0 0
  %6563 = vperm.xlu0 %6562, %v6272
  %v6564 = vpop.permute.xlu0 %6563
  %6565 = vset.pattern.permute.xlu0 0
  %6566 = vperm.xlu0 %6565, %v6273
  %v6567 = vpop.permute.xlu0 %6566
  %6568 = vset.pattern.permute.xlu0 0
  %6569 = vperm.xlu0 %6568, %v6274
  %v6570 = vpop.permute.xlu0 %6569
  %6571 = vset.pattern.permute.xlu0 0
  %6572 = vperm.xlu0 %6571, %v6275
  %v6573 = vpop.permute.xlu0 %6572
  %6574 = vset.pattern.permute.xlu0 0
  %6575 = vperm.xlu0 %6574, %v6276
  %v6576 = vpop.permute.xlu0 %6575
  %6577 = vset.pattern.permute.xlu0 0
  %6578 = vperm.xlu0 %6577, %v6277
  %v6579 = vpop.permute.xlu0 %6578
  %6580 = vset.pattern.permute.xlu0 0
  %6581 = vperm.xlu0 %6580, %v6278
  %v6582 = vpop.permute.xlu0 %6581
  %6583 = vset.pattern.permute.xlu0 0
  %6584 = vperm.xlu0 %6583, %v6279
  %v6585 = vpop.permute.xlu0 %6584
  %6586 = vset.pattern.permute.xlu0 0
  %6587 = vperm.xlu0 %6586, %v6280
  %v6588 = vpop.permute.xlu0 %6587
  %6589 = vset.pattern.permute.xlu0 0
  %6590 = vperm.xlu0 %6589, %v6281
  %v6591 = vpop.permute.xlu0 %6590
  %6592 = vset.pattern.permute.xlu0 0
  %6593 = vperm.xlu0 %6592, %v6282
  %v6594 = vpop.permute.xlu0 %6593
  %6595 = vset.pattern.permute.xlu0 0
  %6596 = vperm.xlu0 %6595, %v6283
  %v6597 = vpop.permute.xlu0 %6596
  %6598 = vset.pattern.permute.xlu0 0
  %6599 = vperm.xlu0 %6598, %v6284
  %v6600 = vpop.permute.xlu0 %6599
  %6601 = vset.pattern.permute.xlu0 0
  %6602 = vperm.xlu0 %6601, %v6285
  %v6603 = vpop.permute.xlu0 %6602
  %6604 = vset.pattern.permute.xlu0 0
  %6605 = vperm.xlu0 %6604, %v6286
  %v6606 = vpop.permute.xlu0 %6605
  %6607 = vset.pattern.permute.xlu0 0
  %6608 = vperm.xlu0 %6607, %v6287
  %v6609 = vpop.permute.xlu0 %6608
  %6610 = vset.pattern.permute.xlu0 0
  %6611 = vperm.xlu0 %6610, %v6288
  %v6612 = vpop.permute.xlu0 %6611
  %6613 = vset.pattern.permute.xlu0 0
  %6614 = vperm.xlu0 %6613, %v6289
  %v6615 = vpop.permute.xlu0 %6614
  %6616 = vset.pattern.permute.xlu0 0
  %6617 = vperm.xlu0 %6616, %v6290
  %v6618 = vpop.permute.xlu0 %6617
  %6619 = vset.pattern.permute.xlu0 0
  %6620 = vperm.xlu0 %6619, %v6291
  %v6621 = vpop.permute.xlu0 %6620
  %6622 = vset.pattern.permute.xlu0 0
  %6623 = vperm.xlu0 %6622, %v6292
  %v6624 = vpop.permute.xlu0 %6623
  %6625 = vset.pattern.permute.xlu0 0
  %6626 = vperm.xlu0 %6625, %v6293
  %v6627 = vpop.permute.xlu0 %6626
  %6628 = vset.pattern.permute.xlu0 0
  %6629 = vperm.xlu0 %6628, %v6294
  %v6630 = vpop.permute.xlu0 %6629
  %6631 = vset.pattern.permute.xlu0 0
  %6632 = vperm.xlu0 %6631, %v6295
  %v6633 = vpop.permute.xlu0 %6632
  %6634 = vset.pattern.permute.xlu0 0
  %6635 = vperm.xlu0 %6634, %v6296
  %v6636 = vpop.permute.xlu0 %6635
  %6637 = vset.pattern.permute.xlu0 0
  %6638 = vperm.xlu0 %6637, %v6297
  %v6639 = vpop.permute.xlu0 %6638
  %6640 = vset.pattern.permute.xlu0 0
  %6641 = vperm.xlu0 %6640, %v6298
  %v6642 = vpop.permute.xlu0 %6641
  %6643 = vset.pattern.permute.xlu0 0
  %6644 = vperm.xlu0 %6643, %v6299
  %v6645 = vpop.permute.xlu0 %6644
  %6646 = vset.pattern.permute.xlu0 0
  %6647 = vperm.xlu0 %6646, %v6300
  %v6648 = vpop.permute.xlu0 %6647
  %6649 = vset.pattern.permute.xlu0 0
  %6650 = vperm.xlu0 %6649, %v6301
  %v6651 = vpop.permute.xlu0 %6650
  %6652 = vset.pattern.permute.xlu0 0
  %6653 = vperm.xlu0 %6652, %v6302
  %v6654 = vpop.permute.xlu0 %6653
  %6655 = vset.pattern.permute.xlu0 0
  %6656 = vperm.xlu0 %6655, %v6303
  %v6657 = vpop.permute.xlu0 %6656
  %6658 = vset.pattern.permute.xlu0 0
  %6659 = vperm.xlu0 %6658, %v6304
  %v6660 = vpop.permute.xlu0 %6659
  %6661 = vset.pattern.permute.xlu0 0
  %6662 = vperm.xlu0 %6661, %v6305
  %v6663 = vpop.permute.xlu0 %6662
  %6664 = vset.pattern.permute.xlu0 0
  %6665 = vperm.xlu0 %6664, %v6306
  %v6666 = vpop.permute.xlu0 %6665
  %6667 = vset.pattern.permute.xlu0 0
  %6668 = vperm.xlu0 %6667, %v6307
  %v6669 = vpop.permute.xlu0 %6668
  %6670 = vset.pattern.permute.xlu0 0
  %6671 = vperm.xlu0 %6670, %v6308
  %v6672 = vpop.permute.xlu0 %6671
  %6673 = vset.pattern.permute.xlu0 0
  %6674 = vperm.xlu0 %6673, %v6309
  %v6675 = vpop.permute.xlu0 %6674
  %6676 = vset.pattern.permute.xlu0 0
  %6677 = vperm.xlu0 %6676, %v6310
  %v6678 = vpop.permute.xlu0 %6677
  %6679 = vset.pattern.permute.xlu0 0
  %6680 = vperm.xlu0 %6679, %v6311
  %v6681 = vpop.permute.xlu0 %6680
  %6682 = vset.pattern.permute.xlu0 0
  %6683 = vperm.xlu0 %6682, %v6312
  %v6684 = vpop.permute.xlu0 %6683
  %6685 = vset.pattern.permute.xlu0 0
  %6686 = vperm.xlu0 %6685, %v6313
  %v6687 = vpop.permute.xlu0 %6686
  %6688 = vset.pattern.permute.xlu0 0
  %6689 = vperm.xlu0 %6688, %v6314
  %v6690 = vpop.permute.xlu0 %6689
  %6691 = vset.pattern.permute.xlu0 0
  %6692 = vperm.xlu0 %6691, %v6315
  %v6693 = vpop.permute.xlu0 %6692
  %6694 = vset.pattern.permute.xlu0 0
  %6695 = vperm.xlu0 %6694, %v6316
  %v6696 = vpop.permute.xlu0 %6695
  %6697 = vset.pattern.permute.xlu0 0
  %6698 = vperm.xlu0 %6697, %v6317
  %v6699 = vpop.permute.xlu0 %6698
  %6700 = vset.pattern.permute.xlu0 0
  %6701 = vperm.xlu0 %6700, %v6318
  %v6702 = vpop.permute.xlu0 %6701
  %v6703 = vlaneseq
  %v6704 = vshrl.u32 %v6703, 7
  %v6705 = vsub.s32 %v3212, %v6704
  %v6706 = vrot.slane %v6321, %v6705
  %v6707 = vlaneseq
  %v6708 = vshrl.u32 %v6707, 7
  %v6709 = vsub.s32 %v3217, %v6708
  %v6710 = vrot.slane %v6324, %v6709
  %v6711 = vsel %vm3222, %v6710, %v6706
  %v6712 = vlaneseq
  %v6713 = vshrl.u32 %v6712, 7
  %v6714 = vsub.s32 %v3224, %v6713
  %v6715 = vrot.slane %v6327, %v6714
  %v6716 = vsel %vm3229, %v6715, %v6711
  %v6717 = vlaneseq
  %v6718 = vshrl.u32 %v6717, 7
  %v6719 = vsub.s32 %v3231, %v6718
  %v6720 = vrot.slane %v6330, %v6719
  %v6721 = vsel %vm3236, %v6720, %v6716
  %v6722 = vlaneseq
  %v6723 = vshrl.u32 %v6722, 7
  %v6724 = vsub.s32 %v3238, %v6723
  %v6725 = vrot.slane %v6333, %v6724
  %v6726 = vsel %vm3243, %v6725, %v6721
  %v6727 = vlaneseq
  %v6728 = vshrl.u32 %v6727, 7
  %v6729 = vsub.s32 %v3245, %v6728
  %v6730 = vrot.slane %v6336, %v6729
  %v6731 = vsel %vm3250, %v6730, %v6726
  %v6732 = vlaneseq
  %v6733 = vshrl.u32 %v6732, 7
  %v6734 = vsub.s32 %v3252, %v6733
  %v6735 = vrot.slane %v6339, %v6734
  %v6736 = vsel %vm3257, %v6735, %v6731
  %v6737 = vlaneseq
  %v6738 = vshrl.u32 %v6737, 7
  %v6739 = vsub.s32 %v3259, %v6738
  %v6740 = vrot.slane %v6342, %v6739
  %v6741 = vsel %vm3264, %v6740, %v6736
  %v6742 = vlaneseq
  %v6743 = vshrl.u32 %v6742, 7
  %v6744 = vsub.s32 %v3266, %v6743
  %v6745 = vrot.slane %v6345, %v6744
  %v6746 = vsel %vm3271, %v6745, %v6741
  %v6747 = vlaneseq
  %v6748 = vshrl.u32 %v6747, 7
  %v6749 = vsub.s32 %v3273, %v6748
  %v6750 = vrot.slane %v6348, %v6749
  %v6751 = vsel %vm3278, %v6750, %v6746
  %v6752 = vlaneseq
  %v6753 = vshrl.u32 %v6752, 7
  %v6754 = vsub.s32 %v3280, %v6753
  %v6755 = vrot.slane %v6351, %v6754
  %v6756 = vsel %vm3285, %v6755, %v6751
  %v6757 = vlaneseq
  %v6758 = vshrl.u32 %v6757, 7
  %v6759 = vsub.s32 %v3287, %v6758
  %v6760 = vrot.slane %v6354, %v6759
  %v6761 = vsel %vm3292, %v6760, %v6756
  %v6762 = vlaneseq
  %v6763 = vshrl.u32 %v6762, 7
  %v6764 = vsub.s32 %v3294, %v6763
  %v6765 = vrot.slane %v6357, %v6764
  %v6766 = vsel %vm3299, %v6765, %v6761
  %v6767 = vlaneseq
  %v6768 = vshrl.u32 %v6767, 7
  %v6769 = vsub.s32 %v3301, %v6768
  %v6770 = vrot.slane %v6360, %v6769
  %v6771 = vsel %vm3306, %v6770, %v6766
  %v6772 = vlaneseq
  %v6773 = vshrl.u32 %v6772, 7
  %v6774 = vsub.s32 %v3308, %v6773
  %v6775 = vrot.slane %v6363, %v6774
  %v6776 = vsel %vm3313, %v6775, %v6771
  %v6777 = vlaneseq
  %v6778 = vshrl.u32 %v6777, 7
  %v6779 = vsub.s32 %v3315, %v6778
  %v6780 = vrot.slane %v6366, %v6779
  %v6781 = vsel %vm3320, %v6780, %v6776
  %v6782 = vlaneseq
  %v6783 = vshrl.u32 %v6782, 7
  %v6784 = vsub.s32 %v3212, %v6783
  %v6785 = vrot.slane %v6369, %v6784
  %v6786 = vlaneseq
  %v6787 = vshrl.u32 %v6786, 7
  %v6788 = vsub.s32 %v3217, %v6787
  %v6789 = vrot.slane %v6372, %v6788
  %v6790 = vsel %vm3222, %v6789, %v6785
  %v6791 = vlaneseq
  %v6792 = vshrl.u32 %v6791, 7
  %v6793 = vsub.s32 %v3224, %v6792
  %v6794 = vrot.slane %v6375, %v6793
  %v6795 = vsel %vm3229, %v6794, %v6790
  %v6796 = vlaneseq
  %v6797 = vshrl.u32 %v6796, 7
  %v6798 = vsub.s32 %v3231, %v6797
  %v6799 = vrot.slane %v6378, %v6798
  %v6800 = vsel %vm3236, %v6799, %v6795
  %v6801 = vlaneseq
  %v6802 = vshrl.u32 %v6801, 7
  %v6803 = vsub.s32 %v3238, %v6802
  %v6804 = vrot.slane %v6381, %v6803
  %v6805 = vsel %vm3243, %v6804, %v6800
  %v6806 = vlaneseq
  %v6807 = vshrl.u32 %v6806, 7
  %v6808 = vsub.s32 %v3245, %v6807
  %v6809 = vrot.slane %v6384, %v6808
  %v6810 = vsel %vm3250, %v6809, %v6805
  %v6811 = vlaneseq
  %v6812 = vshrl.u32 %v6811, 7
  %v6813 = vsub.s32 %v3252, %v6812
  %v6814 = vrot.slane %v6387, %v6813
  %v6815 = vsel %vm3257, %v6814, %v6810
  %v6816 = vlaneseq
  %v6817 = vshrl.u32 %v6816, 7
  %v6818 = vsub.s32 %v3259, %v6817
  %v6819 = vrot.slane %v6390, %v6818
  %v6820 = vsel %vm3264, %v6819, %v6815
  %v6821 = vlaneseq
  %v6822 = vshrl.u32 %v6821, 7
  %v6823 = vsub.s32 %v3266, %v6822
  %v6824 = vrot.slane %v6393, %v6823
  %v6825 = vsel %vm3271, %v6824, %v6820
  %v6826 = vlaneseq
  %v6827 = vshrl.u32 %v6826, 7
  %v6828 = vsub.s32 %v3273, %v6827
  %v6829 = vrot.slane %v6396, %v6828
  %v6830 = vsel %vm3278, %v6829, %v6825
  %v6831 = vlaneseq
  %v6832 = vshrl.u32 %v6831, 7
  %v6833 = vsub.s32 %v3280, %v6832
  %v6834 = vrot.slane %v6399, %v6833
  %v6835 = vsel %vm3285, %v6834, %v6830
  %v6836 = vlaneseq
  %v6837 = vshrl.u32 %v6836, 7
  %v6838 = vsub.s32 %v3287, %v6837
  %v6839 = vrot.slane %v6402, %v6838
  %v6840 = vsel %vm3292, %v6839, %v6835
  %v6841 = vlaneseq
  %v6842 = vshrl.u32 %v6841, 7
  %v6843 = vsub.s32 %v3294, %v6842
  %v6844 = vrot.slane %v6405, %v6843
  %v6845 = vsel %vm3299, %v6844, %v6840
  %v6846 = vlaneseq
  %v6847 = vshrl.u32 %v6846, 7
  %v6848 = vsub.s32 %v3301, %v6847
  %v6849 = vrot.slane %v6408, %v6848
  %v6850 = vsel %vm3306, %v6849, %v6845
  %v6851 = vlaneseq
  %v6852 = vshrl.u32 %v6851, 7
  %v6853 = vsub.s32 %v3308, %v6852
  %v6854 = vrot.slane %v6411, %v6853
  %v6855 = vsel %vm3313, %v6854, %v6850
  %v6856 = vlaneseq
  %v6857 = vshrl.u32 %v6856, 7
  %v6858 = vsub.s32 %v3315, %v6857
  %v6859 = vrot.slane %v6414, %v6858
  %v6860 = vsel %vm3320, %v6859, %v6855
  %v6861 = vlaneseq
  %v6862 = vshrl.u32 %v6861, 7
  %v6863 = vsub.s32 %v3212, %v6862
  %v6864 = vrot.slane %v6417, %v6863
  %v6865 = vlaneseq
  %v6866 = vshrl.u32 %v6865, 7
  %v6867 = vsub.s32 %v3217, %v6866
  %v6868 = vrot.slane %v6420, %v6867
  %v6869 = vsel %vm3222, %v6868, %v6864
  %v6870 = vlaneseq
  %v6871 = vshrl.u32 %v6870, 7
  %v6872 = vsub.s32 %v3224, %v6871
  %v6873 = vrot.slane %v6423, %v6872
  %v6874 = vsel %vm3229, %v6873, %v6869
  %v6875 = vlaneseq
  %v6876 = vshrl.u32 %v6875, 7
  %v6877 = vsub.s32 %v3231, %v6876
  %v6878 = vrot.slane %v6426, %v6877
  %v6879 = vsel %vm3236, %v6878, %v6874
  %v6880 = vlaneseq
  %v6881 = vshrl.u32 %v6880, 7
  %v6882 = vsub.s32 %v3238, %v6881
  %v6883 = vrot.slane %v6429, %v6882
  %v6884 = vsel %vm3243, %v6883, %v6879
  %v6885 = vlaneseq
  %v6886 = vshrl.u32 %v6885, 7
  %v6887 = vsub.s32 %v3245, %v6886
  %v6888 = vrot.slane %v6432, %v6887
  %v6889 = vsel %vm3250, %v6888, %v6884
  %v6890 = vlaneseq
  %v6891 = vshrl.u32 %v6890, 7
  %v6892 = vsub.s32 %v3252, %v6891
  %v6893 = vrot.slane %v6435, %v6892
  %v6894 = vsel %vm3257, %v6893, %v6889
  %v6895 = vlaneseq
  %v6896 = vshrl.u32 %v6895, 7
  %v6897 = vsub.s32 %v3259, %v6896
  %v6898 = vrot.slane %v6438, %v6897
  %v6899 = vsel %vm3264, %v6898, %v6894
  %v6900 = vlaneseq
  %v6901 = vshrl.u32 %v6900, 7
  %v6902 = vsub.s32 %v3266, %v6901
  %v6903 = vrot.slane %v6441, %v6902
  %v6904 = vsel %vm3271, %v6903, %v6899
  %v6905 = vlaneseq
  %v6906 = vshrl.u32 %v6905, 7
  %v6907 = vsub.s32 %v3273, %v6906
  %v6908 = vrot.slane %v6444, %v6907
  %v6909 = vsel %vm3278, %v6908, %v6904
  %v6910 = vlaneseq
  %v6911 = vshrl.u32 %v6910, 7
  %v6912 = vsub.s32 %v3280, %v6911
  %v6913 = vrot.slane %v6447, %v6912
  %v6914 = vsel %vm3285, %v6913, %v6909
  %v6915 = vlaneseq
  %v6916 = vshrl.u32 %v6915, 7
  %v6917 = vsub.s32 %v3287, %v6916
  %v6918 = vrot.slane %v6450, %v6917
  %v6919 = vsel %vm3292, %v6918, %v6914
  %v6920 = vlaneseq
  %v6921 = vshrl.u32 %v6920, 7
  %v6922 = vsub.s32 %v3294, %v6921
  %v6923 = vrot.slane %v6453, %v6922
  %v6924 = vsel %vm3299, %v6923, %v6919
  %v6925 = vlaneseq
  %v6926 = vshrl.u32 %v6925, 7
  %v6927 = vsub.s32 %v3301, %v6926
  %v6928 = vrot.slane %v6456, %v6927
  %v6929 = vsel %vm3306, %v6928, %v6924
  %v6930 = vlaneseq
  %v6931 = vshrl.u32 %v6930, 7
  %v6932 = vsub.s32 %v3308, %v6931
  %v6933 = vrot.slane %v6459, %v6932
  %v6934 = vsel %vm3313, %v6933, %v6929
  %v6935 = vlaneseq
  %v6936 = vshrl.u32 %v6935, 7
  %v6937 = vsub.s32 %v3315, %v6936
  %v6938 = vrot.slane %v6462, %v6937
  %v6939 = vsel %vm3320, %v6938, %v6934
  %v6940 = vlaneseq
  %v6941 = vshrl.u32 %v6940, 7
  %v6942 = vsub.s32 %v3212, %v6941
  %v6943 = vrot.slane %v6465, %v6942
  %v6944 = vlaneseq
  %v6945 = vshrl.u32 %v6944, 7
  %v6946 = vsub.s32 %v3217, %v6945
  %v6947 = vrot.slane %v6468, %v6946
  %v6948 = vsel %vm3222, %v6947, %v6943
  %v6949 = vlaneseq
  %v6950 = vshrl.u32 %v6949, 7
  %v6951 = vsub.s32 %v3224, %v6950
  %v6952 = vrot.slane %v6471, %v6951
  %v6953 = vsel %vm3229, %v6952, %v6948
  %v6954 = vlaneseq
  %v6955 = vshrl.u32 %v6954, 7
  %v6956 = vsub.s32 %v3231, %v6955
  %v6957 = vrot.slane %v6474, %v6956
  %v6958 = vsel %vm3236, %v6957, %v6953
  %v6959 = vlaneseq
  %v6960 = vshrl.u32 %v6959, 7
  %v6961 = vsub.s32 %v3238, %v6960
  %v6962 = vrot.slane %v6477, %v6961
  %v6963 = vsel %vm3243, %v6962, %v6958
  %v6964 = vlaneseq
  %v6965 = vshrl.u32 %v6964, 7
  %v6966 = vsub.s32 %v3245, %v6965
  %v6967 = vrot.slane %v6480, %v6966
  %v6968 = vsel %vm3250, %v6967, %v6963
  %v6969 = vlaneseq
  %v6970 = vshrl.u32 %v6969, 7
  %v6971 = vsub.s32 %v3252, %v6970
  %v6972 = vrot.slane %v6483, %v6971
  %v6973 = vsel %vm3257, %v6972, %v6968
  %v6974 = vlaneseq
  %v6975 = vshrl.u32 %v6974, 7
  %v6976 = vsub.s32 %v3259, %v6975
  %v6977 = vrot.slane %v6486, %v6976
  %v6978 = vsel %vm3264, %v6977, %v6973
  %v6979 = vlaneseq
  %v6980 = vshrl.u32 %v6979, 7
  %v6981 = vsub.s32 %v3266, %v6980
  %v6982 = vrot.slane %v6489, %v6981
  %v6983 = vsel %vm3271, %v6982, %v6978
  %v6984 = vlaneseq
  %v6985 = vshrl.u32 %v6984, 7
  %v6986 = vsub.s32 %v3273, %v6985
  %v6987 = vrot.slane %v6492, %v6986
  %v6988 = vsel %vm3278, %v6987, %v6983
  %v6989 = vlaneseq
  %v6990 = vshrl.u32 %v6989, 7
  %v6991 = vsub.s32 %v3280, %v6990
  %v6992 = vrot.slane %v6495, %v6991
  %v6993 = vsel %vm3285, %v6992, %v6988
  %v6994 = vlaneseq
  %v6995 = vshrl.u32 %v6994, 7
  %v6996 = vsub.s32 %v3287, %v6995
  %v6997 = vrot.slane %v6498, %v6996
  %v6998 = vsel %vm3292, %v6997, %v6993
  %v6999 = vlaneseq
  %v7000 = vshrl.u32 %v6999, 7
  %v7001 = vsub.s32 %v3294, %v7000
  %v7002 = vrot.slane %v6501, %v7001
  %v7003 = vsel %vm3299, %v7002, %v6998
  %v7004 = vlaneseq
  %v7005 = vshrl.u32 %v7004, 7
  %v7006 = vsub.s32 %v3301, %v7005
  %v7007 = vrot.slane %v6504, %v7006
  %v7008 = vsel %vm3306, %v7007, %v7003
  %v7009 = vlaneseq
  %v7010 = vshrl.u32 %v7009, 7
  %v7011 = vsub.s32 %v3308, %v7010
  %v7012 = vrot.slane %v6507, %v7011
  %v7013 = vsel %vm3313, %v7012, %v7008
  %v7014 = vlaneseq
  %v7015 = vshrl.u32 %v7014, 7
  %v7016 = vsub.s32 %v3315, %v7015
  %v7017 = vrot.slane %v6510, %v7016
  %v7018 = vsel %vm3320, %v7017, %v7013
  %v7019 = vlaneseq
  %v7020 = vshrl.u32 %v7019, 7
  %v7021 = vsub.s32 %v3212, %v7020
  %v7022 = vrot.slane %v6513, %v7021
  %v7023 = vlaneseq
  %v7024 = vshrl.u32 %v7023, 7
  %v7025 = vsub.s32 %v3217, %v7024
  %v7026 = vrot.slane %v6516, %v7025
  %v7027 = vsel %vm3222, %v7026, %v7022
  %v7028 = vlaneseq
  %v7029 = vshrl.u32 %v7028, 7
  %v7030 = vsub.s32 %v3224, %v7029
  %v7031 = vrot.slane %v6519, %v7030
  %v7032 = vsel %vm3229, %v7031, %v7027
  %v7033 = vlaneseq
  %v7034 = vshrl.u32 %v7033, 7
  %v7035 = vsub.s32 %v3231, %v7034
  %v7036 = vrot.slane %v6522, %v7035
  %v7037 = vsel %vm3236, %v7036, %v7032
  %v7038 = vlaneseq
  %v7039 = vshrl.u32 %v7038, 7
  %v7040 = vsub.s32 %v3238, %v7039
  %v7041 = vrot.slane %v6525, %v7040
  %v7042 = vsel %vm3243, %v7041, %v7037
  %v7043 = vlaneseq
  %v7044 = vshrl.u32 %v7043, 7
  %v7045 = vsub.s32 %v3245, %v7044
  %v7046 = vrot.slane %v6528, %v7045
  %v7047 = vsel %vm3250, %v7046, %v7042
  %v7048 = vlaneseq
  %v7049 = vshrl.u32 %v7048, 7
  %v7050 = vsub.s32 %v3252, %v7049
  %v7051 = vrot.slane %v6531, %v7050
  %v7052 = vsel %vm3257, %v7051, %v7047
  %v7053 = vlaneseq
  %v7054 = vshrl.u32 %v7053, 7
  %v7055 = vsub.s32 %v3259, %v7054
  %v7056 = vrot.slane %v6534, %v7055
  %v7057 = vsel %vm3264, %v7056, %v7052
  %v7058 = vlaneseq
  %v7059 = vshrl.u32 %v7058, 7
  %v7060 = vsub.s32 %v3266, %v7059
  %v7061 = vrot.slane %v6537, %v7060
  %v7062 = vsel %vm3271, %v7061, %v7057
  %v7063 = vlaneseq
  %v7064 = vshrl.u32 %v7063, 7
  %v7065 = vsub.s32 %v3273, %v7064
  %v7066 = vrot.slane %v6540, %v7065
  %v7067 = vsel %vm3278, %v7066, %v7062
  %v7068 = vlaneseq
  %v7069 = vshrl.u32 %v7068, 7
  %v7070 = vsub.s32 %v3280, %v7069
  %v7071 = vrot.slane %v6543, %v7070
  %v7072 = vsel %vm3285, %v7071, %v7067
  %v7073 = vlaneseq
  %v7074 = vshrl.u32 %v7073, 7
  %v7075 = vsub.s32 %v3287, %v7074
  %v7076 = vrot.slane %v6546, %v7075
  %v7077 = vsel %vm3292, %v7076, %v7072
  %v7078 = vlaneseq
  %v7079 = vshrl.u32 %v7078, 7
  %v7080 = vsub.s32 %v3294, %v7079
  %v7081 = vrot.slane %v6549, %v7080
  %v7082 = vsel %vm3299, %v7081, %v7077
  %v7083 = vlaneseq
  %v7084 = vshrl.u32 %v7083, 7
  %v7085 = vsub.s32 %v3301, %v7084
  %v7086 = vrot.slane %v6552, %v7085
  %v7087 = vsel %vm3306, %v7086, %v7082
  %v7088 = vlaneseq
  %v7089 = vshrl.u32 %v7088, 7
  %v7090 = vsub.s32 %v3308, %v7089
  %v7091 = vrot.slane %v6555, %v7090
  %v7092 = vsel %vm3313, %v7091, %v7087
  %v7093 = vlaneseq
  %v7094 = vshrl.u32 %v7093, 7
  %v7095 = vsub.s32 %v3315, %v7094
  %v7096 = vrot.slane %v6558, %v7095
  %v7097 = vsel %vm3320, %v7096, %v7092
  %v7098 = vlaneseq
  %v7099 = vshrl.u32 %v7098, 7
  %v7100 = vsub.s32 %v3212, %v7099
  %v7101 = vrot.slane %v6561, %v7100
  %v7102 = vlaneseq
  %v7103 = vshrl.u32 %v7102, 7
  %v7104 = vsub.s32 %v3217, %v7103
  %v7105 = vrot.slane %v6564, %v7104
  %v7106 = vsel %vm3222, %v7105, %v7101
  %v7107 = vlaneseq
  %v7108 = vshrl.u32 %v7107, 7
  %v7109 = vsub.s32 %v3224, %v7108
  %v7110 = vrot.slane %v6567, %v7109
  %v7111 = vsel %vm3229, %v7110, %v7106
  %v7112 = vlaneseq
  %v7113 = vshrl.u32 %v7112, 7
  %v7114 = vsub.s32 %v3231, %v7113
  %v7115 = vrot.slane %v6570, %v7114
  %v7116 = vsel %vm3236, %v7115, %v7111
  %v7117 = vlaneseq
  %v7118 = vshrl.u32 %v7117, 7
  %v7119 = vsub.s32 %v3238, %v7118
  %v7120 = vrot.slane %v6573, %v7119
  %v7121 = vsel %vm3243, %v7120, %v7116
  %v7122 = vlaneseq
  %v7123 = vshrl.u32 %v7122, 7
  %v7124 = vsub.s32 %v3245, %v7123
  %v7125 = vrot.slane %v6576, %v7124
  %v7126 = vsel %vm3250, %v7125, %v7121
  %v7127 = vlaneseq
  %v7128 = vshrl.u32 %v7127, 7
  %v7129 = vsub.s32 %v3252, %v7128
  %v7130 = vrot.slane %v6579, %v7129
  %v7131 = vsel %vm3257, %v7130, %v7126
  %v7132 = vlaneseq
  %v7133 = vshrl.u32 %v7132, 7
  %v7134 = vsub.s32 %v3259, %v7133
  %v7135 = vrot.slane %v6582, %v7134
  %v7136 = vsel %vm3264, %v7135, %v7131
  %v7137 = vlaneseq
  %v7138 = vshrl.u32 %v7137, 7
  %v7139 = vsub.s32 %v3266, %v7138
  %v7140 = vrot.slane %v6585, %v7139
  %v7141 = vsel %vm3271, %v7140, %v7136
  %v7142 = vlaneseq
  %v7143 = vshrl.u32 %v7142, 7
  %v7144 = vsub.s32 %v3273, %v7143
  %v7145 = vrot.slane %v6588, %v7144
  %v7146 = vsel %vm3278, %v7145, %v7141
  %v7147 = vlaneseq
  %v7148 = vshrl.u32 %v7147, 7
  %v7149 = vsub.s32 %v3280, %v7148
  %v7150 = vrot.slane %v6591, %v7149
  %v7151 = vsel %vm3285, %v7150, %v7146
  %v7152 = vlaneseq
  %v7153 = vshrl.u32 %v7152, 7
  %v7154 = vsub.s32 %v3287, %v7153
  %v7155 = vrot.slane %v6594, %v7154
  %v7156 = vsel %vm3292, %v7155, %v7151
  %v7157 = vlaneseq
  %v7158 = vshrl.u32 %v7157, 7
  %v7159 = vsub.s32 %v3294, %v7158
  %v7160 = vrot.slane %v6597, %v7159
  %v7161 = vsel %vm3299, %v7160, %v7156
  %v7162 = vlaneseq
  %v7163 = vshrl.u32 %v7162, 7
  %v7164 = vsub.s32 %v3301, %v7163
  %v7165 = vrot.slane %v6600, %v7164
  %v7166 = vsel %vm3306, %v7165, %v7161
  %v7167 = vlaneseq
  %v7168 = vshrl.u32 %v7167, 7
  %v7169 = vsub.s32 %v3308, %v7168
  %v7170 = vrot.slane %v6603, %v7169
  %v7171 = vsel %vm3313, %v7170, %v7166
  %v7172 = vlaneseq
  %v7173 = vshrl.u32 %v7172, 7
  %v7174 = vsub.s32 %v3315, %v7173
  %v7175 = vrot.slane %v6606, %v7174
  %v7176 = vsel %vm3320, %v7175, %v7171
  %v7177 = vlaneseq
  %v7178 = vshrl.u32 %v7177, 7
  %v7179 = vsub.s32 %v3212, %v7178
  %v7180 = vrot.slane %v6609, %v7179
  %v7181 = vlaneseq
  %v7182 = vshrl.u32 %v7181, 7
  %v7183 = vsub.s32 %v3217, %v7182
  %v7184 = vrot.slane %v6612, %v7183
  %v7185 = vsel %vm3222, %v7184, %v7180
  %v7186 = vlaneseq
  %v7187 = vshrl.u32 %v7186, 7
  %v7188 = vsub.s32 %v3224, %v7187
  %v7189 = vrot.slane %v6615, %v7188
  %v7190 = vsel %vm3229, %v7189, %v7185
  %v7191 = vlaneseq
  %v7192 = vshrl.u32 %v7191, 7
  %v7193 = vsub.s32 %v3231, %v7192
  %v7194 = vrot.slane %v6618, %v7193
  %v7195 = vsel %vm3236, %v7194, %v7190
  %v7196 = vlaneseq
  %v7197 = vshrl.u32 %v7196, 7
  %v7198 = vsub.s32 %v3238, %v7197
  %v7199 = vrot.slane %v6621, %v7198
  %v7200 = vsel %vm3243, %v7199, %v7195
  %v7201 = vlaneseq
  %v7202 = vshrl.u32 %v7201, 7
  %v7203 = vsub.s32 %v3245, %v7202
  %v7204 = vrot.slane %v6624, %v7203
  %v7205 = vsel %vm3250, %v7204, %v7200
  %v7206 = vlaneseq
  %v7207 = vshrl.u32 %v7206, 7
  %v7208 = vsub.s32 %v3252, %v7207
  %v7209 = vrot.slane %v6627, %v7208
  %v7210 = vsel %vm3257, %v7209, %v7205
  %v7211 = vlaneseq
  %v7212 = vshrl.u32 %v7211, 7
  %v7213 = vsub.s32 %v3259, %v7212
  %v7214 = vrot.slane %v6630, %v7213
  %v7215 = vsel %vm3264, %v7214, %v7210
  %v7216 = vlaneseq
  %v7217 = vshrl.u32 %v7216, 7
  %v7218 = vsub.s32 %v3266, %v7217
  %v7219 = vrot.slane %v6633, %v7218
  %v7220 = vsel %vm3271, %v7219, %v7215
  %v7221 = vlaneseq
  %v7222 = vshrl.u32 %v7221, 7
  %v7223 = vsub.s32 %v3273, %v7222
  %v7224 = vrot.slane %v6636, %v7223
  %v7225 = vsel %vm3278, %v7224, %v7220
  %v7226 = vlaneseq
  %v7227 = vshrl.u32 %v7226, 7
  %v7228 = vsub.s32 %v3280, %v7227
  %v7229 = vrot.slane %v6639, %v7228
  %v7230 = vsel %vm3285, %v7229, %v7225
  %v7231 = vlaneseq
  %v7232 = vshrl.u32 %v7231, 7
  %v7233 = vsub.s32 %v3287, %v7232
  %v7234 = vrot.slane %v6642, %v7233
  %v7235 = vsel %vm3292, %v7234, %v7230
  %v7236 = vlaneseq
  %v7237 = vshrl.u32 %v7236, 7
  %v7238 = vsub.s32 %v3294, %v7237
  %v7239 = vrot.slane %v6645, %v7238
  %v7240 = vsel %vm3299, %v7239, %v7235
  %v7241 = vlaneseq
  %v7242 = vshrl.u32 %v7241, 7
  %v7243 = vsub.s32 %v3301, %v7242
  %v7244 = vrot.slane %v6648, %v7243
  %v7245 = vsel %vm3306, %v7244, %v7240
  %v7246 = vlaneseq
  %v7247 = vshrl.u32 %v7246, 7
  %v7248 = vsub.s32 %v3308, %v7247
  %v7249 = vrot.slane %v6651, %v7248
  %v7250 = vsel %vm3313, %v7249, %v7245
  %v7251 = vlaneseq
  %v7252 = vshrl.u32 %v7251, 7
  %v7253 = vsub.s32 %v3315, %v7252
  %v7254 = vrot.slane %v6654, %v7253
  %v7255 = vsel %vm3320, %v7254, %v7250
  %v7256 = vlaneseq
  %v7257 = vshrl.u32 %v7256, 7
  %v7258 = vsub.s32 %v3212, %v7257
  %v7259 = vrot.slane %v6657, %v7258
  %v7260 = vlaneseq
  %v7261 = vshrl.u32 %v7260, 7
  %v7262 = vsub.s32 %v3217, %v7261
  %v7263 = vrot.slane %v6660, %v7262
  %v7264 = vsel %vm3222, %v7263, %v7259
  %v7265 = vlaneseq
  %v7266 = vshrl.u32 %v7265, 7
  %v7267 = vsub.s32 %v3224, %v7266
  %v7268 = vrot.slane %v6663, %v7267
  %v7269 = vsel %vm3229, %v7268, %v7264
  %v7270 = vlaneseq
  %v7271 = vshrl.u32 %v7270, 7
  %v7272 = vsub.s32 %v3231, %v7271
  %v7273 = vrot.slane %v6666, %v7272
  %v7274 = vsel %vm3236, %v7273, %v7269
  %v7275 = vlaneseq
  %v7276 = vshrl.u32 %v7275, 7
  %v7277 = vsub.s32 %v3238, %v7276
  %v7278 = vrot.slane %v6669, %v7277
  %v7279 = vsel %vm3243, %v7278, %v7274
  %v7280 = vlaneseq
  %v7281 = vshrl.u32 %v7280, 7
  %v7282 = vsub.s32 %v3245, %v7281
  %v7283 = vrot.slane %v6672, %v7282
  %v7284 = vsel %vm3250, %v7283, %v7279
  %v7285 = vlaneseq
  %v7286 = vshrl.u32 %v7285, 7
  %v7287 = vsub.s32 %v3252, %v7286
  %v7288 = vrot.slane %v6675, %v7287
  %v7289 = vsel %vm3257, %v7288, %v7284
  %v7290 = vlaneseq
  %v7291 = vshrl.u32 %v7290, 7
  %v7292 = vsub.s32 %v3259, %v7291
  %v7293 = vrot.slane %v6678, %v7292
  %v7294 = vsel %vm3264, %v7293, %v7289
  %v7295 = vlaneseq
  %v7296 = vshrl.u32 %v7295, 7
  %v7297 = vsub.s32 %v3266, %v7296
  %v7298 = vrot.slane %v6681, %v7297
  %v7299 = vsel %vm3271, %v7298, %v7294
  %v7300 = vlaneseq
  %v7301 = vshrl.u32 %v7300, 7
  %v7302 = vsub.s32 %v3273, %v7301
  %v7303 = vrot.slane %v6684, %v7302
  %v7304 = vsel %vm3278, %v7303, %v7299
  %v7305 = vlaneseq
  %v7306 = vshrl.u32 %v7305, 7
  %v7307 = vsub.s32 %v3280, %v7306
  %v7308 = vrot.slane %v6687, %v7307
  %v7309 = vsel %vm3285, %v7308, %v7304
  %v7310 = vlaneseq
  %v7311 = vshrl.u32 %v7310, 7
  %v7312 = vsub.s32 %v3287, %v7311
  %v7313 = vrot.slane %v6690, %v7312
  %v7314 = vsel %vm3292, %v7313, %v7309
  %v7315 = vlaneseq
  %v7316 = vshrl.u32 %v7315, 7
  %v7317 = vsub.s32 %v3294, %v7316
  %v7318 = vrot.slane %v6693, %v7317
  %v7319 = vsel %vm3299, %v7318, %v7314
  %v7320 = vlaneseq
  %v7321 = vshrl.u32 %v7320, 7
  %v7322 = vsub.s32 %v3301, %v7321
  %v7323 = vrot.slane %v6696, %v7322
  %v7324 = vsel %vm3306, %v7323, %v7319
  %v7325 = vlaneseq
  %v7326 = vshrl.u32 %v7325, 7
  %v7327 = vsub.s32 %v3308, %v7326
  %v7328 = vrot.slane %v6699, %v7327
  %v7329 = vsel %vm3313, %v7328, %v7324
  %v7330 = vlaneseq
  %v7331 = vshrl.u32 %v7330, 7
  %v7332 = vsub.s32 %v3315, %v7331
  %v7333 = vrot.slane %v6702, %v7332
  %v7334 = vsel %vm3320, %v7333, %v7329
  %v7335 = vsel %vm3875, %v6939, %v6781
  %v7336 = vsel %vm3877, %v7097, %v7335
  %v7337 = vsel %vm3879, %v7255, %v7336
  %v7338 = vsel %vm3875, %v7018, %v6860
  %v7339 = vsel %vm3877, %v7176, %v7338
  %v7340 = vsel %vm3879, %v7334, %v7339
  %v7341 = vcombine.low %v7337, %v7340
  %7343 = vst [vmem:[%s2] sm:$0xff] %v7341
  // Predicated region
  $region6: #{avgmax_attention.3} parent=0 // pred_check
    _
  $region7: #{avgmax_attention.3} parent=0 // pred_check_branch
    %7345 = sbr.rel (0) target = $region9
  $region8: #{avgmax_attention.3} parent=0 // pred_region
    _
  $region9: #{avgmax_attention.3} parent=0 // pred_fallthru
    _
  // Predicated region
  $region10: #{avgmax_attention.3} parent=0 // pred_check
    _
  $region11: #{avgmax_attention.3} parent=0 // pred_check_branch
    %7347 = sbr.rel (0) target = $region13
  $region12: #{avgmax_attention.3} parent=0 // pred_region
    _
  $region13: #{avgmax_attention.3} parent=0 // pred_fallthru
    _
  // Predicated region
  $region14: #{avgmax_attention.3} parent=0 // pred_check
    _
  $region15: #{avgmax_attention.3} parent=0 // pred_check_branch
    %7349 = sbr.rel (0) target = $region17
  $region16: #{avgmax_attention.3} parent=0 // pred_region
    _
  $region17: #{avgmax_attention.3} parent=0 // pred_fallthru
    _
  // Predicated region
  $region18: #{avgmax_attention.3} parent=0 // pred_check
    _
  $region19: #{avgmax_attention.3} parent=0 // pred_check_branch
    %7351 = sbr.rel (0) target = $region21
  $region20: #{avgmax_attention.3} parent=0 // pred_region
    _
  $region21: #{avgmax_attention.3} parent=0 // pred_fallthru
    _

</llo_original>
